<compile_context>
chip_gen: v7x
topology: tpu7x:2x2x1
jax: 0.10.0
libtpu: 0.0.40
codegen_flags: <defaults>
</compile_context>

<pallas_src>
import functools
import math

import jax
import jax.numpy as jnp
from jax.experimental import pallas as pl
from jax.experimental.pallas import tpu as pltpu

INPUT_SIZE = 32
HIDDEN = 512
D1 = 256
D2 = 128
N_BLOCKS = 3

# ----- rows of the packed small-vector table (32 rows x 512 lanes, f32) -----------
_ROW_B0 = 0                      # folded input bias (Linear + BatchNorm)
# residual block i occupies rows 1+6i .. 6+6i : b1, g1, be1, b2, g2, be2
_ROW_BD1, _ROW_LG1, _ROW_LB1 = 19, 20, 21      # downsample 512->256 (first D1 lanes)
_ROW_BD2, _ROW_LG2, _ROW_LB2 = 22, 23, 24      # downsample 256->128 (first D2 lanes)
_ROW_WO, _ROW_BO = 25, 26                      # output weight row / output bias
_N_VEC_ROWS = 32                               # padded to a sublane multiple


# ---------------------------------------------------------------------------
# in-kernel helpers
# ---------------------------------------------------------------------------
def _layernorm(o, g, b, eps=1e-5):
    """One-pass LayerNorm on an f32 tensor: var = E[x^2]-E[x]^2; rsqrt folded
    into the gain so the normalize is one mul + one add per element."""
    mu = jnp.mean(o, axis=-1, keepdims=True)
    var = jnp.mean(o * o, axis=-1, keepdims=True) - mu * mu
    scale = jax.lax.rsqrt(var + eps) * g
    return o * scale + (b - mu * scale)


def _gelu_tanh(h):
    # tanh approximation -> EUP; ~1e-3 abs deviation from exact-erf nn.GELU()
    c = 0.7978845608028654  # sqrt(2/pi)
    return 0.5 * h * (1.0 + jnp.tanh(c * (h + 0.044715 * (h * h * h))))


def _gelu_exact(h):
    hf = h.astype(jnp.float32)
    g = 0.5 * hf * (1.0 + jax.lax.erf(hf * 0.7071067811865476))
    return g.astype(h.dtype)


def _selu(h):
    alpha = 1.6732632423543772
    scale = 1.0507009873554805
    return scale * jnp.where(h > 0, h, alpha * (jnp.exp(h) - 1.0))


def _leaky_relu(h, slope=0.1):   # module uses nn.LeakyReLU(0.1) explicitly
    return jnp.where(h > 0, h, slope * h)


# ---------------------------------------------------------------------------
# the Pallas kernel: full EnergyPredictor forward for one batch tile
# ---------------------------------------------------------------------------
def _energy_kernel(x_ref, w0_ref, wres_ref, wd1_ref, wd2_ref, vec_ref, out_ref,
                   *, elem_dtype, approx_gelu):
    f32 = jnp.float32
    bf16 = jnp.bfloat16
    gelu = _gelu_tanh if approx_gelu else _gelu_exact

    def vrow(r, n=HIDDEN):
        return vec_ref[r:r + 1, :n]

    # ---- input_layer: Linear(+folded eval-BN) -> LeakyReLU(0.1) -> Dropout(id)
    h = jnp.dot(x_ref[...].astype(bf16), w0_ref[...], preferred_element_type=f32)
    h = h + vrow(_ROW_B0)
    h = _leaky_relu(h.astype(elem_dtype), 0.1)

    # ---- 3 x ResidualBlock(512); weights read at point of use
    for blk in range(N_BLOCKS):
        base = 1 + 6 * blk
        res = h                                           # residual (elem_dtype)
        o = jnp.dot(h.astype(bf16), wres_ref[2 * blk], preferred_element_type=f32)
        o = _layernorm(o + vrow(base + 0), vrow(base + 1), vrow(base + 2))
        o = gelu(o.astype(elem_dtype))
        # dropout = identity (eval)
        o = jnp.dot(o.astype(bf16), wres_ref[2 * blk + 1], preferred_element_type=f32)
        o = _layernorm(o + vrow(base + 3), vrow(base + 4), vrow(base + 5))
        o = o + res.astype(f32)
        h = gelu(o.astype(elem_dtype))

    # ---- downsample: 512 -> 256 (LN, SELU, Dropout-id)
    h = jnp.dot(h.astype(bf16), wd1_ref[...], preferred_element_type=f32)
    h = _layernorm(h + vrow(_ROW_BD1, D1), vrow(_ROW_LG1, D1), vrow(_ROW_LB1, D1))
    h = _selu(h.astype(elem_dtype))

    # ---- downsample: 256 -> 128 (LN, SELU, Dropout-id)
    h = jnp.dot(h.astype(bf16), wd2_ref[...], preferred_element_type=f32)
    h = _layernorm(h + vrow(_ROW_BD2, D2), vrow(_ROW_LG2, D2), vrow(_ROW_LB2, D2))
    h = _selu(h.astype(elem_dtype))

    # ---- output_layer: Linear(128, 1) on the VPU/XLU
    wo = vrow(_ROW_WO, D2)                       # (1, 128)
    bo = vec_ref[_ROW_BO:_ROW_BO + 1, 0:1]       # (1, 1)
    y = jnp.sum(h.astype(f32) * wo, axis=-1, keepdims=True) + bo
    out_ref[...] = y.astype(out_ref.dtype)


# ---------------------------------------------------------------------------
# parameter construction (deterministic, PyTorch-style default init / layout)
# ---------------------------------------------------------------------------
def init_raw_params(key, input_size=INPUT_SIZE):
    """PyTorch-layout parameters: Linear weight (out,in), bias (out,)."""
    def linear(k, fin, fout):
        k1, k2 = jax.random.split(k)
        bound = 1.0 / math.sqrt(fin)
        w = jax.random.uniform(k1, (fout, fin), jnp.float32, -bound, bound)
        b = jax.random.uniform(k2, (fout,), jnp.float32, -bound, bound)
        return w, b

    keys = iter(jax.random.split(key, 16))
    p = {}
    p["w0"], p["b0"] = linear(next(keys), input_size, HIDDEN)
    p["bn_g"] = jax.random.uniform(next(keys), (HIDDEN,), jnp.float32, 0.5, 1.5)
    p["bn_b"] = jax.random.uniform(next(keys), (HIDDEN,), jnp.float32, -0.1, 0.1)
    p["bn_m"] = jax.random.uniform(next(keys), (HIDDEN,), jnp.float32, -0.1, 0.1)
    p["bn_v"] = jax.random.uniform(next(keys), (HIDDEN,), jnp.float32, 0.5, 1.5)
    p["blocks"] = []
    for _ in range(N_BLOCKS):
        w1, b1 = linear(next(keys), HIDDEN, HIDDEN)
        w2, b2 = linear(next(keys), HIDDEN, HIDDEN)
        p["blocks"].append(dict(
            w1=w1, b1=b1, g1=jnp.ones((HIDDEN,), jnp.float32),
            be1=jnp.zeros((HIDDEN,), jnp.float32),
            w2=w2, b2=b2, g2=jnp.ones((HIDDEN,), jnp.float32),
            be2=jnp.zeros((HIDDEN,), jnp.float32)))
    p["wd1"], p["bd1"] = linear(next(keys), HIDDEN, D1)
    p["lg1"], p["lb1"] = jnp.ones((D1,), jnp.float32), jnp.zeros((D1,), jnp.float32)
    p["wd2"], p["bd2"] = linear(next(keys), D1, D2)
    p["lg2"], p["lb2"] = jnp.ones((D2,), jnp.float32), jnp.zeros((D2,), jnp.float32)
    p["wo"], p["bo"] = linear(next(keys), D2, 1)
    return p


def pack_params(p, bn_eps=1e-5, weight_dtype=jnp.bfloat16):
    """Fold eval BN into the input Linear, transpose weights to (in,out), cast big
    weights to bf16, and pack all small vectors into one (32, 512) f32 table."""
    scale = p["bn_g"] / jnp.sqrt(p["bn_v"] + bn_eps)                 # (512,)
    w0 = (p["w0"].T * scale[None, :]).astype(weight_dtype)           # (in, 512)
    b0 = p["b0"] * scale + (p["bn_b"] - p["bn_m"] * scale)           # (512,) f32

    wres = jnp.stack([blk[name].T for blk in p["blocks"]
                      for name in ("w1", "w2")]).astype(weight_dtype)  # (6,512,512)
    wd1 = p["wd1"].T.astype(weight_dtype)                             # (512,256)
    wd2 = p["wd2"].T.astype(weight_dtype)                             # (256,128)

    vec = jnp.zeros((_N_VEC_ROWS, HIDDEN), jnp.float32)
    vec = vec.at[_ROW_B0, :HIDDEN].set(b0)
    for i, blk in enumerate(p["blocks"]):
        base = 1 + 6 * i
        vec = vec.at[base + 0, :HIDDEN].set(blk["b1"])
        vec = vec.at[base + 1, :HIDDEN].set(blk["g1"])
        vec = vec.at[base + 2, :HIDDEN].set(blk["be1"])
        vec = vec.at[base + 3, :HIDDEN].set(blk["b2"])
        vec = vec.at[base + 4, :HIDDEN].set(blk["g2"])
        vec = vec.at[base + 5, :HIDDEN].set(blk["be2"])
    vec = vec.at[_ROW_BD1, :D1].set(p["bd1"])
    vec = vec.at[_ROW_LG1, :D1].set(p["lg1"])
    vec = vec.at[_ROW_LB1, :D1].set(p["lb1"])
    vec = vec.at[_ROW_BD2, :D2].set(p["bd2"])
    vec = vec.at[_ROW_LG2, :D2].set(p["lg2"])
    vec = vec.at[_ROW_LB2, :D2].set(p["lb2"])
    vec = vec.at[_ROW_WO, :D2].set(p["wo"][0])
    vec = vec.at[_ROW_BO, 0].set(p["bo"][0])
    return (w0, wres, wd1, wd2, vec)


# ---------------------------------------------------------------------------
# wrapper: balanced batch-tiled grid, weights resident (constant index_maps)
# ---------------------------------------------------------------------------
def _round_up(n, m):
    return ((n + m - 1) // m) * m


def _cdiv(a, b):
    return -(-a // b)


def _device_kind():
    try:
        return jax.devices()[0].device_kind.lower()
    except Exception:
        return ""


@functools.partial(jax.jit, static_argnames=("tm", "approx_gelu"))
def energy_predictor(x, packed, tm=None, approx_gelu=True):
    w0, wres, wd1, wd2, vec = packed
    b = x.shape[0]

    kind = _device_kind()
    has_bf16_valu = ("v6" in kind) or ("v7" in kind) or ("7x" in kind)
    # elementwise math in bf16 only where the VPU/EUP supports it (v6e / v7x)
    elem_dtype = jnp.bfloat16 if has_bf16_valu else jnp.float32
    if tm is None:
        tm = 512 if has_bf16_valu else 256

    # Balanced tiles; guarantee >=2 grid steps when the batch allows it so the
    # "parallel" axis can shard across both v7x TensorCores.
    n_tiles = max(_cdiv(b, tm), 2 if b >= 16 else 1)
    tile_m = _round_up(_cdiv(b, n_tiles), 8)
    n_tiles = _cdiv(b, tile_m)
    bp = tile_m * n_tiles
    if bp != b:
        x = jnp.pad(x, ((0, bp - b), (0, 0)))

    kernel = functools.partial(_energy_kernel, elem_dtype=elem_dtype,
                               approx_gelu=approx_gelu)

    out = pl.pallas_call(
        kernel,
        out_shape=jax.ShapeDtypeStruct((bp, 1), jnp.float32),
        grid=(n_tiles,),
        in_specs=[
            pl.BlockSpec((tile_m, INPUT_SIZE), lambda i: (i, 0)),        # activations stream
            pl.BlockSpec((INPUT_SIZE, HIDDEN), lambda i: (0, 0)),        # weights resident
            pl.BlockSpec((2 * N_BLOCKS, HIDDEN, HIDDEN), lambda i: (0, 0, 0)),
            pl.BlockSpec((HIDDEN, D1), lambda i: (0, 0)),
            pl.BlockSpec((D1, D2), lambda i: (0, 0)),
            pl.BlockSpec((_N_VEC_ROWS, HIDDEN), lambda i: (0, 0)),       # packed vectors
        ],
        out_specs=pl.BlockSpec((tile_m, 1), lambda i: (i, 0)),
        compiler_params=pltpu.CompilerParams(
            dimension_semantics=("parallel",),
        ),
    )(x, w0, wres, wd1, wd2, vec)
    return out[:b]


if __name__ == "__main__":
    key = jax.random.PRNGKey(0)
    kx, kp = jax.random.split(key)
    batch = 8
    x = jax.random.normal(kx, (batch, INPUT_SIZE), dtype=jnp.float32)
    raw = init_raw_params(kp, INPUT_SIZE)
    packed = pack_params(raw)

    y = energy_predictor(x, packed)
    y = jax.block_until_ready(y)
    assert y.shape == (batch, 1), y.shape
    assert bool(jnp.all(jnp.isfinite(y)))
    print("KERNEL_OK")
</pallas_src>

<mosaic_0001>
module attributes {stable_mosaic.version = 11 : i64} {
  func.func @_energy_kernel(%arg0: i32, %arg1: memref<8x32xf32, #tpu.memory_space<vmem>>, %arg2: memref<32x512xbf16, #tpu.memory_space<vmem>>, %arg3: memref<6x512x512xbf16, #tpu.memory_space<vmem>>, %arg4: memref<512x256xbf16, #tpu.memory_space<vmem>>, %arg5: memref<256x128xbf16, #tpu.memory_space<vmem>>, %arg6: memref<32x512xf32, #tpu.memory_space<vmem>>, %arg7: memref<8x1xf32, #tpu.memory_space<vmem>>) attributes {dimension_semantics = [#tpu.dimension_semantics<parallel>], iteration_bounds = array<i64: 1>, scalar_prefetch = 0 : i64, scratch_operands = 0 : i64, tpu.core_type = #tpu.core_type<tc>, window_params = [{transform_indices = @transform_0, window_bounds = array<i64: 8, 32>}, {pipeline_mode = #tpu.pipeline_mode<synchronous>, transform_indices = @transform_1, window_bounds = array<i64: 32, 512>}, {pipeline_mode = #tpu.pipeline_mode<synchronous>, transform_indices = @transform_2, window_bounds = array<i64: 6, 512, 512>}, {pipeline_mode = #tpu.pipeline_mode<synchronous>, transform_indices = @transform_3, window_bounds = array<i64: 512, 256>}, {pipeline_mode = #tpu.pipeline_mode<synchronous>, transform_indices = @transform_4, window_bounds = array<i64: 256, 128>}, {pipeline_mode = #tpu.pipeline_mode<synchronous>, transform_indices = @transform_5, window_bounds = array<i64: 32, 512>}, {transform_indices = @transform_6, window_bounds = array<i64: 8, 1>}]} {
    %c0 = arith.constant 0 : index
    %c0_0 = arith.constant 0 : index
    %0 = vector.load %arg1[%c0, %c0_0] : memref<8x32xf32, #tpu.memory_space<vmem>>, vector<8x32xf32>
    %1 = arith.truncf %0 : vector<8x32xf32> to vector<8x32xbf16>
    %c0_1 = arith.constant 0 : index
    %c0_2 = arith.constant 0 : index
    %2 = vector.load %arg2[%c0_1, %c0_2] : memref<32x512xbf16, #tpu.memory_space<vmem>>, vector<32x512xbf16>
    %cst = arith.constant dense<0.000000e+00> : vector<8x512xf32>
    %3 = tpu.matmul %1, %2, %cst {dimension_numbers = #tpu.dot_dimension_numbers<[1], [0], [0], [1], [0, 0, 1, 1], [], []>} : vector<8x32xbf16>, vector<32x512xbf16>, vector<8x512xf32> -> vector<8x512xf32>
    %c0_3 = arith.constant 0 : index
    %c0_4 = arith.constant 0 : index
    %4 = vector.load %arg6[%c0_3, %c0_4] : memref<32x512xf32, #tpu.memory_space<vmem>>, vector<1x512xf32>
    %5 = vector.broadcast %4 : vector<1x512xf32> to vector<8x512xf32>
    %6 = arith.addf %3, %5 : vector<8x512xf32>
    %cst_5 = arith.constant 0.000000e+00 : f32
    %7 = vector.broadcast %cst_5 : f32 to vector<8x512xf32>
    %8 = arith.cmpf ogt, %6, %7 : vector<8x512xf32>
    %cst_6 = arith.constant 1.000000e-01 : f32
    %9 = vector.broadcast %cst_6 : f32 to vector<8x512xf32>
    %10 = arith.mulf %9, %6 : vector<8x512xf32>
    %11 = arith.select %8, %6, %10 : vector<8x512xi1>, vector<8x512xf32>
    %12 = arith.truncf %11 : vector<8x512xf32> to vector<8x512xbf16>
    %c0_7 = arith.constant 0 : index
    %c0_8 = arith.constant 0 : index
    %c0_9 = arith.constant 0 : index
    %13 = vector.load %arg3[%c0_7, %c0_8, %c0_9] : memref<6x512x512xbf16, #tpu.memory_space<vmem>>, vector<1x512x512xbf16>
    %14 = vector.shape_cast %13 : vector<1x512x512xbf16> to vector<512x512xbf16>
    %cst_10 = arith.constant dense<0.000000e+00> : vector<8x512xf32>
    %15 = tpu.matmul %12, %14, %cst_10 {dimension_numbers = #tpu.dot_dimension_numbers<[1], [0], [0], [1], [0, 0, 1, 1], [], []>} : vector<8x512xbf16>, vector<512x512xbf16>, vector<8x512xf32> -> vector<8x512xf32>
    %c1 = arith.constant 1 : index
    %c0_11 = arith.constant 0 : index
    %16 = vector.load %arg6[%c1, %c0_11] : memref<32x512xf32, #tpu.memory_space<vmem>>, vector<1x512xf32>
    %17 = vector.broadcast %16 : vector<1x512xf32> to vector<8x512xf32>
    %18 = arith.addf %15, %17 : vector<8x512xf32>
    %c2 = arith.constant 2 : index
    %c0_12 = arith.constant 0 : index
    %19 = vector.load %arg6[%c2, %c0_12] : memref<32x512xf32, #tpu.memory_space<vmem>>, vector<1x512xf32>
    %c3 = arith.constant 3 : index
    %c0_13 = arith.constant 0 : index
    %20 = vector.load %arg6[%c3, %c0_13] : memref<32x512xf32, #tpu.memory_space<vmem>>, vector<1x512xf32>
    %cst_14 = arith.constant dense<0.000000e+00> : vector<8xf32>
    %21 = vector.multi_reduction <add>, %18, %cst_14 [1] : vector<8x512xf32> to vector<8xf32>
    %22 = vector.shape_cast %21 : vector<8xf32> to vector<8x1xf32>
    %cst_15 = arith.constant 5.120000e+02 : f32
    %23 = vector.broadcast %cst_15 : f32 to vector<8x1xf32>
    %24 = arith.divf %22, %23 : vector<8x1xf32>
    %25 = arith.mulf %18, %18 : vector<8x512xf32>
    %cst_16 = arith.constant dense<0.000000e+00> : vector<8xf32>
    %26 = vector.multi_reduction <add>, %25, %cst_16 [1] : vector<8x512xf32> to vector<8xf32>
    %27 = vector.shape_cast %26 : vector<8xf32> to vector<8x1xf32>
    %cst_17 = arith.constant 5.120000e+02 : f32
    %28 = vector.broadcast %cst_17 : f32 to vector<8x1xf32>
    %29 = arith.divf %27, %28 : vector<8x1xf32>
    %30 = arith.mulf %24, %24 : vector<8x1xf32>
    %31 = arith.subf %29, %30 : vector<8x1xf32>
    %cst_18 = arith.constant 9.99999974E-6 : f32
    %32 = vector.broadcast %cst_18 : f32 to vector<8x1xf32>
    %33 = arith.addf %31, %32 : vector<8x1xf32>
    %34 = math.rsqrt %33 : vector<8x1xf32>
    %35 = vector.broadcast %34 : vector<8x1xf32> to vector<8x512xf32>
    %36 = vector.broadcast %19 : vector<1x512xf32> to vector<8x512xf32>
    %37 = arith.mulf %35, %36 : vector<8x512xf32>
    %38 = arith.mulf %18, %37 : vector<8x512xf32>
    %39 = vector.broadcast %24 : vector<8x1xf32> to vector<8x512xf32>
    %40 = arith.mulf %39, %37 : vector<8x512xf32>
    %41 = vector.broadcast %20 : vector<1x512xf32> to vector<8x512xf32>
    %42 = arith.subf %41, %40 : vector<8x512xf32>
    %43 = arith.addf %38, %42 : vector<8x512xf32>
    %cst_19 = arith.constant 5.000000e-01 : f32
    %44 = vector.broadcast %cst_19 : f32 to vector<8x512xf32>
    %45 = arith.mulf %44, %43 : vector<8x512xf32>
    %46 = arith.mulf %43, %43 : vector<8x512xf32>
    %47 = arith.mulf %46, %43 : vector<8x512xf32>
    %cst_20 = arith.constant 4.471500e-02 : f32
    %48 = vector.broadcast %cst_20 : f32 to vector<8x512xf32>
    %49 = arith.mulf %48, %47 : vector<8x512xf32>
    %50 = arith.addf %43, %49 : vector<8x512xf32>
    %cst_21 = arith.constant 0.797884583 : f32
    %51 = vector.broadcast %cst_21 : f32 to vector<8x512xf32>
    %52 = arith.mulf %51, %50 : vector<8x512xf32>
    %53 = math.tanh %52 : vector<8x512xf32>
    %cst_22 = arith.constant 1.000000e+00 : f32
    %54 = vector.broadcast %cst_22 : f32 to vector<8x512xf32>
    %55 = arith.addf %54, %53 : vector<8x512xf32>
    %56 = arith.mulf %45, %55 : vector<8x512xf32>
    %57 = arith.truncf %56 : vector<8x512xf32> to vector<8x512xbf16>
    %c1_23 = arith.constant 1 : index
    %c0_24 = arith.constant 0 : index
    %c0_25 = arith.constant 0 : index
    %58 = vector.load %arg3[%c1_23, %c0_24, %c0_25] : memref<6x512x512xbf16, #tpu.memory_space<vmem>>, vector<1x512x512xbf16>
    %59 = vector.shape_cast %58 : vector<1x512x512xbf16> to vector<512x512xbf16>
    %cst_26 = arith.constant dense<0.000000e+00> : vector<8x512xf32>
    %60 = tpu.matmul %57, %59, %cst_26 {dimension_numbers = #tpu.dot_dimension_numbers<[1], [0], [0], [1], [0, 0, 1, 1], [], []>} : vector<8x512xbf16>, vector<512x512xbf16>, vector<8x512xf32> -> vector<8x512xf32>
    %c4 = arith.constant 4 : index
    %c0_27 = arith.constant 0 : index
    %61 = vector.load %arg6[%c4, %c0_27] : memref<32x512xf32, #tpu.memory_space<vmem>>, vector<1x512xf32>
    %62 = vector.broadcast %61 : vector<1x512xf32> to vector<8x512xf32>
    %63 = arith.addf %60, %62 : vector<8x512xf32>
    %c5 = arith.constant 5 : index
    %c0_28 = arith.constant 0 : index
    %64 = vector.load %arg6[%c5, %c0_28] : memref<32x512xf32, #tpu.memory_space<vmem>>, vector<1x512xf32>
    %c6 = arith.constant 6 : index
    %c0_29 = arith.constant 0 : index
    %65 = vector.load %arg6[%c6, %c0_29] : memref<32x512xf32, #tpu.memory_space<vmem>>, vector<1x512xf32>
    %cst_30 = arith.constant dense<0.000000e+00> : vector<8xf32>
    %66 = vector.multi_reduction <add>, %63, %cst_30 [1] : vector<8x512xf32> to vector<8xf32>
    %67 = vector.shape_cast %66 : vector<8xf32> to vector<8x1xf32>
    %cst_31 = arith.constant 5.120000e+02 : f32
    %68 = vector.broadcast %cst_31 : f32 to vector<8x1xf32>
    %69 = arith.divf %67, %68 : vector<8x1xf32>
    %70 = arith.mulf %63, %63 : vector<8x512xf32>
    %cst_32 = arith.constant dense<0.000000e+00> : vector<8xf32>
    %71 = vector.multi_reduction <add>, %70, %cst_32 [1] : vector<8x512xf32> to vector<8xf32>
    %72 = vector.shape_cast %71 : vector<8xf32> to vector<8x1xf32>
    %cst_33 = arith.constant 5.120000e+02 : f32
    %73 = vector.broadcast %cst_33 : f32 to vector<8x1xf32>
    %74 = arith.divf %72, %73 : vector<8x1xf32>
    %75 = arith.mulf %69, %69 : vector<8x1xf32>
    %76 = arith.subf %74, %75 : vector<8x1xf32>
    %cst_34 = arith.constant 9.99999974E-6 : f32
    %77 = vector.broadcast %cst_34 : f32 to vector<8x1xf32>
    %78 = arith.addf %76, %77 : vector<8x1xf32>
    %79 = math.rsqrt %78 : vector<8x1xf32>
    %80 = vector.broadcast %79 : vector<8x1xf32> to vector<8x512xf32>
    %81 = vector.broadcast %64 : vector<1x512xf32> to vector<8x512xf32>
    %82 = arith.mulf %80, %81 : vector<8x512xf32>
    %83 = arith.mulf %63, %82 : vector<8x512xf32>
    %84 = vector.broadcast %69 : vector<8x1xf32> to vector<8x512xf32>
    %85 = arith.mulf %84, %82 : vector<8x512xf32>
    %86 = vector.broadcast %65 : vector<1x512xf32> to vector<8x512xf32>
    %87 = arith.subf %86, %85 : vector<8x512xf32>
    %88 = arith.addf %83, %87 : vector<8x512xf32>
    %89 = arith.addf %88, %11 : vector<8x512xf32>
    %cst_35 = arith.constant 5.000000e-01 : f32
    %90 = vector.broadcast %cst_35 : f32 to vector<8x512xf32>
    %91 = arith.mulf %90, %89 : vector<8x512xf32>
    %92 = arith.mulf %89, %89 : vector<8x512xf32>
    %93 = arith.mulf %92, %89 : vector<8x512xf32>
    %cst_36 = arith.constant 4.471500e-02 : f32
    %94 = vector.broadcast %cst_36 : f32 to vector<8x512xf32>
    %95 = arith.mulf %94, %93 : vector<8x512xf32>
    %96 = arith.addf %89, %95 : vector<8x512xf32>
    %cst_37 = arith.constant 0.797884583 : f32
    %97 = vector.broadcast %cst_37 : f32 to vector<8x512xf32>
    %98 = arith.mulf %97, %96 : vector<8x512xf32>
    %99 = math.tanh %98 : vector<8x512xf32>
    %cst_38 = arith.constant 1.000000e+00 : f32
    %100 = vector.broadcast %cst_38 : f32 to vector<8x512xf32>
    %101 = arith.addf %100, %99 : vector<8x512xf32>
    %102 = arith.mulf %91, %101 : vector<8x512xf32>
    %103 = arith.truncf %102 : vector<8x512xf32> to vector<8x512xbf16>
    %c2_39 = arith.constant 2 : index
    %c0_40 = arith.constant 0 : index
    %c0_41 = arith.constant 0 : index
    %104 = vector.load %arg3[%c2_39, %c0_40, %c0_41] : memref<6x512x512xbf16, #tpu.memory_space<vmem>>, vector<1x512x512xbf16>
    %105 = vector.shape_cast %104 : vector<1x512x512xbf16> to vector<512x512xbf16>
    %cst_42 = arith.constant dense<0.000000e+00> : vector<8x512xf32>
    %106 = tpu.matmul %103, %105, %cst_42 {dimension_numbers = #tpu.dot_dimension_numbers<[1], [0], [0], [1], [0, 0, 1, 1], [], []>} : vector<8x512xbf16>, vector<512x512xbf16>, vector<8x512xf32> -> vector<8x512xf32>
    %c7 = arith.constant 7 : index
    %c0_43 = arith.constant 0 : index
    %107 = vector.load %arg6[%c7, %c0_43] : memref<32x512xf32, #tpu.memory_space<vmem>>, vector<1x512xf32>
    %108 = vector.broadcast %107 : vector<1x512xf32> to vector<8x512xf32>
    %109 = arith.addf %106, %108 : vector<8x512xf32>
    %c8 = arith.constant 8 : index
    %c0_44 = arith.constant 0 : index
    %110 = vector.load %arg6[%c8, %c0_44] : memref<32x512xf32, #tpu.memory_space<vmem>>, vector<1x512xf32>
    %c9 = arith.constant 9 : index
    %c0_45 = arith.constant 0 : index
    %111 = vector.load %arg6[%c9, %c0_45] : memref<32x512xf32, #tpu.memory_space<vmem>>, vector<1x512xf32>
    %cst_46 = arith.constant dense<0.000000e+00> : vector<8xf32>
    %112 = vector.multi_reduction <add>, %109, %cst_46 [1] : vector<8x512xf32> to vector<8xf32>
    %113 = vector.shape_cast %112 : vector<8xf32> to vector<8x1xf32>
    %cst_47 = arith.constant 5.120000e+02 : f32
    %114 = vector.broadcast %cst_47 : f32 to vector<8x1xf32>
    %115 = arith.divf %113, %114 : vector<8x1xf32>
    %116 = arith.mulf %109, %109 : vector<8x512xf32>
    %cst_48 = arith.constant dense<0.000000e+00> : vector<8xf32>
    %117 = vector.multi_reduction <add>, %116, %cst_48 [1] : vector<8x512xf32> to vector<8xf32>
    %118 = vector.shape_cast %117 : vector<8xf32> to vector<8x1xf32>
    %cst_49 = arith.constant 5.120000e+02 : f32
    %119 = vector.broadcast %cst_49 : f32 to vector<8x1xf32>
    %120 = arith.divf %118, %119 : vector<8x1xf32>
    %121 = arith.mulf %115, %115 : vector<8x1xf32>
    %122 = arith.subf %120, %121 : vector<8x1xf32>
    %cst_50 = arith.constant 9.99999974E-6 : f32
    %123 = vector.broadcast %cst_50 : f32 to vector<8x1xf32>
    %124 = arith.addf %122, %123 : vector<8x1xf32>
    %125 = math.rsqrt %124 : vector<8x1xf32>
    %126 = vector.broadcast %125 : vector<8x1xf32> to vector<8x512xf32>
    %127 = vector.broadcast %110 : vector<1x512xf32> to vector<8x512xf32>
    %128 = arith.mulf %126, %127 : vector<8x512xf32>
    %129 = arith.mulf %109, %128 : vector<8x512xf32>
    %130 = vector.broadcast %115 : vector<8x1xf32> to vector<8x512xf32>
    %131 = arith.mulf %130, %128 : vector<8x512xf32>
    %132 = vector.broadcast %111 : vector<1x512xf32> to vector<8x512xf32>
    %133 = arith.subf %132, %131 : vector<8x512xf32>
    %134 = arith.addf %129, %133 : vector<8x512xf32>
    %cst_51 = arith.constant 5.000000e-01 : f32
    %135 = vector.broadcast %cst_51 : f32 to vector<8x512xf32>
    %136 = arith.mulf %135, %134 : vector<8x512xf32>
    %137 = arith.mulf %134, %134 : vector<8x512xf32>
    %138 = arith.mulf %137, %134 : vector<8x512xf32>
    %cst_52 = arith.constant 4.471500e-02 : f32
    %139 = vector.broadcast %cst_52 : f32 to vector<8x512xf32>
    %140 = arith.mulf %139, %138 : vector<8x512xf32>
    %141 = arith.addf %134, %140 : vector<8x512xf32>
    %cst_53 = arith.constant 0.797884583 : f32
    %142 = vector.broadcast %cst_53 : f32 to vector<8x512xf32>
    %143 = arith.mulf %142, %141 : vector<8x512xf32>
    %144 = math.tanh %143 : vector<8x512xf32>
    %cst_54 = arith.constant 1.000000e+00 : f32
    %145 = vector.broadcast %cst_54 : f32 to vector<8x512xf32>
    %146 = arith.addf %145, %144 : vector<8x512xf32>
    %147 = arith.mulf %136, %146 : vector<8x512xf32>
    %148 = arith.truncf %147 : vector<8x512xf32> to vector<8x512xbf16>
    %c3_55 = arith.constant 3 : index
    %c0_56 = arith.constant 0 : index
    %c0_57 = arith.constant 0 : index
    %149 = vector.load %arg3[%c3_55, %c0_56, %c0_57] : memref<6x512x512xbf16, #tpu.memory_space<vmem>>, vector<1x512x512xbf16>
    %150 = vector.shape_cast %149 : vector<1x512x512xbf16> to vector<512x512xbf16>
    %cst_58 = arith.constant dense<0.000000e+00> : vector<8x512xf32>
    %151 = tpu.matmul %148, %150, %cst_58 {dimension_numbers = #tpu.dot_dimension_numbers<[1], [0], [0], [1], [0, 0, 1, 1], [], []>} : vector<8x512xbf16>, vector<512x512xbf16>, vector<8x512xf32> -> vector<8x512xf32>
    %c10 = arith.constant 10 : index
    %c0_59 = arith.constant 0 : index
    %152 = vector.load %arg6[%c10, %c0_59] : memref<32x512xf32, #tpu.memory_space<vmem>>, vector<1x512xf32>
    %153 = vector.broadcast %152 : vector<1x512xf32> to vector<8x512xf32>
    %154 = arith.addf %151, %153 : vector<8x512xf32>
    %c11 = arith.constant 11 : index
    %c0_60 = arith.constant 0 : index
    %155 = vector.load %arg6[%c11, %c0_60] : memref<32x512xf32, #tpu.memory_space<vmem>>, vector<1x512xf32>
    %c12 = arith.constant 12 : index
    %c0_61 = arith.constant 0 : index
    %156 = vector.load %arg6[%c12, %c0_61] : memref<32x512xf32, #tpu.memory_space<vmem>>, vector<1x512xf32>
    %cst_62 = arith.constant dense<0.000000e+00> : vector<8xf32>
    %157 = vector.multi_reduction <add>, %154, %cst_62 [1] : vector<8x512xf32> to vector<8xf32>
    %158 = vector.shape_cast %157 : vector<8xf32> to vector<8x1xf32>
    %cst_63 = arith.constant 5.120000e+02 : f32
    %159 = vector.broadcast %cst_63 : f32 to vector<8x1xf32>
    %160 = arith.divf %158, %159 : vector<8x1xf32>
    %161 = arith.mulf %154, %154 : vector<8x512xf32>
    %cst_64 = arith.constant dense<0.000000e+00> : vector<8xf32>
    %162 = vector.multi_reduction <add>, %161, %cst_64 [1] : vector<8x512xf32> to vector<8xf32>
    %163 = vector.shape_cast %162 : vector<8xf32> to vector<8x1xf32>
    %cst_65 = arith.constant 5.120000e+02 : f32
    %164 = vector.broadcast %cst_65 : f32 to vector<8x1xf32>
    %165 = arith.divf %163, %164 : vector<8x1xf32>
    %166 = arith.mulf %160, %160 : vector<8x1xf32>
    %167 = arith.subf %165, %166 : vector<8x1xf32>
    %cst_66 = arith.constant 9.99999974E-6 : f32
    %168 = vector.broadcast %cst_66 : f32 to vector<8x1xf32>
    %169 = arith.addf %167, %168 : vector<8x1xf32>
    %170 = math.rsqrt %169 : vector<8x1xf32>
    %171 = vector.broadcast %170 : vector<8x1xf32> to vector<8x512xf32>
    %172 = vector.broadcast %155 : vector<1x512xf32> to vector<8x512xf32>
    %173 = arith.mulf %171, %172 : vector<8x512xf32>
    %174 = arith.mulf %154, %173 : vector<8x512xf32>
    %175 = vector.broadcast %160 : vector<8x1xf32> to vector<8x512xf32>
    %176 = arith.mulf %175, %173 : vector<8x512xf32>
    %177 = vector.broadcast %156 : vector<1x512xf32> to vector<8x512xf32>
    %178 = arith.subf %177, %176 : vector<8x512xf32>
    %179 = arith.addf %174, %178 : vector<8x512xf32>
    %180 = arith.addf %179, %102 : vector<8x512xf32>
    %cst_67 = arith.constant 5.000000e-01 : f32
    %181 = vector.broadcast %cst_67 : f32 to vector<8x512xf32>
    %182 = arith.mulf %181, %180 : vector<8x512xf32>
    %183 = arith.mulf %180, %180 : vector<8x512xf32>
    %184 = arith.mulf %183, %180 : vector<8x512xf32>
    %cst_68 = arith.constant 4.471500e-02 : f32
    %185 = vector.broadcast %cst_68 : f32 to vector<8x512xf32>
    %186 = arith.mulf %185, %184 : vector<8x512xf32>
    %187 = arith.addf %180, %186 : vector<8x512xf32>
    %cst_69 = arith.constant 0.797884583 : f32
    %188 = vector.broadcast %cst_69 : f32 to vector<8x512xf32>
    %189 = arith.mulf %188, %187 : vector<8x512xf32>
    %190 = math.tanh %189 : vector<8x512xf32>
    %cst_70 = arith.constant 1.000000e+00 : f32
    %191 = vector.broadcast %cst_70 : f32 to vector<8x512xf32>
    %192 = arith.addf %191, %190 : vector<8x512xf32>
    %193 = arith.mulf %182, %192 : vector<8x512xf32>
    %194 = arith.truncf %193 : vector<8x512xf32> to vector<8x512xbf16>
    %c4_71 = arith.constant 4 : index
    %c0_72 = arith.constant 0 : index
    %c0_73 = arith.constant 0 : index
    %195 = vector.load %arg3[%c4_71, %c0_72, %c0_73] : memref<6x512x512xbf16, #tpu.memory_space<vmem>>, vector<1x512x512xbf16>
    %196 = vector.shape_cast %195 : vector<1x512x512xbf16> to vector<512x512xbf16>
    %cst_74 = arith.constant dense<0.000000e+00> : vector<8x512xf32>
    %197 = tpu.matmul %194, %196, %cst_74 {dimension_numbers = #tpu.dot_dimension_numbers<[1], [0], [0], [1], [0, 0, 1, 1], [], []>} : vector<8x512xbf16>, vector<512x512xbf16>, vector<8x512xf32> -> vector<8x512xf32>
    %c13 = arith.constant 13 : index
    %c0_75 = arith.constant 0 : index
    %198 = vector.load %arg6[%c13, %c0_75] : memref<32x512xf32, #tpu.memory_space<vmem>>, vector<1x512xf32>
    %199 = vector.broadcast %198 : vector<1x512xf32> to vector<8x512xf32>
    %200 = arith.addf %197, %199 : vector<8x512xf32>
    %c14 = arith.constant 14 : index
    %c0_76 = arith.constant 0 : index
    %201 = vector.load %arg6[%c14, %c0_76] : memref<32x512xf32, #tpu.memory_space<vmem>>, vector<1x512xf32>
    %c15 = arith.constant 15 : index
    %c0_77 = arith.constant 0 : index
    %202 = vector.load %arg6[%c15, %c0_77] : memref<32x512xf32, #tpu.memory_space<vmem>>, vector<1x512xf32>
    %cst_78 = arith.constant dense<0.000000e+00> : vector<8xf32>
    %203 = vector.multi_reduction <add>, %200, %cst_78 [1] : vector<8x512xf32> to vector<8xf32>
    %204 = vector.shape_cast %203 : vector<8xf32> to vector<8x1xf32>
    %cst_79 = arith.constant 5.120000e+02 : f32
    %205 = vector.broadcast %cst_79 : f32 to vector<8x1xf32>
    %206 = arith.divf %204, %205 : vector<8x1xf32>
    %207 = arith.mulf %200, %200 : vector<8x512xf32>
    %cst_80 = arith.constant dense<0.000000e+00> : vector<8xf32>
    %208 = vector.multi_reduction <add>, %207, %cst_80 [1] : vector<8x512xf32> to vector<8xf32>
    %209 = vector.shape_cast %208 : vector<8xf32> to vector<8x1xf32>
    %cst_81 = arith.constant 5.120000e+02 : f32
    %210 = vector.broadcast %cst_81 : f32 to vector<8x1xf32>
    %211 = arith.divf %209, %210 : vector<8x1xf32>
    %212 = arith.mulf %206, %206 : vector<8x1xf32>
    %213 = arith.subf %211, %212 : vector<8x1xf32>
    %cst_82 = arith.constant 9.99999974E-6 : f32
    %214 = vector.broadcast %cst_82 : f32 to vector<8x1xf32>
    %215 = arith.addf %213, %214 : vector<8x1xf32>
    %216 = math.rsqrt %215 : vector<8x1xf32>
    %217 = vector.broadcast %216 : vector<8x1xf32> to vector<8x512xf32>
    %218 = vector.broadcast %201 : vector<1x512xf32> to vector<8x512xf32>
    %219 = arith.mulf %217, %218 : vector<8x512xf32>
    %220 = arith.mulf %200, %219 : vector<8x512xf32>
    %221 = vector.broadcast %206 : vector<8x1xf32> to vector<8x512xf32>
    %222 = arith.mulf %221, %219 : vector<8x512xf32>
    %223 = vector.broadcast %202 : vector<1x512xf32> to vector<8x512xf32>
    %224 = arith.subf %223, %222 : vector<8x512xf32>
    %225 = arith.addf %220, %224 : vector<8x512xf32>
    %cst_83 = arith.constant 5.000000e-01 : f32
    %226 = vector.broadcast %cst_83 : f32 to vector<8x512xf32>
    %227 = arith.mulf %226, %225 : vector<8x512xf32>
    %228 = arith.mulf %225, %225 : vector<8x512xf32>
    %229 = arith.mulf %228, %225 : vector<8x512xf32>
    %cst_84 = arith.constant 4.471500e-02 : f32
    %230 = vector.broadcast %cst_84 : f32 to vector<8x512xf32>
    %231 = arith.mulf %230, %229 : vector<8x512xf32>
    %232 = arith.addf %225, %231 : vector<8x512xf32>
    %cst_85 = arith.constant 0.797884583 : f32
    %233 = vector.broadcast %cst_85 : f32 to vector<8x512xf32>
    %234 = arith.mulf %233, %232 : vector<8x512xf32>
    %235 = math.tanh %234 : vector<8x512xf32>
    %cst_86 = arith.constant 1.000000e+00 : f32
    %236 = vector.broadcast %cst_86 : f32 to vector<8x512xf32>
    %237 = arith.addf %236, %235 : vector<8x512xf32>
    %238 = arith.mulf %227, %237 : vector<8x512xf32>
    %239 = arith.truncf %238 : vector<8x512xf32> to vector<8x512xbf16>
    %c5_87 = arith.constant 5 : index
    %c0_88 = arith.constant 0 : index
    %c0_89 = arith.constant 0 : index
    %240 = vector.load %arg3[%c5_87, %c0_88, %c0_89] : memref<6x512x512xbf16, #tpu.memory_space<vmem>>, vector<1x512x512xbf16>
    %241 = vector.shape_cast %240 : vector<1x512x512xbf16> to vector<512x512xbf16>
    %cst_90 = arith.constant dense<0.000000e+00> : vector<8x512xf32>
    %242 = tpu.matmul %239, %241, %cst_90 {dimension_numbers = #tpu.dot_dimension_numbers<[1], [0], [0], [1], [0, 0, 1, 1], [], []>} : vector<8x512xbf16>, vector<512x512xbf16>, vector<8x512xf32> -> vector<8x512xf32>
    %c16 = arith.constant 16 : index
    %c0_91 = arith.constant 0 : index
    %243 = vector.load %arg6[%c16, %c0_91] : memref<32x512xf32, #tpu.memory_space<vmem>>, vector<1x512xf32>
    %244 = vector.broadcast %243 : vector<1x512xf32> to vector<8x512xf32>
    %245 = arith.addf %242, %244 : vector<8x512xf32>
    %c17 = arith.constant 17 : index
    %c0_92 = arith.constant 0 : index
    %246 = vector.load %arg6[%c17, %c0_92] : memref<32x512xf32, #tpu.memory_space<vmem>>, vector<1x512xf32>
    %c18 = arith.constant 18 : index
    %c0_93 = arith.constant 0 : index
    %247 = vector.load %arg6[%c18, %c0_93] : memref<32x512xf32, #tpu.memory_space<vmem>>, vector<1x512xf32>
    %cst_94 = arith.constant dense<0.000000e+00> : vector<8xf32>
    %248 = vector.multi_reduction <add>, %245, %cst_94 [1] : vector<8x512xf32> to vector<8xf32>
    %249 = vector.shape_cast %248 : vector<8xf32> to vector<8x1xf32>
    %cst_95 = arith.constant 5.120000e+02 : f32
    %250 = vector.broadcast %cst_95 : f32 to vector<8x1xf32>
    %251 = arith.divf %249, %250 : vector<8x1xf32>
    %252 = arith.mulf %245, %245 : vector<8x512xf32>
    %cst_96 = arith.constant dense<0.000000e+00> : vector<8xf32>
    %253 = vector.multi_reduction <add>, %252, %cst_96 [1] : vector<8x512xf32> to vector<8xf32>
    %254 = vector.shape_cast %253 : vector<8xf32> to vector<8x1xf32>
    %cst_97 = arith.constant 5.120000e+02 : f32
    %255 = vector.broadcast %cst_97 : f32 to vector<8x1xf32>
    %256 = arith.divf %254, %255 : vector<8x1xf32>
    %257 = arith.mulf %251, %251 : vector<8x1xf32>
    %258 = arith.subf %256, %257 : vector<8x1xf32>
    %cst_98 = arith.constant 9.99999974E-6 : f32
    %259 = vector.broadcast %cst_98 : f32 to vector<8x1xf32>
    %260 = arith.addf %258, %259 : vector<8x1xf32>
    %261 = math.rsqrt %260 : vector<8x1xf32>
    %262 = vector.broadcast %261 : vector<8x1xf32> to vector<8x512xf32>
    %263 = vector.broadcast %246 : vector<1x512xf32> to vector<8x512xf32>
    %264 = arith.mulf %262, %263 : vector<8x512xf32>
    %265 = arith.mulf %245, %264 : vector<8x512xf32>
    %266 = vector.broadcast %251 : vector<8x1xf32> to vector<8x512xf32>
    %267 = arith.mulf %266, %264 : vector<8x512xf32>
    %268 = vector.broadcast %247 : vector<1x512xf32> to vector<8x512xf32>
    %269 = arith.subf %268, %267 : vector<8x512xf32>
    %270 = arith.addf %265, %269 : vector<8x512xf32>
    %271 = arith.addf %270, %193 : vector<8x512xf32>
    %cst_99 = arith.constant 5.000000e-01 : f32
    %272 = vector.broadcast %cst_99 : f32 to vector<8x512xf32>
    %273 = arith.mulf %272, %271 : vector<8x512xf32>
    %274 = arith.mulf %271, %271 : vector<8x512xf32>
    %275 = arith.mulf %274, %271 : vector<8x512xf32>
    %cst_100 = arith.constant 4.471500e-02 : f32
    %276 = vector.broadcast %cst_100 : f32 to vector<8x512xf32>
    %277 = arith.mulf %276, %275 : vector<8x512xf32>
    %278 = arith.addf %271, %277 : vector<8x512xf32>
    %cst_101 = arith.constant 0.797884583 : f32
    %279 = vector.broadcast %cst_101 : f32 to vector<8x512xf32>
    %280 = arith.mulf %279, %278 : vector<8x512xf32>
    %281 = math.tanh %280 : vector<8x512xf32>
    %cst_102 = arith.constant 1.000000e+00 : f32
    %282 = vector.broadcast %cst_102 : f32 to vector<8x512xf32>
    %283 = arith.addf %282, %281 : vector<8x512xf32>
    %284 = arith.mulf %273, %283 : vector<8x512xf32>
    %285 = arith.truncf %284 : vector<8x512xf32> to vector<8x512xbf16>
    %c0_103 = arith.constant 0 : index
    %c0_104 = arith.constant 0 : index
    %286 = vector.load %arg4[%c0_103, %c0_104] : memref<512x256xbf16, #tpu.memory_space<vmem>>, vector<512x256xbf16>
    %cst_105 = arith.constant dense<0.000000e+00> : vector<8x256xf32>
    %287 = tpu.matmul %285, %286, %cst_105 {dimension_numbers = #tpu.dot_dimension_numbers<[1], [0], [0], [1], [0, 0, 1, 1], [], []>} : vector<8x512xbf16>, vector<512x256xbf16>, vector<8x256xf32> -> vector<8x256xf32>
    %c19 = arith.constant 19 : index
    %c0_106 = arith.constant 0 : index
    %288 = vector.load %arg6[%c19, %c0_106] : memref<32x512xf32, #tpu.memory_space<vmem>>, vector<1x256xf32>
    %289 = vector.broadcast %288 : vector<1x256xf32> to vector<8x256xf32>
    %290 = arith.addf %287, %289 : vector<8x256xf32>
    %c20 = arith.constant 20 : index
    %c0_107 = arith.constant 0 : index
    %291 = vector.load %arg6[%c20, %c0_107] : memref<32x512xf32, #tpu.memory_space<vmem>>, vector<1x256xf32>
    %c21 = arith.constant 21 : index
    %c0_108 = arith.constant 0 : index
    %292 = vector.load %arg6[%c21, %c0_108] : memref<32x512xf32, #tpu.memory_space<vmem>>, vector<1x256xf32>
    %cst_109 = arith.constant dense<0.000000e+00> : vector<8xf32>
    %293 = vector.multi_reduction <add>, %290, %cst_109 [1] : vector<8x256xf32> to vector<8xf32>
    %294 = vector.shape_cast %293 : vector<8xf32> to vector<8x1xf32>
    %cst_110 = arith.constant 2.560000e+02 : f32
    %295 = vector.broadcast %cst_110 : f32 to vector<8x1xf32>
    %296 = arith.divf %294, %295 : vector<8x1xf32>
    %297 = arith.mulf %290, %290 : vector<8x256xf32>
    %cst_111 = arith.constant dense<0.000000e+00> : vector<8xf32>
    %298 = vector.multi_reduction <add>, %297, %cst_111 [1] : vector<8x256xf32> to vector<8xf32>
    %299 = vector.shape_cast %298 : vector<8xf32> to vector<8x1xf32>
    %cst_112 = arith.constant 2.560000e+02 : f32
    %300 = vector.broadcast %cst_112 : f32 to vector<8x1xf32>
    %301 = arith.divf %299, %300 : vector<8x1xf32>
    %302 = arith.mulf %296, %296 : vector<8x1xf32>
    %303 = arith.subf %301, %302 : vector<8x1xf32>
    %cst_113 = arith.constant 9.99999974E-6 : f32
    %304 = vector.broadcast %cst_113 : f32 to vector<8x1xf32>
    %305 = arith.addf %303, %304 : vector<8x1xf32>
    %306 = math.rsqrt %305 : vector<8x1xf32>
    %307 = vector.broadcast %306 : vector<8x1xf32> to vector<8x256xf32>
    %308 = vector.broadcast %291 : vector<1x256xf32> to vector<8x256xf32>
    %309 = arith.mulf %307, %308 : vector<8x256xf32>
    %310 = arith.mulf %290, %309 : vector<8x256xf32>
    %311 = vector.broadcast %296 : vector<8x1xf32> to vector<8x256xf32>
    %312 = arith.mulf %311, %309 : vector<8x256xf32>
    %313 = vector.broadcast %292 : vector<1x256xf32> to vector<8x256xf32>
    %314 = arith.subf %313, %312 : vector<8x256xf32>
    %315 = arith.addf %310, %314 : vector<8x256xf32>
    %cst_114 = arith.constant 0.000000e+00 : f32
    %316 = vector.broadcast %cst_114 : f32 to vector<8x256xf32>
    %317 = arith.cmpf ogt, %315, %316 : vector<8x256xf32>
    %318 = math.exp %315 : vector<8x256xf32>
    %cst_115 = arith.constant 1.000000e+00 : f32
    %319 = vector.broadcast %cst_115 : f32 to vector<8x256xf32>
    %320 = arith.subf %318, %319 : vector<8x256xf32>
    %cst_116 = arith.constant 1.67326319 : f32
    %321 = vector.broadcast %cst_116 : f32 to vector<8x256xf32>
    %322 = arith.mulf %321, %320 : vector<8x256xf32>
    %323 = arith.select %317, %315, %322 : vector<8x256xi1>, vector<8x256xf32>
    %cst_117 = arith.constant 1.05070102 : f32
    %324 = vector.broadcast %cst_117 : f32 to vector<8x256xf32>
    %325 = arith.mulf %324, %323 : vector<8x256xf32>
    %326 = arith.truncf %325 : vector<8x256xf32> to vector<8x256xbf16>
    %c0_118 = arith.constant 0 : index
    %c0_119 = arith.constant 0 : index
    %327 = vector.load %arg5[%c0_118, %c0_119] : memref<256x128xbf16, #tpu.memory_space<vmem>>, vector<256x128xbf16>
    %cst_120 = arith.constant dense<0.000000e+00> : vector<8x128xf32>
    %328 = tpu.matmul %326, %327, %cst_120 {dimension_numbers = #tpu.dot_dimension_numbers<[1], [0], [0], [1], [0, 0, 1, 1], [], []>} : vector<8x256xbf16>, vector<256x128xbf16>, vector<8x128xf32> -> vector<8x128xf32>
    %c22 = arith.constant 22 : index
    %c0_121 = arith.constant 0 : index
    %329 = vector.load %arg6[%c22, %c0_121] : memref<32x512xf32, #tpu.memory_space<vmem>>, vector<1x128xf32>
    %330 = vector.broadcast %329 : vector<1x128xf32> to vector<8x128xf32>
    %331 = arith.addf %328, %330 : vector<8x128xf32>
    %c23 = arith.constant 23 : index
    %c0_122 = arith.constant 0 : index
    %332 = vector.load %arg6[%c23, %c0_122] : memref<32x512xf32, #tpu.memory_space<vmem>>, vector<1x128xf32>
    %c24 = arith.constant 24 : index
    %c0_123 = arith.constant 0 : index
    %333 = vector.load %arg6[%c24, %c0_123] : memref<32x512xf32, #tpu.memory_space<vmem>>, vector<1x128xf32>
    %cst_124 = arith.constant dense<0.000000e+00> : vector<8xf32>
    %334 = vector.multi_reduction <add>, %331, %cst_124 [1] : vector<8x128xf32> to vector<8xf32>
    %335 = vector.shape_cast %334 : vector<8xf32> to vector<8x1xf32>
    %cst_125 = arith.constant 1.280000e+02 : f32
    %336 = vector.broadcast %cst_125 : f32 to vector<8x1xf32>
    %337 = arith.divf %335, %336 : vector<8x1xf32>
    %338 = arith.mulf %331, %331 : vector<8x128xf32>
    %cst_126 = arith.constant dense<0.000000e+00> : vector<8xf32>
    %339 = vector.multi_reduction <add>, %338, %cst_126 [1] : vector<8x128xf32> to vector<8xf32>
    %340 = vector.shape_cast %339 : vector<8xf32> to vector<8x1xf32>
    %cst_127 = arith.constant 1.280000e+02 : f32
    %341 = vector.broadcast %cst_127 : f32 to vector<8x1xf32>
    %342 = arith.divf %340, %341 : vector<8x1xf32>
    %343 = arith.mulf %337, %337 : vector<8x1xf32>
    %344 = arith.subf %342, %343 : vector<8x1xf32>
    %cst_128 = arith.constant 9.99999974E-6 : f32
    %345 = vector.broadcast %cst_128 : f32 to vector<8x1xf32>
    %346 = arith.addf %344, %345 : vector<8x1xf32>
    %347 = math.rsqrt %346 : vector<8x1xf32>
    %348 = vector.broadcast %347 : vector<8x1xf32> to vector<8x128xf32>
    %349 = vector.broadcast %332 : vector<1x128xf32> to vector<8x128xf32>
    %350 = arith.mulf %348, %349 : vector<8x128xf32>
    %351 = arith.mulf %331, %350 : vector<8x128xf32>
    %352 = vector.broadcast %337 : vector<8x1xf32> to vector<8x128xf32>
    %353 = arith.mulf %352, %350 : vector<8x128xf32>
    %354 = vector.broadcast %333 : vector<1x128xf32> to vector<8x128xf32>
    %355 = arith.subf %354, %353 : vector<8x128xf32>
    %356 = arith.addf %351, %355 : vector<8x128xf32>
    %cst_129 = arith.constant 0.000000e+00 : f32
    %357 = vector.broadcast %cst_129 : f32 to vector<8x128xf32>
    %358 = arith.cmpf ogt, %356, %357 : vector<8x128xf32>
    %359 = math.exp %356 : vector<8x128xf32>
    %cst_130 = arith.constant 1.000000e+00 : f32
    %360 = vector.broadcast %cst_130 : f32 to vector<8x128xf32>
    %361 = arith.subf %359, %360 : vector<8x128xf32>
    %cst_131 = arith.constant 1.67326319 : f32
    %362 = vector.broadcast %cst_131 : f32 to vector<8x128xf32>
    %363 = arith.mulf %362, %361 : vector<8x128xf32>
    %364 = arith.select %358, %356, %363 : vector<8x128xi1>, vector<8x128xf32>
    %cst_132 = arith.constant 1.05070102 : f32
    %365 = vector.broadcast %cst_132 : f32 to vector<8x128xf32>
    %366 = arith.mulf %365, %364 : vector<8x128xf32>
    %c25 = arith.constant 25 : index
    %c0_133 = arith.constant 0 : index
    %367 = vector.load %arg6[%c25, %c0_133] : memref<32x512xf32, #tpu.memory_space<vmem>>, vector<1x128xf32>
    %c26 = arith.constant 26 : index
    %c0_134 = arith.constant 0 : index
    %368 = vector.load %arg6[%c26, %c0_134] : memref<32x512xf32, #tpu.memory_space<vmem>>, vector<1x1xf32>
    %369 = vector.broadcast %367 : vector<1x128xf32> to vector<8x128xf32>
    %370 = arith.mulf %366, %369 : vector<8x128xf32>
    %cst_135 = arith.constant dense<0.000000e+00> : vector<8xf32>
    %371 = vector.multi_reduction <add>, %370, %cst_135 [1] : vector<8x128xf32> to vector<8xf32>
    %372 = vector.shape_cast %371 : vector<8xf32> to vector<8x1xf32>
    %373 = vector.broadcast %368 : vector<1x1xf32> to vector<8x1xf32>
    %374 = arith.addf %372, %373 : vector<8x1xf32>
    %c0_136 = arith.constant 0 : index
    %c0_137 = arith.constant 0 : index
    %375 = vector.load %arg7[%c0_136, %c0_137] : memref<8x1xf32, #tpu.memory_space<vmem>>, vector<8x1xf32>
    tpu.vector_store %arg7[%c0_136, %c0_137], %374 {strides = array<i32>} : memref<8x1xf32, #tpu.memory_space<vmem>>, vector<8x1xf32>,
    return
  }
  func.func @transform_0(%arg0: i32) -> (i32, i32) {
    %c0_i32 = arith.constant 0 : i32
    %c0_i32_0 = arith.constant 0 : i32
    return %arg0, %c0_i32 : i32, i32
  }
  func.func @transform_1(%arg0: i32) -> (i32, i32) {
    %c0_i32 = arith.constant 0 : i32
    %c0_i32_0 = arith.constant 0 : i32
    %c0_i32_1 = arith.constant 0 : i32
    return %c0_i32, %c0_i32_0 : i32, i32
  }
  func.func @transform_2(%arg0: i32) -> (i32, i32, i32) {
    %c0_i32 = arith.constant 0 : i32
    %c0_i32_0 = arith.constant 0 : i32
    %c0_i32_1 = arith.constant 0 : i32
    %c0_i32_2 = arith.constant 0 : i32
    return %c0_i32, %c0_i32_0, %c0_i32_1 : i32, i32, i32
  }
  func.func @transform_3(%arg0: i32) -> (i32, i32) {
    %c0_i32 = arith.constant 0 : i32
    %c0_i32_0 = arith.constant 0 : i32
    %c0_i32_1 = arith.constant 0 : i32
    return %c0_i32, %c0_i32_0 : i32, i32
  }
  func.func @transform_4(%arg0: i32) -> (i32, i32) {
    %c0_i32 = arith.constant 0 : i32
    %c0_i32_0 = arith.constant 0 : i32
    %c0_i32_1 = arith.constant 0 : i32
    return %c0_i32, %c0_i32_0 : i32, i32
  }
  func.func @transform_5(%arg0: i32) -> (i32, i32) {
    %c0_i32 = arith.constant 0 : i32
    %c0_i32_0 = arith.constant 0 : i32
    %c0_i32_1 = arith.constant 0 : i32
    return %c0_i32, %c0_i32_0 : i32, i32
  }
  func.func @transform_6(%arg0: i32) -> (i32, i32) {
    %c0_i32 = arith.constant 0 : i32
    %c0_i32_0 = arith.constant 0 : i32
    return %arg0, %c0_i32 : i32, i32
  }
}

</mosaic_0001>

<llo_original>
// kernel: energy_predictor.1
$region0: #{energy_predictor.1}
  #allocation0 [shape = 'u32[]', space=smem, size = 0x4, offset = 0x4, fixed_abs, tag = 'smem constant byte address 0x4 - core index']
  #allocation1 [shape = 'u32[144,128]{1,0:T(1,128)}', space=vmem, size = 0x12000, scoped, tag = 'internal scratch']
  %s0 = inlined_call_operand.hbm [shape: f32[8,32], index: 0, kind: input, shape index: {}]
  %s1 = inlined_call_operand.hbm [shape: bf16[32,512], index: 1, kind: input, shape index: {}]
  %s2 = inlined_call_operand.hbm [shape: bf16[6,512,512], index: 2, kind: input, shape index: {}]
  %s3 = inlined_call_operand.hbm [shape: bf16[512,256], index: 3, kind: input, shape index: {}]
  %s4 = inlined_call_operand.hbm [shape: bf16[256,128], index: 4, kind: input, shape index: {}]
  %s5 = inlined_call_operand.hbm [shape: f32[32,512], index: 5, kind: input, shape index: {}]
  %s6 = inlined_call_operand.vmem [shape: f32[8,1], index: 6, kind: output, shape index: {}]
  %s7 = sld [smem:[#allocation0]]
  $region58: #{energy_predictor.1} parent=0
    _
  %s9 = ssub.s32 1, %s7
  %s10 = scalar_select 0, %s9, %s7
  $region1: #{energy_predictor.1} parent=0
    #allocation2 [shape = 'u8[4096]{0}', space=vmem, size = 0x1000, scoped, tag = 'input window, operand 0, single buffered']
    #allocation3 [shape = 's32[1]{0}', space=sflag, size = 0x4, scoped, tag = 'scoped memory for energy_predictor.1']
    #allocation4 [shape = 'u8[32768]{0}', space=vmem, size = 0x8000, scoped, tag = 'input window, operand 1, single buffered']
    #allocation5 [shape = 's32[1]{0}', space=sflag, size = 0x4, scoped, tag = 'scoped memory for energy_predictor.1']
    #allocation6 [shape = 'u8[3145728]{0}', space=vmem, size = 0x300000, scoped, tag = 'input window, operand 2, single buffered']
    #allocation7 [shape = 'u8[262144]{0}', space=vmem, size = 0x40000, scoped, tag = 'input window, operand 3, single buffered']
    #allocation8 [shape = 's32[1]{0}', space=sflag, size = 0x4, scoped, tag = 'scoped memory for energy_predictor.1']
    #allocation9 [shape = 'u8[65536]{0}', space=vmem, size = 0x10000, scoped, tag = 'input window, operand 4, single buffered']
    #allocation10 [shape = 'u8[65536]{0}', space=vmem, size = 0x10000, scoped, tag = 'input window, operand 5, single buffered']
    #allocation11 [shape = 's32[1]{0}', space=sflag, size = 0x4, scoped, tag = 'scoped memory for energy_predictor.1']
    %11 = vsyncpa [#allocation3], 0
    %12 = vsyncpa [#allocation5], 0
    %13 = vsyncpa [#allocation8], 0
    %14 = vsyncpa [#allocation11], 0
    // Predicated region
    $region2: #{energy_predictor.1} parent=1 // pred_check
      _
    $region3: #{energy_predictor.1} parent=1 // pred_check_branch
      %16 = sbr.rel (0) target = $region5
    $region4: #{energy_predictor.1} parent=1 // pred_region
      %s18 = ssub.s32 128, 128
      %19 = vsyncadd [#allocation3], %s18
      %s21 = sshll.u32 [#allocation2], 4
      %s22 = int_to_ptr.vmem [resolvable:$true] %s21
      %24 = dma.hbm_to_vmem [thread:$0]  %s0, 128, %s22, [#allocation3]
    $region5: #{energy_predictor.1} parent=1 // pred_fallthru
      _
    // Predicated region
    $region6: #{energy_predictor.1} parent=1 // pred_check
      _
    $region7: #{energy_predictor.1} parent=1 // pred_check_branch
      %26 = sbr.rel (0) target = $region9
    $region8: #{energy_predictor.1} parent=1 // pred_region
      %s28 = ssub.s32 1024, 1024
      %29 = vsyncadd [#allocation5], %s28
      %s30 = sshll.u32 [#allocation4], 4
      %s31 = int_to_ptr.vmem [resolvable:$true] %s30
      %36 = dma.hbm_to_vmem [thread:$0]  %s1, 1024, %s31, [#allocation5], 256, 256, 16
    $region9: #{energy_predictor.1} parent=1 // pred_fallthru
      _
    // Predicated region
    $region10: #{energy_predictor.1} parent=1 // pred_check
      _
    $region11: #{energy_predictor.1} parent=1 // pred_check_branch
      %38 = sbr.rel (0) target = $region13
    $region12: #{energy_predictor.1} parent=1 // pred_region
      %s40 = ssub.s32 98304, 98304
      %41 = vsyncadd [#allocation5], %s40
      %s42 = sshll.u32 [#allocation6], 4
      %s43 = int_to_ptr.vmem [resolvable:$true] %s42
      %48 = dma.hbm_to_vmem [thread:$0]  %s2, 98304, %s43, [#allocation5], 256, 256, 16
    $region13: #{energy_predictor.1} parent=1 // pred_fallthru
      _
    // Predicated region
    $region14: #{energy_predictor.1} parent=1 // pred_check
      _
    $region15: #{energy_predictor.1} parent=1 // pred_check_branch
      %50 = sbr.rel (0) target = $region17
    $region16: #{energy_predictor.1} parent=1 // pred_region
      %s52 = ssub.s32 8192, 8192
      %53 = vsyncadd [#allocation8], %s52
      %s54 = sshll.u32 [#allocation7], 4
      %s55 = int_to_ptr.vmem [resolvable:$true] %s54
      %60 = dma.hbm_to_vmem [thread:$0]  %s3, 8192, %s55, [#allocation8], 128, 128, 8
    $region17: #{energy_predictor.1} parent=1 // pred_fallthru
      _
    // Predicated region
    $region18: #{energy_predictor.1} parent=1 // pred_check
      _
    $region19: #{energy_predictor.1} parent=1 // pred_check_branch
      %62 = sbr.rel (0) target = $region21
    $region20: #{energy_predictor.1} parent=1 // pred_region
      %s64 = ssub.s32 2048, 2048
      %65 = vsyncadd [#allocation8], %s64
      %s66 = sshll.u32 [#allocation9], 4
      %s67 = int_to_ptr.vmem [resolvable:$true] %s66
      %72 = dma.hbm_to_vmem [thread:$0]  %s4, 2048, %s67, [#allocation8], 64, 64, 4
    $region21: #{energy_predictor.1} parent=1 // pred_fallthru
      _
    // Predicated region
    $region22: #{energy_predictor.1} parent=1 // pred_check
      _
    $region23: #{energy_predictor.1} parent=1 // pred_check_branch
      %74 = sbr.rel (0) target = $region25
    $region24: #{energy_predictor.1} parent=1 // pred_region
      %s76 = ssub.s32 2048, 2048
      %77 = vsyncadd [#allocation11], %s76
      %s78 = sshll.u32 [#allocation10], 4
      %s79 = int_to_ptr.vmem [resolvable:$true] %s78
      %84 = dma.hbm_to_vmem [thread:$0]  %s5, 2048, %s79, [#allocation11], 512, 512, 32
    $region25: #{energy_predictor.1} parent=1 // pred_fallthru
      _
    // Predicated region
    $region26: #{energy_predictor.1} parent=1 // pred_check
      _
    $region27: #{energy_predictor.1} parent=1 // pred_check_branch
      %86 = sbr.rel (0) target = $region29
    $region28: #{energy_predictor.1} parent=1 // pred_region
      %87 = dma.done [#allocation3], 128
    $region29: #{energy_predictor.1} parent=1 // pred_fallthru
      _
    // Predicated region
    $region30: #{energy_predictor.1} parent=1 // pred_check
      _
    $region31: #{energy_predictor.1} parent=1 // pred_check_branch
      %89 = sbr.rel (0) target = $region33
    $region32: #{energy_predictor.1} parent=1 // pred_region
      %90 = dma.done [#allocation5], 1024
    $region33: #{energy_predictor.1} parent=1 // pred_fallthru
      _
    // Predicated region
    $region34: #{energy_predictor.1} parent=1 // pred_check
      _
    $region35: #{energy_predictor.1} parent=1 // pred_check_branch
      %92 = sbr.rel (0) target = $region37
    $region36: #{energy_predictor.1} parent=1 // pred_region
      %93 = dma.done [#allocation5], 98304
    $region37: #{energy_predictor.1} parent=1 // pred_fallthru
      _
    // Predicated region
    $region38: #{energy_predictor.1} parent=1 // pred_check
      _
    $region39: #{energy_predictor.1} parent=1 // pred_check_branch
      %95 = sbr.rel (0) target = $region41
    $region40: #{energy_predictor.1} parent=1 // pred_region
      %96 = dma.done [#allocation8], 8192
    $region41: #{energy_predictor.1} parent=1 // pred_fallthru
      _
    // Predicated region
    $region42: #{energy_predictor.1} parent=1 // pred_check
      _
    $region43: #{energy_predictor.1} parent=1 // pred_check_branch
      %98 = sbr.rel (0) target = $region45
    $region44: #{energy_predictor.1} parent=1 // pred_region
      %99 = dma.done [#allocation8], 2048
    $region45: #{energy_predictor.1} parent=1 // pred_fallthru
      _
    // Predicated region
    $region46: #{energy_predictor.1} parent=1 // pred_check
      _
    $region47: #{energy_predictor.1} parent=1 // pred_check_branch
      %101 = sbr.rel (0) target = $region49
    $region48: #{energy_predictor.1} parent=1 // pred_region
      %102 = dma.done [#allocation11], 2048
    $region49: #{energy_predictor.1} parent=1 // pred_fallthru
      _
    %v104 = vld [vmem:[#allocation2] sm:$0xff]
    %v105 = vpack.c.bf16 %v104, %v104
    %v106 = vld [vmem:[#allocation4] sm:$0xff]
    %v107 = vld [vmem:[#allocation4 + $0x8] sm:$0xff]
    %v108 = vld [vmem:[#allocation4 + $0x10] sm:$0xff]
    %v109 = vld [vmem:[#allocation4 + $0x18] sm:$0xff]
    %v110 = vld [vmem:[#allocation4 + $0x20] sm:$0xff]
    %v111 = vld [vmem:[#allocation4 + $0x28] sm:$0xff]
    %v112 = vld [vmem:[#allocation4 + $0x30] sm:$0xff]
    %v113 = vld [vmem:[#allocation4 + $0x38] sm:$0xff]
    %v114 = vld [vmem:[#allocation10] ss:$8 sm:$0xf]
    %v116 = vlaneseq
    %v117 = vshrl.u32 %v116, 7
    %v118 = vsub.s32 0, %v117
    %v119 = vrot.slane %v114, %v118
    %v120 = vlaneseq
    %v121 = vshrl.u32 %v120, 7
    %v122 = vsub.s32 1, %v121
    %v123 = vrot.slane %v114, %v122
    %v124 = vlaneseq
    %v125 = vshrl.u32 %v124, 7
    %v126 = vsub.s32 2, %v125
    %v127 = vrot.slane %v114, %v126
    %v128 = vlaneseq
    %v129 = vshrl.u32 %v128, 7
    %v130 = vsub.s32 3, %v129
    %v131 = vrot.slane %v114, %v130
    %v144 = vunpack.c.l.b16 %v106
    %v145 = vunpack.c.h.b16 %v106
    %v146 = vunpack.c.l.b16 %v107
    %v147 = vunpack.c.h.b16 %v107
    %v148 = vunpack.c.l.b16 %v108
    %v149 = vunpack.c.h.b16 %v108
    %v150 = vunpack.c.l.b16 %v109
    %v151 = vunpack.c.h.b16 %v109
    %v152 = vunpack.c.l.b16 %v110
    %v153 = vunpack.c.h.b16 %v110
    %v154 = vunpack.c.l.b16 %v111
    %v155 = vunpack.c.h.b16 %v111
    %v156 = vunpack.c.l.b16 %v112
    %v157 = vunpack.c.h.b16 %v112
    %v158 = vunpack.c.l.b16 %v113
    %v159 = vunpack.c.h.b16 %v113
    %v160 = vpack.c.b16 %v148, %v144
    %v161 = vpack.c.b16 %v149, %v145
    %v162 = vpack.c.b16 %v150, %v146
    %v163 = vpack.c.b16 %v151, %v147
    %v164 = vpack.c.b16 %v156, %v152
    %v165 = vpack.c.b16 %v157, %v153
    %v166 = vpack.c.b16 %v158, %v154
    %v167 = vpack.c.b16 %v159, %v155
    %vm176 = vcmask 261120
    %v178 = vsel %vm176, %v105, 0
    %180 = vmatprep.subr.bf16.mxu0 %v161
    %181 = vmatpush1.bf16.msra.mxu0 %v160
    %182 = vmatprep.subr.bf16.mxu0 %v165
    %183 = vmatpush1.bf16.msra.mxu0 %v164
    %184 = vmatprep.subr.bf16.mxu0 0
    %185 = vmatpush1.bf16.msra.mxu0 0
    %186 = vmatprep.subr.bf16.mxu0 0
    %187 = vmatpush1.bf16.msra.mxu0 0
    %188 = vmatprep.subr.bf16.mxu0 0
    %189 = vmatpush1.bf16.msra.mxu0 0
    %190 = vmatprep.subr.bf16.mxu0 0
    %191 = vmatpush1.bf16.msra.mxu0 0
    %192 = vmatprep.subr.bf16.mxu0 0
    %193 = vmatpush1.bf16.msra.mxu0 0
    %194 = vmatprep.subr.bf16.mxu0 0
    %195 = vmatpush1.bf16.msra.mxu0 0
    %196 = vmatprep.subr.bf16.mxu0 0
    %197 = vmatpush1.bf16.msra.mxu0 0
    %198 = vmatprep.subr.bf16.mxu0 0
    %199 = vmatpush1.bf16.msra.mxu0 0
    %200 = vmatprep.subr.bf16.mxu0 0
    %201 = vmatpush1.bf16.msra.mxu0 0
    %202 = vmatprep.subr.bf16.mxu0 0
    %203 = vmatpush1.bf16.msra.mxu0 0
    %204 = vmatprep.subr.bf16.mxu0 0
    %205 = vmatpush1.bf16.msra.mxu0 0
    %206 = vmatprep.subr.bf16.mxu0 0
    %207 = vmatpush1.bf16.msra.mxu0 0
    %208 = vmatprep.subr.bf16.mxu0 0
    %209 = vmatpush1.bf16.msra.mxu0 0
    %210 = vmatprep.subr.bf16.mxu0 0
    %211 = vmatpush1.bf16.msra.mxu0 0
    %212 = vmatprep.mubr.bf16.mxu0 0
    %213 = vmatmul.mubr.bf16.gmra.mrb[0].mxu0 %v178
    %v214 = vpop.f32.mrb[0].mxu0
    %v215 = vadd.f32 %v119, %v214
    %v216 = vpop.f32.mrb[0].mxu0
    %v217 = vadd.f32 %v123, %v216
    %v218 = vpop.f32.mrb[0].mxu0
    %v219 = vpop.f32.mrb[0].mxu0
    %220 = vdwg.mxu0
    %221 = vmatprep.subr.bf16.mxu0 %v163
    %222 = vmatpush1.bf16.msra.mxu0 %v162
    %223 = vmatprep.subr.bf16.mxu0 %v167
    %224 = vmatpush1.bf16.msra.mxu0 %v166
    %225 = vmatprep.subr.bf16.mxu0 0
    %226 = vmatpush1.bf16.msra.mxu0 0
    %227 = vmatprep.subr.bf16.mxu0 0
    %228 = vmatpush1.bf16.msra.mxu0 0
    %229 = vmatprep.subr.bf16.mxu0 0
    %230 = vmatpush1.bf16.msra.mxu0 0
    %231 = vmatprep.subr.bf16.mxu0 0
    %232 = vmatpush1.bf16.msra.mxu0 0
    %233 = vmatprep.subr.bf16.mxu0 0
    %234 = vmatpush1.bf16.msra.mxu0 0
    %235 = vmatprep.subr.bf16.mxu0 0
    %236 = vmatpush1.bf16.msra.mxu0 0
    %237 = vmatprep.subr.bf16.mxu0 0
    %238 = vmatpush1.bf16.msra.mxu0 0
    %239 = vmatprep.subr.bf16.mxu0 0
    %240 = vmatpush1.bf16.msra.mxu0 0
    %241 = vmatprep.subr.bf16.mxu0 0
    %242 = vmatpush1.bf16.msra.mxu0 0
    %243 = vmatprep.subr.bf16.mxu0 0
    %244 = vmatpush1.bf16.msra.mxu0 0
    %245 = vmatprep.subr.bf16.mxu0 0
    %246 = vmatpush1.bf16.msra.mxu0 0
    %247 = vmatprep.subr.bf16.mxu0 0
    %248 = vmatpush1.bf16.msra.mxu0 0
    %249 = vmatprep.subr.bf16.mxu0 0
    %250 = vmatpush1.bf16.msra.mxu0 0
    %251 = vmatprep.subr.bf16.mxu0 0
    %252 = vmatpush1.bf16.msra.mxu0 0
    %253 = vmatprep.mubr.bf16.mxu0 0
    %254 = vmatmul.mubr.bf16.gmra.mrb[0].mxu0 %v178
    %v255 = vpop.f32.mrb[0].mxu0
    %v256 = vadd.f32 %v127, %v255
    %v257 = vpop.f32.mrb[0].mxu0
    %v258 = vadd.f32 %v131, %v257
    %v259 = vpop.f32.mrb[0].mxu0
    %v260 = vpop.f32.mrb[0].mxu0
    %261 = vdwg.mxu0
    %vm262 = vcmp.gt.f32.partialorder %v215, 0.0
    %vm263 = vcmp.gt.f32.partialorder %v217, 0.0
    %vm264 = vcmp.gt.f32.partialorder %v256, 0.0
    %vm265 = vcmp.gt.f32.partialorder %v258, 0.0
    %v266 = vmul.f32 %v215, 0.1
    %v267 = vmul.f32 %v217, 0.1
    %v268 = vmul.f32 %v256, 0.1
    %v269 = vmul.f32 %v258, 0.1
    %v270 = vsel %vm262, %v215, %v266
    %v271 = vsel %vm263, %v217, %v267
    %v272 = vsel %vm264, %v256, %v268
    %v273 = vsel %vm265, %v258, %v269
    %v274 = vpack.c.bf16 %v270, %v270
    %v275 = vpack.c.bf16 %v271, %v271
    %v276 = vpack.c.bf16 %v272, %v272
    %v277 = vpack.c.bf16 %v273, %v273
    %v278 = vld [vmem:[#allocation6] sm:$0xff]
    %v279 = vld [vmem:[#allocation6 + $0x8] sm:$0xff]
    %v280 = vld [vmem:[#allocation6 + $0x10] sm:$0xff]
    %v281 = vld [vmem:[#allocation6 + $0x18] sm:$0xff]
    %v282 = vld [vmem:[#allocation6 + $0x20] sm:$0xff]
    %v283 = vld [vmem:[#allocation6 + $0x28] sm:$0xff]
    %v284 = vld [vmem:[#allocation6 + $0x30] sm:$0xff]
    %v285 = vld [vmem:[#allocation6 + $0x38] sm:$0xff]
    %v286 = vld [vmem:[#allocation6 + $0x40] sm:$0xff]
    %v287 = vld [vmem:[#allocation6 + $0x48] sm:$0xff]
    %v288 = vld [vmem:[#allocation6 + $0x50] sm:$0xff]
    %v289 = vld [vmem:[#allocation6 + $0x58] sm:$0xff]
    %v290 = vld [vmem:[#allocation6 + $0x60] sm:$0xff]
    %v291 = vld [vmem:[#allocation6 + $0x68] sm:$0xff]
    %v292 = vld [vmem:[#allocation6 + $0x70] sm:$0xff]
    %v293 = vld [vmem:[#allocation6 + $0x78] sm:$0xff]
    %v294 = vld [vmem:[#allocation6 + $0x80] sm:$0xff]
    %v295 = vld [vmem:[#allocation6 + $0x88] sm:$0xff]
    %v296 = vld [vmem:[#allocation6 + $0x90] sm:$0xff]
    %v297 = vld [vmem:[#allocation6 + $0x98] sm:$0xff]
    %v298 = vld [vmem:[#allocation6 + $0xa0] sm:$0xff]
    %v299 = vld [vmem:[#allocation6 + $0xa8] sm:$0xff]
    %v300 = vld [vmem:[#allocation6 + $0xb0] sm:$0xff]
    %v301 = vld [vmem:[#allocation6 + $0xb8] sm:$0xff]
    %v302 = vld [vmem:[#allocation6 + $0xc0] sm:$0xff]
    %v303 = vld [vmem:[#allocation6 + $0xc8] sm:$0xff]
    %v304 = vld [vmem:[#allocation6 + $0xd0] sm:$0xff]
    %v305 = vld [vmem:[#allocation6 + $0xd8] sm:$0xff]
    %v306 = vld [vmem:[#allocation6 + $0xe0] sm:$0xff]
    %v307 = vld [vmem:[#allocation6 + $0xe8] sm:$0xff]
    %v308 = vld [vmem:[#allocation6 + $0xf0] sm:$0xff]
    %v309 = vld [vmem:[#allocation6 + $0xf8] sm:$0xff]
    %v310 = vld [vmem:[#allocation6 + $0x100] sm:$0xff]
    %v311 = vld [vmem:[#allocation6 + $0x108] sm:$0xff]
    %v312 = vld [vmem:[#allocation6 + $0x110] sm:$0xff]
    %v313 = vld [vmem:[#allocation6 + $0x118] sm:$0xff]
    %v314 = vld [vmem:[#allocation6 + $0x120] sm:$0xff]
    %v315 = vld [vmem:[#allocation6 + $0x128] sm:$0xff]
    %v316 = vld [vmem:[#allocation6 + $0x130] sm:$0xff]
    %v317 = vld [vmem:[#allocation6 + $0x138] sm:$0xff]
    %v318 = vld [vmem:[#allocation6 + $0x140] sm:$0xff]
    %v319 = vld [vmem:[#allocation6 + $0x148] sm:$0xff]
    %v320 = vld [vmem:[#allocation6 + $0x150] sm:$0xff]
    %v321 = vld [vmem:[#allocation6 + $0x158] sm:$0xff]
    %v322 = vld [vmem:[#allocation6 + $0x160] sm:$0xff]
    %v323 = vld [vmem:[#allocation6 + $0x168] sm:$0xff]
    %v324 = vld [vmem:[#allocation6 + $0x170] sm:$0xff]
    %v325 = vld [vmem:[#allocation6 + $0x178] sm:$0xff]
    %v326 = vld [vmem:[#allocation6 + $0x180] sm:$0xff]
    %v327 = vld [vmem:[#allocation6 + $0x188] sm:$0xff]
    %v328 = vld [vmem:[#allocation6 + $0x190] sm:$0xff]
    %v329 = vld [vmem:[#allocation6 + $0x198] sm:$0xff]
    %v330 = vld [vmem:[#allocation6 + $0x1a0] sm:$0xff]
    %v331 = vld [vmem:[#allocation6 + $0x1a8] sm:$0xff]
    %v332 = vld [vmem:[#allocation6 + $0x1b0] sm:$0xff]
    %v333 = vld [vmem:[#allocation6 + $0x1b8] sm:$0xff]
    %v334 = vld [vmem:[#allocation6 + $0x1c0] sm:$0xff]
    %v335 = vld [vmem:[#allocation6 + $0x1c8] sm:$0xff]
    %v336 = vld [vmem:[#allocation6 + $0x1d0] sm:$0xff]
    %v337 = vld [vmem:[#allocation6 + $0x1d8] sm:$0xff]
    %v338 = vld [vmem:[#allocation6 + $0x1e0] sm:$0xff]
    %v339 = vld [vmem:[#allocation6 + $0x1e8] sm:$0xff]
    %v340 = vld [vmem:[#allocation6 + $0x1f0] sm:$0xff]
    %v341 = vld [vmem:[#allocation6 + $0x1f8] sm:$0xff]
    %v342 = vld [vmem:[#allocation6 + $0x200] sm:$0xff]
    %v343 = vld [vmem:[#allocation6 + $0x208] sm:$0xff]
    %v344 = vld [vmem:[#allocation6 + $0x210] sm:$0xff]
    %v345 = vld [vmem:[#allocation6 + $0x218] sm:$0xff]
    %v346 = vld [vmem:[#allocation6 + $0x220] sm:$0xff]
    %v347 = vld [vmem:[#allocation6 + $0x228] sm:$0xff]
    %v348 = vld [vmem:[#allocation6 + $0x230] sm:$0xff]
    %v349 = vld [vmem:[#allocation6 + $0x238] sm:$0xff]
    %v350 = vld [vmem:[#allocation6 + $0x240] sm:$0xff]
    %v351 = vld [vmem:[#allocation6 + $0x248] sm:$0xff]
    %v352 = vld [vmem:[#allocation6 + $0x250] sm:$0xff]
    %v353 = vld [vmem:[#allocation6 + $0x258] sm:$0xff]
    %v354 = vld [vmem:[#allocation6 + $0x260] sm:$0xff]
    %v355 = vld [vmem:[#allocation6 + $0x268] sm:$0xff]
    %v356 = vld [vmem:[#allocation6 + $0x270] sm:$0xff]
    %v357 = vld [vmem:[#allocation6 + $0x278] sm:$0xff]
    %v358 = vld [vmem:[#allocation6 + $0x280] sm:$0xff]
    %v359 = vld [vmem:[#allocation6 + $0x288] sm:$0xff]
    %v360 = vld [vmem:[#allocation6 + $0x290] sm:$0xff]
    %v361 = vld [vmem:[#allocation6 + $0x298] sm:$0xff]
    %v362 = vld [vmem:[#allocation6 + $0x2a0] sm:$0xff]
    %v363 = vld [vmem:[#allocation6 + $0x2a8] sm:$0xff]
    %v364 = vld [vmem:[#allocation6 + $0x2b0] sm:$0xff]
    %v365 = vld [vmem:[#allocation6 + $0x2b8] sm:$0xff]
    %v366 = vld [vmem:[#allocation6 + $0x2c0] sm:$0xff]
    %v367 = vld [vmem:[#allocation6 + $0x2c8] sm:$0xff]
    %v368 = vld [vmem:[#allocation6 + $0x2d0] sm:$0xff]
    %v369 = vld [vmem:[#allocation6 + $0x2d8] sm:$0xff]
    %v370 = vld [vmem:[#allocation6 + $0x2e0] sm:$0xff]
    %v371 = vld [vmem:[#allocation6 + $0x2e8] sm:$0xff]
    %v372 = vld [vmem:[#allocation6 + $0x2f0] sm:$0xff]
    %v373 = vld [vmem:[#allocation6 + $0x2f8] sm:$0xff]
    %v374 = vld [vmem:[#allocation6 + $0x300] sm:$0xff]
    %v375 = vld [vmem:[#allocation6 + $0x308] sm:$0xff]
    %v376 = vld [vmem:[#allocation6 + $0x310] sm:$0xff]
    %v377 = vld [vmem:[#allocation6 + $0x318] sm:$0xff]
    %v378 = vld [vmem:[#allocation6 + $0x320] sm:$0xff]
    %v379 = vld [vmem:[#allocation6 + $0x328] sm:$0xff]
    %v380 = vld [vmem:[#allocation6 + $0x330] sm:$0xff]
    %v381 = vld [vmem:[#allocation6 + $0x338] sm:$0xff]
    %v382 = vld [vmem:[#allocation6 + $0x340] sm:$0xff]
    %v383 = vld [vmem:[#allocation6 + $0x348] sm:$0xff]
    %v384 = vld [vmem:[#allocation6 + $0x350] sm:$0xff]
    %v385 = vld [vmem:[#allocation6 + $0x358] sm:$0xff]
    %v386 = vld [vmem:[#allocation6 + $0x360] sm:$0xff]
    %v387 = vld [vmem:[#allocation6 + $0x368] sm:$0xff]
    %v388 = vld [vmem:[#allocation6 + $0x370] sm:$0xff]
    %v389 = vld [vmem:[#allocation6 + $0x378] sm:$0xff]
    %v390 = vld [vmem:[#allocation6 + $0x380] sm:$0xff]
    %v391 = vld [vmem:[#allocation6 + $0x388] sm:$0xff]
    %v392 = vld [vmem:[#allocation6 + $0x390] sm:$0xff]
    %v393 = vld [vmem:[#allocation6 + $0x398] sm:$0xff]
    %v394 = vld [vmem:[#allocation6 + $0x3a0] sm:$0xff]
    %v395 = vld [vmem:[#allocation6 + $0x3a8] sm:$0xff]
    %v396 = vld [vmem:[#allocation6 + $0x3b0] sm:$0xff]
    %v397 = vld [vmem:[#allocation6 + $0x3b8] sm:$0xff]
    %v398 = vld [vmem:[#allocation6 + $0x3c0] sm:$0xff]
    %v399 = vld [vmem:[#allocation6 + $0x3c8] sm:$0xff]
    %v400 = vld [vmem:[#allocation6 + $0x3d0] sm:$0xff]
    %v401 = vld [vmem:[#allocation6 + $0x3d8] sm:$0xff]
    %v402 = vld [vmem:[#allocation6 + $0x3e0] sm:$0xff]
    %v403 = vld [vmem:[#allocation6 + $0x3e8] sm:$0xff]
    %v404 = vld [vmem:[#allocation6 + $0x3f0] sm:$0xff]
    %v405 = vld [vmem:[#allocation6 + $0x3f8] sm:$0xff]
    %s406 = scalar_lea.vmem [#allocation10], 1
    %v407 = vld [vmem:[%s406] ss:$8 sm:$0xf]
    %v409 = vlaneseq
    %v410 = vshrl.u32 %v409, 7
    %v411 = vsub.s32 0, %v410
    %v412 = vrot.slane %v407, %v411
    %v413 = vlaneseq
    %v414 = vshrl.u32 %v413, 7
    %v415 = vsub.s32 1, %v414
    %v416 = vrot.slane %v407, %v415
    %v417 = vlaneseq
    %v418 = vshrl.u32 %v417, 7
    %v419 = vsub.s32 2, %v418
    %v420 = vrot.slane %v407, %v419
    %v421 = vlaneseq
    %v422 = vshrl.u32 %v421, 7
    %v423 = vsub.s32 3, %v422
    %v424 = vrot.slane %v407, %v423
    %v557 = vunpack.c.l.b16 %v278
    %v558 = vunpack.c.h.b16 %v278
    %v559 = vunpack.c.l.b16 %v279
    %v560 = vunpack.c.h.b16 %v279
    %v561 = vunpack.c.l.b16 %v280
    %v562 = vunpack.c.h.b16 %v280
    %v563 = vunpack.c.l.b16 %v281
    %v564 = vunpack.c.h.b16 %v281
    %v565 = vunpack.c.l.b16 %v282
    %v566 = vunpack.c.h.b16 %v282
    %v567 = vunpack.c.l.b16 %v283
    %v568 = vunpack.c.h.b16 %v283
    %v569 = vunpack.c.l.b16 %v284
    %v570 = vunpack.c.h.b16 %v284
    %v571 = vunpack.c.l.b16 %v285
    %v572 = vunpack.c.h.b16 %v285
    %v573 = vunpack.c.l.b16 %v286
    %v574 = vunpack.c.h.b16 %v286
    %v575 = vunpack.c.l.b16 %v287
    %v576 = vunpack.c.h.b16 %v287
    %v577 = vunpack.c.l.b16 %v288
    %v578 = vunpack.c.h.b16 %v288
    %v579 = vunpack.c.l.b16 %v289
    %v580 = vunpack.c.h.b16 %v289
    %v581 = vunpack.c.l.b16 %v290
    %v582 = vunpack.c.h.b16 %v290
    %v583 = vunpack.c.l.b16 %v291
    %v584 = vunpack.c.h.b16 %v291
    %v585 = vunpack.c.l.b16 %v292
    %v586 = vunpack.c.h.b16 %v292
    %v587 = vunpack.c.l.b16 %v293
    %v588 = vunpack.c.h.b16 %v293
    %v589 = vunpack.c.l.b16 %v294
    %v590 = vunpack.c.h.b16 %v294
    %v591 = vunpack.c.l.b16 %v295
    %v592 = vunpack.c.h.b16 %v295
    %v593 = vunpack.c.l.b16 %v296
    %v594 = vunpack.c.h.b16 %v296
    %v595 = vunpack.c.l.b16 %v297
    %v596 = vunpack.c.h.b16 %v297
    %v597 = vunpack.c.l.b16 %v298
    %v598 = vunpack.c.h.b16 %v298
    %v599 = vunpack.c.l.b16 %v299
    %v600 = vunpack.c.h.b16 %v299
    %v601 = vunpack.c.l.b16 %v300
    %v602 = vunpack.c.h.b16 %v300
    %v603 = vunpack.c.l.b16 %v301
    %v604 = vunpack.c.h.b16 %v301
    %v605 = vunpack.c.l.b16 %v302
    %v606 = vunpack.c.h.b16 %v302
    %v607 = vunpack.c.l.b16 %v303
    %v608 = vunpack.c.h.b16 %v303
    %v609 = vunpack.c.l.b16 %v304
    %v610 = vunpack.c.h.b16 %v304
    %v611 = vunpack.c.l.b16 %v305
    %v612 = vunpack.c.h.b16 %v305
    %v613 = vunpack.c.l.b16 %v306
    %v614 = vunpack.c.h.b16 %v306
    %v615 = vunpack.c.l.b16 %v307
    %v616 = vunpack.c.h.b16 %v307
    %v617 = vunpack.c.l.b16 %v308
    %v618 = vunpack.c.h.b16 %v308
    %v619 = vunpack.c.l.b16 %v309
    %v620 = vunpack.c.h.b16 %v309
    %v621 = vunpack.c.l.b16 %v310
    %v622 = vunpack.c.h.b16 %v310
    %v623 = vunpack.c.l.b16 %v311
    %v624 = vunpack.c.h.b16 %v311
    %v625 = vunpack.c.l.b16 %v312
    %v626 = vunpack.c.h.b16 %v312
    %v627 = vunpack.c.l.b16 %v313
    %v628 = vunpack.c.h.b16 %v313
    %v629 = vunpack.c.l.b16 %v314
    %v630 = vunpack.c.h.b16 %v314
    %v631 = vunpack.c.l.b16 %v315
    %v632 = vunpack.c.h.b16 %v315
    %v633 = vunpack.c.l.b16 %v316
    %v634 = vunpack.c.h.b16 %v316
    %v635 = vunpack.c.l.b16 %v317
    %v636 = vunpack.c.h.b16 %v317
    %v637 = vunpack.c.l.b16 %v318
    %v638 = vunpack.c.h.b16 %v318
    %v639 = vunpack.c.l.b16 %v319
    %v640 = vunpack.c.h.b16 %v319
    %v641 = vunpack.c.l.b16 %v320
    %v642 = vunpack.c.h.b16 %v320
    %v643 = vunpack.c.l.b16 %v321
    %v644 = vunpack.c.h.b16 %v321
    %v645 = vunpack.c.l.b16 %v322
    %v646 = vunpack.c.h.b16 %v322
    %v647 = vunpack.c.l.b16 %v323
    %v648 = vunpack.c.h.b16 %v323
    %v649 = vunpack.c.l.b16 %v324
    %v650 = vunpack.c.h.b16 %v324
    %v651 = vunpack.c.l.b16 %v325
    %v652 = vunpack.c.h.b16 %v325
    %v653 = vunpack.c.l.b16 %v326
    %v654 = vunpack.c.h.b16 %v326
    %v655 = vunpack.c.l.b16 %v327
    %v656 = vunpack.c.h.b16 %v327
    %v657 = vunpack.c.l.b16 %v328
    %v658 = vunpack.c.h.b16 %v328
    %v659 = vunpack.c.l.b16 %v329
    %v660 = vunpack.c.h.b16 %v329
    %v661 = vunpack.c.l.b16 %v330
    %v662 = vunpack.c.h.b16 %v330
    %v663 = vunpack.c.l.b16 %v331
    %v664 = vunpack.c.h.b16 %v331
    %v665 = vunpack.c.l.b16 %v332
    %v666 = vunpack.c.h.b16 %v332
    %v667 = vunpack.c.l.b16 %v333
    %v668 = vunpack.c.h.b16 %v333
    %v669 = vunpack.c.l.b16 %v334
    %v670 = vunpack.c.h.b16 %v334
    %v671 = vunpack.c.l.b16 %v335
    %v672 = vunpack.c.h.b16 %v335
    %v673 = vunpack.c.l.b16 %v336
    %v674 = vunpack.c.h.b16 %v336
    %v675 = vunpack.c.l.b16 %v337
    %v676 = vunpack.c.h.b16 %v337
    %v677 = vunpack.c.l.b16 %v338
    %v678 = vunpack.c.h.b16 %v338
    %v679 = vunpack.c.l.b16 %v339
    %v680 = vunpack.c.h.b16 %v339
    %v681 = vunpack.c.l.b16 %v340
    %v682 = vunpack.c.h.b16 %v340
    %v683 = vunpack.c.l.b16 %v341
    %v684 = vunpack.c.h.b16 %v341
    %v685 = vunpack.c.l.b16 %v342
    %v686 = vunpack.c.h.b16 %v342
    %v687 = vunpack.c.l.b16 %v343
    %v688 = vunpack.c.h.b16 %v343
    %v689 = vunpack.c.l.b16 %v344
    %v690 = vunpack.c.h.b16 %v344
    %v691 = vunpack.c.l.b16 %v345
    %v692 = vunpack.c.h.b16 %v345
    %v693 = vunpack.c.l.b16 %v346
    %v694 = vunpack.c.h.b16 %v346
    %v695 = vunpack.c.l.b16 %v347
    %v696 = vunpack.c.h.b16 %v347
    %v697 = vunpack.c.l.b16 %v348
    %v698 = vunpack.c.h.b16 %v348
    %v699 = vunpack.c.l.b16 %v349
    %v700 = vunpack.c.h.b16 %v349
    %v701 = vunpack.c.l.b16 %v350
    %v702 = vunpack.c.h.b16 %v350
    %v703 = vunpack.c.l.b16 %v351
    %v704 = vunpack.c.h.b16 %v351
    %v705 = vunpack.c.l.b16 %v352
    %v706 = vunpack.c.h.b16 %v352
    %v707 = vunpack.c.l.b16 %v353
    %v708 = vunpack.c.h.b16 %v353
    %v709 = vunpack.c.l.b16 %v354
    %v710 = vunpack.c.h.b16 %v354
    %v711 = vunpack.c.l.b16 %v355
    %v712 = vunpack.c.h.b16 %v355
    %v713 = vunpack.c.l.b16 %v356
    %v714 = vunpack.c.h.b16 %v356
    %v715 = vunpack.c.l.b16 %v357
    %v716 = vunpack.c.h.b16 %v357
    %v717 = vunpack.c.l.b16 %v358
    %v718 = vunpack.c.h.b16 %v358
    %v719 = vunpack.c.l.b16 %v359
    %v720 = vunpack.c.h.b16 %v359
    %v721 = vunpack.c.l.b16 %v360
    %v722 = vunpack.c.h.b16 %v360
    %v723 = vunpack.c.l.b16 %v361
    %v724 = vunpack.c.h.b16 %v361
    %v725 = vunpack.c.l.b16 %v362
    %v726 = vunpack.c.h.b16 %v362
    %v727 = vunpack.c.l.b16 %v363
    %v728 = vunpack.c.h.b16 %v363
    %v729 = vunpack.c.l.b16 %v364
    %v730 = vunpack.c.h.b16 %v364
    %v731 = vunpack.c.l.b16 %v365
    %v732 = vunpack.c.h.b16 %v365
    %v733 = vunpack.c.l.b16 %v366
    %v734 = vunpack.c.h.b16 %v366
    %v735 = vunpack.c.l.b16 %v367
    %v736 = vunpack.c.h.b16 %v367
    %v737 = vunpack.c.l.b16 %v368
    %v738 = vunpack.c.h.b16 %v368
    %v739 = vunpack.c.l.b16 %v369
    %v740 = vunpack.c.h.b16 %v369
    %v741 = vunpack.c.l.b16 %v370
    %v742 = vunpack.c.h.b16 %v370
    %v743 = vunpack.c.l.b16 %v371
    %v744 = vunpack.c.h.b16 %v371
    %v745 = vunpack.c.l.b16 %v372
    %v746 = vunpack.c.h.b16 %v372
    %v747 = vunpack.c.l.b16 %v373
    %v748 = vunpack.c.h.b16 %v373
    %v749 = vunpack.c.l.b16 %v374
    %v750 = vunpack.c.h.b16 %v374
    %v751 = vunpack.c.l.b16 %v375
    %v752 = vunpack.c.h.b16 %v375
    %v753 = vunpack.c.l.b16 %v376
    %v754 = vunpack.c.h.b16 %v376
    %v755 = vunpack.c.l.b16 %v377
    %v756 = vunpack.c.h.b16 %v377
    %v757 = vunpack.c.l.b16 %v378
    %v758 = vunpack.c.h.b16 %v378
    %v759 = vunpack.c.l.b16 %v379
    %v760 = vunpack.c.h.b16 %v379
    %v761 = vunpack.c.l.b16 %v380
    %v762 = vunpack.c.h.b16 %v380
    %v763 = vunpack.c.l.b16 %v381
    %v764 = vunpack.c.h.b16 %v381
    %v765 = vunpack.c.l.b16 %v382
    %v766 = vunpack.c.h.b16 %v382
    %v767 = vunpack.c.l.b16 %v383
    %v768 = vunpack.c.h.b16 %v383
    %v769 = vunpack.c.l.b16 %v384
    %v770 = vunpack.c.h.b16 %v384
    %v771 = vunpack.c.l.b16 %v385
    %v772 = vunpack.c.h.b16 %v385
    %v773 = vunpack.c.l.b16 %v386
    %v774 = vunpack.c.h.b16 %v386
    %v775 = vunpack.c.l.b16 %v387
    %v776 = vunpack.c.h.b16 %v387
    %v777 = vunpack.c.l.b16 %v388
    %v778 = vunpack.c.h.b16 %v388
    %v779 = vunpack.c.l.b16 %v389
    %v780 = vunpack.c.h.b16 %v389
    %v781 = vunpack.c.l.b16 %v390
    %v782 = vunpack.c.h.b16 %v390
    %v783 = vunpack.c.l.b16 %v391
    %v784 = vunpack.c.h.b16 %v391
    %v785 = vunpack.c.l.b16 %v392
    %v786 = vunpack.c.h.b16 %v392
    %v787 = vunpack.c.l.b16 %v393
    %v788 = vunpack.c.h.b16 %v393
    %v789 = vunpack.c.l.b16 %v394
    %v790 = vunpack.c.h.b16 %v394
    %v791 = vunpack.c.l.b16 %v395
    %v792 = vunpack.c.h.b16 %v395
    %v793 = vunpack.c.l.b16 %v396
    %v794 = vunpack.c.h.b16 %v396
    %v795 = vunpack.c.l.b16 %v397
    %v796 = vunpack.c.h.b16 %v397
    %v797 = vunpack.c.l.b16 %v398
    %v798 = vunpack.c.h.b16 %v398
    %v799 = vunpack.c.l.b16 %v399
    %v800 = vunpack.c.h.b16 %v399
    %v801 = vunpack.c.l.b16 %v400
    %v802 = vunpack.c.h.b16 %v400
    %v803 = vunpack.c.l.b16 %v401
    %v804 = vunpack.c.h.b16 %v401
    %v805 = vunpack.c.l.b16 %v402
    %v806 = vunpack.c.h.b16 %v402
    %v807 = vunpack.c.l.b16 %v403
    %v808 = vunpack.c.h.b16 %v403
    %v809 = vunpack.c.l.b16 %v404
    %v810 = vunpack.c.h.b16 %v404
    %v811 = vunpack.c.l.b16 %v405
    %v812 = vunpack.c.h.b16 %v405
    %v813 = vpack.c.b16 %v561, %v557
    %v814 = vpack.c.b16 %v562, %v558
    %v815 = vpack.c.b16 %v563, %v559
    %v816 = vpack.c.b16 %v564, %v560
    %v817 = vpack.c.b16 %v569, %v565
    %v818 = vpack.c.b16 %v570, %v566
    %v819 = vpack.c.b16 %v571, %v567
    %v820 = vpack.c.b16 %v572, %v568
    %v821 = vpack.c.b16 %v577, %v573
    %v822 = vpack.c.b16 %v578, %v574
    %v823 = vpack.c.b16 %v579, %v575
    %v824 = vpack.c.b16 %v580, %v576
    %v825 = vpack.c.b16 %v585, %v581
    %v826 = vpack.c.b16 %v586, %v582
    %v827 = vpack.c.b16 %v587, %v583
    %v828 = vpack.c.b16 %v588, %v584
    %v829 = vpack.c.b16 %v593, %v589
    %v830 = vpack.c.b16 %v594, %v590
    %v831 = vpack.c.b16 %v595, %v591
    %v832 = vpack.c.b16 %v596, %v592
    %v833 = vpack.c.b16 %v601, %v597
    %v834 = vpack.c.b16 %v602, %v598
    %v835 = vpack.c.b16 %v603, %v599
    %v836 = vpack.c.b16 %v604, %v600
    %v837 = vpack.c.b16 %v609, %v605
    %v838 = vpack.c.b16 %v610, %v606
    %v839 = vpack.c.b16 %v611, %v607
    %v840 = vpack.c.b16 %v612, %v608
    %v841 = vpack.c.b16 %v617, %v613
    %v842 = vpack.c.b16 %v618, %v614
    %v843 = vpack.c.b16 %v619, %v615
    %v844 = vpack.c.b16 %v620, %v616
    %v845 = vpack.c.b16 %v625, %v621
    %v846 = vpack.c.b16 %v626, %v622
    %v847 = vpack.c.b16 %v627, %v623
    %v848 = vpack.c.b16 %v628, %v624
    %v849 = vpack.c.b16 %v633, %v629
    %v850 = vpack.c.b16 %v634, %v630
    %v851 = vpack.c.b16 %v635, %v631
    %v852 = vpack.c.b16 %v636, %v632
    %v853 = vpack.c.b16 %v641, %v637
    %v854 = vpack.c.b16 %v642, %v638
    %v855 = vpack.c.b16 %v643, %v639
    %v856 = vpack.c.b16 %v644, %v640
    %v857 = vpack.c.b16 %v649, %v645
    %v858 = vpack.c.b16 %v650, %v646
    %v859 = vpack.c.b16 %v651, %v647
    %v860 = vpack.c.b16 %v652, %v648
    %v861 = vpack.c.b16 %v657, %v653
    %v862 = vpack.c.b16 %v658, %v654
    %v863 = vpack.c.b16 %v659, %v655
    %v864 = vpack.c.b16 %v660, %v656
    %v865 = vpack.c.b16 %v665, %v661
    %v866 = vpack.c.b16 %v666, %v662
    %v867 = vpack.c.b16 %v667, %v663
    %v868 = vpack.c.b16 %v668, %v664
    %v869 = vpack.c.b16 %v673, %v669
    %v870 = vpack.c.b16 %v674, %v670
    %v871 = vpack.c.b16 %v675, %v671
    %v872 = vpack.c.b16 %v676, %v672
    %v873 = vpack.c.b16 %v681, %v677
    %v874 = vpack.c.b16 %v682, %v678
    %v875 = vpack.c.b16 %v683, %v679
    %v876 = vpack.c.b16 %v684, %v680
    %v877 = vpack.c.b16 %v689, %v685
    %v878 = vpack.c.b16 %v690, %v686
    %v879 = vpack.c.b16 %v691, %v687
    %v880 = vpack.c.b16 %v692, %v688
    %v881 = vpack.c.b16 %v697, %v693
    %v882 = vpack.c.b16 %v698, %v694
    %v883 = vpack.c.b16 %v699, %v695
    %v884 = vpack.c.b16 %v700, %v696
    %v885 = vpack.c.b16 %v705, %v701
    %v886 = vpack.c.b16 %v706, %v702
    %v887 = vpack.c.b16 %v707, %v703
    %v888 = vpack.c.b16 %v708, %v704
    %v889 = vpack.c.b16 %v713, %v709
    %v890 = vpack.c.b16 %v714, %v710
    %v891 = vpack.c.b16 %v715, %v711
    %v892 = vpack.c.b16 %v716, %v712
    %v893 = vpack.c.b16 %v721, %v717
    %v894 = vpack.c.b16 %v722, %v718
    %v895 = vpack.c.b16 %v723, %v719
    %v896 = vpack.c.b16 %v724, %v720
    %v897 = vpack.c.b16 %v729, %v725
    %v898 = vpack.c.b16 %v730, %v726
    %v899 = vpack.c.b16 %v731, %v727
    %v900 = vpack.c.b16 %v732, %v728
    %v901 = vpack.c.b16 %v737, %v733
    %v902 = vpack.c.b16 %v738, %v734
    %v903 = vpack.c.b16 %v739, %v735
    %v904 = vpack.c.b16 %v740, %v736
    %v905 = vpack.c.b16 %v745, %v741
    %v906 = vpack.c.b16 %v746, %v742
    %v907 = vpack.c.b16 %v747, %v743
    %v908 = vpack.c.b16 %v748, %v744
    %v909 = vpack.c.b16 %v753, %v749
    %v910 = vpack.c.b16 %v754, %v750
    %v911 = vpack.c.b16 %v755, %v751
    %v912 = vpack.c.b16 %v756, %v752
    %v913 = vpack.c.b16 %v761, %v757
    %v914 = vpack.c.b16 %v762, %v758
    %v915 = vpack.c.b16 %v763, %v759
    %v916 = vpack.c.b16 %v764, %v760
    %v917 = vpack.c.b16 %v769, %v765
    %v918 = vpack.c.b16 %v770, %v766
    %v919 = vpack.c.b16 %v771, %v767
    %v920 = vpack.c.b16 %v772, %v768
    %v921 = vpack.c.b16 %v777, %v773
    %v922 = vpack.c.b16 %v778, %v774
    %v923 = vpack.c.b16 %v779, %v775
    %v924 = vpack.c.b16 %v780, %v776
    %v925 = vpack.c.b16 %v785, %v781
    %v926 = vpack.c.b16 %v786, %v782
    %v927 = vpack.c.b16 %v787, %v783
    %v928 = vpack.c.b16 %v788, %v784
    %v929 = vpack.c.b16 %v793, %v789
    %v930 = vpack.c.b16 %v794, %v790
    %v931 = vpack.c.b16 %v795, %v791
    %v932 = vpack.c.b16 %v796, %v792
    %v933 = vpack.c.b16 %v801, %v797
    %v934 = vpack.c.b16 %v802, %v798
    %v935 = vpack.c.b16 %v803, %v799
    %v936 = vpack.c.b16 %v804, %v800
    %v937 = vpack.c.b16 %v809, %v805
    %v938 = vpack.c.b16 %v810, %v806
    %v939 = vpack.c.b16 %v811, %v807
    %v940 = vpack.c.b16 %v812, %v808
    %1069 = vmatprep.subr.bf16.mxu0 %v814
    %1070 = vmatpush1.bf16.msra.mxu0 %v813
    %1071 = vmatprep.subr.bf16.mxu0 %v818
    %1072 = vmatpush1.bf16.msra.mxu0 %v817
    %1073 = vmatprep.subr.bf16.mxu0 %v822
    %1074 = vmatpush1.bf16.msra.mxu0 %v821
    %1075 = vmatprep.subr.bf16.mxu0 %v826
    %1076 = vmatpush1.bf16.msra.mxu0 %v825
    %1077 = vmatprep.subr.bf16.mxu0 %v830
    %1078 = vmatpush1.bf16.msra.mxu0 %v829
    %1079 = vmatprep.subr.bf16.mxu0 %v834
    %1080 = vmatpush1.bf16.msra.mxu0 %v833
    %1081 = vmatprep.subr.bf16.mxu0 %v838
    %1082 = vmatpush1.bf16.msra.mxu0 %v837
    %1083 = vmatprep.subr.bf16.mxu0 %v842
    %1084 = vmatpush1.bf16.msra.mxu0 %v841
    %1085 = vmatprep.subr.bf16.mxu0 %v846
    %1086 = vmatpush1.bf16.msra.mxu0 %v845
    %1087 = vmatprep.subr.bf16.mxu0 %v850
    %1088 = vmatpush1.bf16.msra.mxu0 %v849
    %1089 = vmatprep.subr.bf16.mxu0 %v854
    %1090 = vmatpush1.bf16.msra.mxu0 %v853
    %1091 = vmatprep.subr.bf16.mxu0 %v858
    %1092 = vmatpush1.bf16.msra.mxu0 %v857
    %1093 = vmatprep.subr.bf16.mxu0 %v862
    %1094 = vmatpush1.bf16.msra.mxu0 %v861
    %1095 = vmatprep.subr.bf16.mxu0 %v866
    %1096 = vmatpush1.bf16.msra.mxu0 %v865
    %1097 = vmatprep.subr.bf16.mxu0 %v870
    %1098 = vmatpush1.bf16.msra.mxu0 %v869
    %1099 = vmatprep.subr.bf16.mxu0 %v874
    %1100 = vmatpush1.bf16.msra.mxu0 %v873
    %1101 = vmatprep.mubr.bf16.mxu0 %v275
    %1102 = vmatmul.mubr.bf16.gmra.mrb[0].mxu0 %v274
    %v1103 = vpop.f32.mrb[0].mxu0
    %v1104 = vadd.f32 %v412, %v1103
    %v1105 = vpop.f32.mrb[0].mxu0
    %v1106 = vadd.f32 %v416, %v1105
    %v1107 = vpop.f32.mrb[0].mxu0
    %v1108 = vpop.f32.mrb[0].mxu0
    %1109 = vdwg.mxu0
    %1110 = vmatprep.subr.bf16.mxu0 %v878
    %1111 = vmatpush1.bf16.msra.mxu0 %v877
    %1112 = vmatprep.subr.bf16.mxu0 %v882
    %1113 = vmatpush1.bf16.msra.mxu0 %v881
    %1114 = vmatprep.subr.bf16.mxu0 %v886
    %1115 = vmatpush1.bf16.msra.mxu0 %v885
    %1116 = vmatprep.subr.bf16.mxu0 %v890
    %1117 = vmatpush1.bf16.msra.mxu0 %v889
    %1118 = vmatprep.subr.bf16.mxu0 %v894
    %1119 = vmatpush1.bf16.msra.mxu0 %v893
    %1120 = vmatprep.subr.bf16.mxu0 %v898
    %1121 = vmatpush1.bf16.msra.mxu0 %v897
    %1122 = vmatprep.subr.bf16.mxu0 %v902
    %1123 = vmatpush1.bf16.msra.mxu0 %v901
    %1124 = vmatprep.subr.bf16.mxu0 %v906
    %1125 = vmatpush1.bf16.msra.mxu0 %v905
    %1126 = vmatprep.subr.bf16.mxu0 %v910
    %1127 = vmatpush1.bf16.msra.mxu0 %v909
    %1128 = vmatprep.subr.bf16.mxu0 %v914
    %1129 = vmatpush1.bf16.msra.mxu0 %v913
    %1130 = vmatprep.subr.bf16.mxu0 %v918
    %1131 = vmatpush1.bf16.msra.mxu0 %v917
    %1132 = vmatprep.subr.bf16.mxu0 %v922
    %1133 = vmatpush1.bf16.msra.mxu0 %v921
    %1134 = vmatprep.subr.bf16.mxu0 %v926
    %1135 = vmatpush1.bf16.msra.mxu0 %v925
    %1136 = vmatprep.subr.bf16.mxu0 %v930
    %1137 = vmatpush1.bf16.msra.mxu0 %v929
    %1138 = vmatprep.subr.bf16.mxu0 %v934
    %1139 = vmatpush1.bf16.msra.mxu0 %v933
    %1140 = vmatprep.subr.bf16.mxu0 %v938
    %1141 = vmatpush1.bf16.msra.mxu0 %v937
    %1142 = vmatprep.mubr.bf16.mxu0 %v277
    %1143 = vmatmul.mubr.bf16.gmra.mrb[0].mxu0 %v276
    %v1144 = vpop.f32.mrb[0].mxu0
    %v1145 = vadd.f32 %v1104, %v1144
    %v1146 = vpop.f32.mrb[0].mxu0
    %v1147 = vadd.f32 %v1106, %v1146
    %v1148 = vpop.f32.mrb[0].mxu0
    %v1149 = vpop.f32.mrb[0].mxu0
    %1150 = vdwg.mxu0
    %1151 = vmatprep.subr.bf16.mxu0 %v816
    %1152 = vmatpush1.bf16.msra.mxu0 %v815
    %1153 = vmatprep.subr.bf16.mxu0 %v820
    %1154 = vmatpush1.bf16.msra.mxu0 %v819
    %1155 = vmatprep.subr.bf16.mxu0 %v824
    %1156 = vmatpush1.bf16.msra.mxu0 %v823
    %1157 = vmatprep.subr.bf16.mxu0 %v828
    %1158 = vmatpush1.bf16.msra.mxu0 %v827
    %1159 = vmatprep.subr.bf16.mxu0 %v832
    %1160 = vmatpush1.bf16.msra.mxu0 %v831
    %1161 = vmatprep.subr.bf16.mxu0 %v836
    %1162 = vmatpush1.bf16.msra.mxu0 %v835
    %1163 = vmatprep.subr.bf16.mxu0 %v840
    %1164 = vmatpush1.bf16.msra.mxu0 %v839
    %1165 = vmatprep.subr.bf16.mxu0 %v844
    %1166 = vmatpush1.bf16.msra.mxu0 %v843
    %1167 = vmatprep.subr.bf16.mxu0 %v848
    %1168 = vmatpush1.bf16.msra.mxu0 %v847
    %1169 = vmatprep.subr.bf16.mxu0 %v852
    %1170 = vmatpush1.bf16.msra.mxu0 %v851
    %1171 = vmatprep.subr.bf16.mxu0 %v856
    %1172 = vmatpush1.bf16.msra.mxu0 %v855
    %1173 = vmatprep.subr.bf16.mxu0 %v860
    %1174 = vmatpush1.bf16.msra.mxu0 %v859
    %1175 = vmatprep.subr.bf16.mxu0 %v864
    %1176 = vmatpush1.bf16.msra.mxu0 %v863
    %1177 = vmatprep.subr.bf16.mxu0 %v868
    %1178 = vmatpush1.bf16.msra.mxu0 %v867
    %1179 = vmatprep.subr.bf16.mxu0 %v872
    %1180 = vmatpush1.bf16.msra.mxu0 %v871
    %1181 = vmatprep.subr.bf16.mxu0 %v876
    %1182 = vmatpush1.bf16.msra.mxu0 %v875
    %1183 = vmatprep.mubr.bf16.mxu0 %v275
    %1184 = vmatmul.mubr.bf16.gmra.mrb[0].mxu0 %v274
    %v1185 = vpop.f32.mrb[0].mxu0
    %v1186 = vadd.f32 %v420, %v1185
    %v1187 = vpop.f32.mrb[0].mxu0
    %v1188 = vadd.f32 %v424, %v1187
    %v1189 = vpop.f32.mrb[0].mxu0
    %v1190 = vpop.f32.mrb[0].mxu0
    %1191 = vdwg.mxu0
    %1192 = vmatprep.subr.bf16.mxu0 %v880
    %1193 = vmatpush1.bf16.msra.mxu0 %v879
    %1194 = vmatprep.subr.bf16.mxu0 %v884
    %1195 = vmatpush1.bf16.msra.mxu0 %v883
    %1196 = vmatprep.subr.bf16.mxu0 %v888
    %1197 = vmatpush1.bf16.msra.mxu0 %v887
    %1198 = vmatprep.subr.bf16.mxu0 %v892
    %1199 = vmatpush1.bf16.msra.mxu0 %v891
    %1200 = vmatprep.subr.bf16.mxu0 %v896
    %1201 = vmatpush1.bf16.msra.mxu0 %v895
    %1202 = vmatprep.subr.bf16.mxu0 %v900
    %1203 = vmatpush1.bf16.msra.mxu0 %v899
    %1204 = vmatprep.subr.bf16.mxu0 %v904
    %1205 = vmatpush1.bf16.msra.mxu0 %v903
    %1206 = vmatprep.subr.bf16.mxu0 %v908
    %1207 = vmatpush1.bf16.msra.mxu0 %v907
    %1208 = vmatprep.subr.bf16.mxu0 %v912
    %1209 = vmatpush1.bf16.msra.mxu0 %v911
    %1210 = vmatprep.subr.bf16.mxu0 %v916
    %1211 = vmatpush1.bf16.msra.mxu0 %v915
    %1212 = vmatprep.subr.bf16.mxu0 %v920
    %1213 = vmatpush1.bf16.msra.mxu0 %v919
    %1214 = vmatprep.subr.bf16.mxu0 %v924
    %1215 = vmatpush1.bf16.msra.mxu0 %v923
    %1216 = vmatprep.subr.bf16.mxu0 %v928
    %1217 = vmatpush1.bf16.msra.mxu0 %v927
    %1218 = vmatprep.subr.bf16.mxu0 %v932
    %1219 = vmatpush1.bf16.msra.mxu0 %v931
    %1220 = vmatprep.subr.bf16.mxu0 %v936
    %1221 = vmatpush1.bf16.msra.mxu0 %v935
    %1222 = vmatprep.subr.bf16.mxu0 %v940
    %1223 = vmatpush1.bf16.msra.mxu0 %v939
    %1224 = vmatprep.mubr.bf16.mxu0 %v277
    %1225 = vmatmul.mubr.bf16.gmra.mrb[0].mxu0 %v276
    %v1226 = vpop.f32.mrb[0].mxu0
    %v1227 = vadd.f32 %v1186, %v1226
    %v1228 = vpop.f32.mrb[0].mxu0
    %v1229 = vadd.f32 %v1188, %v1228
    %v1230 = vpop.f32.mrb[0].mxu0
    %v1231 = vpop.f32.mrb[0].mxu0
    %1232 = vdwg.mxu0
    %s1233 = scalar_lea.vmem [#allocation10], 2
    %v1234 = vld [vmem:[%s1233] ss:$8 sm:$0xf]
    %s1235 = scalar_lea.vmem [#allocation10], 3
    %v1236 = vld [vmem:[%s1235] ss:$8 sm:$0xf]
    %v1237 = vadd.f32 %v1145, %v1147
    %v1238 = vadd.f32 %v1237, %v1227
    %v1239 = vadd.f32 %v1238, %v1229
    %1240 = vadd.xlane.f32.xlu0 %v1239
    %v1241 = vpop.xlane.xlu0 %1240
    %v1242 = vrcp.pop 512.0
    %v1243 = vmul.f32 %v1241, %v1242
    %v1244 = vmul.f32 %v1145, %v1145
    %v1245 = vmul.f32 %v1147, %v1147
    %v1246 = vmul.f32 %v1227, %v1227
    %v1247 = vmul.f32 %v1229, %v1229
    %v1248 = vadd.f32 %v1244, %v1245
    %v1249 = vadd.f32 %v1248, %v1246
    %v1250 = vadd.f32 %v1249, %v1247
    %1251 = vadd.xlane.f32.xlu0 %v1250
    %v1252 = vpop.xlane.xlu0 %1251
    %v1253 = vmul.f32 %v1252, %v1242
    %v1254 = vmul.f32 %v1243, %v1243
    %v1255 = vsub.f32 %v1253, %v1254
    %v1256 = vadd.f32 %v1255, 1e-05
    %v1257 = vrsqrt.pop %v1256
    %v1259 = vlaneseq
    %v1260 = vshrl.u32 %v1259, 7
    %v1261 = vsub.s32 0, %v1260
    %v1262 = vrot.slane %v1234, %v1261
    %v1263 = vlaneseq
    %v1264 = vshrl.u32 %v1263, 7
    %v1265 = vsub.s32 1, %v1264
    %v1266 = vrot.slane %v1234, %v1265
    %v1267 = vlaneseq
    %v1268 = vshrl.u32 %v1267, 7
    %v1269 = vsub.s32 2, %v1268
    %v1270 = vrot.slane %v1234, %v1269
    %v1271 = vlaneseq
    %v1272 = vshrl.u32 %v1271, 7
    %v1273 = vsub.s32 3, %v1272
    %v1274 = vrot.slane %v1234, %v1273
    %v1279 = vmul.f32 %v1257, %v1262
    %v1280 = vmul.f32 %v1257, %v1266
    %v1281 = vmul.f32 %v1257, %v1270
    %v1282 = vmul.f32 %v1257, %v1274
    %v1283 = vmul.f32 %v1145, %v1279
    %v1284 = vmul.f32 %v1147, %v1280
    %v1285 = vmul.f32 %v1227, %v1281
    %v1286 = vmul.f32 %v1229, %v1282
    %v1287 = vmul.f32 %v1243, %v1279
    %v1288 = vmul.f32 %v1243, %v1280
    %v1289 = vmul.f32 %v1243, %v1281
    %v1290 = vmul.f32 %v1243, %v1282
    %v1292 = vlaneseq
    %v1293 = vshrl.u32 %v1292, 7
    %v1294 = vsub.s32 0, %v1293
    %v1295 = vrot.slane %v1236, %v1294
    %v1296 = vlaneseq
    %v1297 = vshrl.u32 %v1296, 7
    %v1298 = vsub.s32 1, %v1297
    %v1299 = vrot.slane %v1236, %v1298
    %v1300 = vlaneseq
    %v1301 = vshrl.u32 %v1300, 7
    %v1302 = vsub.s32 2, %v1301
    %v1303 = vrot.slane %v1236, %v1302
    %v1304 = vlaneseq
    %v1305 = vshrl.u32 %v1304, 7
    %v1306 = vsub.s32 3, %v1305
    %v1307 = vrot.slane %v1236, %v1306
    %v1312 = vsub.f32 %v1295, %v1287
    %v1313 = vsub.f32 %v1299, %v1288
    %v1314 = vsub.f32 %v1303, %v1289
    %v1315 = vsub.f32 %v1307, %v1290
    %v1316 = vadd.f32 %v1283, %v1312
    %v1317 = vadd.f32 %v1284, %v1313
    %v1318 = vadd.f32 %v1285, %v1314
    %v1319 = vadd.f32 %v1286, %v1315
    %v1320 = vmul.f32 %v1316, 0.5
    %v1321 = vmul.f32 %v1317, 0.5
    %v1322 = vmul.f32 %v1318, 0.5
    %v1323 = vmul.f32 %v1319, 0.5
    %v1324 = vmul.f32 %v1316, %v1316
    %v1325 = vmul.f32 %v1317, %v1317
    %v1326 = vmul.f32 %v1318, %v1318
    %v1327 = vmul.f32 %v1319, %v1319
    %v1328 = vmul.f32 %v1324, %v1316
    %v1329 = vmul.f32 %v1325, %v1317
    %v1330 = vmul.f32 %v1326, %v1318
    %v1331 = vmul.f32 %v1327, %v1319
    %v1332 = vmul.f32 %v1328, 0.044715
    %v1333 = vmul.f32 %v1329, 0.044715
    %v1334 = vmul.f32 %v1330, 0.044715
    %v1335 = vmul.f32 %v1331, 0.044715
    %v1336 = vadd.f32 %v1316, %v1332
    %v1337 = vadd.f32 %v1317, %v1333
    %v1338 = vadd.f32 %v1318, %v1334
    %v1339 = vadd.f32 %v1319, %v1335
    %v1340 = vmul.f32 %v1336, 0.7978846
    %v1341 = vmul.f32 %v1337, 0.7978846
    %v1342 = vmul.f32 %v1338, 0.7978846
    %v1343 = vmul.f32 %v1339, 0.7978846
    %v1344 = vtanh.pop %v1340
    %v1345 = vtanh.pop %v1341
    %v1346 = vtanh.pop %v1342
    %v1347 = vtanh.pop %v1343
    %v1348 = vadd.f32 %v1344, 1.0
    %v1349 = vadd.f32 %v1345, 1.0
    %v1350 = vadd.f32 %v1346, 1.0
    %v1351 = vadd.f32 %v1347, 1.0
    %v1352 = vmul.f32 %v1320, %v1348
    %v1353 = vmul.f32 %v1321, %v1349
    %v1354 = vmul.f32 %v1322, %v1350
    %v1355 = vmul.f32 %v1323, %v1351
    %v1356 = vpack.c.bf16 %v1352, %v1352
    %v1357 = vpack.c.bf16 %v1353, %v1353
    %v1358 = vpack.c.bf16 %v1354, %v1354
    %v1359 = vpack.c.bf16 %v1355, %v1355
    %s1360 = scalar_lea.vmem [#allocation6], 1024
    %v1361 = vld [vmem:[%s1360] sm:$0xff]
    %v1362 = vld [vmem:[%s1360 + $0x8] sm:$0xff]
    %v1363 = vld [vmem:[%s1360 + $0x10] sm:$0xff]
    %v1364 = vld [vmem:[%s1360 + $0x18] sm:$0xff]
    %v1365 = vld [vmem:[%s1360 + $0x20] sm:$0xff]
    %v1366 = vld [vmem:[%s1360 + $0x28] sm:$0xff]
    %v1367 = vld [vmem:[%s1360 + $0x30] sm:$0xff]
    %v1368 = vld [vmem:[%s1360 + $0x38] sm:$0xff]
    %v1369 = vld [vmem:[%s1360 + $0x40] sm:$0xff]
    %v1370 = vld [vmem:[%s1360 + $0x48] sm:$0xff]
    %v1371 = vld [vmem:[%s1360 + $0x50] sm:$0xff]
    %v1372 = vld [vmem:[%s1360 + $0x58] sm:$0xff]
    %v1373 = vld [vmem:[%s1360 + $0x60] sm:$0xff]
    %v1374 = vld [vmem:[%s1360 + $0x68] sm:$0xff]
    %v1375 = vld [vmem:[%s1360 + $0x70] sm:$0xff]
    %v1376 = vld [vmem:[%s1360 + $0x78] sm:$0xff]
    %v1377 = vld [vmem:[%s1360 + $0x80] sm:$0xff]
    %v1378 = vld [vmem:[%s1360 + $0x88] sm:$0xff]
    %v1379 = vld [vmem:[%s1360 + $0x90] sm:$0xff]
    %v1380 = vld [vmem:[%s1360 + $0x98] sm:$0xff]
    %v1381 = vld [vmem:[%s1360 + $0xa0] sm:$0xff]
    %v1382 = vld [vmem:[%s1360 + $0xa8] sm:$0xff]
    %v1383 = vld [vmem:[%s1360 + $0xb0] sm:$0xff]
    %v1384 = vld [vmem:[%s1360 + $0xb8] sm:$0xff]
    %v1385 = vld [vmem:[%s1360 + $0xc0] sm:$0xff]
    %v1386 = vld [vmem:[%s1360 + $0xc8] sm:$0xff]
    %v1387 = vld [vmem:[%s1360 + $0xd0] sm:$0xff]
    %v1388 = vld [vmem:[%s1360 + $0xd8] sm:$0xff]
    %v1389 = vld [vmem:[%s1360 + $0xe0] sm:$0xff]
    %v1390 = vld [vmem:[%s1360 + $0xe8] sm:$0xff]
    %v1391 = vld [vmem:[%s1360 + $0xf0] sm:$0xff]
    %v1392 = vld [vmem:[%s1360 + $0xf8] sm:$0xff]
    %v1393 = vld [vmem:[%s1360 + $0x100] sm:$0xff]
    %v1394 = vld [vmem:[%s1360 + $0x108] sm:$0xff]
    %v1395 = vld [vmem:[%s1360 + $0x110] sm:$0xff]
    %v1396 = vld [vmem:[%s1360 + $0x118] sm:$0xff]
    %v1397 = vld [vmem:[%s1360 + $0x120] sm:$0xff]
    %v1398 = vld [vmem:[%s1360 + $0x128] sm:$0xff]
    %v1399 = vld [vmem:[%s1360 + $0x130] sm:$0xff]
    %v1400 = vld [vmem:[%s1360 + $0x138] sm:$0xff]
    %v1401 = vld [vmem:[%s1360 + $0x140] sm:$0xff]
    %v1402 = vld [vmem:[%s1360 + $0x148] sm:$0xff]
    %v1403 = vld [vmem:[%s1360 + $0x150] sm:$0xff]
    %v1404 = vld [vmem:[%s1360 + $0x158] sm:$0xff]
    %v1405 = vld [vmem:[%s1360 + $0x160] sm:$0xff]
    %v1406 = vld [vmem:[%s1360 + $0x168] sm:$0xff]
    %v1407 = vld [vmem:[%s1360 + $0x170] sm:$0xff]
    %v1408 = vld [vmem:[%s1360 + $0x178] sm:$0xff]
    %v1409 = vld [vmem:[%s1360 + $0x180] sm:$0xff]
    %v1410 = vld [vmem:[%s1360 + $0x188] sm:$0xff]
    %v1411 = vld [vmem:[%s1360 + $0x190] sm:$0xff]
    %v1412 = vld [vmem:[%s1360 + $0x198] sm:$0xff]
    %v1413 = vld [vmem:[%s1360 + $0x1a0] sm:$0xff]
    %v1414 = vld [vmem:[%s1360 + $0x1a8] sm:$0xff]
    %v1415 = vld [vmem:[%s1360 + $0x1b0] sm:$0xff]
    %v1416 = vld [vmem:[%s1360 + $0x1b8] sm:$0xff]
    %v1417 = vld [vmem:[%s1360 + $0x1c0] sm:$0xff]
    %v1418 = vld [vmem:[%s1360 + $0x1c8] sm:$0xff]
    %v1419 = vld [vmem:[%s1360 + $0x1d0] sm:$0xff]
    %v1420 = vld [vmem:[%s1360 + $0x1d8] sm:$0xff]
    %v1421 = vld [vmem:[%s1360 + $0x1e0] sm:$0xff]
    %v1422 = vld [vmem:[%s1360 + $0x1e8] sm:$0xff]
    %v1423 = vld [vmem:[%s1360 + $0x1f0] sm:$0xff]
    %v1424 = vld [vmem:[%s1360 + $0x1f8] sm:$0xff]
    %v1425 = vld [vmem:[%s1360 + $0x200] sm:$0xff]
    %v1426 = vld [vmem:[%s1360 + $0x208] sm:$0xff]
    %v1427 = vld [vmem:[%s1360 + $0x210] sm:$0xff]
    %v1428 = vld [vmem:[%s1360 + $0x218] sm:$0xff]
    %v1429 = vld [vmem:[%s1360 + $0x220] sm:$0xff]
    %v1430 = vld [vmem:[%s1360 + $0x228] sm:$0xff]
    %v1431 = vld [vmem:[%s1360 + $0x230] sm:$0xff]
    %v1432 = vld [vmem:[%s1360 + $0x238] sm:$0xff]
    %v1433 = vld [vmem:[%s1360 + $0x240] sm:$0xff]
    %v1434 = vld [vmem:[%s1360 + $0x248] sm:$0xff]
    %v1435 = vld [vmem:[%s1360 + $0x250] sm:$0xff]
    %v1436 = vld [vmem:[%s1360 + $0x258] sm:$0xff]
    %v1437 = vld [vmem:[%s1360 + $0x260] sm:$0xff]
    %v1438 = vld [vmem:[%s1360 + $0x268] sm:$0xff]
    %v1439 = vld [vmem:[%s1360 + $0x270] sm:$0xff]
    %v1440 = vld [vmem:[%s1360 + $0x278] sm:$0xff]
    %v1441 = vld [vmem:[%s1360 + $0x280] sm:$0xff]
    %v1442 = vld [vmem:[%s1360 + $0x288] sm:$0xff]
    %v1443 = vld [vmem:[%s1360 + $0x290] sm:$0xff]
    %v1444 = vld [vmem:[%s1360 + $0x298] sm:$0xff]
    %v1445 = vld [vmem:[%s1360 + $0x2a0] sm:$0xff]
    %v1446 = vld [vmem:[%s1360 + $0x2a8] sm:$0xff]
    %v1447 = vld [vmem:[%s1360 + $0x2b0] sm:$0xff]
    %v1448 = vld [vmem:[%s1360 + $0x2b8] sm:$0xff]
    %v1449 = vld [vmem:[%s1360 + $0x2c0] sm:$0xff]
    %v1450 = vld [vmem:[%s1360 + $0x2c8] sm:$0xff]
    %v1451 = vld [vmem:[%s1360 + $0x2d0] sm:$0xff]
    %v1452 = vld [vmem:[%s1360 + $0x2d8] sm:$0xff]
    %v1453 = vld [vmem:[%s1360 + $0x2e0] sm:$0xff]
    %v1454 = vld [vmem:[%s1360 + $0x2e8] sm:$0xff]
    %v1455 = vld [vmem:[%s1360 + $0x2f0] sm:$0xff]
    %v1456 = vld [vmem:[%s1360 + $0x2f8] sm:$0xff]
    %v1457 = vld [vmem:[%s1360 + $0x300] sm:$0xff]
    %v1458 = vld [vmem:[%s1360 + $0x308] sm:$0xff]
    %v1459 = vld [vmem:[%s1360 + $0x310] sm:$0xff]
    %v1460 = vld [vmem:[%s1360 + $0x318] sm:$0xff]
    %v1461 = vld [vmem:[%s1360 + $0x320] sm:$0xff]
    %v1462 = vld [vmem:[%s1360 + $0x328] sm:$0xff]
    %v1463 = vld [vmem:[%s1360 + $0x330] sm:$0xff]
    %v1464 = vld [vmem:[%s1360 + $0x338] sm:$0xff]
    %v1465 = vld [vmem:[%s1360 + $0x340] sm:$0xff]
    %v1466 = vld [vmem:[%s1360 + $0x348] sm:$0xff]
    %v1467 = vld [vmem:[%s1360 + $0x350] sm:$0xff]
    %v1468 = vld [vmem:[%s1360 + $0x358] sm:$0xff]
    %v1469 = vld [vmem:[%s1360 + $0x360] sm:$0xff]
    %v1470 = vld [vmem:[%s1360 + $0x368] sm:$0xff]
    %v1471 = vld [vmem:[%s1360 + $0x370] sm:$0xff]
    %v1472 = vld [vmem:[%s1360 + $0x378] sm:$0xff]
    %v1473 = vld [vmem:[%s1360 + $0x380] sm:$0xff]
    %v1474 = vld [vmem:[%s1360 + $0x388] sm:$0xff]
    %v1475 = vld [vmem:[%s1360 + $0x390] sm:$0xff]
    %v1476 = vld [vmem:[%s1360 + $0x398] sm:$0xff]
    %v1477 = vld [vmem:[%s1360 + $0x3a0] sm:$0xff]
    %v1478 = vld [vmem:[%s1360 + $0x3a8] sm:$0xff]
    %v1479 = vld [vmem:[%s1360 + $0x3b0] sm:$0xff]
    %v1480 = vld [vmem:[%s1360 + $0x3b8] sm:$0xff]
    %v1481 = vld [vmem:[%s1360 + $0x3c0] sm:$0xff]
    %v1482 = vld [vmem:[%s1360 + $0x3c8] sm:$0xff]
    %v1483 = vld [vmem:[%s1360 + $0x3d0] sm:$0xff]
    %v1484 = vld [vmem:[%s1360 + $0x3d8] sm:$0xff]
    %v1485 = vld [vmem:[%s1360 + $0x3e0] sm:$0xff]
    %v1486 = vld [vmem:[%s1360 + $0x3e8] sm:$0xff]
    %v1487 = vld [vmem:[%s1360 + $0x3f0] sm:$0xff]
    %v1488 = vld [vmem:[%s1360 + $0x3f8] sm:$0xff]
    %s1489 = scalar_lea.vmem [#allocation10], 4
    %v1490 = vld [vmem:[%s1489] ss:$8 sm:$0xf]
    %v1492 = vlaneseq
    %v1493 = vshrl.u32 %v1492, 7
    %v1494 = vsub.s32 0, %v1493
    %v1495 = vrot.slane %v1490, %v1494
    %v1496 = vlaneseq
    %v1497 = vshrl.u32 %v1496, 7
    %v1498 = vsub.s32 1, %v1497
    %v1499 = vrot.slane %v1490, %v1498
    %v1500 = vlaneseq
    %v1501 = vshrl.u32 %v1500, 7
    %v1502 = vsub.s32 2, %v1501
    %v1503 = vrot.slane %v1490, %v1502
    %v1504 = vlaneseq
    %v1505 = vshrl.u32 %v1504, 7
    %v1506 = vsub.s32 3, %v1505
    %v1507 = vrot.slane %v1490, %v1506
    %v1640 = vunpack.c.l.b16 %v1361
    %v1641 = vunpack.c.h.b16 %v1361
    %v1642 = vunpack.c.l.b16 %v1362
    %v1643 = vunpack.c.h.b16 %v1362
    %v1644 = vunpack.c.l.b16 %v1363
    %v1645 = vunpack.c.h.b16 %v1363
    %v1646 = vunpack.c.l.b16 %v1364
    %v1647 = vunpack.c.h.b16 %v1364
    %v1648 = vunpack.c.l.b16 %v1365
    %v1649 = vunpack.c.h.b16 %v1365
    %v1650 = vunpack.c.l.b16 %v1366
    %v1651 = vunpack.c.h.b16 %v1366
    %v1652 = vunpack.c.l.b16 %v1367
    %v1653 = vunpack.c.h.b16 %v1367
    %v1654 = vunpack.c.l.b16 %v1368
    %v1655 = vunpack.c.h.b16 %v1368
    %v1656 = vunpack.c.l.b16 %v1369
    %v1657 = vunpack.c.h.b16 %v1369
    %v1658 = vunpack.c.l.b16 %v1370
    %v1659 = vunpack.c.h.b16 %v1370
    %v1660 = vunpack.c.l.b16 %v1371
    %v1661 = vunpack.c.h.b16 %v1371
    %v1662 = vunpack.c.l.b16 %v1372
    %v1663 = vunpack.c.h.b16 %v1372
    %v1664 = vunpack.c.l.b16 %v1373
    %v1665 = vunpack.c.h.b16 %v1373
    %v1666 = vunpack.c.l.b16 %v1374
    %v1667 = vunpack.c.h.b16 %v1374
    %v1668 = vunpack.c.l.b16 %v1375
    %v1669 = vunpack.c.h.b16 %v1375
    %v1670 = vunpack.c.l.b16 %v1376
    %v1671 = vunpack.c.h.b16 %v1376
    %v1672 = vunpack.c.l.b16 %v1377
    %v1673 = vunpack.c.h.b16 %v1377
    %v1674 = vunpack.c.l.b16 %v1378
    %v1675 = vunpack.c.h.b16 %v1378
    %v1676 = vunpack.c.l.b16 %v1379
    %v1677 = vunpack.c.h.b16 %v1379
    %v1678 = vunpack.c.l.b16 %v1380
    %v1679 = vunpack.c.h.b16 %v1380
    %v1680 = vunpack.c.l.b16 %v1381
    %v1681 = vunpack.c.h.b16 %v1381
    %v1682 = vunpack.c.l.b16 %v1382
    %v1683 = vunpack.c.h.b16 %v1382
    %v1684 = vunpack.c.l.b16 %v1383
    %v1685 = vunpack.c.h.b16 %v1383
    %v1686 = vunpack.c.l.b16 %v1384
    %v1687 = vunpack.c.h.b16 %v1384
    %v1688 = vunpack.c.l.b16 %v1385
    %v1689 = vunpack.c.h.b16 %v1385
    %v1690 = vunpack.c.l.b16 %v1386
    %v1691 = vunpack.c.h.b16 %v1386
    %v1692 = vunpack.c.l.b16 %v1387
    %v1693 = vunpack.c.h.b16 %v1387
    %v1694 = vunpack.c.l.b16 %v1388
    %v1695 = vunpack.c.h.b16 %v1388
    %v1696 = vunpack.c.l.b16 %v1389
    %v1697 = vunpack.c.h.b16 %v1389
    %v1698 = vunpack.c.l.b16 %v1390
    %v1699 = vunpack.c.h.b16 %v1390
    %v1700 = vunpack.c.l.b16 %v1391
    %v1701 = vunpack.c.h.b16 %v1391
    %v1702 = vunpack.c.l.b16 %v1392
    %v1703 = vunpack.c.h.b16 %v1392
    %v1704 = vunpack.c.l.b16 %v1393
    %v1705 = vunpack.c.h.b16 %v1393
    %v1706 = vunpack.c.l.b16 %v1394
    %v1707 = vunpack.c.h.b16 %v1394
    %v1708 = vunpack.c.l.b16 %v1395
    %v1709 = vunpack.c.h.b16 %v1395
    %v1710 = vunpack.c.l.b16 %v1396
    %v1711 = vunpack.c.h.b16 %v1396
    %v1712 = vunpack.c.l.b16 %v1397
    %v1713 = vunpack.c.h.b16 %v1397
    %v1714 = vunpack.c.l.b16 %v1398
    %v1715 = vunpack.c.h.b16 %v1398
    %v1716 = vunpack.c.l.b16 %v1399
    %v1717 = vunpack.c.h.b16 %v1399
    %v1718 = vunpack.c.l.b16 %v1400
    %v1719 = vunpack.c.h.b16 %v1400
    %v1720 = vunpack.c.l.b16 %v1401
    %v1721 = vunpack.c.h.b16 %v1401
    %v1722 = vunpack.c.l.b16 %v1402
    %v1723 = vunpack.c.h.b16 %v1402
    %v1724 = vunpack.c.l.b16 %v1403
    %v1725 = vunpack.c.h.b16 %v1403
    %v1726 = vunpack.c.l.b16 %v1404
    %v1727 = vunpack.c.h.b16 %v1404
    %v1728 = vunpack.c.l.b16 %v1405
    %v1729 = vunpack.c.h.b16 %v1405
    %v1730 = vunpack.c.l.b16 %v1406
    %v1731 = vunpack.c.h.b16 %v1406
    %v1732 = vunpack.c.l.b16 %v1407
    %v1733 = vunpack.c.h.b16 %v1407
    %v1734 = vunpack.c.l.b16 %v1408
    %v1735 = vunpack.c.h.b16 %v1408
    %v1736 = vunpack.c.l.b16 %v1409
    %v1737 = vunpack.c.h.b16 %v1409
    %v1738 = vunpack.c.l.b16 %v1410
    %v1739 = vunpack.c.h.b16 %v1410
    %v1740 = vunpack.c.l.b16 %v1411
    %v1741 = vunpack.c.h.b16 %v1411
    %v1742 = vunpack.c.l.b16 %v1412
    %v1743 = vunpack.c.h.b16 %v1412
    %v1744 = vunpack.c.l.b16 %v1413
    %v1745 = vunpack.c.h.b16 %v1413
    %v1746 = vunpack.c.l.b16 %v1414
    %v1747 = vunpack.c.h.b16 %v1414
    %v1748 = vunpack.c.l.b16 %v1415
    %v1749 = vunpack.c.h.b16 %v1415
    %v1750 = vunpack.c.l.b16 %v1416
    %v1751 = vunpack.c.h.b16 %v1416
    %v1752 = vunpack.c.l.b16 %v1417
    %v1753 = vunpack.c.h.b16 %v1417
    %v1754 = vunpack.c.l.b16 %v1418
    %v1755 = vunpack.c.h.b16 %v1418
    %v1756 = vunpack.c.l.b16 %v1419
    %v1757 = vunpack.c.h.b16 %v1419
    %v1758 = vunpack.c.l.b16 %v1420
    %v1759 = vunpack.c.h.b16 %v1420
    %v1760 = vunpack.c.l.b16 %v1421
    %v1761 = vunpack.c.h.b16 %v1421
    %v1762 = vunpack.c.l.b16 %v1422
    %v1763 = vunpack.c.h.b16 %v1422
    %v1764 = vunpack.c.l.b16 %v1423
    %v1765 = vunpack.c.h.b16 %v1423
    %v1766 = vunpack.c.l.b16 %v1424
    %v1767 = vunpack.c.h.b16 %v1424
    %v1768 = vunpack.c.l.b16 %v1425
    %v1769 = vunpack.c.h.b16 %v1425
    %v1770 = vunpack.c.l.b16 %v1426
    %v1771 = vunpack.c.h.b16 %v1426
    %v1772 = vunpack.c.l.b16 %v1427
    %v1773 = vunpack.c.h.b16 %v1427
    %v1774 = vunpack.c.l.b16 %v1428
    %v1775 = vunpack.c.h.b16 %v1428
    %v1776 = vunpack.c.l.b16 %v1429
    %v1777 = vunpack.c.h.b16 %v1429
    %v1778 = vunpack.c.l.b16 %v1430
    %v1779 = vunpack.c.h.b16 %v1430
    %v1780 = vunpack.c.l.b16 %v1431
    %v1781 = vunpack.c.h.b16 %v1431
    %v1782 = vunpack.c.l.b16 %v1432
    %v1783 = vunpack.c.h.b16 %v1432
    %v1784 = vunpack.c.l.b16 %v1433
    %v1785 = vunpack.c.h.b16 %v1433
    %v1786 = vunpack.c.l.b16 %v1434
    %v1787 = vunpack.c.h.b16 %v1434
    %v1788 = vunpack.c.l.b16 %v1435
    %v1789 = vunpack.c.h.b16 %v1435
    %v1790 = vunpack.c.l.b16 %v1436
    %v1791 = vunpack.c.h.b16 %v1436
    %v1792 = vunpack.c.l.b16 %v1437
    %v1793 = vunpack.c.h.b16 %v1437
    %v1794 = vunpack.c.l.b16 %v1438
    %v1795 = vunpack.c.h.b16 %v1438
    %v1796 = vunpack.c.l.b16 %v1439
    %v1797 = vunpack.c.h.b16 %v1439
    %v1798 = vunpack.c.l.b16 %v1440
    %v1799 = vunpack.c.h.b16 %v1440
    %v1800 = vunpack.c.l.b16 %v1441
    %v1801 = vunpack.c.h.b16 %v1441
    %v1802 = vunpack.c.l.b16 %v1442
    %v1803 = vunpack.c.h.b16 %v1442
    %v1804 = vunpack.c.l.b16 %v1443
    %v1805 = vunpack.c.h.b16 %v1443
    %v1806 = vunpack.c.l.b16 %v1444
    %v1807 = vunpack.c.h.b16 %v1444
    %v1808 = vunpack.c.l.b16 %v1445
    %v1809 = vunpack.c.h.b16 %v1445
    %v1810 = vunpack.c.l.b16 %v1446
    %v1811 = vunpack.c.h.b16 %v1446
    %v1812 = vunpack.c.l.b16 %v1447
    %v1813 = vunpack.c.h.b16 %v1447
    %v1814 = vunpack.c.l.b16 %v1448
    %v1815 = vunpack.c.h.b16 %v1448
    %v1816 = vunpack.c.l.b16 %v1449
    %v1817 = vunpack.c.h.b16 %v1449
    %v1818 = vunpack.c.l.b16 %v1450
    %v1819 = vunpack.c.h.b16 %v1450
    %v1820 = vunpack.c.l.b16 %v1451
    %v1821 = vunpack.c.h.b16 %v1451
    %v1822 = vunpack.c.l.b16 %v1452
    %v1823 = vunpack.c.h.b16 %v1452
    %v1824 = vunpack.c.l.b16 %v1453
    %v1825 = vunpack.c.h.b16 %v1453
    %v1826 = vunpack.c.l.b16 %v1454
    %v1827 = vunpack.c.h.b16 %v1454
    %v1828 = vunpack.c.l.b16 %v1455
    %v1829 = vunpack.c.h.b16 %v1455
    %v1830 = vunpack.c.l.b16 %v1456
    %v1831 = vunpack.c.h.b16 %v1456
    %v1832 = vunpack.c.l.b16 %v1457
    %v1833 = vunpack.c.h.b16 %v1457
    %v1834 = vunpack.c.l.b16 %v1458
    %v1835 = vunpack.c.h.b16 %v1458
    %v1836 = vunpack.c.l.b16 %v1459
    %v1837 = vunpack.c.h.b16 %v1459
    %v1838 = vunpack.c.l.b16 %v1460
    %v1839 = vunpack.c.h.b16 %v1460
    %v1840 = vunpack.c.l.b16 %v1461
    %v1841 = vunpack.c.h.b16 %v1461
    %v1842 = vunpack.c.l.b16 %v1462
    %v1843 = vunpack.c.h.b16 %v1462
    %v1844 = vunpack.c.l.b16 %v1463
    %v1845 = vunpack.c.h.b16 %v1463
    %v1846 = vunpack.c.l.b16 %v1464
    %v1847 = vunpack.c.h.b16 %v1464
    %v1848 = vunpack.c.l.b16 %v1465
    %v1849 = vunpack.c.h.b16 %v1465
    %v1850 = vunpack.c.l.b16 %v1466
    %v1851 = vunpack.c.h.b16 %v1466
    %v1852 = vunpack.c.l.b16 %v1467
    %v1853 = vunpack.c.h.b16 %v1467
    %v1854 = vunpack.c.l.b16 %v1468
    %v1855 = vunpack.c.h.b16 %v1468
    %v1856 = vunpack.c.l.b16 %v1469
    %v1857 = vunpack.c.h.b16 %v1469
    %v1858 = vunpack.c.l.b16 %v1470
    %v1859 = vunpack.c.h.b16 %v1470
    %v1860 = vunpack.c.l.b16 %v1471
    %v1861 = vunpack.c.h.b16 %v1471
    %v1862 = vunpack.c.l.b16 %v1472
    %v1863 = vunpack.c.h.b16 %v1472
    %v1864 = vunpack.c.l.b16 %v1473
    %v1865 = vunpack.c.h.b16 %v1473
    %v1866 = vunpack.c.l.b16 %v1474
    %v1867 = vunpack.c.h.b16 %v1474
    %v1868 = vunpack.c.l.b16 %v1475
    %v1869 = vunpack.c.h.b16 %v1475
    %v1870 = vunpack.c.l.b16 %v1476
    %v1871 = vunpack.c.h.b16 %v1476
    %v1872 = vunpack.c.l.b16 %v1477
    %v1873 = vunpack.c.h.b16 %v1477
    %v1874 = vunpack.c.l.b16 %v1478
    %v1875 = vunpack.c.h.b16 %v1478
    %v1876 = vunpack.c.l.b16 %v1479
    %v1877 = vunpack.c.h.b16 %v1479
    %v1878 = vunpack.c.l.b16 %v1480
    %v1879 = vunpack.c.h.b16 %v1480
    %v1880 = vunpack.c.l.b16 %v1481
    %v1881 = vunpack.c.h.b16 %v1481
    %v1882 = vunpack.c.l.b16 %v1482
    %v1883 = vunpack.c.h.b16 %v1482
    %v1884 = vunpack.c.l.b16 %v1483
    %v1885 = vunpack.c.h.b16 %v1483
    %v1886 = vunpack.c.l.b16 %v1484
    %v1887 = vunpack.c.h.b16 %v1484
    %v1888 = vunpack.c.l.b16 %v1485
    %v1889 = vunpack.c.h.b16 %v1485
    %v1890 = vunpack.c.l.b16 %v1486
    %v1891 = vunpack.c.h.b16 %v1486
    %v1892 = vunpack.c.l.b16 %v1487
    %v1893 = vunpack.c.h.b16 %v1487
    %v1894 = vunpack.c.l.b16 %v1488
    %v1895 = vunpack.c.h.b16 %v1488
    %v1896 = vpack.c.b16 %v1644, %v1640
    %v1897 = vpack.c.b16 %v1645, %v1641
    %v1898 = vpack.c.b16 %v1646, %v1642
    %v1899 = vpack.c.b16 %v1647, %v1643
    %v1900 = vpack.c.b16 %v1652, %v1648
    %v1901 = vpack.c.b16 %v1653, %v1649
    %v1902 = vpack.c.b16 %v1654, %v1650
    %v1903 = vpack.c.b16 %v1655, %v1651
    %v1904 = vpack.c.b16 %v1660, %v1656
    %v1905 = vpack.c.b16 %v1661, %v1657
    %v1906 = vpack.c.b16 %v1662, %v1658
    %v1907 = vpack.c.b16 %v1663, %v1659
    %v1908 = vpack.c.b16 %v1668, %v1664
    %v1909 = vpack.c.b16 %v1669, %v1665
    %v1910 = vpack.c.b16 %v1670, %v1666
    %v1911 = vpack.c.b16 %v1671, %v1667
    %v1912 = vpack.c.b16 %v1676, %v1672
    %v1913 = vpack.c.b16 %v1677, %v1673
    %v1914 = vpack.c.b16 %v1678, %v1674
    %v1915 = vpack.c.b16 %v1679, %v1675
    %v1916 = vpack.c.b16 %v1684, %v1680
    %v1917 = vpack.c.b16 %v1685, %v1681
    %v1918 = vpack.c.b16 %v1686, %v1682
    %v1919 = vpack.c.b16 %v1687, %v1683
    %v1920 = vpack.c.b16 %v1692, %v1688
    %v1921 = vpack.c.b16 %v1693, %v1689
    %v1922 = vpack.c.b16 %v1694, %v1690
    %v1923 = vpack.c.b16 %v1695, %v1691
    %v1924 = vpack.c.b16 %v1700, %v1696
    %v1925 = vpack.c.b16 %v1701, %v1697
    %v1926 = vpack.c.b16 %v1702, %v1698
    %v1927 = vpack.c.b16 %v1703, %v1699
    %v1928 = vpack.c.b16 %v1708, %v1704
    %v1929 = vpack.c.b16 %v1709, %v1705
    %v1930 = vpack.c.b16 %v1710, %v1706
    %v1931 = vpack.c.b16 %v1711, %v1707
    %v1932 = vpack.c.b16 %v1716, %v1712
    %v1933 = vpack.c.b16 %v1717, %v1713
    %v1934 = vpack.c.b16 %v1718, %v1714
    %v1935 = vpack.c.b16 %v1719, %v1715
    %v1936 = vpack.c.b16 %v1724, %v1720
    %v1937 = vpack.c.b16 %v1725, %v1721
    %v1938 = vpack.c.b16 %v1726, %v1722
    %v1939 = vpack.c.b16 %v1727, %v1723
    %v1940 = vpack.c.b16 %v1732, %v1728
    %v1941 = vpack.c.b16 %v1733, %v1729
    %v1942 = vpack.c.b16 %v1734, %v1730
    %v1943 = vpack.c.b16 %v1735, %v1731
    %v1944 = vpack.c.b16 %v1740, %v1736
    %v1945 = vpack.c.b16 %v1741, %v1737
    %v1946 = vpack.c.b16 %v1742, %v1738
    %v1947 = vpack.c.b16 %v1743, %v1739
    %v1948 = vpack.c.b16 %v1748, %v1744
    %v1949 = vpack.c.b16 %v1749, %v1745
    %v1950 = vpack.c.b16 %v1750, %v1746
    %v1951 = vpack.c.b16 %v1751, %v1747
    %v1952 = vpack.c.b16 %v1756, %v1752
    %v1953 = vpack.c.b16 %v1757, %v1753
    %v1954 = vpack.c.b16 %v1758, %v1754
    %v1955 = vpack.c.b16 %v1759, %v1755
    %v1956 = vpack.c.b16 %v1764, %v1760
    %v1957 = vpack.c.b16 %v1765, %v1761
    %v1958 = vpack.c.b16 %v1766, %v1762
    %v1959 = vpack.c.b16 %v1767, %v1763
    %v1960 = vpack.c.b16 %v1772, %v1768
    %v1961 = vpack.c.b16 %v1773, %v1769
    %v1962 = vpack.c.b16 %v1774, %v1770
    %v1963 = vpack.c.b16 %v1775, %v1771
    %v1964 = vpack.c.b16 %v1780, %v1776
    %v1965 = vpack.c.b16 %v1781, %v1777
    %v1966 = vpack.c.b16 %v1782, %v1778
    %v1967 = vpack.c.b16 %v1783, %v1779
    %v1968 = vpack.c.b16 %v1788, %v1784
    %v1969 = vpack.c.b16 %v1789, %v1785
    %v1970 = vpack.c.b16 %v1790, %v1786
    %v1971 = vpack.c.b16 %v1791, %v1787
    %v1972 = vpack.c.b16 %v1796, %v1792
    %v1973 = vpack.c.b16 %v1797, %v1793
    %v1974 = vpack.c.b16 %v1798, %v1794
    %v1975 = vpack.c.b16 %v1799, %v1795
    %v1976 = vpack.c.b16 %v1804, %v1800
    %v1977 = vpack.c.b16 %v1805, %v1801
    %v1978 = vpack.c.b16 %v1806, %v1802
    %v1979 = vpack.c.b16 %v1807, %v1803
    %v1980 = vpack.c.b16 %v1812, %v1808
    %v1981 = vpack.c.b16 %v1813, %v1809
    %v1982 = vpack.c.b16 %v1814, %v1810
    %v1983 = vpack.c.b16 %v1815, %v1811
    %v1984 = vpack.c.b16 %v1820, %v1816
    %v1985 = vpack.c.b16 %v1821, %v1817
    %v1986 = vpack.c.b16 %v1822, %v1818
    %v1987 = vpack.c.b16 %v1823, %v1819
    %v1988 = vpack.c.b16 %v1828, %v1824
    %v1989 = vpack.c.b16 %v1829, %v1825
    %v1990 = vpack.c.b16 %v1830, %v1826
    %v1991 = vpack.c.b16 %v1831, %v1827
    %v1992 = vpack.c.b16 %v1836, %v1832
    %v1993 = vpack.c.b16 %v1837, %v1833
    %v1994 = vpack.c.b16 %v1838, %v1834
    %v1995 = vpack.c.b16 %v1839, %v1835
    %v1996 = vpack.c.b16 %v1844, %v1840
    %v1997 = vpack.c.b16 %v1845, %v1841
    %v1998 = vpack.c.b16 %v1846, %v1842
    %v1999 = vpack.c.b16 %v1847, %v1843
    %v2000 = vpack.c.b16 %v1852, %v1848
    %v2001 = vpack.c.b16 %v1853, %v1849
    %v2002 = vpack.c.b16 %v1854, %v1850
    %v2003 = vpack.c.b16 %v1855, %v1851
    %v2004 = vpack.c.b16 %v1860, %v1856
    %v2005 = vpack.c.b16 %v1861, %v1857
    %v2006 = vpack.c.b16 %v1862, %v1858
    %v2007 = vpack.c.b16 %v1863, %v1859
    %v2008 = vpack.c.b16 %v1868, %v1864
    %v2009 = vpack.c.b16 %v1869, %v1865
    %v2010 = vpack.c.b16 %v1870, %v1866
    %v2011 = vpack.c.b16 %v1871, %v1867
    %v2012 = vpack.c.b16 %v1876, %v1872
    %v2013 = vpack.c.b16 %v1877, %v1873
    %v2014 = vpack.c.b16 %v1878, %v1874
    %v2015 = vpack.c.b16 %v1879, %v1875
    %v2016 = vpack.c.b16 %v1884, %v1880
    %v2017 = vpack.c.b16 %v1885, %v1881
    %v2018 = vpack.c.b16 %v1886, %v1882
    %v2019 = vpack.c.b16 %v1887, %v1883
    %v2020 = vpack.c.b16 %v1892, %v1888
    %v2021 = vpack.c.b16 %v1893, %v1889
    %v2022 = vpack.c.b16 %v1894, %v1890
    %v2023 = vpack.c.b16 %v1895, %v1891
    %2152 = vmatprep.subr.bf16.mxu0 %v1897
    %2153 = vmatpush1.bf16.msra.mxu0 %v1896
    %2154 = vmatprep.subr.bf16.mxu0 %v1901
    %2155 = vmatpush1.bf16.msra.mxu0 %v1900
    %2156 = vmatprep.subr.bf16.mxu0 %v1905
    %2157 = vmatpush1.bf16.msra.mxu0 %v1904
    %2158 = vmatprep.subr.bf16.mxu0 %v1909
    %2159 = vmatpush1.bf16.msra.mxu0 %v1908
    %2160 = vmatprep.subr.bf16.mxu0 %v1913
    %2161 = vmatpush1.bf16.msra.mxu0 %v1912
    %2162 = vmatprep.subr.bf16.mxu0 %v1917
    %2163 = vmatpush1.bf16.msra.mxu0 %v1916
    %2164 = vmatprep.subr.bf16.mxu0 %v1921
    %2165 = vmatpush1.bf16.msra.mxu0 %v1920
    %2166 = vmatprep.subr.bf16.mxu0 %v1925
    %2167 = vmatpush1.bf16.msra.mxu0 %v1924
    %2168 = vmatprep.subr.bf16.mxu0 %v1929
    %2169 = vmatpush1.bf16.msra.mxu0 %v1928
    %2170 = vmatprep.subr.bf16.mxu0 %v1933
    %2171 = vmatpush1.bf16.msra.mxu0 %v1932
    %2172 = vmatprep.subr.bf16.mxu0 %v1937
    %2173 = vmatpush1.bf16.msra.mxu0 %v1936
    %2174 = vmatprep.subr.bf16.mxu0 %v1941
    %2175 = vmatpush1.bf16.msra.mxu0 %v1940
    %2176 = vmatprep.subr.bf16.mxu0 %v1945
    %2177 = vmatpush1.bf16.msra.mxu0 %v1944
    %2178 = vmatprep.subr.bf16.mxu0 %v1949
    %2179 = vmatpush1.bf16.msra.mxu0 %v1948
    %2180 = vmatprep.subr.bf16.mxu0 %v1953
    %2181 = vmatpush1.bf16.msra.mxu0 %v1952
    %2182 = vmatprep.subr.bf16.mxu0 %v1957
    %2183 = vmatpush1.bf16.msra.mxu0 %v1956
    %2184 = vmatprep.mubr.bf16.mxu0 %v1357
    %2185 = vmatmul.mubr.bf16.gmra.mrb[0].mxu0 %v1356
    %v2186 = vpop.f32.mrb[0].mxu0
    %v2187 = vadd.f32 %v1495, %v2186
    %v2188 = vpop.f32.mrb[0].mxu0
    %v2189 = vadd.f32 %v1499, %v2188
    %v2190 = vpop.f32.mrb[0].mxu0
    %v2191 = vpop.f32.mrb[0].mxu0
    %2192 = vdwg.mxu0
    %2193 = vmatprep.subr.bf16.mxu0 %v1961
    %2194 = vmatpush1.bf16.msra.mxu0 %v1960
    %2195 = vmatprep.subr.bf16.mxu0 %v1965
    %2196 = vmatpush1.bf16.msra.mxu0 %v1964
    %2197 = vmatprep.subr.bf16.mxu0 %v1969
    %2198 = vmatpush1.bf16.msra.mxu0 %v1968
    %2199 = vmatprep.subr.bf16.mxu0 %v1973
    %2200 = vmatpush1.bf16.msra.mxu0 %v1972
    %2201 = vmatprep.subr.bf16.mxu0 %v1977
    %2202 = vmatpush1.bf16.msra.mxu0 %v1976
    %2203 = vmatprep.subr.bf16.mxu0 %v1981
    %2204 = vmatpush1.bf16.msra.mxu0 %v1980
    %2205 = vmatprep.subr.bf16.mxu0 %v1985
    %2206 = vmatpush1.bf16.msra.mxu0 %v1984
    %2207 = vmatprep.subr.bf16.mxu0 %v1989
    %2208 = vmatpush1.bf16.msra.mxu0 %v1988
    %2209 = vmatprep.subr.bf16.mxu0 %v1993
    %2210 = vmatpush1.bf16.msra.mxu0 %v1992
    %2211 = vmatprep.subr.bf16.mxu0 %v1997
    %2212 = vmatpush1.bf16.msra.mxu0 %v1996
    %2213 = vmatprep.subr.bf16.mxu0 %v2001
    %2214 = vmatpush1.bf16.msra.mxu0 %v2000
    %2215 = vmatprep.subr.bf16.mxu0 %v2005
    %2216 = vmatpush1.bf16.msra.mxu0 %v2004
    %2217 = vmatprep.subr.bf16.mxu0 %v2009
    %2218 = vmatpush1.bf16.msra.mxu0 %v2008
    %2219 = vmatprep.subr.bf16.mxu0 %v2013
    %2220 = vmatpush1.bf16.msra.mxu0 %v2012
    %2221 = vmatprep.subr.bf16.mxu0 %v2017
    %2222 = vmatpush1.bf16.msra.mxu0 %v2016
    %2223 = vmatprep.subr.bf16.mxu0 %v2021
    %2224 = vmatpush1.bf16.msra.mxu0 %v2020
    %2225 = vmatprep.mubr.bf16.mxu0 %v1359
    %2226 = vmatmul.mubr.bf16.gmra.mrb[0].mxu0 %v1358
    %v2227 = vpop.f32.mrb[0].mxu0
    %v2228 = vadd.f32 %v2187, %v2227
    %v2229 = vpop.f32.mrb[0].mxu0
    %v2230 = vadd.f32 %v2189, %v2229
    %v2231 = vpop.f32.mrb[0].mxu0
    %v2232 = vpop.f32.mrb[0].mxu0
    %2233 = vdwg.mxu0
    %2234 = vmatprep.subr.bf16.mxu0 %v1899
    %2235 = vmatpush1.bf16.msra.mxu0 %v1898
    %2236 = vmatprep.subr.bf16.mxu0 %v1903
    %2237 = vmatpush1.bf16.msra.mxu0 %v1902
    %2238 = vmatprep.subr.bf16.mxu0 %v1907
    %2239 = vmatpush1.bf16.msra.mxu0 %v1906
    %2240 = vmatprep.subr.bf16.mxu0 %v1911
    %2241 = vmatpush1.bf16.msra.mxu0 %v1910
    %2242 = vmatprep.subr.bf16.mxu0 %v1915
    %2243 = vmatpush1.bf16.msra.mxu0 %v1914
    %2244 = vmatprep.subr.bf16.mxu0 %v1919
    %2245 = vmatpush1.bf16.msra.mxu0 %v1918
    %2246 = vmatprep.subr.bf16.mxu0 %v1923
    %2247 = vmatpush1.bf16.msra.mxu0 %v1922
    %2248 = vmatprep.subr.bf16.mxu0 %v1927
    %2249 = vmatpush1.bf16.msra.mxu0 %v1926
    %2250 = vmatprep.subr.bf16.mxu0 %v1931
    %2251 = vmatpush1.bf16.msra.mxu0 %v1930
    %2252 = vmatprep.subr.bf16.mxu0 %v1935
    %2253 = vmatpush1.bf16.msra.mxu0 %v1934
    %2254 = vmatprep.subr.bf16.mxu0 %v1939
    %2255 = vmatpush1.bf16.msra.mxu0 %v1938
    %2256 = vmatprep.subr.bf16.mxu0 %v1943
    %2257 = vmatpush1.bf16.msra.mxu0 %v1942
    %2258 = vmatprep.subr.bf16.mxu0 %v1947
    %2259 = vmatpush1.bf16.msra.mxu0 %v1946
    %2260 = vmatprep.subr.bf16.mxu0 %v1951
    %2261 = vmatpush1.bf16.msra.mxu0 %v1950
    %2262 = vmatprep.subr.bf16.mxu0 %v1955
    %2263 = vmatpush1.bf16.msra.mxu0 %v1954
    %2264 = vmatprep.subr.bf16.mxu0 %v1959
    %2265 = vmatpush1.bf16.msra.mxu0 %v1958
    %2266 = vmatprep.mubr.bf16.mxu0 %v1357
    %2267 = vmatmul.mubr.bf16.gmra.mrb[0].mxu0 %v1356
    %v2268 = vpop.f32.mrb[0].mxu0
    %v2269 = vadd.f32 %v1503, %v2268
    %v2270 = vpop.f32.mrb[0].mxu0
    %v2271 = vadd.f32 %v1507, %v2270
    %v2272 = vpop.f32.mrb[0].mxu0
    %v2273 = vpop.f32.mrb[0].mxu0
    %2274 = vdwg.mxu0
    %2275 = vmatprep.subr.bf16.mxu0 %v1963
    %2276 = vmatpush1.bf16.msra.mxu0 %v1962
    %2277 = vmatprep.subr.bf16.mxu0 %v1967
    %2278 = vmatpush1.bf16.msra.mxu0 %v1966
    %2279 = vmatprep.subr.bf16.mxu0 %v1971
    %2280 = vmatpush1.bf16.msra.mxu0 %v1970
    %2281 = vmatprep.subr.bf16.mxu0 %v1975
    %2282 = vmatpush1.bf16.msra.mxu0 %v1974
    %2283 = vmatprep.subr.bf16.mxu0 %v1979
    %2284 = vmatpush1.bf16.msra.mxu0 %v1978
    %2285 = vmatprep.subr.bf16.mxu0 %v1983
    %2286 = vmatpush1.bf16.msra.mxu0 %v1982
    %2287 = vmatprep.subr.bf16.mxu0 %v1987
    %2288 = vmatpush1.bf16.msra.mxu0 %v1986
    %2289 = vmatprep.subr.bf16.mxu0 %v1991
    %2290 = vmatpush1.bf16.msra.mxu0 %v1990
    %2291 = vmatprep.subr.bf16.mxu0 %v1995
    %2292 = vmatpush1.bf16.msra.mxu0 %v1994
    %2293 = vmatprep.subr.bf16.mxu0 %v1999
    %2294 = vmatpush1.bf16.msra.mxu0 %v1998
    %2295 = vmatprep.subr.bf16.mxu0 %v2003
    %2296 = vmatpush1.bf16.msra.mxu0 %v2002
    %2297 = vmatprep.subr.bf16.mxu0 %v2007
    %2298 = vmatpush1.bf16.msra.mxu0 %v2006
    %2299 = vmatprep.subr.bf16.mxu0 %v2011
    %2300 = vmatpush1.bf16.msra.mxu0 %v2010
    %2301 = vmatprep.subr.bf16.mxu0 %v2015
    %2302 = vmatpush1.bf16.msra.mxu0 %v2014
    %2303 = vmatprep.subr.bf16.mxu0 %v2019
    %2304 = vmatpush1.bf16.msra.mxu0 %v2018
    %2305 = vmatprep.subr.bf16.mxu0 %v2023
    %2306 = vmatpush1.bf16.msra.mxu0 %v2022
    %2307 = vmatprep.mubr.bf16.mxu0 %v1359
    %2308 = vmatmul.mubr.bf16.gmra.mrb[0].mxu0 %v1358
    %v2309 = vpop.f32.mrb[0].mxu0
    %v2310 = vadd.f32 %v2269, %v2309
    %v2311 = vpop.f32.mrb[0].mxu0
    %v2312 = vadd.f32 %v2271, %v2311
    %v2313 = vpop.f32.mrb[0].mxu0
    %v2314 = vpop.f32.mrb[0].mxu0
    %2315 = vdwg.mxu0
    %s2316 = scalar_lea.vmem [#allocation10], 5
    %v2317 = vld [vmem:[%s2316] ss:$8 sm:$0xf]
    %s2318 = scalar_lea.vmem [#allocation10], 6
    %v2319 = vld [vmem:[%s2318] ss:$8 sm:$0xf]
    %v2320 = vadd.f32 %v2228, %v2230
    %v2321 = vadd.f32 %v2320, %v2310
    %v2322 = vadd.f32 %v2321, %v2312
    %2323 = vadd.xlane.f32.xlu0 %v2322
    %v2324 = vpop.xlane.xlu0 %2323
    %v2325 = vmul.f32 %v2324, %v1242
    %v2326 = vmul.f32 %v2228, %v2228
    %v2327 = vmul.f32 %v2230, %v2230
    %v2328 = vmul.f32 %v2310, %v2310
    %v2329 = vmul.f32 %v2312, %v2312
    %v2330 = vadd.f32 %v2326, %v2327
    %v2331 = vadd.f32 %v2330, %v2328
    %v2332 = vadd.f32 %v2331, %v2329
    %2333 = vadd.xlane.f32.xlu0 %v2332
    %v2334 = vpop.xlane.xlu0 %2333
    %v2335 = vmul.f32 %v2334, %v1242
    %v2336 = vmul.f32 %v2325, %v2325
    %v2337 = vsub.f32 %v2335, %v2336
    %v2338 = vadd.f32 %v2337, 1e-05
    %v2339 = vrsqrt.pop %v2338
    %v2341 = vlaneseq
    %v2342 = vshrl.u32 %v2341, 7
    %v2343 = vsub.s32 0, %v2342
    %v2344 = vrot.slane %v2317, %v2343
    %v2345 = vlaneseq
    %v2346 = vshrl.u32 %v2345, 7
    %v2347 = vsub.s32 1, %v2346
    %v2348 = vrot.slane %v2317, %v2347
    %v2349 = vlaneseq
    %v2350 = vshrl.u32 %v2349, 7
    %v2351 = vsub.s32 2, %v2350
    %v2352 = vrot.slane %v2317, %v2351
    %v2353 = vlaneseq
    %v2354 = vshrl.u32 %v2353, 7
    %v2355 = vsub.s32 3, %v2354
    %v2356 = vrot.slane %v2317, %v2355
    %v2361 = vmul.f32 %v2339, %v2344
    %v2362 = vmul.f32 %v2339, %v2348
    %v2363 = vmul.f32 %v2339, %v2352
    %v2364 = vmul.f32 %v2339, %v2356
    %v2365 = vmul.f32 %v2228, %v2361
    %v2366 = vmul.f32 %v2230, %v2362
    %v2367 = vmul.f32 %v2310, %v2363
    %v2368 = vmul.f32 %v2312, %v2364
    %v2369 = vmul.f32 %v2325, %v2361
    %v2370 = vmul.f32 %v2325, %v2362
    %v2371 = vmul.f32 %v2325, %v2363
    %v2372 = vmul.f32 %v2325, %v2364
    %v2374 = vlaneseq
    %v2375 = vshrl.u32 %v2374, 7
    %v2376 = vsub.s32 0, %v2375
    %v2377 = vrot.slane %v2319, %v2376
    %v2378 = vlaneseq
    %v2379 = vshrl.u32 %v2378, 7
    %v2380 = vsub.s32 1, %v2379
    %v2381 = vrot.slane %v2319, %v2380
    %v2382 = vlaneseq
    %v2383 = vshrl.u32 %v2382, 7
    %v2384 = vsub.s32 2, %v2383
    %v2385 = vrot.slane %v2319, %v2384
    %v2386 = vlaneseq
    %v2387 = vshrl.u32 %v2386, 7
    %v2388 = vsub.s32 3, %v2387
    %v2389 = vrot.slane %v2319, %v2388
    %v2394 = vsub.f32 %v2377, %v2369
    %v2395 = vsub.f32 %v2381, %v2370
    %v2396 = vsub.f32 %v2385, %v2371
    %v2397 = vsub.f32 %v2389, %v2372
    %v2398 = vadd.f32 %v2365, %v2394
    %v2399 = vadd.f32 %v2366, %v2395
    %v2400 = vadd.f32 %v2367, %v2396
    %v2401 = vadd.f32 %v2368, %v2397
    %v2402 = vadd.f32 %v2398, %v270
    %v2403 = vadd.f32 %v2399, %v271
    %v2404 = vadd.f32 %v2400, %v272
    %v2405 = vadd.f32 %v2401, %v273
    %v2406 = vmul.f32 %v2402, 0.5
    %v2407 = vmul.f32 %v2403, 0.5
    %v2408 = vmul.f32 %v2404, 0.5
    %v2409 = vmul.f32 %v2405, 0.5
    %v2410 = vmul.f32 %v2402, %v2402
    %v2411 = vmul.f32 %v2403, %v2403
    %v2412 = vmul.f32 %v2404, %v2404
    %v2413 = vmul.f32 %v2405, %v2405
    %v2414 = vmul.f32 %v2410, %v2402
    %v2415 = vmul.f32 %v2411, %v2403
    %v2416 = vmul.f32 %v2412, %v2404
    %v2417 = vmul.f32 %v2413, %v2405
    %v2418 = vmul.f32 %v2414, 0.044715
    %v2419 = vmul.f32 %v2415, 0.044715
    %v2420 = vmul.f32 %v2416, 0.044715
    %v2421 = vmul.f32 %v2417, 0.044715
    %v2422 = vadd.f32 %v2402, %v2418
    %v2423 = vadd.f32 %v2403, %v2419
    %v2424 = vadd.f32 %v2404, %v2420
    %v2425 = vadd.f32 %v2405, %v2421
    %v2426 = vmul.f32 %v2422, 0.7978846
    %v2427 = vmul.f32 %v2423, 0.7978846
    %v2428 = vmul.f32 %v2424, 0.7978846
    %v2429 = vmul.f32 %v2425, 0.7978846
    %v2430 = vtanh.pop %v2426
    %v2431 = vtanh.pop %v2427
    %v2432 = vtanh.pop %v2428
    %v2433 = vtanh.pop %v2429
    %v2434 = vadd.f32 %v2430, 1.0
    %v2435 = vadd.f32 %v2431, 1.0
    %v2436 = vadd.f32 %v2432, 1.0
    %v2437 = vadd.f32 %v2433, 1.0
    %v2438 = vmul.f32 %v2406, %v2434
    %v2439 = vmul.f32 %v2407, %v2435
    %v2440 = vmul.f32 %v2408, %v2436
    %v2441 = vmul.f32 %v2409, %v2437
    %v2442 = vpack.c.bf16 %v2438, %v2438
    %v2443 = vpack.c.bf16 %v2439, %v2439
    %v2444 = vpack.c.bf16 %v2440, %v2440
    %v2445 = vpack.c.bf16 %v2441, %v2441
    %s2446 = scalar_lea.vmem [#allocation6], 2048
    %v2447 = vld [vmem:[%s2446] sm:$0xff]
    %v2448 = vld [vmem:[%s2446 + $0x8] sm:$0xff]
    %v2449 = vld [vmem:[%s2446 + $0x10] sm:$0xff]
    %v2450 = vld [vmem:[%s2446 + $0x18] sm:$0xff]
    %v2451 = vld [vmem:[%s2446 + $0x20] sm:$0xff]
    %v2452 = vld [vmem:[%s2446 + $0x28] sm:$0xff]
    %v2453 = vld [vmem:[%s2446 + $0x30] sm:$0xff]
    %v2454 = vld [vmem:[%s2446 + $0x38] sm:$0xff]
    %v2455 = vld [vmem:[%s2446 + $0x40] sm:$0xff]
    %v2456 = vld [vmem:[%s2446 + $0x48] sm:$0xff]
    %v2457 = vld [vmem:[%s2446 + $0x50] sm:$0xff]
    %v2458 = vld [vmem:[%s2446 + $0x58] sm:$0xff]
    %v2459 = vld [vmem:[%s2446 + $0x60] sm:$0xff]
    %v2460 = vld [vmem:[%s2446 + $0x68] sm:$0xff]
    %v2461 = vld [vmem:[%s2446 + $0x70] sm:$0xff]
    %v2462 = vld [vmem:[%s2446 + $0x78] sm:$0xff]
    %v2463 = vld [vmem:[%s2446 + $0x80] sm:$0xff]
    %v2464 = vld [vmem:[%s2446 + $0x88] sm:$0xff]
    %v2465 = vld [vmem:[%s2446 + $0x90] sm:$0xff]
    %v2466 = vld [vmem:[%s2446 + $0x98] sm:$0xff]
    %v2467 = vld [vmem:[%s2446 + $0xa0] sm:$0xff]
    %v2468 = vld [vmem:[%s2446 + $0xa8] sm:$0xff]
    %v2469 = vld [vmem:[%s2446 + $0xb0] sm:$0xff]
    %v2470 = vld [vmem:[%s2446 + $0xb8] sm:$0xff]
    %v2471 = vld [vmem:[%s2446 + $0xc0] sm:$0xff]
    %v2472 = vld [vmem:[%s2446 + $0xc8] sm:$0xff]
    %v2473 = vld [vmem:[%s2446 + $0xd0] sm:$0xff]
    %v2474 = vld [vmem:[%s2446 + $0xd8] sm:$0xff]
    %v2475 = vld [vmem:[%s2446 + $0xe0] sm:$0xff]
    %v2476 = vld [vmem:[%s2446 + $0xe8] sm:$0xff]
    %v2477 = vld [vmem:[%s2446 + $0xf0] sm:$0xff]
    %v2478 = vld [vmem:[%s2446 + $0xf8] sm:$0xff]
    %v2479 = vld [vmem:[%s2446 + $0x100] sm:$0xff]
    %v2480 = vld [vmem:[%s2446 + $0x108] sm:$0xff]
    %v2481 = vld [vmem:[%s2446 + $0x110] sm:$0xff]
    %v2482 = vld [vmem:[%s2446 + $0x118] sm:$0xff]
    %v2483 = vld [vmem:[%s2446 + $0x120] sm:$0xff]
    %v2484 = vld [vmem:[%s2446 + $0x128] sm:$0xff]
    %v2485 = vld [vmem:[%s2446 + $0x130] sm:$0xff]
    %v2486 = vld [vmem:[%s2446 + $0x138] sm:$0xff]
    %v2487 = vld [vmem:[%s2446 + $0x140] sm:$0xff]
    %v2488 = vld [vmem:[%s2446 + $0x148] sm:$0xff]
    %v2489 = vld [vmem:[%s2446 + $0x150] sm:$0xff]
    %v2490 = vld [vmem:[%s2446 + $0x158] sm:$0xff]
    %v2491 = vld [vmem:[%s2446 + $0x160] sm:$0xff]
    %v2492 = vld [vmem:[%s2446 + $0x168] sm:$0xff]
    %v2493 = vld [vmem:[%s2446 + $0x170] sm:$0xff]
    %v2494 = vld [vmem:[%s2446 + $0x178] sm:$0xff]
    %v2495 = vld [vmem:[%s2446 + $0x180] sm:$0xff]
    %v2496 = vld [vmem:[%s2446 + $0x188] sm:$0xff]
    %v2497 = vld [vmem:[%s2446 + $0x190] sm:$0xff]
    %v2498 = vld [vmem:[%s2446 + $0x198] sm:$0xff]
    %v2499 = vld [vmem:[%s2446 + $0x1a0] sm:$0xff]
    %v2500 = vld [vmem:[%s2446 + $0x1a8] sm:$0xff]
    %v2501 = vld [vmem:[%s2446 + $0x1b0] sm:$0xff]
    %v2502 = vld [vmem:[%s2446 + $0x1b8] sm:$0xff]
    %v2503 = vld [vmem:[%s2446 + $0x1c0] sm:$0xff]
    %v2504 = vld [vmem:[%s2446 + $0x1c8] sm:$0xff]
    %v2505 = vld [vmem:[%s2446 + $0x1d0] sm:$0xff]
    %v2506 = vld [vmem:[%s2446 + $0x1d8] sm:$0xff]
    %v2507 = vld [vmem:[%s2446 + $0x1e0] sm:$0xff]
    %v2508 = vld [vmem:[%s2446 + $0x1e8] sm:$0xff]
    %v2509 = vld [vmem:[%s2446 + $0x1f0] sm:$0xff]
    %v2510 = vld [vmem:[%s2446 + $0x1f8] sm:$0xff]
    %v2511 = vld [vmem:[%s2446 + $0x200] sm:$0xff]
    %v2512 = vld [vmem:[%s2446 + $0x208] sm:$0xff]
    %v2513 = vld [vmem:[%s2446 + $0x210] sm:$0xff]
    %v2514 = vld [vmem:[%s2446 + $0x218] sm:$0xff]
    %v2515 = vld [vmem:[%s2446 + $0x220] sm:$0xff]
    %v2516 = vld [vmem:[%s2446 + $0x228] sm:$0xff]
    %v2517 = vld [vmem:[%s2446 + $0x230] sm:$0xff]
    %v2518 = vld [vmem:[%s2446 + $0x238] sm:$0xff]
    %v2519 = vld [vmem:[%s2446 + $0x240] sm:$0xff]
    %v2520 = vld [vmem:[%s2446 + $0x248] sm:$0xff]
    %v2521 = vld [vmem:[%s2446 + $0x250] sm:$0xff]
    %v2522 = vld [vmem:[%s2446 + $0x258] sm:$0xff]
    %v2523 = vld [vmem:[%s2446 + $0x260] sm:$0xff]
    %v2524 = vld [vmem:[%s2446 + $0x268] sm:$0xff]
    %v2525 = vld [vmem:[%s2446 + $0x270] sm:$0xff]
    %v2526 = vld [vmem:[%s2446 + $0x278] sm:$0xff]
    %v2527 = vld [vmem:[%s2446 + $0x280] sm:$0xff]
    %v2528 = vld [vmem:[%s2446 + $0x288] sm:$0xff]
    %v2529 = vld [vmem:[%s2446 + $0x290] sm:$0xff]
    %v2530 = vld [vmem:[%s2446 + $0x298] sm:$0xff]
    %v2531 = vld [vmem:[%s2446 + $0x2a0] sm:$0xff]
    %v2532 = vld [vmem:[%s2446 + $0x2a8] sm:$0xff]
    %v2533 = vld [vmem:[%s2446 + $0x2b0] sm:$0xff]
    %v2534 = vld [vmem:[%s2446 + $0x2b8] sm:$0xff]
    %v2535 = vld [vmem:[%s2446 + $0x2c0] sm:$0xff]
    %v2536 = vld [vmem:[%s2446 + $0x2c8] sm:$0xff]
    %v2537 = vld [vmem:[%s2446 + $0x2d0] sm:$0xff]
    %v2538 = vld [vmem:[%s2446 + $0x2d8] sm:$0xff]
    %v2539 = vld [vmem:[%s2446 + $0x2e0] sm:$0xff]
    %v2540 = vld [vmem:[%s2446 + $0x2e8] sm:$0xff]
    %v2541 = vld [vmem:[%s2446 + $0x2f0] sm:$0xff]
    %v2542 = vld [vmem:[%s2446 + $0x2f8] sm:$0xff]
    %v2543 = vld [vmem:[%s2446 + $0x300] sm:$0xff]
    %v2544 = vld [vmem:[%s2446 + $0x308] sm:$0xff]
    %v2545 = vld [vmem:[%s2446 + $0x310] sm:$0xff]
    %v2546 = vld [vmem:[%s2446 + $0x318] sm:$0xff]
    %v2547 = vld [vmem:[%s2446 + $0x320] sm:$0xff]
    %v2548 = vld [vmem:[%s2446 + $0x328] sm:$0xff]
    %v2549 = vld [vmem:[%s2446 + $0x330] sm:$0xff]
    %v2550 = vld [vmem:[%s2446 + $0x338] sm:$0xff]
    %v2551 = vld [vmem:[%s2446 + $0x340] sm:$0xff]
    %v2552 = vld [vmem:[%s2446 + $0x348] sm:$0xff]
    %v2553 = vld [vmem:[%s2446 + $0x350] sm:$0xff]
    %v2554 = vld [vmem:[%s2446 + $0x358] sm:$0xff]
    %v2555 = vld [vmem:[%s2446 + $0x360] sm:$0xff]
    %v2556 = vld [vmem:[%s2446 + $0x368] sm:$0xff]
    %v2557 = vld [vmem:[%s2446 + $0x370] sm:$0xff]
    %v2558 = vld [vmem:[%s2446 + $0x378] sm:$0xff]
    %v2559 = vld [vmem:[%s2446 + $0x380] sm:$0xff]
    %v2560 = vld [vmem:[%s2446 + $0x388] sm:$0xff]
    %v2561 = vld [vmem:[%s2446 + $0x390] sm:$0xff]
    %v2562 = vld [vmem:[%s2446 + $0x398] sm:$0xff]
    %v2563 = vld [vmem:[%s2446 + $0x3a0] sm:$0xff]
    %v2564 = vld [vmem:[%s2446 + $0x3a8] sm:$0xff]
    %v2565 = vld [vmem:[%s2446 + $0x3b0] sm:$0xff]
    %v2566 = vld [vmem:[%s2446 + $0x3b8] sm:$0xff]
    %v2567 = vld [vmem:[%s2446 + $0x3c0] sm:$0xff]
    %v2568 = vld [vmem:[%s2446 + $0x3c8] sm:$0xff]
    %v2569 = vld [vmem:[%s2446 + $0x3d0] sm:$0xff]
    %v2570 = vld [vmem:[%s2446 + $0x3d8] sm:$0xff]
    %v2571 = vld [vmem:[%s2446 + $0x3e0] sm:$0xff]
    %v2572 = vld [vmem:[%s2446 + $0x3e8] sm:$0xff]
    %v2573 = vld [vmem:[%s2446 + $0x3f0] sm:$0xff]
    %v2574 = vld [vmem:[%s2446 + $0x3f8] sm:$0xff]
    %s2575 = scalar_lea.vmem [#allocation10], 7
    %v2576 = vld [vmem:[%s2575] ss:$8 sm:$0xf]
    %v2578 = vlaneseq
    %v2579 = vshrl.u32 %v2578, 7
    %v2580 = vsub.s32 0, %v2579
    %v2581 = vrot.slane %v2576, %v2580
    %v2582 = vlaneseq
    %v2583 = vshrl.u32 %v2582, 7
    %v2584 = vsub.s32 1, %v2583
    %v2585 = vrot.slane %v2576, %v2584
    %v2586 = vlaneseq
    %v2587 = vshrl.u32 %v2586, 7
    %v2588 = vsub.s32 2, %v2587
    %v2589 = vrot.slane %v2576, %v2588
    %v2590 = vlaneseq
    %v2591 = vshrl.u32 %v2590, 7
    %v2592 = vsub.s32 3, %v2591
    %v2593 = vrot.slane %v2576, %v2592
    %v2726 = vunpack.c.l.b16 %v2447
    %v2727 = vunpack.c.h.b16 %v2447
    %v2728 = vunpack.c.l.b16 %v2448
    %v2729 = vunpack.c.h.b16 %v2448
    %v2730 = vunpack.c.l.b16 %v2449
    %v2731 = vunpack.c.h.b16 %v2449
    %v2732 = vunpack.c.l.b16 %v2450
    %v2733 = vunpack.c.h.b16 %v2450
    %v2734 = vunpack.c.l.b16 %v2451
    %v2735 = vunpack.c.h.b16 %v2451
    %v2736 = vunpack.c.l.b16 %v2452
    %v2737 = vunpack.c.h.b16 %v2452
    %v2738 = vunpack.c.l.b16 %v2453
    %v2739 = vunpack.c.h.b16 %v2453
    %v2740 = vunpack.c.l.b16 %v2454
    %v2741 = vunpack.c.h.b16 %v2454
    %v2742 = vunpack.c.l.b16 %v2455
    %v2743 = vunpack.c.h.b16 %v2455
    %v2744 = vunpack.c.l.b16 %v2456
    %v2745 = vunpack.c.h.b16 %v2456
    %v2746 = vunpack.c.l.b16 %v2457
    %v2747 = vunpack.c.h.b16 %v2457
    %v2748 = vunpack.c.l.b16 %v2458
    %v2749 = vunpack.c.h.b16 %v2458
    %v2750 = vunpack.c.l.b16 %v2459
    %v2751 = vunpack.c.h.b16 %v2459
    %v2752 = vunpack.c.l.b16 %v2460
    %v2753 = vunpack.c.h.b16 %v2460
    %v2754 = vunpack.c.l.b16 %v2461
    %v2755 = vunpack.c.h.b16 %v2461
    %v2756 = vunpack.c.l.b16 %v2462
    %v2757 = vunpack.c.h.b16 %v2462
    %v2758 = vunpack.c.l.b16 %v2463
    %v2759 = vunpack.c.h.b16 %v2463
    %v2760 = vunpack.c.l.b16 %v2464
    %v2761 = vunpack.c.h.b16 %v2464
    %v2762 = vunpack.c.l.b16 %v2465
    %v2763 = vunpack.c.h.b16 %v2465
    %v2764 = vunpack.c.l.b16 %v2466
    %v2765 = vunpack.c.h.b16 %v2466
    %v2766 = vunpack.c.l.b16 %v2467
    %v2767 = vunpack.c.h.b16 %v2467
    %v2768 = vunpack.c.l.b16 %v2468
    %v2769 = vunpack.c.h.b16 %v2468
    %v2770 = vunpack.c.l.b16 %v2469
    %v2771 = vunpack.c.h.b16 %v2469
    %v2772 = vunpack.c.l.b16 %v2470
    %v2773 = vunpack.c.h.b16 %v2470
    %v2774 = vunpack.c.l.b16 %v2471
    %v2775 = vunpack.c.h.b16 %v2471
    %v2776 = vunpack.c.l.b16 %v2472
    %v2777 = vunpack.c.h.b16 %v2472
    %v2778 = vunpack.c.l.b16 %v2473
    %v2779 = vunpack.c.h.b16 %v2473
    %v2780 = vunpack.c.l.b16 %v2474
    %v2781 = vunpack.c.h.b16 %v2474
    %v2782 = vunpack.c.l.b16 %v2475
    %v2783 = vunpack.c.h.b16 %v2475
    %v2784 = vunpack.c.l.b16 %v2476
    %v2785 = vunpack.c.h.b16 %v2476
    %v2786 = vunpack.c.l.b16 %v2477
    %v2787 = vunpack.c.h.b16 %v2477
    %v2788 = vunpack.c.l.b16 %v2478
    %v2789 = vunpack.c.h.b16 %v2478
    %v2790 = vunpack.c.l.b16 %v2479
    %v2791 = vunpack.c.h.b16 %v2479
    %v2792 = vunpack.c.l.b16 %v2480
    %v2793 = vunpack.c.h.b16 %v2480
    %v2794 = vunpack.c.l.b16 %v2481
    %v2795 = vunpack.c.h.b16 %v2481
    %v2796 = vunpack.c.l.b16 %v2482
    %v2797 = vunpack.c.h.b16 %v2482
    %v2798 = vunpack.c.l.b16 %v2483
    %v2799 = vunpack.c.h.b16 %v2483
    %v2800 = vunpack.c.l.b16 %v2484
    %v2801 = vunpack.c.h.b16 %v2484
    %v2802 = vunpack.c.l.b16 %v2485
    %v2803 = vunpack.c.h.b16 %v2485
    %v2804 = vunpack.c.l.b16 %v2486
    %v2805 = vunpack.c.h.b16 %v2486
    %v2806 = vunpack.c.l.b16 %v2487
    %v2807 = vunpack.c.h.b16 %v2487
    %v2808 = vunpack.c.l.b16 %v2488
    %v2809 = vunpack.c.h.b16 %v2488
    %v2810 = vunpack.c.l.b16 %v2489
    %v2811 = vunpack.c.h.b16 %v2489
    %v2812 = vunpack.c.l.b16 %v2490
    %v2813 = vunpack.c.h.b16 %v2490
    %v2814 = vunpack.c.l.b16 %v2491
    %v2815 = vunpack.c.h.b16 %v2491
    %v2816 = vunpack.c.l.b16 %v2492
    %v2817 = vunpack.c.h.b16 %v2492
    %v2818 = vunpack.c.l.b16 %v2493
    %v2819 = vunpack.c.h.b16 %v2493
    %v2820 = vunpack.c.l.b16 %v2494
    %v2821 = vunpack.c.h.b16 %v2494
    %v2822 = vunpack.c.l.b16 %v2495
    %v2823 = vunpack.c.h.b16 %v2495
    %v2824 = vunpack.c.l.b16 %v2496
    %v2825 = vunpack.c.h.b16 %v2496
    %v2826 = vunpack.c.l.b16 %v2497
    %v2827 = vunpack.c.h.b16 %v2497
    %v2828 = vunpack.c.l.b16 %v2498
    %v2829 = vunpack.c.h.b16 %v2498
    %v2830 = vunpack.c.l.b16 %v2499
    %v2831 = vunpack.c.h.b16 %v2499
    %v2832 = vunpack.c.l.b16 %v2500
    %v2833 = vunpack.c.h.b16 %v2500
    %v2834 = vunpack.c.l.b16 %v2501
    %v2835 = vunpack.c.h.b16 %v2501
    %v2836 = vunpack.c.l.b16 %v2502
    %v2837 = vunpack.c.h.b16 %v2502
    %v2838 = vunpack.c.l.b16 %v2503
    %v2839 = vunpack.c.h.b16 %v2503
    %v2840 = vunpack.c.l.b16 %v2504
    %v2841 = vunpack.c.h.b16 %v2504
    %v2842 = vunpack.c.l.b16 %v2505
    %v2843 = vunpack.c.h.b16 %v2505
    %v2844 = vunpack.c.l.b16 %v2506
    %v2845 = vunpack.c.h.b16 %v2506
    %v2846 = vunpack.c.l.b16 %v2507
    %v2847 = vunpack.c.h.b16 %v2507
    %v2848 = vunpack.c.l.b16 %v2508
    %v2849 = vunpack.c.h.b16 %v2508
    %v2850 = vunpack.c.l.b16 %v2509
    %v2851 = vunpack.c.h.b16 %v2509
    %v2852 = vunpack.c.l.b16 %v2510
    %v2853 = vunpack.c.h.b16 %v2510
    %v2854 = vunpack.c.l.b16 %v2511
    %v2855 = vunpack.c.h.b16 %v2511
    %v2856 = vunpack.c.l.b16 %v2512
    %v2857 = vunpack.c.h.b16 %v2512
    %v2858 = vunpack.c.l.b16 %v2513
    %v2859 = vunpack.c.h.b16 %v2513
    %v2860 = vunpack.c.l.b16 %v2514
    %v2861 = vunpack.c.h.b16 %v2514
    %v2862 = vunpack.c.l.b16 %v2515
    %v2863 = vunpack.c.h.b16 %v2515
    %v2864 = vunpack.c.l.b16 %v2516
    %v2865 = vunpack.c.h.b16 %v2516
    %v2866 = vunpack.c.l.b16 %v2517
    %v2867 = vunpack.c.h.b16 %v2517
    %v2868 = vunpack.c.l.b16 %v2518
    %v2869 = vunpack.c.h.b16 %v2518
    %v2870 = vunpack.c.l.b16 %v2519
    %v2871 = vunpack.c.h.b16 %v2519
    %v2872 = vunpack.c.l.b16 %v2520
    %v2873 = vunpack.c.h.b16 %v2520
    %v2874 = vunpack.c.l.b16 %v2521
    %v2875 = vunpack.c.h.b16 %v2521
    %v2876 = vunpack.c.l.b16 %v2522
    %v2877 = vunpack.c.h.b16 %v2522
    %v2878 = vunpack.c.l.b16 %v2523
    %v2879 = vunpack.c.h.b16 %v2523
    %v2880 = vunpack.c.l.b16 %v2524
    %v2881 = vunpack.c.h.b16 %v2524
    %v2882 = vunpack.c.l.b16 %v2525
    %v2883 = vunpack.c.h.b16 %v2525
    %v2884 = vunpack.c.l.b16 %v2526
    %v2885 = vunpack.c.h.b16 %v2526
    %v2886 = vunpack.c.l.b16 %v2527
    %v2887 = vunpack.c.h.b16 %v2527
    %v2888 = vunpack.c.l.b16 %v2528
    %v2889 = vunpack.c.h.b16 %v2528
    %v2890 = vunpack.c.l.b16 %v2529
    %v2891 = vunpack.c.h.b16 %v2529
    %v2892 = vunpack.c.l.b16 %v2530
    %v2893 = vunpack.c.h.b16 %v2530
    %v2894 = vunpack.c.l.b16 %v2531
    %v2895 = vunpack.c.h.b16 %v2531
    %v2896 = vunpack.c.l.b16 %v2532
    %v2897 = vunpack.c.h.b16 %v2532
    %v2898 = vunpack.c.l.b16 %v2533
    %v2899 = vunpack.c.h.b16 %v2533
    %v2900 = vunpack.c.l.b16 %v2534
    %v2901 = vunpack.c.h.b16 %v2534
    %v2902 = vunpack.c.l.b16 %v2535
    %v2903 = vunpack.c.h.b16 %v2535
    %v2904 = vunpack.c.l.b16 %v2536
    %v2905 = vunpack.c.h.b16 %v2536
    %v2906 = vunpack.c.l.b16 %v2537
    %v2907 = vunpack.c.h.b16 %v2537
    %v2908 = vunpack.c.l.b16 %v2538
    %v2909 = vunpack.c.h.b16 %v2538
    %v2910 = vunpack.c.l.b16 %v2539
    %v2911 = vunpack.c.h.b16 %v2539
    %v2912 = vunpack.c.l.b16 %v2540
    %v2913 = vunpack.c.h.b16 %v2540
    %v2914 = vunpack.c.l.b16 %v2541
    %v2915 = vunpack.c.h.b16 %v2541
    %v2916 = vunpack.c.l.b16 %v2542
    %v2917 = vunpack.c.h.b16 %v2542
    %v2918 = vunpack.c.l.b16 %v2543
    %v2919 = vunpack.c.h.b16 %v2543
    %v2920 = vunpack.c.l.b16 %v2544
    %v2921 = vunpack.c.h.b16 %v2544
    %v2922 = vunpack.c.l.b16 %v2545
    %v2923 = vunpack.c.h.b16 %v2545
    %v2924 = vunpack.c.l.b16 %v2546
    %v2925 = vunpack.c.h.b16 %v2546
    %v2926 = vunpack.c.l.b16 %v2547
    %v2927 = vunpack.c.h.b16 %v2547
    %v2928 = vunpack.c.l.b16 %v2548
    %v2929 = vunpack.c.h.b16 %v2548
    %v2930 = vunpack.c.l.b16 %v2549
    %v2931 = vunpack.c.h.b16 %v2549
    %v2932 = vunpack.c.l.b16 %v2550
    %v2933 = vunpack.c.h.b16 %v2550
    %v2934 = vunpack.c.l.b16 %v2551
    %v2935 = vunpack.c.h.b16 %v2551
    %v2936 = vunpack.c.l.b16 %v2552
    %v2937 = vunpack.c.h.b16 %v2552
    %v2938 = vunpack.c.l.b16 %v2553
    %v2939 = vunpack.c.h.b16 %v2553
    %v2940 = vunpack.c.l.b16 %v2554
    %v2941 = vunpack.c.h.b16 %v2554
    %v2942 = vunpack.c.l.b16 %v2555
    %v2943 = vunpack.c.h.b16 %v2555
    %v2944 = vunpack.c.l.b16 %v2556
    %v2945 = vunpack.c.h.b16 %v2556
    %v2946 = vunpack.c.l.b16 %v2557
    %v2947 = vunpack.c.h.b16 %v2557
    %v2948 = vunpack.c.l.b16 %v2558
    %v2949 = vunpack.c.h.b16 %v2558
    %v2950 = vunpack.c.l.b16 %v2559
    %v2951 = vunpack.c.h.b16 %v2559
    %v2952 = vunpack.c.l.b16 %v2560
    %v2953 = vunpack.c.h.b16 %v2560
    %v2954 = vunpack.c.l.b16 %v2561
    %v2955 = vunpack.c.h.b16 %v2561
    %v2956 = vunpack.c.l.b16 %v2562
    %v2957 = vunpack.c.h.b16 %v2562
    %v2958 = vunpack.c.l.b16 %v2563
    %v2959 = vunpack.c.h.b16 %v2563
    %v2960 = vunpack.c.l.b16 %v2564
    %v2961 = vunpack.c.h.b16 %v2564
    %v2962 = vunpack.c.l.b16 %v2565
    %v2963 = vunpack.c.h.b16 %v2565
    %v2964 = vunpack.c.l.b16 %v2566
    %v2965 = vunpack.c.h.b16 %v2566
    %v2966 = vunpack.c.l.b16 %v2567
    %v2967 = vunpack.c.h.b16 %v2567
    %v2968 = vunpack.c.l.b16 %v2568
    %v2969 = vunpack.c.h.b16 %v2568
    %v2970 = vunpack.c.l.b16 %v2569
    %v2971 = vunpack.c.h.b16 %v2569
    %v2972 = vunpack.c.l.b16 %v2570
    %v2973 = vunpack.c.h.b16 %v2570
    %v2974 = vunpack.c.l.b16 %v2571
    %v2975 = vunpack.c.h.b16 %v2571
    %v2976 = vunpack.c.l.b16 %v2572
    %v2977 = vunpack.c.h.b16 %v2572
    %v2978 = vunpack.c.l.b16 %v2573
    %v2979 = vunpack.c.h.b16 %v2573
    %v2980 = vunpack.c.l.b16 %v2574
    %v2981 = vunpack.c.h.b16 %v2574
    %v2982 = vpack.c.b16 %v2730, %v2726
    %v2983 = vpack.c.b16 %v2731, %v2727
    %v2984 = vpack.c.b16 %v2732, %v2728
    %v2985 = vpack.c.b16 %v2733, %v2729
    %v2986 = vpack.c.b16 %v2738, %v2734
    %v2987 = vpack.c.b16 %v2739, %v2735
    %v2988 = vpack.c.b16 %v2740, %v2736
    %v2989 = vpack.c.b16 %v2741, %v2737
    %v2990 = vpack.c.b16 %v2746, %v2742
    %v2991 = vpack.c.b16 %v2747, %v2743
    %v2992 = vpack.c.b16 %v2748, %v2744
    %v2993 = vpack.c.b16 %v2749, %v2745
    %v2994 = vpack.c.b16 %v2754, %v2750
    %v2995 = vpack.c.b16 %v2755, %v2751
    %v2996 = vpack.c.b16 %v2756, %v2752
    %v2997 = vpack.c.b16 %v2757, %v2753
    %v2998 = vpack.c.b16 %v2762, %v2758
    %v2999 = vpack.c.b16 %v2763, %v2759
    %v3000 = vpack.c.b16 %v2764, %v2760
    %v3001 = vpack.c.b16 %v2765, %v2761
    %v3002 = vpack.c.b16 %v2770, %v2766
    %v3003 = vpack.c.b16 %v2771, %v2767
    %v3004 = vpack.c.b16 %v2772, %v2768
    %v3005 = vpack.c.b16 %v2773, %v2769
    %v3006 = vpack.c.b16 %v2778, %v2774
    %v3007 = vpack.c.b16 %v2779, %v2775
    %v3008 = vpack.c.b16 %v2780, %v2776
    %v3009 = vpack.c.b16 %v2781, %v2777
    %v3010 = vpack.c.b16 %v2786, %v2782
    %v3011 = vpack.c.b16 %v2787, %v2783
    %v3012 = vpack.c.b16 %v2788, %v2784
    %v3013 = vpack.c.b16 %v2789, %v2785
    %v3014 = vpack.c.b16 %v2794, %v2790
    %v3015 = vpack.c.b16 %v2795, %v2791
    %v3016 = vpack.c.b16 %v2796, %v2792
    %v3017 = vpack.c.b16 %v2797, %v2793
    %v3018 = vpack.c.b16 %v2802, %v2798
    %v3019 = vpack.c.b16 %v2803, %v2799
    %v3020 = vpack.c.b16 %v2804, %v2800
    %v3021 = vpack.c.b16 %v2805, %v2801
    %v3022 = vpack.c.b16 %v2810, %v2806
    %v3023 = vpack.c.b16 %v2811, %v2807
    %v3024 = vpack.c.b16 %v2812, %v2808
    %v3025 = vpack.c.b16 %v2813, %v2809
    %v3026 = vpack.c.b16 %v2818, %v2814
    %v3027 = vpack.c.b16 %v2819, %v2815
    %v3028 = vpack.c.b16 %v2820, %v2816
    %v3029 = vpack.c.b16 %v2821, %v2817
    %v3030 = vpack.c.b16 %v2826, %v2822
    %v3031 = vpack.c.b16 %v2827, %v2823
    %v3032 = vpack.c.b16 %v2828, %v2824
    %v3033 = vpack.c.b16 %v2829, %v2825
    %v3034 = vpack.c.b16 %v2834, %v2830
    %v3035 = vpack.c.b16 %v2835, %v2831
    %v3036 = vpack.c.b16 %v2836, %v2832
    %v3037 = vpack.c.b16 %v2837, %v2833
    %v3038 = vpack.c.b16 %v2842, %v2838
    %v3039 = vpack.c.b16 %v2843, %v2839
    %v3040 = vpack.c.b16 %v2844, %v2840
    %v3041 = vpack.c.b16 %v2845, %v2841
    %v3042 = vpack.c.b16 %v2850, %v2846
    %v3043 = vpack.c.b16 %v2851, %v2847
    %v3044 = vpack.c.b16 %v2852, %v2848
    %v3045 = vpack.c.b16 %v2853, %v2849
    %v3046 = vpack.c.b16 %v2858, %v2854
    %v3047 = vpack.c.b16 %v2859, %v2855
    %v3048 = vpack.c.b16 %v2860, %v2856
    %v3049 = vpack.c.b16 %v2861, %v2857
    %v3050 = vpack.c.b16 %v2866, %v2862
    %v3051 = vpack.c.b16 %v2867, %v2863
    %v3052 = vpack.c.b16 %v2868, %v2864
    %v3053 = vpack.c.b16 %v2869, %v2865
    %v3054 = vpack.c.b16 %v2874, %v2870
    %v3055 = vpack.c.b16 %v2875, %v2871
    %v3056 = vpack.c.b16 %v2876, %v2872
    %v3057 = vpack.c.b16 %v2877, %v2873
    %v3058 = vpack.c.b16 %v2882, %v2878
    %v3059 = vpack.c.b16 %v2883, %v2879
    %v3060 = vpack.c.b16 %v2884, %v2880
    %v3061 = vpack.c.b16 %v2885, %v2881
    %v3062 = vpack.c.b16 %v2890, %v2886
    %v3063 = vpack.c.b16 %v2891, %v2887
    %v3064 = vpack.c.b16 %v2892, %v2888
    %v3065 = vpack.c.b16 %v2893, %v2889
    %v3066 = vpack.c.b16 %v2898, %v2894
    %v3067 = vpack.c.b16 %v2899, %v2895
    %v3068 = vpack.c.b16 %v2900, %v2896
    %v3069 = vpack.c.b16 %v2901, %v2897
    %v3070 = vpack.c.b16 %v2906, %v2902
    %v3071 = vpack.c.b16 %v2907, %v2903
    %v3072 = vpack.c.b16 %v2908, %v2904
    %v3073 = vpack.c.b16 %v2909, %v2905
    %v3074 = vpack.c.b16 %v2914, %v2910
    %v3075 = vpack.c.b16 %v2915, %v2911
    %v3076 = vpack.c.b16 %v2916, %v2912
    %v3077 = vpack.c.b16 %v2917, %v2913
    %v3078 = vpack.c.b16 %v2922, %v2918
    %v3079 = vpack.c.b16 %v2923, %v2919
    %v3080 = vpack.c.b16 %v2924, %v2920
    %v3081 = vpack.c.b16 %v2925, %v2921
    %v3082 = vpack.c.b16 %v2930, %v2926
    %v3083 = vpack.c.b16 %v2931, %v2927
    %v3084 = vpack.c.b16 %v2932, %v2928
    %v3085 = vpack.c.b16 %v2933, %v2929
    %v3086 = vpack.c.b16 %v2938, %v2934
    %v3087 = vpack.c.b16 %v2939, %v2935
    %v3088 = vpack.c.b16 %v2940, %v2936
    %v3089 = vpack.c.b16 %v2941, %v2937
    %v3090 = vpack.c.b16 %v2946, %v2942
    %v3091 = vpack.c.b16 %v2947, %v2943
    %v3092 = vpack.c.b16 %v2948, %v2944
    %v3093 = vpack.c.b16 %v2949, %v2945
    %v3094 = vpack.c.b16 %v2954, %v2950
    %v3095 = vpack.c.b16 %v2955, %v2951
    %v3096 = vpack.c.b16 %v2956, %v2952
    %v3097 = vpack.c.b16 %v2957, %v2953
    %v3098 = vpack.c.b16 %v2962, %v2958
    %v3099 = vpack.c.b16 %v2963, %v2959
    %v3100 = vpack.c.b16 %v2964, %v2960
    %v3101 = vpack.c.b16 %v2965, %v2961
    %v3102 = vpack.c.b16 %v2970, %v2966
    %v3103 = vpack.c.b16 %v2971, %v2967
    %v3104 = vpack.c.b16 %v2972, %v2968
    %v3105 = vpack.c.b16 %v2973, %v2969
    %v3106 = vpack.c.b16 %v2978, %v2974
    %v3107 = vpack.c.b16 %v2979, %v2975
    %v3108 = vpack.c.b16 %v2980, %v2976
    %v3109 = vpack.c.b16 %v2981, %v2977
    %3238 = vmatprep.subr.bf16.mxu0 %v2983
    %3239 = vmatpush1.bf16.msra.mxu0 %v2982
    %3240 = vmatprep.subr.bf16.mxu0 %v2987
    %3241 = vmatpush1.bf16.msra.mxu0 %v2986
    %3242 = vmatprep.subr.bf16.mxu0 %v2991
    %3243 = vmatpush1.bf16.msra.mxu0 %v2990
    %3244 = vmatprep.subr.bf16.mxu0 %v2995
    %3245 = vmatpush1.bf16.msra.mxu0 %v2994
    %3246 = vmatprep.subr.bf16.mxu0 %v2999
    %3247 = vmatpush1.bf16.msra.mxu0 %v2998
    %3248 = vmatprep.subr.bf16.mxu0 %v3003
    %3249 = vmatpush1.bf16.msra.mxu0 %v3002
    %3250 = vmatprep.subr.bf16.mxu0 %v3007
    %3251 = vmatpush1.bf16.msra.mxu0 %v3006
    %3252 = vmatprep.subr.bf16.mxu0 %v3011
    %3253 = vmatpush1.bf16.msra.mxu0 %v3010
    %3254 = vmatprep.subr.bf16.mxu0 %v3015
    %3255 = vmatpush1.bf16.msra.mxu0 %v3014
    %3256 = vmatprep.subr.bf16.mxu0 %v3019
    %3257 = vmatpush1.bf16.msra.mxu0 %v3018
    %3258 = vmatprep.subr.bf16.mxu0 %v3023
    %3259 = vmatpush1.bf16.msra.mxu0 %v3022
    %3260 = vmatprep.subr.bf16.mxu0 %v3027
    %3261 = vmatpush1.bf16.msra.mxu0 %v3026
    %3262 = vmatprep.subr.bf16.mxu0 %v3031
    %3263 = vmatpush1.bf16.msra.mxu0 %v3030
    %3264 = vmatprep.subr.bf16.mxu0 %v3035
    %3265 = vmatpush1.bf16.msra.mxu0 %v3034
    %3266 = vmatprep.subr.bf16.mxu0 %v3039
    %3267 = vmatpush1.bf16.msra.mxu0 %v3038
    %3268 = vmatprep.subr.bf16.mxu0 %v3043
    %3269 = vmatpush1.bf16.msra.mxu0 %v3042
    %3270 = vmatprep.mubr.bf16.mxu0 %v2443
    %3271 = vmatmul.mubr.bf16.gmra.mrb[0].mxu0 %v2442
    %v3272 = vpop.f32.mrb[0].mxu0
    %v3273 = vadd.f32 %v2581, %v3272
    %v3274 = vpop.f32.mrb[0].mxu0
    %v3275 = vadd.f32 %v2585, %v3274
    %v3276 = vpop.f32.mrb[0].mxu0
    %v3277 = vpop.f32.mrb[0].mxu0
    %3278 = vdwg.mxu0
    %3279 = vmatprep.subr.bf16.mxu0 %v3047
    %3280 = vmatpush1.bf16.msra.mxu0 %v3046
    %3281 = vmatprep.subr.bf16.mxu0 %v3051
    %3282 = vmatpush1.bf16.msra.mxu0 %v3050
    %3283 = vmatprep.subr.bf16.mxu0 %v3055
    %3284 = vmatpush1.bf16.msra.mxu0 %v3054
    %3285 = vmatprep.subr.bf16.mxu0 %v3059
    %3286 = vmatpush1.bf16.msra.mxu0 %v3058
    %3287 = vmatprep.subr.bf16.mxu0 %v3063
    %3288 = vmatpush1.bf16.msra.mxu0 %v3062
    %3289 = vmatprep.subr.bf16.mxu0 %v3067
    %3290 = vmatpush1.bf16.msra.mxu0 %v3066
    %3291 = vmatprep.subr.bf16.mxu0 %v3071
    %3292 = vmatpush1.bf16.msra.mxu0 %v3070
    %3293 = vmatprep.subr.bf16.mxu0 %v3075
    %3294 = vmatpush1.bf16.msra.mxu0 %v3074
    %3295 = vmatprep.subr.bf16.mxu0 %v3079
    %3296 = vmatpush1.bf16.msra.mxu0 %v3078
    %3297 = vmatprep.subr.bf16.mxu0 %v3083
    %3298 = vmatpush1.bf16.msra.mxu0 %v3082
    %3299 = vmatprep.subr.bf16.mxu0 %v3087
    %3300 = vmatpush1.bf16.msra.mxu0 %v3086
    %3301 = vmatprep.subr.bf16.mxu0 %v3091
    %3302 = vmatpush1.bf16.msra.mxu0 %v3090
    %3303 = vmatprep.subr.bf16.mxu0 %v3095
    %3304 = vmatpush1.bf16.msra.mxu0 %v3094
    %3305 = vmatprep.subr.bf16.mxu0 %v3099
    %3306 = vmatpush1.bf16.msra.mxu0 %v3098
    %3307 = vmatprep.subr.bf16.mxu0 %v3103
    %3308 = vmatpush1.bf16.msra.mxu0 %v3102
    %3309 = vmatprep.subr.bf16.mxu0 %v3107
    %3310 = vmatpush1.bf16.msra.mxu0 %v3106
    %3311 = vmatprep.mubr.bf16.mxu0 %v2445
    %3312 = vmatmul.mubr.bf16.gmra.mrb[0].mxu0 %v2444
    %v3313 = vpop.f32.mrb[0].mxu0
    %v3314 = vadd.f32 %v3273, %v3313
    %v3315 = vpop.f32.mrb[0].mxu0
    %v3316 = vadd.f32 %v3275, %v3315
    %v3317 = vpop.f32.mrb[0].mxu0
    %v3318 = vpop.f32.mrb[0].mxu0
    %3319 = vdwg.mxu0
    %3320 = vmatprep.subr.bf16.mxu0 %v2985
    %3321 = vmatpush1.bf16.msra.mxu0 %v2984
    %3322 = vmatprep.subr.bf16.mxu0 %v2989
    %3323 = vmatpush1.bf16.msra.mxu0 %v2988
    %3324 = vmatprep.subr.bf16.mxu0 %v2993
    %3325 = vmatpush1.bf16.msra.mxu0 %v2992
    %3326 = vmatprep.subr.bf16.mxu0 %v2997
    %3327 = vmatpush1.bf16.msra.mxu0 %v2996
    %3328 = vmatprep.subr.bf16.mxu0 %v3001
    %3329 = vmatpush1.bf16.msra.mxu0 %v3000
    %3330 = vmatprep.subr.bf16.mxu0 %v3005
    %3331 = vmatpush1.bf16.msra.mxu0 %v3004
    %3332 = vmatprep.subr.bf16.mxu0 %v3009
    %3333 = vmatpush1.bf16.msra.mxu0 %v3008
    %3334 = vmatprep.subr.bf16.mxu0 %v3013
    %3335 = vmatpush1.bf16.msra.mxu0 %v3012
    %3336 = vmatprep.subr.bf16.mxu0 %v3017
    %3337 = vmatpush1.bf16.msra.mxu0 %v3016
    %3338 = vmatprep.subr.bf16.mxu0 %v3021
    %3339 = vmatpush1.bf16.msra.mxu0 %v3020
    %3340 = vmatprep.subr.bf16.mxu0 %v3025
    %3341 = vmatpush1.bf16.msra.mxu0 %v3024
    %3342 = vmatprep.subr.bf16.mxu0 %v3029
    %3343 = vmatpush1.bf16.msra.mxu0 %v3028
    %3344 = vmatprep.subr.bf16.mxu0 %v3033
    %3345 = vmatpush1.bf16.msra.mxu0 %v3032
    %3346 = vmatprep.subr.bf16.mxu0 %v3037
    %3347 = vmatpush1.bf16.msra.mxu0 %v3036
    %3348 = vmatprep.subr.bf16.mxu0 %v3041
    %3349 = vmatpush1.bf16.msra.mxu0 %v3040
    %3350 = vmatprep.subr.bf16.mxu0 %v3045
    %3351 = vmatpush1.bf16.msra.mxu0 %v3044
    %3352 = vmatprep.mubr.bf16.mxu0 %v2443
    %3353 = vmatmul.mubr.bf16.gmra.mrb[0].mxu0 %v2442
    %v3354 = vpop.f32.mrb[0].mxu0
    %v3355 = vadd.f32 %v2589, %v3354
    %v3356 = vpop.f32.mrb[0].mxu0
    %v3357 = vadd.f32 %v2593, %v3356
    %v3358 = vpop.f32.mrb[0].mxu0
    %v3359 = vpop.f32.mrb[0].mxu0
    %3360 = vdwg.mxu0
    %3361 = vmatprep.subr.bf16.mxu0 %v3049
    %3362 = vmatpush1.bf16.msra.mxu0 %v3048
    %3363 = vmatprep.subr.bf16.mxu0 %v3053
    %3364 = vmatpush1.bf16.msra.mxu0 %v3052
    %3365 = vmatprep.subr.bf16.mxu0 %v3057
    %3366 = vmatpush1.bf16.msra.mxu0 %v3056
    %3367 = vmatprep.subr.bf16.mxu0 %v3061
    %3368 = vmatpush1.bf16.msra.mxu0 %v3060
    %3369 = vmatprep.subr.bf16.mxu0 %v3065
    %3370 = vmatpush1.bf16.msra.mxu0 %v3064
    %3371 = vmatprep.subr.bf16.mxu0 %v3069
    %3372 = vmatpush1.bf16.msra.mxu0 %v3068
    %3373 = vmatprep.subr.bf16.mxu0 %v3073
    %3374 = vmatpush1.bf16.msra.mxu0 %v3072
    %3375 = vmatprep.subr.bf16.mxu0 %v3077
    %3376 = vmatpush1.bf16.msra.mxu0 %v3076
    %3377 = vmatprep.subr.bf16.mxu0 %v3081
    %3378 = vmatpush1.bf16.msra.mxu0 %v3080
    %3379 = vmatprep.subr.bf16.mxu0 %v3085
    %3380 = vmatpush1.bf16.msra.mxu0 %v3084
    %3381 = vmatprep.subr.bf16.mxu0 %v3089
    %3382 = vmatpush1.bf16.msra.mxu0 %v3088
    %3383 = vmatprep.subr.bf16.mxu0 %v3093
    %3384 = vmatpush1.bf16.msra.mxu0 %v3092
    %3385 = vmatprep.subr.bf16.mxu0 %v3097
    %3386 = vmatpush1.bf16.msra.mxu0 %v3096
    %3387 = vmatprep.subr.bf16.mxu0 %v3101
    %3388 = vmatpush1.bf16.msra.mxu0 %v3100
    %3389 = vmatprep.subr.bf16.mxu0 %v3105
    %3390 = vmatpush1.bf16.msra.mxu0 %v3104
    %3391 = vmatprep.subr.bf16.mxu0 %v3109
    %3392 = vmatpush1.bf16.msra.mxu0 %v3108
    %3393 = vmatprep.mubr.bf16.mxu0 %v2445
    %3394 = vmatmul.mubr.bf16.gmra.mrb[0].mxu0 %v2444
    %v3395 = vpop.f32.mrb[0].mxu0
    %v3396 = vadd.f32 %v3355, %v3395
    %v3397 = vpop.f32.mrb[0].mxu0
    %v3398 = vadd.f32 %v3357, %v3397
    %v3399 = vpop.f32.mrb[0].mxu0
    %v3400 = vpop.f32.mrb[0].mxu0
    %3401 = vdwg.mxu0
    %s3402 = scalar_lea.vmem [#allocation10], 32
    %v3403 = vld [vmem:[%s3402] ss:$8 sm:$0xf]
    %s3404 = scalar_lea.vmem [#allocation10], 33
    %v3405 = vld [vmem:[%s3404] ss:$8 sm:$0xf]
    %v3406 = vadd.f32 %v3314, %v3316
    %v3407 = vadd.f32 %v3406, %v3396
    %v3408 = vadd.f32 %v3407, %v3398
    %3409 = vadd.xlane.f32.xlu0 %v3408
    %v3410 = vpop.xlane.xlu0 %3409
    %v3411 = vmul.f32 %v3410, %v1242
    %v3412 = vmul.f32 %v3314, %v3314
    %v3413 = vmul.f32 %v3316, %v3316
    %v3414 = vmul.f32 %v3396, %v3396
    %v3415 = vmul.f32 %v3398, %v3398
    %v3416 = vadd.f32 %v3412, %v3413
    %v3417 = vadd.f32 %v3416, %v3414
    %v3418 = vadd.f32 %v3417, %v3415
    %3419 = vadd.xlane.f32.xlu0 %v3418
    %v3420 = vpop.xlane.xlu0 %3419
    %v3421 = vmul.f32 %v3420, %v1242
    %v3422 = vmul.f32 %v3411, %v3411
    %v3423 = vsub.f32 %v3421, %v3422
    %v3424 = vadd.f32 %v3423, 1e-05
    %v3425 = vrsqrt.pop %v3424
    %v3427 = vlaneseq
    %v3428 = vshrl.u32 %v3427, 7
    %v3429 = vsub.s32 0, %v3428
    %v3430 = vrot.slane %v3403, %v3429
    %v3431 = vlaneseq
    %v3432 = vshrl.u32 %v3431, 7
    %v3433 = vsub.s32 1, %v3432
    %v3434 = vrot.slane %v3403, %v3433
    %v3435 = vlaneseq
    %v3436 = vshrl.u32 %v3435, 7
    %v3437 = vsub.s32 2, %v3436
    %v3438 = vrot.slane %v3403, %v3437
    %v3439 = vlaneseq
    %v3440 = vshrl.u32 %v3439, 7
    %v3441 = vsub.s32 3, %v3440
    %v3442 = vrot.slane %v3403, %v3441
    %v3447 = vmul.f32 %v3425, %v3430
    %v3448 = vmul.f32 %v3425, %v3434
    %v3449 = vmul.f32 %v3425, %v3438
    %v3450 = vmul.f32 %v3425, %v3442
    %v3451 = vmul.f32 %v3314, %v3447
    %v3452 = vmul.f32 %v3316, %v3448
    %v3453 = vmul.f32 %v3396, %v3449
    %v3454 = vmul.f32 %v3398, %v3450
    %v3455 = vmul.f32 %v3411, %v3447
    %v3456 = vmul.f32 %v3411, %v3448
    %v3457 = vmul.f32 %v3411, %v3449
    %v3458 = vmul.f32 %v3411, %v3450
    %v3460 = vlaneseq
    %v3461 = vshrl.u32 %v3460, 7
    %v3462 = vsub.s32 0, %v3461
    %v3463 = vrot.slane %v3405, %v3462
    %v3464 = vlaneseq
    %v3465 = vshrl.u32 %v3464, 7
    %v3466 = vsub.s32 1, %v3465
    %v3467 = vrot.slane %v3405, %v3466
    %v3468 = vlaneseq
    %v3469 = vshrl.u32 %v3468, 7
    %v3470 = vsub.s32 2, %v3469
    %v3471 = vrot.slane %v3405, %v3470
    %v3472 = vlaneseq
    %v3473 = vshrl.u32 %v3472, 7
    %v3474 = vsub.s32 3, %v3473
    %v3475 = vrot.slane %v3405, %v3474
    %v3480 = vsub.f32 %v3463, %v3455
    %v3481 = vsub.f32 %v3467, %v3456
    %v3482 = vsub.f32 %v3471, %v3457
    %v3483 = vsub.f32 %v3475, %v3458
    %v3484 = vadd.f32 %v3451, %v3480
    %v3485 = vadd.f32 %v3452, %v3481
    %v3486 = vadd.f32 %v3453, %v3482
    %v3487 = vadd.f32 %v3454, %v3483
    %v3488 = vmul.f32 %v3484, 0.5
    %v3489 = vmul.f32 %v3485, 0.5
    %v3490 = vmul.f32 %v3486, 0.5
    %v3491 = vmul.f32 %v3487, 0.5
    %v3492 = vmul.f32 %v3484, %v3484
    %v3493 = vmul.f32 %v3485, %v3485
    %v3494 = vmul.f32 %v3486, %v3486
    %v3495 = vmul.f32 %v3487, %v3487
    %v3496 = vmul.f32 %v3492, %v3484
    %v3497 = vmul.f32 %v3493, %v3485
    %v3498 = vmul.f32 %v3494, %v3486
    %v3499 = vmul.f32 %v3495, %v3487
    %v3500 = vmul.f32 %v3496, 0.044715
    %v3501 = vmul.f32 %v3497, 0.044715
    %v3502 = vmul.f32 %v3498, 0.044715
    %v3503 = vmul.f32 %v3499, 0.044715
    %v3504 = vadd.f32 %v3484, %v3500
    %v3505 = vadd.f32 %v3485, %v3501
    %v3506 = vadd.f32 %v3486, %v3502
    %v3507 = vadd.f32 %v3487, %v3503
    %v3508 = vmul.f32 %v3504, 0.7978846
    %v3509 = vmul.f32 %v3505, 0.7978846
    %v3510 = vmul.f32 %v3506, 0.7978846
    %v3511 = vmul.f32 %v3507, 0.7978846
    %v3512 = vtanh.pop %v3508
    %v3513 = vtanh.pop %v3509
    %v3514 = vtanh.pop %v3510
    %v3515 = vtanh.pop %v3511
    %v3516 = vadd.f32 %v3512, 1.0
    %v3517 = vadd.f32 %v3513, 1.0
    %v3518 = vadd.f32 %v3514, 1.0
    %v3519 = vadd.f32 %v3515, 1.0
    %v3520 = vmul.f32 %v3488, %v3516
    %v3521 = vmul.f32 %v3489, %v3517
    %v3522 = vmul.f32 %v3490, %v3518
    %v3523 = vmul.f32 %v3491, %v3519
    %v3524 = vpack.c.bf16 %v3520, %v3520
    %v3525 = vpack.c.bf16 %v3521, %v3521
    %v3526 = vpack.c.bf16 %v3522, %v3522
    %v3527 = vpack.c.bf16 %v3523, %v3523
    %s3528 = scalar_lea.vmem [#allocation6], 3072
    %v3529 = vld [vmem:[%s3528] sm:$0xff]
    %v3530 = vld [vmem:[%s3528 + $0x8] sm:$0xff]
    %v3531 = vld [vmem:[%s3528 + $0x10] sm:$0xff]
    %v3532 = vld [vmem:[%s3528 + $0x18] sm:$0xff]
    %v3533 = vld [vmem:[%s3528 + $0x20] sm:$0xff]
    %v3534 = vld [vmem:[%s3528 + $0x28] sm:$0xff]
    %v3535 = vld [vmem:[%s3528 + $0x30] sm:$0xff]
    %v3536 = vld [vmem:[%s3528 + $0x38] sm:$0xff]
    %v3537 = vld [vmem:[%s3528 + $0x40] sm:$0xff]
    %v3538 = vld [vmem:[%s3528 + $0x48] sm:$0xff]
    %v3539 = vld [vmem:[%s3528 + $0x50] sm:$0xff]
    %v3540 = vld [vmem:[%s3528 + $0x58] sm:$0xff]
    %v3541 = vld [vmem:[%s3528 + $0x60] sm:$0xff]
    %v3542 = vld [vmem:[%s3528 + $0x68] sm:$0xff]
    %v3543 = vld [vmem:[%s3528 + $0x70] sm:$0xff]
    %v3544 = vld [vmem:[%s3528 + $0x78] sm:$0xff]
    %v3545 = vld [vmem:[%s3528 + $0x80] sm:$0xff]
    %v3546 = vld [vmem:[%s3528 + $0x88] sm:$0xff]
    %v3547 = vld [vmem:[%s3528 + $0x90] sm:$0xff]
    %v3548 = vld [vmem:[%s3528 + $0x98] sm:$0xff]
    %v3549 = vld [vmem:[%s3528 + $0xa0] sm:$0xff]
    %v3550 = vld [vmem:[%s3528 + $0xa8] sm:$0xff]
    %v3551 = vld [vmem:[%s3528 + $0xb0] sm:$0xff]
    %v3552 = vld [vmem:[%s3528 + $0xb8] sm:$0xff]
    %v3553 = vld [vmem:[%s3528 + $0xc0] sm:$0xff]
    %v3554 = vld [vmem:[%s3528 + $0xc8] sm:$0xff]
    %v3555 = vld [vmem:[%s3528 + $0xd0] sm:$0xff]
    %v3556 = vld [vmem:[%s3528 + $0xd8] sm:$0xff]
    %v3557 = vld [vmem:[%s3528 + $0xe0] sm:$0xff]
    %v3558 = vld [vmem:[%s3528 + $0xe8] sm:$0xff]
    %v3559 = vld [vmem:[%s3528 + $0xf0] sm:$0xff]
    %v3560 = vld [vmem:[%s3528 + $0xf8] sm:$0xff]
    %v3561 = vld [vmem:[%s3528 + $0x100] sm:$0xff]
    %v3562 = vld [vmem:[%s3528 + $0x108] sm:$0xff]
    %v3563 = vld [vmem:[%s3528 + $0x110] sm:$0xff]
    %v3564 = vld [vmem:[%s3528 + $0x118] sm:$0xff]
    %v3565 = vld [vmem:[%s3528 + $0x120] sm:$0xff]
    %v3566 = vld [vmem:[%s3528 + $0x128] sm:$0xff]
    %v3567 = vld [vmem:[%s3528 + $0x130] sm:$0xff]
    %v3568 = vld [vmem:[%s3528 + $0x138] sm:$0xff]
    %v3569 = vld [vmem:[%s3528 + $0x140] sm:$0xff]
    %v3570 = vld [vmem:[%s3528 + $0x148] sm:$0xff]
    %v3571 = vld [vmem:[%s3528 + $0x150] sm:$0xff]
    %v3572 = vld [vmem:[%s3528 + $0x158] sm:$0xff]
    %v3573 = vld [vmem:[%s3528 + $0x160] sm:$0xff]
    %v3574 = vld [vmem:[%s3528 + $0x168] sm:$0xff]
    %v3575 = vld [vmem:[%s3528 + $0x170] sm:$0xff]
    %v3576 = vld [vmem:[%s3528 + $0x178] sm:$0xff]
    %v3577 = vld [vmem:[%s3528 + $0x180] sm:$0xff]
    %v3578 = vld [vmem:[%s3528 + $0x188] sm:$0xff]
    %v3579 = vld [vmem:[%s3528 + $0x190] sm:$0xff]
    %v3580 = vld [vmem:[%s3528 + $0x198] sm:$0xff]
    %v3581 = vld [vmem:[%s3528 + $0x1a0] sm:$0xff]
    %v3582 = vld [vmem:[%s3528 + $0x1a8] sm:$0xff]
    %v3583 = vld [vmem:[%s3528 + $0x1b0] sm:$0xff]
    %v3584 = vld [vmem:[%s3528 + $0x1b8] sm:$0xff]
    %v3585 = vld [vmem:[%s3528 + $0x1c0] sm:$0xff]
    %v3586 = vld [vmem:[%s3528 + $0x1c8] sm:$0xff]
    %v3587 = vld [vmem:[%s3528 + $0x1d0] sm:$0xff]
    %v3588 = vld [vmem:[%s3528 + $0x1d8] sm:$0xff]
    %v3589 = vld [vmem:[%s3528 + $0x1e0] sm:$0xff]
    %v3590 = vld [vmem:[%s3528 + $0x1e8] sm:$0xff]
    %v3591 = vld [vmem:[%s3528 + $0x1f0] sm:$0xff]
    %v3592 = vld [vmem:[%s3528 + $0x1f8] sm:$0xff]
    %v3593 = vld [vmem:[%s3528 + $0x200] sm:$0xff]
    %v3594 = vld [vmem:[%s3528 + $0x208] sm:$0xff]
    %v3595 = vld [vmem:[%s3528 + $0x210] sm:$0xff]
    %v3596 = vld [vmem:[%s3528 + $0x218] sm:$0xff]
    %v3597 = vld [vmem:[%s3528 + $0x220] sm:$0xff]
    %v3598 = vld [vmem:[%s3528 + $0x228] sm:$0xff]
    %v3599 = vld [vmem:[%s3528 + $0x230] sm:$0xff]
    %v3600 = vld [vmem:[%s3528 + $0x238] sm:$0xff]
    %v3601 = vld [vmem:[%s3528 + $0x240] sm:$0xff]
    %v3602 = vld [vmem:[%s3528 + $0x248] sm:$0xff]
    %v3603 = vld [vmem:[%s3528 + $0x250] sm:$0xff]
    %v3604 = vld [vmem:[%s3528 + $0x258] sm:$0xff]
    %v3605 = vld [vmem:[%s3528 + $0x260] sm:$0xff]
    %v3606 = vld [vmem:[%s3528 + $0x268] sm:$0xff]
    %v3607 = vld [vmem:[%s3528 + $0x270] sm:$0xff]
    %v3608 = vld [vmem:[%s3528 + $0x278] sm:$0xff]
    %v3609 = vld [vmem:[%s3528 + $0x280] sm:$0xff]
    %v3610 = vld [vmem:[%s3528 + $0x288] sm:$0xff]
    %v3611 = vld [vmem:[%s3528 + $0x290] sm:$0xff]
    %v3612 = vld [vmem:[%s3528 + $0x298] sm:$0xff]
    %v3613 = vld [vmem:[%s3528 + $0x2a0] sm:$0xff]
    %v3614 = vld [vmem:[%s3528 + $0x2a8] sm:$0xff]
    %v3615 = vld [vmem:[%s3528 + $0x2b0] sm:$0xff]
    %v3616 = vld [vmem:[%s3528 + $0x2b8] sm:$0xff]
    %v3617 = vld [vmem:[%s3528 + $0x2c0] sm:$0xff]
    %v3618 = vld [vmem:[%s3528 + $0x2c8] sm:$0xff]
    %v3619 = vld [vmem:[%s3528 + $0x2d0] sm:$0xff]
    %v3620 = vld [vmem:[%s3528 + $0x2d8] sm:$0xff]
    %v3621 = vld [vmem:[%s3528 + $0x2e0] sm:$0xff]
    %v3622 = vld [vmem:[%s3528 + $0x2e8] sm:$0xff]
    %v3623 = vld [vmem:[%s3528 + $0x2f0] sm:$0xff]
    %v3624 = vld [vmem:[%s3528 + $0x2f8] sm:$0xff]
    %v3625 = vld [vmem:[%s3528 + $0x300] sm:$0xff]
    %v3626 = vld [vmem:[%s3528 + $0x308] sm:$0xff]
    %v3627 = vld [vmem:[%s3528 + $0x310] sm:$0xff]
    %v3628 = vld [vmem:[%s3528 + $0x318] sm:$0xff]
    %v3629 = vld [vmem:[%s3528 + $0x320] sm:$0xff]
    %v3630 = vld [vmem:[%s3528 + $0x328] sm:$0xff]
    %v3631 = vld [vmem:[%s3528 + $0x330] sm:$0xff]
    %v3632 = vld [vmem:[%s3528 + $0x338] sm:$0xff]
    %v3633 = vld [vmem:[%s3528 + $0x340] sm:$0xff]
    %v3634 = vld [vmem:[%s3528 + $0x348] sm:$0xff]
    %v3635 = vld [vmem:[%s3528 + $0x350] sm:$0xff]
    %v3636 = vld [vmem:[%s3528 + $0x358] sm:$0xff]
    %v3637 = vld [vmem:[%s3528 + $0x360] sm:$0xff]
    %v3638 = vld [vmem:[%s3528 + $0x368] sm:$0xff]
    %v3639 = vld [vmem:[%s3528 + $0x370] sm:$0xff]
    %v3640 = vld [vmem:[%s3528 + $0x378] sm:$0xff]
    %v3641 = vld [vmem:[%s3528 + $0x380] sm:$0xff]
    %v3642 = vld [vmem:[%s3528 + $0x388] sm:$0xff]
    %v3643 = vld [vmem:[%s3528 + $0x390] sm:$0xff]
    %v3644 = vld [vmem:[%s3528 + $0x398] sm:$0xff]
    %v3645 = vld [vmem:[%s3528 + $0x3a0] sm:$0xff]
    %v3646 = vld [vmem:[%s3528 + $0x3a8] sm:$0xff]
    %v3647 = vld [vmem:[%s3528 + $0x3b0] sm:$0xff]
    %v3648 = vld [vmem:[%s3528 + $0x3b8] sm:$0xff]
    %v3649 = vld [vmem:[%s3528 + $0x3c0] sm:$0xff]
    %v3650 = vld [vmem:[%s3528 + $0x3c8] sm:$0xff]
    %v3651 = vld [vmem:[%s3528 + $0x3d0] sm:$0xff]
    %v3652 = vld [vmem:[%s3528 + $0x3d8] sm:$0xff]
    %v3653 = vld [vmem:[%s3528 + $0x3e0] sm:$0xff]
    %v3654 = vld [vmem:[%s3528 + $0x3e8] sm:$0xff]
    %v3655 = vld [vmem:[%s3528 + $0x3f0] sm:$0xff]
    %v3656 = vld [vmem:[%s3528 + $0x3f8] sm:$0xff]
    %s3657 = scalar_lea.vmem [#allocation10], 34
    %v3658 = vld [vmem:[%s3657] ss:$8 sm:$0xf]
    %v3660 = vlaneseq
    %v3661 = vshrl.u32 %v3660, 7
    %v3662 = vsub.s32 0, %v3661
    %v3663 = vrot.slane %v3658, %v3662
    %v3664 = vlaneseq
    %v3665 = vshrl.u32 %v3664, 7
    %v3666 = vsub.s32 1, %v3665
    %v3667 = vrot.slane %v3658, %v3666
    %v3668 = vlaneseq
    %v3669 = vshrl.u32 %v3668, 7
    %v3670 = vsub.s32 2, %v3669
    %v3671 = vrot.slane %v3658, %v3670
    %v3672 = vlaneseq
    %v3673 = vshrl.u32 %v3672, 7
    %v3674 = vsub.s32 3, %v3673
    %v3675 = vrot.slane %v3658, %v3674
    %v3808 = vunpack.c.l.b16 %v3529
    %v3809 = vunpack.c.h.b16 %v3529
    %v3810 = vunpack.c.l.b16 %v3530
    %v3811 = vunpack.c.h.b16 %v3530
    %v3812 = vunpack.c.l.b16 %v3531
    %v3813 = vunpack.c.h.b16 %v3531
    %v3814 = vunpack.c.l.b16 %v3532
    %v3815 = vunpack.c.h.b16 %v3532
    %v3816 = vunpack.c.l.b16 %v3533
    %v3817 = vunpack.c.h.b16 %v3533
    %v3818 = vunpack.c.l.b16 %v3534
    %v3819 = vunpack.c.h.b16 %v3534
    %v3820 = vunpack.c.l.b16 %v3535
    %v3821 = vunpack.c.h.b16 %v3535
    %v3822 = vunpack.c.l.b16 %v3536
    %v3823 = vunpack.c.h.b16 %v3536
    %v3824 = vunpack.c.l.b16 %v3537
    %v3825 = vunpack.c.h.b16 %v3537
    %v3826 = vunpack.c.l.b16 %v3538
    %v3827 = vunpack.c.h.b16 %v3538
    %v3828 = vunpack.c.l.b16 %v3539
    %v3829 = vunpack.c.h.b16 %v3539
    %v3830 = vunpack.c.l.b16 %v3540
    %v3831 = vunpack.c.h.b16 %v3540
    %v3832 = vunpack.c.l.b16 %v3541
    %v3833 = vunpack.c.h.b16 %v3541
    %v3834 = vunpack.c.l.b16 %v3542
    %v3835 = vunpack.c.h.b16 %v3542
    %v3836 = vunpack.c.l.b16 %v3543
    %v3837 = vunpack.c.h.b16 %v3543
    %v3838 = vunpack.c.l.b16 %v3544
    %v3839 = vunpack.c.h.b16 %v3544
    %v3840 = vunpack.c.l.b16 %v3545
    %v3841 = vunpack.c.h.b16 %v3545
    %v3842 = vunpack.c.l.b16 %v3546
    %v3843 = vunpack.c.h.b16 %v3546
    %v3844 = vunpack.c.l.b16 %v3547
    %v3845 = vunpack.c.h.b16 %v3547
    %v3846 = vunpack.c.l.b16 %v3548
    %v3847 = vunpack.c.h.b16 %v3548
    %v3848 = vunpack.c.l.b16 %v3549
    %v3849 = vunpack.c.h.b16 %v3549
    %v3850 = vunpack.c.l.b16 %v3550
    %v3851 = vunpack.c.h.b16 %v3550
    %v3852 = vunpack.c.l.b16 %v3551
    %v3853 = vunpack.c.h.b16 %v3551
    %v3854 = vunpack.c.l.b16 %v3552
    %v3855 = vunpack.c.h.b16 %v3552
    %v3856 = vunpack.c.l.b16 %v3553
    %v3857 = vunpack.c.h.b16 %v3553
    %v3858 = vunpack.c.l.b16 %v3554
    %v3859 = vunpack.c.h.b16 %v3554
    %v3860 = vunpack.c.l.b16 %v3555
    %v3861 = vunpack.c.h.b16 %v3555
    %v3862 = vunpack.c.l.b16 %v3556
    %v3863 = vunpack.c.h.b16 %v3556
    %v3864 = vunpack.c.l.b16 %v3557
    %v3865 = vunpack.c.h.b16 %v3557
    %v3866 = vunpack.c.l.b16 %v3558
    %v3867 = vunpack.c.h.b16 %v3558
    %v3868 = vunpack.c.l.b16 %v3559
    %v3869 = vunpack.c.h.b16 %v3559
    %v3870 = vunpack.c.l.b16 %v3560
    %v3871 = vunpack.c.h.b16 %v3560
    %v3872 = vunpack.c.l.b16 %v3561
    %v3873 = vunpack.c.h.b16 %v3561
    %v3874 = vunpack.c.l.b16 %v3562
    %v3875 = vunpack.c.h.b16 %v3562
    %v3876 = vunpack.c.l.b16 %v3563
    %v3877 = vunpack.c.h.b16 %v3563
    %v3878 = vunpack.c.l.b16 %v3564
    %v3879 = vunpack.c.h.b16 %v3564
    %v3880 = vunpack.c.l.b16 %v3565
    %v3881 = vunpack.c.h.b16 %v3565
    %v3882 = vunpack.c.l.b16 %v3566
    %v3883 = vunpack.c.h.b16 %v3566
    %v3884 = vunpack.c.l.b16 %v3567
    %v3885 = vunpack.c.h.b16 %v3567
    %v3886 = vunpack.c.l.b16 %v3568
    %v3887 = vunpack.c.h.b16 %v3568
    %v3888 = vunpack.c.l.b16 %v3569
    %v3889 = vunpack.c.h.b16 %v3569
    %v3890 = vunpack.c.l.b16 %v3570
    %v3891 = vunpack.c.h.b16 %v3570
    %v3892 = vunpack.c.l.b16 %v3571
    %v3893 = vunpack.c.h.b16 %v3571
    %v3894 = vunpack.c.l.b16 %v3572
    %v3895 = vunpack.c.h.b16 %v3572
    %v3896 = vunpack.c.l.b16 %v3573
    %v3897 = vunpack.c.h.b16 %v3573
    %v3898 = vunpack.c.l.b16 %v3574
    %v3899 = vunpack.c.h.b16 %v3574
    %v3900 = vunpack.c.l.b16 %v3575
    %v3901 = vunpack.c.h.b16 %v3575
    %v3902 = vunpack.c.l.b16 %v3576
    %v3903 = vunpack.c.h.b16 %v3576
    %v3904 = vunpack.c.l.b16 %v3577
    %v3905 = vunpack.c.h.b16 %v3577
    %v3906 = vunpack.c.l.b16 %v3578
    %v3907 = vunpack.c.h.b16 %v3578
    %v3908 = vunpack.c.l.b16 %v3579
    %v3909 = vunpack.c.h.b16 %v3579
    %v3910 = vunpack.c.l.b16 %v3580
    %v3911 = vunpack.c.h.b16 %v3580
    %v3912 = vunpack.c.l.b16 %v3581
    %v3913 = vunpack.c.h.b16 %v3581
    %v3914 = vunpack.c.l.b16 %v3582
    %v3915 = vunpack.c.h.b16 %v3582
    %v3916 = vunpack.c.l.b16 %v3583
    %v3917 = vunpack.c.h.b16 %v3583
    %v3918 = vunpack.c.l.b16 %v3584
    %v3919 = vunpack.c.h.b16 %v3584
    %v3920 = vunpack.c.l.b16 %v3585
    %v3921 = vunpack.c.h.b16 %v3585
    %v3922 = vunpack.c.l.b16 %v3586
    %v3923 = vunpack.c.h.b16 %v3586
    %v3924 = vunpack.c.l.b16 %v3587
    %v3925 = vunpack.c.h.b16 %v3587
    %v3926 = vunpack.c.l.b16 %v3588
    %v3927 = vunpack.c.h.b16 %v3588
    %v3928 = vunpack.c.l.b16 %v3589
    %v3929 = vunpack.c.h.b16 %v3589
    %v3930 = vunpack.c.l.b16 %v3590
    %v3931 = vunpack.c.h.b16 %v3590
    %v3932 = vunpack.c.l.b16 %v3591
    %v3933 = vunpack.c.h.b16 %v3591
    %v3934 = vunpack.c.l.b16 %v3592
    %v3935 = vunpack.c.h.b16 %v3592
    %v3936 = vunpack.c.l.b16 %v3593
    %v3937 = vunpack.c.h.b16 %v3593
    %v3938 = vunpack.c.l.b16 %v3594
    %v3939 = vunpack.c.h.b16 %v3594
    %v3940 = vunpack.c.l.b16 %v3595
    %v3941 = vunpack.c.h.b16 %v3595
    %v3942 = vunpack.c.l.b16 %v3596
    %v3943 = vunpack.c.h.b16 %v3596
    %v3944 = vunpack.c.l.b16 %v3597
    %v3945 = vunpack.c.h.b16 %v3597
    %v3946 = vunpack.c.l.b16 %v3598
    %v3947 = vunpack.c.h.b16 %v3598
    %v3948 = vunpack.c.l.b16 %v3599
    %v3949 = vunpack.c.h.b16 %v3599
    %v3950 = vunpack.c.l.b16 %v3600
    %v3951 = vunpack.c.h.b16 %v3600
    %v3952 = vunpack.c.l.b16 %v3601
    %v3953 = vunpack.c.h.b16 %v3601
    %v3954 = vunpack.c.l.b16 %v3602
    %v3955 = vunpack.c.h.b16 %v3602
    %v3956 = vunpack.c.l.b16 %v3603
    %v3957 = vunpack.c.h.b16 %v3603
    %v3958 = vunpack.c.l.b16 %v3604
    %v3959 = vunpack.c.h.b16 %v3604
    %v3960 = vunpack.c.l.b16 %v3605
    %v3961 = vunpack.c.h.b16 %v3605
    %v3962 = vunpack.c.l.b16 %v3606
    %v3963 = vunpack.c.h.b16 %v3606
    %v3964 = vunpack.c.l.b16 %v3607
    %v3965 = vunpack.c.h.b16 %v3607
    %v3966 = vunpack.c.l.b16 %v3608
    %v3967 = vunpack.c.h.b16 %v3608
    %v3968 = vunpack.c.l.b16 %v3609
    %v3969 = vunpack.c.h.b16 %v3609
    %v3970 = vunpack.c.l.b16 %v3610
    %v3971 = vunpack.c.h.b16 %v3610
    %v3972 = vunpack.c.l.b16 %v3611
    %v3973 = vunpack.c.h.b16 %v3611
    %v3974 = vunpack.c.l.b16 %v3612
    %v3975 = vunpack.c.h.b16 %v3612
    %v3976 = vunpack.c.l.b16 %v3613
    %v3977 = vunpack.c.h.b16 %v3613
    %v3978 = vunpack.c.l.b16 %v3614
    %v3979 = vunpack.c.h.b16 %v3614
    %v3980 = vunpack.c.l.b16 %v3615
    %v3981 = vunpack.c.h.b16 %v3615
    %v3982 = vunpack.c.l.b16 %v3616
    %v3983 = vunpack.c.h.b16 %v3616
    %v3984 = vunpack.c.l.b16 %v3617
    %v3985 = vunpack.c.h.b16 %v3617
    %v3986 = vunpack.c.l.b16 %v3618
    %v3987 = vunpack.c.h.b16 %v3618
    %v3988 = vunpack.c.l.b16 %v3619
    %v3989 = vunpack.c.h.b16 %v3619
    %v3990 = vunpack.c.l.b16 %v3620
    %v3991 = vunpack.c.h.b16 %v3620
    %v3992 = vunpack.c.l.b16 %v3621
    %v3993 = vunpack.c.h.b16 %v3621
    %v3994 = vunpack.c.l.b16 %v3622
    %v3995 = vunpack.c.h.b16 %v3622
    %v3996 = vunpack.c.l.b16 %v3623
    %v3997 = vunpack.c.h.b16 %v3623
    %v3998 = vunpack.c.l.b16 %v3624
    %v3999 = vunpack.c.h.b16 %v3624
    %v4000 = vunpack.c.l.b16 %v3625
    %v4001 = vunpack.c.h.b16 %v3625
    %v4002 = vunpack.c.l.b16 %v3626
    %v4003 = vunpack.c.h.b16 %v3626
    %v4004 = vunpack.c.l.b16 %v3627
    %v4005 = vunpack.c.h.b16 %v3627
    %v4006 = vunpack.c.l.b16 %v3628
    %v4007 = vunpack.c.h.b16 %v3628
    %v4008 = vunpack.c.l.b16 %v3629
    %v4009 = vunpack.c.h.b16 %v3629
    %v4010 = vunpack.c.l.b16 %v3630
    %v4011 = vunpack.c.h.b16 %v3630
    %v4012 = vunpack.c.l.b16 %v3631
    %v4013 = vunpack.c.h.b16 %v3631
    %v4014 = vunpack.c.l.b16 %v3632
    %v4015 = vunpack.c.h.b16 %v3632
    %v4016 = vunpack.c.l.b16 %v3633
    %v4017 = vunpack.c.h.b16 %v3633
    %v4018 = vunpack.c.l.b16 %v3634
    %v4019 = vunpack.c.h.b16 %v3634
    %v4020 = vunpack.c.l.b16 %v3635
    %v4021 = vunpack.c.h.b16 %v3635
    %v4022 = vunpack.c.l.b16 %v3636
    %v4023 = vunpack.c.h.b16 %v3636
    %v4024 = vunpack.c.l.b16 %v3637
    %v4025 = vunpack.c.h.b16 %v3637
    %v4026 = vunpack.c.l.b16 %v3638
    %v4027 = vunpack.c.h.b16 %v3638
    %v4028 = vunpack.c.l.b16 %v3639
    %v4029 = vunpack.c.h.b16 %v3639
    %v4030 = vunpack.c.l.b16 %v3640
    %v4031 = vunpack.c.h.b16 %v3640
    %v4032 = vunpack.c.l.b16 %v3641
    %v4033 = vunpack.c.h.b16 %v3641
    %v4034 = vunpack.c.l.b16 %v3642
    %v4035 = vunpack.c.h.b16 %v3642
    %v4036 = vunpack.c.l.b16 %v3643
    %v4037 = vunpack.c.h.b16 %v3643
    %v4038 = vunpack.c.l.b16 %v3644
    %v4039 = vunpack.c.h.b16 %v3644
    %v4040 = vunpack.c.l.b16 %v3645
    %v4041 = vunpack.c.h.b16 %v3645
    %v4042 = vunpack.c.l.b16 %v3646
    %v4043 = vunpack.c.h.b16 %v3646
    %v4044 = vunpack.c.l.b16 %v3647
    %v4045 = vunpack.c.h.b16 %v3647
    %v4046 = vunpack.c.l.b16 %v3648
    %v4047 = vunpack.c.h.b16 %v3648
    %v4048 = vunpack.c.l.b16 %v3649
    %v4049 = vunpack.c.h.b16 %v3649
    %v4050 = vunpack.c.l.b16 %v3650
    %v4051 = vunpack.c.h.b16 %v3650
    %v4052 = vunpack.c.l.b16 %v3651
    %v4053 = vunpack.c.h.b16 %v3651
    %v4054 = vunpack.c.l.b16 %v3652
    %v4055 = vunpack.c.h.b16 %v3652
    %v4056 = vunpack.c.l.b16 %v3653
    %v4057 = vunpack.c.h.b16 %v3653
    %v4058 = vunpack.c.l.b16 %v3654
    %v4059 = vunpack.c.h.b16 %v3654
    %v4060 = vunpack.c.l.b16 %v3655
    %v4061 = vunpack.c.h.b16 %v3655
    %v4062 = vunpack.c.l.b16 %v3656
    %v4063 = vunpack.c.h.b16 %v3656
    %v4064 = vpack.c.b16 %v3812, %v3808
    %v4065 = vpack.c.b16 %v3813, %v3809
    %v4066 = vpack.c.b16 %v3814, %v3810
    %v4067 = vpack.c.b16 %v3815, %v3811
    %v4068 = vpack.c.b16 %v3820, %v3816
    %v4069 = vpack.c.b16 %v3821, %v3817
    %v4070 = vpack.c.b16 %v3822, %v3818
    %v4071 = vpack.c.b16 %v3823, %v3819
    %v4072 = vpack.c.b16 %v3828, %v3824
    %v4073 = vpack.c.b16 %v3829, %v3825
    %v4074 = vpack.c.b16 %v3830, %v3826
    %v4075 = vpack.c.b16 %v3831, %v3827
    %v4076 = vpack.c.b16 %v3836, %v3832
    %v4077 = vpack.c.b16 %v3837, %v3833
    %v4078 = vpack.c.b16 %v3838, %v3834
    %v4079 = vpack.c.b16 %v3839, %v3835
    %v4080 = vpack.c.b16 %v3844, %v3840
    %v4081 = vpack.c.b16 %v3845, %v3841
    %v4082 = vpack.c.b16 %v3846, %v3842
    %v4083 = vpack.c.b16 %v3847, %v3843
    %v4084 = vpack.c.b16 %v3852, %v3848
    %v4085 = vpack.c.b16 %v3853, %v3849
    %v4086 = vpack.c.b16 %v3854, %v3850
    %v4087 = vpack.c.b16 %v3855, %v3851
    %v4088 = vpack.c.b16 %v3860, %v3856
    %v4089 = vpack.c.b16 %v3861, %v3857
    %v4090 = vpack.c.b16 %v3862, %v3858
    %v4091 = vpack.c.b16 %v3863, %v3859
    %v4092 = vpack.c.b16 %v3868, %v3864
    %v4093 = vpack.c.b16 %v3869, %v3865
    %v4094 = vpack.c.b16 %v3870, %v3866
    %v4095 = vpack.c.b16 %v3871, %v3867
    %v4096 = vpack.c.b16 %v3876, %v3872
    %v4097 = vpack.c.b16 %v3877, %v3873
    %v4098 = vpack.c.b16 %v3878, %v3874
    %v4099 = vpack.c.b16 %v3879, %v3875
    %v4100 = vpack.c.b16 %v3884, %v3880
    %v4101 = vpack.c.b16 %v3885, %v3881
    %v4102 = vpack.c.b16 %v3886, %v3882
    %v4103 = vpack.c.b16 %v3887, %v3883
    %v4104 = vpack.c.b16 %v3892, %v3888
    %v4105 = vpack.c.b16 %v3893, %v3889
    %v4106 = vpack.c.b16 %v3894, %v3890
    %v4107 = vpack.c.b16 %v3895, %v3891
    %v4108 = vpack.c.b16 %v3900, %v3896
    %v4109 = vpack.c.b16 %v3901, %v3897
    %v4110 = vpack.c.b16 %v3902, %v3898
    %v4111 = vpack.c.b16 %v3903, %v3899
    %v4112 = vpack.c.b16 %v3908, %v3904
    %v4113 = vpack.c.b16 %v3909, %v3905
    %v4114 = vpack.c.b16 %v3910, %v3906
    %v4115 = vpack.c.b16 %v3911, %v3907
    %v4116 = vpack.c.b16 %v3916, %v3912
    %v4117 = vpack.c.b16 %v3917, %v3913
    %v4118 = vpack.c.b16 %v3918, %v3914
    %v4119 = vpack.c.b16 %v3919, %v3915
    %v4120 = vpack.c.b16 %v3924, %v3920
    %v4121 = vpack.c.b16 %v3925, %v3921
    %v4122 = vpack.c.b16 %v3926, %v3922
    %v4123 = vpack.c.b16 %v3927, %v3923
    %v4124 = vpack.c.b16 %v3932, %v3928
    %v4125 = vpack.c.b16 %v3933, %v3929
    %v4126 = vpack.c.b16 %v3934, %v3930
    %v4127 = vpack.c.b16 %v3935, %v3931
    %v4128 = vpack.c.b16 %v3940, %v3936
    %v4129 = vpack.c.b16 %v3941, %v3937
    %v4130 = vpack.c.b16 %v3942, %v3938
    %v4131 = vpack.c.b16 %v3943, %v3939
    %v4132 = vpack.c.b16 %v3948, %v3944
    %v4133 = vpack.c.b16 %v3949, %v3945
    %v4134 = vpack.c.b16 %v3950, %v3946
    %v4135 = vpack.c.b16 %v3951, %v3947
    %v4136 = vpack.c.b16 %v3956, %v3952
    %v4137 = vpack.c.b16 %v3957, %v3953
    %v4138 = vpack.c.b16 %v3958, %v3954
    %v4139 = vpack.c.b16 %v3959, %v3955
    %v4140 = vpack.c.b16 %v3964, %v3960
    %v4141 = vpack.c.b16 %v3965, %v3961
    %v4142 = vpack.c.b16 %v3966, %v3962
    %v4143 = vpack.c.b16 %v3967, %v3963
    %v4144 = vpack.c.b16 %v3972, %v3968
    %v4145 = vpack.c.b16 %v3973, %v3969
    %v4146 = vpack.c.b16 %v3974, %v3970
    %v4147 = vpack.c.b16 %v3975, %v3971
    %v4148 = vpack.c.b16 %v3980, %v3976
    %v4149 = vpack.c.b16 %v3981, %v3977
    %v4150 = vpack.c.b16 %v3982, %v3978
    %v4151 = vpack.c.b16 %v3983, %v3979
    %v4152 = vpack.c.b16 %v3988, %v3984
    %v4153 = vpack.c.b16 %v3989, %v3985
    %v4154 = vpack.c.b16 %v3990, %v3986
    %v4155 = vpack.c.b16 %v3991, %v3987
    %v4156 = vpack.c.b16 %v3996, %v3992
    %v4157 = vpack.c.b16 %v3997, %v3993
    %v4158 = vpack.c.b16 %v3998, %v3994
    %v4159 = vpack.c.b16 %v3999, %v3995
    %v4160 = vpack.c.b16 %v4004, %v4000
    %v4161 = vpack.c.b16 %v4005, %v4001
    %v4162 = vpack.c.b16 %v4006, %v4002
    %v4163 = vpack.c.b16 %v4007, %v4003
    %v4164 = vpack.c.b16 %v4012, %v4008
    %v4165 = vpack.c.b16 %v4013, %v4009
    %v4166 = vpack.c.b16 %v4014, %v4010
    %v4167 = vpack.c.b16 %v4015, %v4011
    %v4168 = vpack.c.b16 %v4020, %v4016
    %v4169 = vpack.c.b16 %v4021, %v4017
    %v4170 = vpack.c.b16 %v4022, %v4018
    %v4171 = vpack.c.b16 %v4023, %v4019
    %v4172 = vpack.c.b16 %v4028, %v4024
    %v4173 = vpack.c.b16 %v4029, %v4025
    %v4174 = vpack.c.b16 %v4030, %v4026
    %v4175 = vpack.c.b16 %v4031, %v4027
    %v4176 = vpack.c.b16 %v4036, %v4032
    %v4177 = vpack.c.b16 %v4037, %v4033
    %v4178 = vpack.c.b16 %v4038, %v4034
    %v4179 = vpack.c.b16 %v4039, %v4035
    %v4180 = vpack.c.b16 %v4044, %v4040
    %v4181 = vpack.c.b16 %v4045, %v4041
    %v4182 = vpack.c.b16 %v4046, %v4042
    %v4183 = vpack.c.b16 %v4047, %v4043
    %v4184 = vpack.c.b16 %v4052, %v4048
    %v4185 = vpack.c.b16 %v4053, %v4049
    %v4186 = vpack.c.b16 %v4054, %v4050
    %v4187 = vpack.c.b16 %v4055, %v4051
    %v4188 = vpack.c.b16 %v4060, %v4056
    %v4189 = vpack.c.b16 %v4061, %v4057
    %v4190 = vpack.c.b16 %v4062, %v4058
    %v4191 = vpack.c.b16 %v4063, %v4059
    %4320 = vmatprep.subr.bf16.mxu0 %v4065
    %4321 = vmatpush1.bf16.msra.mxu0 %v4064
    %4322 = vmatprep.subr.bf16.mxu0 %v4069
    %4323 = vmatpush1.bf16.msra.mxu0 %v4068
    %4324 = vmatprep.subr.bf16.mxu0 %v4073
    %4325 = vmatpush1.bf16.msra.mxu0 %v4072
    %4326 = vmatprep.subr.bf16.mxu0 %v4077
    %4327 = vmatpush1.bf16.msra.mxu0 %v4076
    %4328 = vmatprep.subr.bf16.mxu0 %v4081
    %4329 = vmatpush1.bf16.msra.mxu0 %v4080
    %4330 = vmatprep.subr.bf16.mxu0 %v4085
    %4331 = vmatpush1.bf16.msra.mxu0 %v4084
    %4332 = vmatprep.subr.bf16.mxu0 %v4089
    %4333 = vmatpush1.bf16.msra.mxu0 %v4088
    %4334 = vmatprep.subr.bf16.mxu0 %v4093
    %4335 = vmatpush1.bf16.msra.mxu0 %v4092
    %4336 = vmatprep.subr.bf16.mxu0 %v4097
    %4337 = vmatpush1.bf16.msra.mxu0 %v4096
    %4338 = vmatprep.subr.bf16.mxu0 %v4101
    %4339 = vmatpush1.bf16.msra.mxu0 %v4100
    %4340 = vmatprep.subr.bf16.mxu0 %v4105
    %4341 = vmatpush1.bf16.msra.mxu0 %v4104
    %4342 = vmatprep.subr.bf16.mxu0 %v4109
    %4343 = vmatpush1.bf16.msra.mxu0 %v4108
    %4344 = vmatprep.subr.bf16.mxu0 %v4113
    %4345 = vmatpush1.bf16.msra.mxu0 %v4112
    %4346 = vmatprep.subr.bf16.mxu0 %v4117
    %4347 = vmatpush1.bf16.msra.mxu0 %v4116
    %4348 = vmatprep.subr.bf16.mxu0 %v4121
    %4349 = vmatpush1.bf16.msra.mxu0 %v4120
    %4350 = vmatprep.subr.bf16.mxu0 %v4125
    %4351 = vmatpush1.bf16.msra.mxu0 %v4124
    %4352 = vmatprep.mubr.bf16.mxu0 %v3525
    %4353 = vmatmul.mubr.bf16.gmra.mrb[0].mxu0 %v3524
    %v4354 = vpop.f32.mrb[0].mxu0
    %v4355 = vadd.f32 %v3663, %v4354
    %v4356 = vpop.f32.mrb[0].mxu0
    %v4357 = vadd.f32 %v3667, %v4356
    %v4358 = vpop.f32.mrb[0].mxu0
    %v4359 = vpop.f32.mrb[0].mxu0
    %4360 = vdwg.mxu0
    %4361 = vmatprep.subr.bf16.mxu0 %v4129
    %4362 = vmatpush1.bf16.msra.mxu0 %v4128
    %4363 = vmatprep.subr.bf16.mxu0 %v4133
    %4364 = vmatpush1.bf16.msra.mxu0 %v4132
    %4365 = vmatprep.subr.bf16.mxu0 %v4137
    %4366 = vmatpush1.bf16.msra.mxu0 %v4136
    %4367 = vmatprep.subr.bf16.mxu0 %v4141
    %4368 = vmatpush1.bf16.msra.mxu0 %v4140
    %4369 = vmatprep.subr.bf16.mxu0 %v4145
    %4370 = vmatpush1.bf16.msra.mxu0 %v4144
    %4371 = vmatprep.subr.bf16.mxu0 %v4149
    %4372 = vmatpush1.bf16.msra.mxu0 %v4148
    %4373 = vmatprep.subr.bf16.mxu0 %v4153
    %4374 = vmatpush1.bf16.msra.mxu0 %v4152
    %4375 = vmatprep.subr.bf16.mxu0 %v4157
    %4376 = vmatpush1.bf16.msra.mxu0 %v4156
    %4377 = vmatprep.subr.bf16.mxu0 %v4161
    %4378 = vmatpush1.bf16.msra.mxu0 %v4160
    %4379 = vmatprep.subr.bf16.mxu0 %v4165
    %4380 = vmatpush1.bf16.msra.mxu0 %v4164
    %4381 = vmatprep.subr.bf16.mxu0 %v4169
    %4382 = vmatpush1.bf16.msra.mxu0 %v4168
    %4383 = vmatprep.subr.bf16.mxu0 %v4173
    %4384 = vmatpush1.bf16.msra.mxu0 %v4172
    %4385 = vmatprep.subr.bf16.mxu0 %v4177
    %4386 = vmatpush1.bf16.msra.mxu0 %v4176
    %4387 = vmatprep.subr.bf16.mxu0 %v4181
    %4388 = vmatpush1.bf16.msra.mxu0 %v4180
    %4389 = vmatprep.subr.bf16.mxu0 %v4185
    %4390 = vmatpush1.bf16.msra.mxu0 %v4184
    %4391 = vmatprep.subr.bf16.mxu0 %v4189
    %4392 = vmatpush1.bf16.msra.mxu0 %v4188
    %4393 = vmatprep.mubr.bf16.mxu0 %v3527
    %4394 = vmatmul.mubr.bf16.gmra.mrb[0].mxu0 %v3526
    %v4395 = vpop.f32.mrb[0].mxu0
    %v4396 = vadd.f32 %v4355, %v4395
    %v4397 = vpop.f32.mrb[0].mxu0
    %v4398 = vadd.f32 %v4357, %v4397
    %v4399 = vpop.f32.mrb[0].mxu0
    %v4400 = vpop.f32.mrb[0].mxu0
    %4401 = vdwg.mxu0
    %4402 = vmatprep.subr.bf16.mxu0 %v4067
    %4403 = vmatpush1.bf16.msra.mxu0 %v4066
    %4404 = vmatprep.subr.bf16.mxu0 %v4071
    %4405 = vmatpush1.bf16.msra.mxu0 %v4070
    %4406 = vmatprep.subr.bf16.mxu0 %v4075
    %4407 = vmatpush1.bf16.msra.mxu0 %v4074
    %4408 = vmatprep.subr.bf16.mxu0 %v4079
    %4409 = vmatpush1.bf16.msra.mxu0 %v4078
    %4410 = vmatprep.subr.bf16.mxu0 %v4083
    %4411 = vmatpush1.bf16.msra.mxu0 %v4082
    %4412 = vmatprep.subr.bf16.mxu0 %v4087
    %4413 = vmatpush1.bf16.msra.mxu0 %v4086
    %4414 = vmatprep.subr.bf16.mxu0 %v4091
    %4415 = vmatpush1.bf16.msra.mxu0 %v4090
    %4416 = vmatprep.subr.bf16.mxu0 %v4095
    %4417 = vmatpush1.bf16.msra.mxu0 %v4094
    %4418 = vmatprep.subr.bf16.mxu0 %v4099
    %4419 = vmatpush1.bf16.msra.mxu0 %v4098
    %4420 = vmatprep.subr.bf16.mxu0 %v4103
    %4421 = vmatpush1.bf16.msra.mxu0 %v4102
    %4422 = vmatprep.subr.bf16.mxu0 %v4107
    %4423 = vmatpush1.bf16.msra.mxu0 %v4106
    %4424 = vmatprep.subr.bf16.mxu0 %v4111
    %4425 = vmatpush1.bf16.msra.mxu0 %v4110
    %4426 = vmatprep.subr.bf16.mxu0 %v4115
    %4427 = vmatpush1.bf16.msra.mxu0 %v4114
    %4428 = vmatprep.subr.bf16.mxu0 %v4119
    %4429 = vmatpush1.bf16.msra.mxu0 %v4118
    %4430 = vmatprep.subr.bf16.mxu0 %v4123
    %4431 = vmatpush1.bf16.msra.mxu0 %v4122
    %4432 = vmatprep.subr.bf16.mxu0 %v4127
    %4433 = vmatpush1.bf16.msra.mxu0 %v4126
    %4434 = vmatprep.mubr.bf16.mxu0 %v3525
    %4435 = vmatmul.mubr.bf16.gmra.mrb[0].mxu0 %v3524
    %v4436 = vpop.f32.mrb[0].mxu0
    %v4437 = vadd.f32 %v3671, %v4436
    %v4438 = vpop.f32.mrb[0].mxu0
    %v4439 = vadd.f32 %v3675, %v4438
    %v4440 = vpop.f32.mrb[0].mxu0
    %v4441 = vpop.f32.mrb[0].mxu0
    %4442 = vdwg.mxu0
    %4443 = vmatprep.subr.bf16.mxu0 %v4131
    %4444 = vmatpush1.bf16.msra.mxu0 %v4130
    %4445 = vmatprep.subr.bf16.mxu0 %v4135
    %4446 = vmatpush1.bf16.msra.mxu0 %v4134
    %4447 = vmatprep.subr.bf16.mxu0 %v4139
    %4448 = vmatpush1.bf16.msra.mxu0 %v4138
    %4449 = vmatprep.subr.bf16.mxu0 %v4143
    %4450 = vmatpush1.bf16.msra.mxu0 %v4142
    %4451 = vmatprep.subr.bf16.mxu0 %v4147
    %4452 = vmatpush1.bf16.msra.mxu0 %v4146
    %4453 = vmatprep.subr.bf16.mxu0 %v4151
    %4454 = vmatpush1.bf16.msra.mxu0 %v4150
    %4455 = vmatprep.subr.bf16.mxu0 %v4155
    %4456 = vmatpush1.bf16.msra.mxu0 %v4154
    %4457 = vmatprep.subr.bf16.mxu0 %v4159
    %4458 = vmatpush1.bf16.msra.mxu0 %v4158
    %4459 = vmatprep.subr.bf16.mxu0 %v4163
    %4460 = vmatpush1.bf16.msra.mxu0 %v4162
    %4461 = vmatprep.subr.bf16.mxu0 %v4167
    %4462 = vmatpush1.bf16.msra.mxu0 %v4166
    %4463 = vmatprep.subr.bf16.mxu0 %v4171
    %4464 = vmatpush1.bf16.msra.mxu0 %v4170
    %4465 = vmatprep.subr.bf16.mxu0 %v4175
    %4466 = vmatpush1.bf16.msra.mxu0 %v4174
    %4467 = vmatprep.subr.bf16.mxu0 %v4179
    %4468 = vmatpush1.bf16.msra.mxu0 %v4178
    %4469 = vmatprep.subr.bf16.mxu0 %v4183
    %4470 = vmatpush1.bf16.msra.mxu0 %v4182
    %4471 = vmatprep.subr.bf16.mxu0 %v4187
    %4472 = vmatpush1.bf16.msra.mxu0 %v4186
    %4473 = vmatprep.subr.bf16.mxu0 %v4191
    %4474 = vmatpush1.bf16.msra.mxu0 %v4190
    %4475 = vmatprep.mubr.bf16.mxu0 %v3527
    %4476 = vmatmul.mubr.bf16.gmra.mrb[0].mxu0 %v3526
    %v4477 = vpop.f32.mrb[0].mxu0
    %v4478 = vadd.f32 %v4437, %v4477
    %v4479 = vpop.f32.mrb[0].mxu0
    %v4480 = vadd.f32 %v4439, %v4479
    %v4481 = vpop.f32.mrb[0].mxu0
    %v4482 = vpop.f32.mrb[0].mxu0
    %4483 = vdwg.mxu0
    %s4484 = scalar_lea.vmem [#allocation10], 35
    %v4485 = vld [vmem:[%s4484] ss:$8 sm:$0xf]
    %s4486 = scalar_lea.vmem [#allocation10], 36
    %v4487 = vld [vmem:[%s4486] ss:$8 sm:$0xf]
    %v4488 = vadd.f32 %v4396, %v4398
    %v4489 = vadd.f32 %v4488, %v4478
    %v4490 = vadd.f32 %v4489, %v4480
    %4491 = vadd.xlane.f32.xlu0 %v4490
    %v4492 = vpop.xlane.xlu0 %4491
    %v4493 = vmul.f32 %v4492, %v1242
    %v4494 = vmul.f32 %v4396, %v4396
    %v4495 = vmul.f32 %v4398, %v4398
    %v4496 = vmul.f32 %v4478, %v4478
    %v4497 = vmul.f32 %v4480, %v4480
    %v4498 = vadd.f32 %v4494, %v4495
    %v4499 = vadd.f32 %v4498, %v4496
    %v4500 = vadd.f32 %v4499, %v4497
    %4501 = vadd.xlane.f32.xlu0 %v4500
    %v4502 = vpop.xlane.xlu0 %4501
    %v4503 = vmul.f32 %v4502, %v1242
    %v4504 = vmul.f32 %v4493, %v4493
    %v4505 = vsub.f32 %v4503, %v4504
    %v4506 = vadd.f32 %v4505, 1e-05
    %v4507 = vrsqrt.pop %v4506
    %v4509 = vlaneseq
    %v4510 = vshrl.u32 %v4509, 7
    %v4511 = vsub.s32 0, %v4510
    %v4512 = vrot.slane %v4485, %v4511
    %v4513 = vlaneseq
    %v4514 = vshrl.u32 %v4513, 7
    %v4515 = vsub.s32 1, %v4514
    %v4516 = vrot.slane %v4485, %v4515
    %v4517 = vlaneseq
    %v4518 = vshrl.u32 %v4517, 7
    %v4519 = vsub.s32 2, %v4518
    %v4520 = vrot.slane %v4485, %v4519
    %v4521 = vlaneseq
    %v4522 = vshrl.u32 %v4521, 7
    %v4523 = vsub.s32 3, %v4522
    %v4524 = vrot.slane %v4485, %v4523
    %v4529 = vmul.f32 %v4507, %v4512
    %v4530 = vmul.f32 %v4507, %v4516
    %v4531 = vmul.f32 %v4507, %v4520
    %v4532 = vmul.f32 %v4507, %v4524
    %v4533 = vmul.f32 %v4396, %v4529
    %v4534 = vmul.f32 %v4398, %v4530
    %v4535 = vmul.f32 %v4478, %v4531
    %v4536 = vmul.f32 %v4480, %v4532
    %v4537 = vmul.f32 %v4493, %v4529
    %v4538 = vmul.f32 %v4493, %v4530
    %v4539 = vmul.f32 %v4493, %v4531
    %v4540 = vmul.f32 %v4493, %v4532
    %v4542 = vlaneseq
    %v4543 = vshrl.u32 %v4542, 7
    %v4544 = vsub.s32 0, %v4543
    %v4545 = vrot.slane %v4487, %v4544
    %v4546 = vlaneseq
    %v4547 = vshrl.u32 %v4546, 7
    %v4548 = vsub.s32 1, %v4547
    %v4549 = vrot.slane %v4487, %v4548
    %v4550 = vlaneseq
    %v4551 = vshrl.u32 %v4550, 7
    %v4552 = vsub.s32 2, %v4551
    %v4553 = vrot.slane %v4487, %v4552
    %v4554 = vlaneseq
    %v4555 = vshrl.u32 %v4554, 7
    %v4556 = vsub.s32 3, %v4555
    %v4557 = vrot.slane %v4487, %v4556
    %v4562 = vsub.f32 %v4545, %v4537
    %v4563 = vsub.f32 %v4549, %v4538
    %v4564 = vsub.f32 %v4553, %v4539
    %v4565 = vsub.f32 %v4557, %v4540
    %v4566 = vadd.f32 %v4533, %v4562
    %v4567 = vadd.f32 %v4534, %v4563
    %v4568 = vadd.f32 %v4535, %v4564
    %v4569 = vadd.f32 %v4536, %v4565
    %v4570 = vadd.f32 %v4566, %v2438
    %v4571 = vadd.f32 %v4567, %v2439
    %v4572 = vadd.f32 %v4568, %v2440
    %v4573 = vadd.f32 %v4569, %v2441
    %v4574 = vmul.f32 %v4570, 0.5
    %v4575 = vmul.f32 %v4571, 0.5
    %v4576 = vmul.f32 %v4572, 0.5
    %v4577 = vmul.f32 %v4573, 0.5
    %v4578 = vmul.f32 %v4570, %v4570
    %v4579 = vmul.f32 %v4571, %v4571
    %v4580 = vmul.f32 %v4572, %v4572
    %v4581 = vmul.f32 %v4573, %v4573
    %v4582 = vmul.f32 %v4578, %v4570
    %v4583 = vmul.f32 %v4579, %v4571
    %v4584 = vmul.f32 %v4580, %v4572
    %v4585 = vmul.f32 %v4581, %v4573
    %v4586 = vmul.f32 %v4582, 0.044715
    %v4587 = vmul.f32 %v4583, 0.044715
    %v4588 = vmul.f32 %v4584, 0.044715
    %v4589 = vmul.f32 %v4585, 0.044715
    %v4590 = vadd.f32 %v4570, %v4586
    %v4591 = vadd.f32 %v4571, %v4587
    %v4592 = vadd.f32 %v4572, %v4588
    %v4593 = vadd.f32 %v4573, %v4589
    %v4594 = vmul.f32 %v4590, 0.7978846
    %v4595 = vmul.f32 %v4591, 0.7978846
    %v4596 = vmul.f32 %v4592, 0.7978846
    %v4597 = vmul.f32 %v4593, 0.7978846
    %v4598 = vtanh.pop %v4594
    %v4599 = vtanh.pop %v4595
    %v4600 = vtanh.pop %v4596
    %v4601 = vtanh.pop %v4597
    %v4602 = vadd.f32 %v4598, 1.0
    %v4603 = vadd.f32 %v4599, 1.0
    %v4604 = vadd.f32 %v4600, 1.0
    %v4605 = vadd.f32 %v4601, 1.0
    %v4606 = vmul.f32 %v4574, %v4602
    %v4607 = vmul.f32 %v4575, %v4603
    %v4608 = vmul.f32 %v4576, %v4604
    %v4609 = vmul.f32 %v4577, %v4605
    %v4610 = vpack.c.bf16 %v4606, %v4606
    %v4611 = vpack.c.bf16 %v4607, %v4607
    %v4612 = vpack.c.bf16 %v4608, %v4608
    %v4613 = vpack.c.bf16 %v4609, %v4609
    %s4614 = scalar_lea.vmem [#allocation6], 4096
    %v4615 = vld [vmem:[%s4614] sm:$0xff]
    %v4616 = vld [vmem:[%s4614 + $0x8] sm:$0xff]
    %v4617 = vld [vmem:[%s4614 + $0x10] sm:$0xff]
    %v4618 = vld [vmem:[%s4614 + $0x18] sm:$0xff]
    %v4619 = vld [vmem:[%s4614 + $0x20] sm:$0xff]
    %v4620 = vld [vmem:[%s4614 + $0x28] sm:$0xff]
    %v4621 = vld [vmem:[%s4614 + $0x30] sm:$0xff]
    %v4622 = vld [vmem:[%s4614 + $0x38] sm:$0xff]
    %v4623 = vld [vmem:[%s4614 + $0x40] sm:$0xff]
    %v4624 = vld [vmem:[%s4614 + $0x48] sm:$0xff]
    %v4625 = vld [vmem:[%s4614 + $0x50] sm:$0xff]
    %v4626 = vld [vmem:[%s4614 + $0x58] sm:$0xff]
    %v4627 = vld [vmem:[%s4614 + $0x60] sm:$0xff]
    %v4628 = vld [vmem:[%s4614 + $0x68] sm:$0xff]
    %v4629 = vld [vmem:[%s4614 + $0x70] sm:$0xff]
    %v4630 = vld [vmem:[%s4614 + $0x78] sm:$0xff]
    %v4631 = vld [vmem:[%s4614 + $0x80] sm:$0xff]
    %v4632 = vld [vmem:[%s4614 + $0x88] sm:$0xff]
    %v4633 = vld [vmem:[%s4614 + $0x90] sm:$0xff]
    %v4634 = vld [vmem:[%s4614 + $0x98] sm:$0xff]
    %v4635 = vld [vmem:[%s4614 + $0xa0] sm:$0xff]
    %v4636 = vld [vmem:[%s4614 + $0xa8] sm:$0xff]
    %v4637 = vld [vmem:[%s4614 + $0xb0] sm:$0xff]
    %v4638 = vld [vmem:[%s4614 + $0xb8] sm:$0xff]
    %v4639 = vld [vmem:[%s4614 + $0xc0] sm:$0xff]
    %v4640 = vld [vmem:[%s4614 + $0xc8] sm:$0xff]
    %v4641 = vld [vmem:[%s4614 + $0xd0] sm:$0xff]
    %v4642 = vld [vmem:[%s4614 + $0xd8] sm:$0xff]
    %v4643 = vld [vmem:[%s4614 + $0xe0] sm:$0xff]
    %v4644 = vld [vmem:[%s4614 + $0xe8] sm:$0xff]
    %v4645 = vld [vmem:[%s4614 + $0xf0] sm:$0xff]
    %v4646 = vld [vmem:[%s4614 + $0xf8] sm:$0xff]
    %v4647 = vld [vmem:[%s4614 + $0x100] sm:$0xff]
    %v4648 = vld [vmem:[%s4614 + $0x108] sm:$0xff]
    %v4649 = vld [vmem:[%s4614 + $0x110] sm:$0xff]
    %v4650 = vld [vmem:[%s4614 + $0x118] sm:$0xff]
    %v4651 = vld [vmem:[%s4614 + $0x120] sm:$0xff]
    %v4652 = vld [vmem:[%s4614 + $0x128] sm:$0xff]
    %v4653 = vld [vmem:[%s4614 + $0x130] sm:$0xff]
    %v4654 = vld [vmem:[%s4614 + $0x138] sm:$0xff]
    %v4655 = vld [vmem:[%s4614 + $0x140] sm:$0xff]
    %v4656 = vld [vmem:[%s4614 + $0x148] sm:$0xff]
    %v4657 = vld [vmem:[%s4614 + $0x150] sm:$0xff]
    %v4658 = vld [vmem:[%s4614 + $0x158] sm:$0xff]
    %v4659 = vld [vmem:[%s4614 + $0x160] sm:$0xff]
    %v4660 = vld [vmem:[%s4614 + $0x168] sm:$0xff]
    %v4661 = vld [vmem:[%s4614 + $0x170] sm:$0xff]
    %v4662 = vld [vmem:[%s4614 + $0x178] sm:$0xff]
    %v4663 = vld [vmem:[%s4614 + $0x180] sm:$0xff]
    %v4664 = vld [vmem:[%s4614 + $0x188] sm:$0xff]
    %v4665 = vld [vmem:[%s4614 + $0x190] sm:$0xff]
    %v4666 = vld [vmem:[%s4614 + $0x198] sm:$0xff]
    %v4667 = vld [vmem:[%s4614 + $0x1a0] sm:$0xff]
    %v4668 = vld [vmem:[%s4614 + $0x1a8] sm:$0xff]
    %v4669 = vld [vmem:[%s4614 + $0x1b0] sm:$0xff]
    %v4670 = vld [vmem:[%s4614 + $0x1b8] sm:$0xff]
    %v4671 = vld [vmem:[%s4614 + $0x1c0] sm:$0xff]
    %v4672 = vld [vmem:[%s4614 + $0x1c8] sm:$0xff]
    %v4673 = vld [vmem:[%s4614 + $0x1d0] sm:$0xff]
    %v4674 = vld [vmem:[%s4614 + $0x1d8] sm:$0xff]
    %v4675 = vld [vmem:[%s4614 + $0x1e0] sm:$0xff]
    %v4676 = vld [vmem:[%s4614 + $0x1e8] sm:$0xff]
    %v4677 = vld [vmem:[%s4614 + $0x1f0] sm:$0xff]
    %v4678 = vld [vmem:[%s4614 + $0x1f8] sm:$0xff]
    %v4679 = vld [vmem:[%s4614 + $0x200] sm:$0xff]
    %v4680 = vld [vmem:[%s4614 + $0x208] sm:$0xff]
    %v4681 = vld [vmem:[%s4614 + $0x210] sm:$0xff]
    %v4682 = vld [vmem:[%s4614 + $0x218] sm:$0xff]
    %v4683 = vld [vmem:[%s4614 + $0x220] sm:$0xff]
    %v4684 = vld [vmem:[%s4614 + $0x228] sm:$0xff]
    %v4685 = vld [vmem:[%s4614 + $0x230] sm:$0xff]
    %v4686 = vld [vmem:[%s4614 + $0x238] sm:$0xff]
    %v4687 = vld [vmem:[%s4614 + $0x240] sm:$0xff]
    %v4688 = vld [vmem:[%s4614 + $0x248] sm:$0xff]
    %v4689 = vld [vmem:[%s4614 + $0x250] sm:$0xff]
    %v4690 = vld [vmem:[%s4614 + $0x258] sm:$0xff]
    %v4691 = vld [vmem:[%s4614 + $0x260] sm:$0xff]
    %v4692 = vld [vmem:[%s4614 + $0x268] sm:$0xff]
    %v4693 = vld [vmem:[%s4614 + $0x270] sm:$0xff]
    %v4694 = vld [vmem:[%s4614 + $0x278] sm:$0xff]
    %v4695 = vld [vmem:[%s4614 + $0x280] sm:$0xff]
    %v4696 = vld [vmem:[%s4614 + $0x288] sm:$0xff]
    %v4697 = vld [vmem:[%s4614 + $0x290] sm:$0xff]
    %v4698 = vld [vmem:[%s4614 + $0x298] sm:$0xff]
    %v4699 = vld [vmem:[%s4614 + $0x2a0] sm:$0xff]
    %v4700 = vld [vmem:[%s4614 + $0x2a8] sm:$0xff]
    %v4701 = vld [vmem:[%s4614 + $0x2b0] sm:$0xff]
    %v4702 = vld [vmem:[%s4614 + $0x2b8] sm:$0xff]
    %v4703 = vld [vmem:[%s4614 + $0x2c0] sm:$0xff]
    %v4704 = vld [vmem:[%s4614 + $0x2c8] sm:$0xff]
    %v4705 = vld [vmem:[%s4614 + $0x2d0] sm:$0xff]
    %v4706 = vld [vmem:[%s4614 + $0x2d8] sm:$0xff]
    %v4707 = vld [vmem:[%s4614 + $0x2e0] sm:$0xff]
    %v4708 = vld [vmem:[%s4614 + $0x2e8] sm:$0xff]
    %v4709 = vld [vmem:[%s4614 + $0x2f0] sm:$0xff]
    %v4710 = vld [vmem:[%s4614 + $0x2f8] sm:$0xff]
    %v4711 = vld [vmem:[%s4614 + $0x300] sm:$0xff]
    %v4712 = vld [vmem:[%s4614 + $0x308] sm:$0xff]
    %v4713 = vld [vmem:[%s4614 + $0x310] sm:$0xff]
    %v4714 = vld [vmem:[%s4614 + $0x318] sm:$0xff]
    %v4715 = vld [vmem:[%s4614 + $0x320] sm:$0xff]
    %v4716 = vld [vmem:[%s4614 + $0x328] sm:$0xff]
    %v4717 = vld [vmem:[%s4614 + $0x330] sm:$0xff]
    %v4718 = vld [vmem:[%s4614 + $0x338] sm:$0xff]
    %v4719 = vld [vmem:[%s4614 + $0x340] sm:$0xff]
    %v4720 = vld [vmem:[%s4614 + $0x348] sm:$0xff]
    %v4721 = vld [vmem:[%s4614 + $0x350] sm:$0xff]
    %v4722 = vld [vmem:[%s4614 + $0x358] sm:$0xff]
    %v4723 = vld [vmem:[%s4614 + $0x360] sm:$0xff]
    %v4724 = vld [vmem:[%s4614 + $0x368] sm:$0xff]
    %v4725 = vld [vmem:[%s4614 + $0x370] sm:$0xff]
    %v4726 = vld [vmem:[%s4614 + $0x378] sm:$0xff]
    %v4727 = vld [vmem:[%s4614 + $0x380] sm:$0xff]
    %v4728 = vld [vmem:[%s4614 + $0x388] sm:$0xff]
    %v4729 = vld [vmem:[%s4614 + $0x390] sm:$0xff]
    %v4730 = vld [vmem:[%s4614 + $0x398] sm:$0xff]
    %v4731 = vld [vmem:[%s4614 + $0x3a0] sm:$0xff]
    %v4732 = vld [vmem:[%s4614 + $0x3a8] sm:$0xff]
    %v4733 = vld [vmem:[%s4614 + $0x3b0] sm:$0xff]
    %v4734 = vld [vmem:[%s4614 + $0x3b8] sm:$0xff]
    %v4735 = vld [vmem:[%s4614 + $0x3c0] sm:$0xff]
    %v4736 = vld [vmem:[%s4614 + $0x3c8] sm:$0xff]
    %v4737 = vld [vmem:[%s4614 + $0x3d0] sm:$0xff]
    %v4738 = vld [vmem:[%s4614 + $0x3d8] sm:$0xff]
    %v4739 = vld [vmem:[%s4614 + $0x3e0] sm:$0xff]
    %v4740 = vld [vmem:[%s4614 + $0x3e8] sm:$0xff]
    %v4741 = vld [vmem:[%s4614 + $0x3f0] sm:$0xff]
    %v4742 = vld [vmem:[%s4614 + $0x3f8] sm:$0xff]
    %s4743 = scalar_lea.vmem [#allocation10], 37
    %v4744 = vld [vmem:[%s4743] ss:$8 sm:$0xf]
    %v4746 = vlaneseq
    %v4747 = vshrl.u32 %v4746, 7
    %v4748 = vsub.s32 0, %v4747
    %v4749 = vrot.slane %v4744, %v4748
    %v4750 = vlaneseq
    %v4751 = vshrl.u32 %v4750, 7
    %v4752 = vsub.s32 1, %v4751
    %v4753 = vrot.slane %v4744, %v4752
    %v4754 = vlaneseq
    %v4755 = vshrl.u32 %v4754, 7
    %v4756 = vsub.s32 2, %v4755
    %v4757 = vrot.slane %v4744, %v4756
    %v4758 = vlaneseq
    %v4759 = vshrl.u32 %v4758, 7
    %v4760 = vsub.s32 3, %v4759
    %v4761 = vrot.slane %v4744, %v4760
    %v4894 = vunpack.c.l.b16 %v4615
    %v4895 = vunpack.c.h.b16 %v4615
    %v4896 = vunpack.c.l.b16 %v4616
    %v4897 = vunpack.c.h.b16 %v4616
    %v4898 = vunpack.c.l.b16 %v4617
    %v4899 = vunpack.c.h.b16 %v4617
    %v4900 = vunpack.c.l.b16 %v4618
    %v4901 = vunpack.c.h.b16 %v4618
    %v4902 = vunpack.c.l.b16 %v4619
    %v4903 = vunpack.c.h.b16 %v4619
    %v4904 = vunpack.c.l.b16 %v4620
    %v4905 = vunpack.c.h.b16 %v4620
    %v4906 = vunpack.c.l.b16 %v4621
    %v4907 = vunpack.c.h.b16 %v4621
    %v4908 = vunpack.c.l.b16 %v4622
    %v4909 = vunpack.c.h.b16 %v4622
    %v4910 = vunpack.c.l.b16 %v4623
    %v4911 = vunpack.c.h.b16 %v4623
    %v4912 = vunpack.c.l.b16 %v4624
    %v4913 = vunpack.c.h.b16 %v4624
    %v4914 = vunpack.c.l.b16 %v4625
    %v4915 = vunpack.c.h.b16 %v4625
    %v4916 = vunpack.c.l.b16 %v4626
    %v4917 = vunpack.c.h.b16 %v4626
    %v4918 = vunpack.c.l.b16 %v4627
    %v4919 = vunpack.c.h.b16 %v4627
    %v4920 = vunpack.c.l.b16 %v4628
    %v4921 = vunpack.c.h.b16 %v4628
    %v4922 = vunpack.c.l.b16 %v4629
    %v4923 = vunpack.c.h.b16 %v4629
    %v4924 = vunpack.c.l.b16 %v4630
    %v4925 = vunpack.c.h.b16 %v4630
    %v4926 = vunpack.c.l.b16 %v4631
    %v4927 = vunpack.c.h.b16 %v4631
    %v4928 = vunpack.c.l.b16 %v4632
    %v4929 = vunpack.c.h.b16 %v4632
    %v4930 = vunpack.c.l.b16 %v4633
    %v4931 = vunpack.c.h.b16 %v4633
    %v4932 = vunpack.c.l.b16 %v4634
    %v4933 = vunpack.c.h.b16 %v4634
    %v4934 = vunpack.c.l.b16 %v4635
    %v4935 = vunpack.c.h.b16 %v4635
    %v4936 = vunpack.c.l.b16 %v4636
    %v4937 = vunpack.c.h.b16 %v4636
    %v4938 = vunpack.c.l.b16 %v4637
    %v4939 = vunpack.c.h.b16 %v4637
    %v4940 = vunpack.c.l.b16 %v4638
    %v4941 = vunpack.c.h.b16 %v4638
    %v4942 = vunpack.c.l.b16 %v4639
    %v4943 = vunpack.c.h.b16 %v4639
    %v4944 = vunpack.c.l.b16 %v4640
    %v4945 = vunpack.c.h.b16 %v4640
    %v4946 = vunpack.c.l.b16 %v4641
    %v4947 = vunpack.c.h.b16 %v4641
    %v4948 = vunpack.c.l.b16 %v4642
    %v4949 = vunpack.c.h.b16 %v4642
    %v4950 = vunpack.c.l.b16 %v4643
    %v4951 = vunpack.c.h.b16 %v4643
    %v4952 = vunpack.c.l.b16 %v4644
    %v4953 = vunpack.c.h.b16 %v4644
    %v4954 = vunpack.c.l.b16 %v4645
    %v4955 = vunpack.c.h.b16 %v4645
    %v4956 = vunpack.c.l.b16 %v4646
    %v4957 = vunpack.c.h.b16 %v4646
    %v4958 = vunpack.c.l.b16 %v4647
    %v4959 = vunpack.c.h.b16 %v4647
    %v4960 = vunpack.c.l.b16 %v4648
    %v4961 = vunpack.c.h.b16 %v4648
    %v4962 = vunpack.c.l.b16 %v4649
    %v4963 = vunpack.c.h.b16 %v4649
    %v4964 = vunpack.c.l.b16 %v4650
    %v4965 = vunpack.c.h.b16 %v4650
    %v4966 = vunpack.c.l.b16 %v4651
    %v4967 = vunpack.c.h.b16 %v4651
    %v4968 = vunpack.c.l.b16 %v4652
    %v4969 = vunpack.c.h.b16 %v4652
    %v4970 = vunpack.c.l.b16 %v4653
    %v4971 = vunpack.c.h.b16 %v4653
    %v4972 = vunpack.c.l.b16 %v4654
    %v4973 = vunpack.c.h.b16 %v4654
    %v4974 = vunpack.c.l.b16 %v4655
    %v4975 = vunpack.c.h.b16 %v4655
    %v4976 = vunpack.c.l.b16 %v4656
    %v4977 = vunpack.c.h.b16 %v4656
    %v4978 = vunpack.c.l.b16 %v4657
    %v4979 = vunpack.c.h.b16 %v4657
    %v4980 = vunpack.c.l.b16 %v4658
    %v4981 = vunpack.c.h.b16 %v4658
    %v4982 = vunpack.c.l.b16 %v4659
    %v4983 = vunpack.c.h.b16 %v4659
    %v4984 = vunpack.c.l.b16 %v4660
    %v4985 = vunpack.c.h.b16 %v4660
    %v4986 = vunpack.c.l.b16 %v4661
    %v4987 = vunpack.c.h.b16 %v4661
    %v4988 = vunpack.c.l.b16 %v4662
    %v4989 = vunpack.c.h.b16 %v4662
    %v4990 = vunpack.c.l.b16 %v4663
    %v4991 = vunpack.c.h.b16 %v4663
    %v4992 = vunpack.c.l.b16 %v4664
    %v4993 = vunpack.c.h.b16 %v4664
    %v4994 = vunpack.c.l.b16 %v4665
    %v4995 = vunpack.c.h.b16 %v4665
    %v4996 = vunpack.c.l.b16 %v4666
    %v4997 = vunpack.c.h.b16 %v4666
    %v4998 = vunpack.c.l.b16 %v4667
    %v4999 = vunpack.c.h.b16 %v4667
    %v5000 = vunpack.c.l.b16 %v4668
    %v5001 = vunpack.c.h.b16 %v4668
    %v5002 = vunpack.c.l.b16 %v4669
    %v5003 = vunpack.c.h.b16 %v4669
    %v5004 = vunpack.c.l.b16 %v4670
    %v5005 = vunpack.c.h.b16 %v4670
    %v5006 = vunpack.c.l.b16 %v4671
    %v5007 = vunpack.c.h.b16 %v4671
    %v5008 = vunpack.c.l.b16 %v4672
    %v5009 = vunpack.c.h.b16 %v4672
    %v5010 = vunpack.c.l.b16 %v4673
    %v5011 = vunpack.c.h.b16 %v4673
    %v5012 = vunpack.c.l.b16 %v4674
    %v5013 = vunpack.c.h.b16 %v4674
    %v5014 = vunpack.c.l.b16 %v4675
    %v5015 = vunpack.c.h.b16 %v4675
    %v5016 = vunpack.c.l.b16 %v4676
    %v5017 = vunpack.c.h.b16 %v4676
    %v5018 = vunpack.c.l.b16 %v4677
    %v5019 = vunpack.c.h.b16 %v4677
    %v5020 = vunpack.c.l.b16 %v4678
    %v5021 = vunpack.c.h.b16 %v4678
    %v5022 = vunpack.c.l.b16 %v4679
    %v5023 = vunpack.c.h.b16 %v4679
    %v5024 = vunpack.c.l.b16 %v4680
    %v5025 = vunpack.c.h.b16 %v4680
    %v5026 = vunpack.c.l.b16 %v4681
    %v5027 = vunpack.c.h.b16 %v4681
    %v5028 = vunpack.c.l.b16 %v4682
    %v5029 = vunpack.c.h.b16 %v4682
    %v5030 = vunpack.c.l.b16 %v4683
    %v5031 = vunpack.c.h.b16 %v4683
    %v5032 = vunpack.c.l.b16 %v4684
    %v5033 = vunpack.c.h.b16 %v4684
    %v5034 = vunpack.c.l.b16 %v4685
    %v5035 = vunpack.c.h.b16 %v4685
    %v5036 = vunpack.c.l.b16 %v4686
    %v5037 = vunpack.c.h.b16 %v4686
    %v5038 = vunpack.c.l.b16 %v4687
    %v5039 = vunpack.c.h.b16 %v4687
    %v5040 = vunpack.c.l.b16 %v4688
    %v5041 = vunpack.c.h.b16 %v4688
    %v5042 = vunpack.c.l.b16 %v4689
    %v5043 = vunpack.c.h.b16 %v4689
    %v5044 = vunpack.c.l.b16 %v4690
    %v5045 = vunpack.c.h.b16 %v4690
    %v5046 = vunpack.c.l.b16 %v4691
    %v5047 = vunpack.c.h.b16 %v4691
    %v5048 = vunpack.c.l.b16 %v4692
    %v5049 = vunpack.c.h.b16 %v4692
    %v5050 = vunpack.c.l.b16 %v4693
    %v5051 = vunpack.c.h.b16 %v4693
    %v5052 = vunpack.c.l.b16 %v4694
    %v5053 = vunpack.c.h.b16 %v4694
    %v5054 = vunpack.c.l.b16 %v4695
    %v5055 = vunpack.c.h.b16 %v4695
    %v5056 = vunpack.c.l.b16 %v4696
    %v5057 = vunpack.c.h.b16 %v4696
    %v5058 = vunpack.c.l.b16 %v4697
    %v5059 = vunpack.c.h.b16 %v4697
    %v5060 = vunpack.c.l.b16 %v4698
    %v5061 = vunpack.c.h.b16 %v4698
    %v5062 = vunpack.c.l.b16 %v4699
    %v5063 = vunpack.c.h.b16 %v4699
    %v5064 = vunpack.c.l.b16 %v4700
    %v5065 = vunpack.c.h.b16 %v4700
    %v5066 = vunpack.c.l.b16 %v4701
    %v5067 = vunpack.c.h.b16 %v4701
    %v5068 = vunpack.c.l.b16 %v4702
    %v5069 = vunpack.c.h.b16 %v4702
    %v5070 = vunpack.c.l.b16 %v4703
    %v5071 = vunpack.c.h.b16 %v4703
    %v5072 = vunpack.c.l.b16 %v4704
    %v5073 = vunpack.c.h.b16 %v4704
    %v5074 = vunpack.c.l.b16 %v4705
    %v5075 = vunpack.c.h.b16 %v4705
    %v5076 = vunpack.c.l.b16 %v4706
    %v5077 = vunpack.c.h.b16 %v4706
    %v5078 = vunpack.c.l.b16 %v4707
    %v5079 = vunpack.c.h.b16 %v4707
    %v5080 = vunpack.c.l.b16 %v4708
    %v5081 = vunpack.c.h.b16 %v4708
    %v5082 = vunpack.c.l.b16 %v4709
    %v5083 = vunpack.c.h.b16 %v4709
    %v5084 = vunpack.c.l.b16 %v4710
    %v5085 = vunpack.c.h.b16 %v4710
    %v5086 = vunpack.c.l.b16 %v4711
    %v5087 = vunpack.c.h.b16 %v4711
    %v5088 = vunpack.c.l.b16 %v4712
    %v5089 = vunpack.c.h.b16 %v4712
    %v5090 = vunpack.c.l.b16 %v4713
    %v5091 = vunpack.c.h.b16 %v4713
    %v5092 = vunpack.c.l.b16 %v4714
    %v5093 = vunpack.c.h.b16 %v4714
    %v5094 = vunpack.c.l.b16 %v4715
    %v5095 = vunpack.c.h.b16 %v4715
    %v5096 = vunpack.c.l.b16 %v4716
    %v5097 = vunpack.c.h.b16 %v4716
    %v5098 = vunpack.c.l.b16 %v4717
    %v5099 = vunpack.c.h.b16 %v4717
    %v5100 = vunpack.c.l.b16 %v4718
    %v5101 = vunpack.c.h.b16 %v4718
    %v5102 = vunpack.c.l.b16 %v4719
    %v5103 = vunpack.c.h.b16 %v4719
    %v5104 = vunpack.c.l.b16 %v4720
    %v5105 = vunpack.c.h.b16 %v4720
    %v5106 = vunpack.c.l.b16 %v4721
    %v5107 = vunpack.c.h.b16 %v4721
    %v5108 = vunpack.c.l.b16 %v4722
    %v5109 = vunpack.c.h.b16 %v4722
    %v5110 = vunpack.c.l.b16 %v4723
    %v5111 = vunpack.c.h.b16 %v4723
    %v5112 = vunpack.c.l.b16 %v4724
    %v5113 = vunpack.c.h.b16 %v4724
    %v5114 = vunpack.c.l.b16 %v4725
    %v5115 = vunpack.c.h.b16 %v4725
    %v5116 = vunpack.c.l.b16 %v4726
    %v5117 = vunpack.c.h.b16 %v4726
    %v5118 = vunpack.c.l.b16 %v4727
    %v5119 = vunpack.c.h.b16 %v4727
    %v5120 = vunpack.c.l.b16 %v4728
    %v5121 = vunpack.c.h.b16 %v4728
    %v5122 = vunpack.c.l.b16 %v4729
    %v5123 = vunpack.c.h.b16 %v4729
    %v5124 = vunpack.c.l.b16 %v4730
    %v5125 = vunpack.c.h.b16 %v4730
    %v5126 = vunpack.c.l.b16 %v4731
    %v5127 = vunpack.c.h.b16 %v4731
    %v5128 = vunpack.c.l.b16 %v4732
    %v5129 = vunpack.c.h.b16 %v4732
    %v5130 = vunpack.c.l.b16 %v4733
    %v5131 = vunpack.c.h.b16 %v4733
    %v5132 = vunpack.c.l.b16 %v4734
    %v5133 = vunpack.c.h.b16 %v4734
    %v5134 = vunpack.c.l.b16 %v4735
    %v5135 = vunpack.c.h.b16 %v4735
    %v5136 = vunpack.c.l.b16 %v4736
    %v5137 = vunpack.c.h.b16 %v4736
    %v5138 = vunpack.c.l.b16 %v4737
    %v5139 = vunpack.c.h.b16 %v4737
    %v5140 = vunpack.c.l.b16 %v4738
    %v5141 = vunpack.c.h.b16 %v4738
    %v5142 = vunpack.c.l.b16 %v4739
    %v5143 = vunpack.c.h.b16 %v4739
    %v5144 = vunpack.c.l.b16 %v4740
    %v5145 = vunpack.c.h.b16 %v4740
    %v5146 = vunpack.c.l.b16 %v4741
    %v5147 = vunpack.c.h.b16 %v4741
    %v5148 = vunpack.c.l.b16 %v4742
    %v5149 = vunpack.c.h.b16 %v4742
    %v5150 = vpack.c.b16 %v4898, %v4894
    %v5151 = vpack.c.b16 %v4899, %v4895
    %v5152 = vpack.c.b16 %v4900, %v4896
    %v5153 = vpack.c.b16 %v4901, %v4897
    %v5154 = vpack.c.b16 %v4906, %v4902
    %v5155 = vpack.c.b16 %v4907, %v4903
    %v5156 = vpack.c.b16 %v4908, %v4904
    %v5157 = vpack.c.b16 %v4909, %v4905
    %v5158 = vpack.c.b16 %v4914, %v4910
    %v5159 = vpack.c.b16 %v4915, %v4911
    %v5160 = vpack.c.b16 %v4916, %v4912
    %v5161 = vpack.c.b16 %v4917, %v4913
    %v5162 = vpack.c.b16 %v4922, %v4918
    %v5163 = vpack.c.b16 %v4923, %v4919
    %v5164 = vpack.c.b16 %v4924, %v4920
    %v5165 = vpack.c.b16 %v4925, %v4921
    %v5166 = vpack.c.b16 %v4930, %v4926
    %v5167 = vpack.c.b16 %v4931, %v4927
    %v5168 = vpack.c.b16 %v4932, %v4928
    %v5169 = vpack.c.b16 %v4933, %v4929
    %v5170 = vpack.c.b16 %v4938, %v4934
    %v5171 = vpack.c.b16 %v4939, %v4935
    %v5172 = vpack.c.b16 %v4940, %v4936
    %v5173 = vpack.c.b16 %v4941, %v4937
    %v5174 = vpack.c.b16 %v4946, %v4942
    %v5175 = vpack.c.b16 %v4947, %v4943
    %v5176 = vpack.c.b16 %v4948, %v4944
    %v5177 = vpack.c.b16 %v4949, %v4945
    %v5178 = vpack.c.b16 %v4954, %v4950
    %v5179 = vpack.c.b16 %v4955, %v4951
    %v5180 = vpack.c.b16 %v4956, %v4952
    %v5181 = vpack.c.b16 %v4957, %v4953
    %v5182 = vpack.c.b16 %v4962, %v4958
    %v5183 = vpack.c.b16 %v4963, %v4959
    %v5184 = vpack.c.b16 %v4964, %v4960
    %v5185 = vpack.c.b16 %v4965, %v4961
    %v5186 = vpack.c.b16 %v4970, %v4966
    %v5187 = vpack.c.b16 %v4971, %v4967
    %v5188 = vpack.c.b16 %v4972, %v4968
    %v5189 = vpack.c.b16 %v4973, %v4969
    %v5190 = vpack.c.b16 %v4978, %v4974
    %v5191 = vpack.c.b16 %v4979, %v4975
    %v5192 = vpack.c.b16 %v4980, %v4976
    %v5193 = vpack.c.b16 %v4981, %v4977
    %v5194 = vpack.c.b16 %v4986, %v4982
    %v5195 = vpack.c.b16 %v4987, %v4983
    %v5196 = vpack.c.b16 %v4988, %v4984
    %v5197 = vpack.c.b16 %v4989, %v4985
    %v5198 = vpack.c.b16 %v4994, %v4990
    %v5199 = vpack.c.b16 %v4995, %v4991
    %v5200 = vpack.c.b16 %v4996, %v4992
    %v5201 = vpack.c.b16 %v4997, %v4993
    %v5202 = vpack.c.b16 %v5002, %v4998
    %v5203 = vpack.c.b16 %v5003, %v4999
    %v5204 = vpack.c.b16 %v5004, %v5000
    %v5205 = vpack.c.b16 %v5005, %v5001
    %v5206 = vpack.c.b16 %v5010, %v5006
    %v5207 = vpack.c.b16 %v5011, %v5007
    %v5208 = vpack.c.b16 %v5012, %v5008
    %v5209 = vpack.c.b16 %v5013, %v5009
    %v5210 = vpack.c.b16 %v5018, %v5014
    %v5211 = vpack.c.b16 %v5019, %v5015
    %v5212 = vpack.c.b16 %v5020, %v5016
    %v5213 = vpack.c.b16 %v5021, %v5017
    %v5214 = vpack.c.b16 %v5026, %v5022
    %v5215 = vpack.c.b16 %v5027, %v5023
    %v5216 = vpack.c.b16 %v5028, %v5024
    %v5217 = vpack.c.b16 %v5029, %v5025
    %v5218 = vpack.c.b16 %v5034, %v5030
    %v5219 = vpack.c.b16 %v5035, %v5031
    %v5220 = vpack.c.b16 %v5036, %v5032
    %v5221 = vpack.c.b16 %v5037, %v5033
    %v5222 = vpack.c.b16 %v5042, %v5038
    %v5223 = vpack.c.b16 %v5043, %v5039
    %v5224 = vpack.c.b16 %v5044, %v5040
    %v5225 = vpack.c.b16 %v5045, %v5041
    %v5226 = vpack.c.b16 %v5050, %v5046
    %v5227 = vpack.c.b16 %v5051, %v5047
    %v5228 = vpack.c.b16 %v5052, %v5048
    %v5229 = vpack.c.b16 %v5053, %v5049
    %v5230 = vpack.c.b16 %v5058, %v5054
    %v5231 = vpack.c.b16 %v5059, %v5055
    %v5232 = vpack.c.b16 %v5060, %v5056
    %v5233 = vpack.c.b16 %v5061, %v5057
    %v5234 = vpack.c.b16 %v5066, %v5062
    %v5235 = vpack.c.b16 %v5067, %v5063
    %v5236 = vpack.c.b16 %v5068, %v5064
    %v5237 = vpack.c.b16 %v5069, %v5065
    %v5238 = vpack.c.b16 %v5074, %v5070
    %v5239 = vpack.c.b16 %v5075, %v5071
    %v5240 = vpack.c.b16 %v5076, %v5072
    %v5241 = vpack.c.b16 %v5077, %v5073
    %v5242 = vpack.c.b16 %v5082, %v5078
    %v5243 = vpack.c.b16 %v5083, %v5079
    %v5244 = vpack.c.b16 %v5084, %v5080
    %v5245 = vpack.c.b16 %v5085, %v5081
    %v5246 = vpack.c.b16 %v5090, %v5086
    %v5247 = vpack.c.b16 %v5091, %v5087
    %v5248 = vpack.c.b16 %v5092, %v5088
    %v5249 = vpack.c.b16 %v5093, %v5089
    %v5250 = vpack.c.b16 %v5098, %v5094
    %v5251 = vpack.c.b16 %v5099, %v5095
    %v5252 = vpack.c.b16 %v5100, %v5096
    %v5253 = vpack.c.b16 %v5101, %v5097
    %v5254 = vpack.c.b16 %v5106, %v5102
    %v5255 = vpack.c.b16 %v5107, %v5103
    %v5256 = vpack.c.b16 %v5108, %v5104
    %v5257 = vpack.c.b16 %v5109, %v5105
    %v5258 = vpack.c.b16 %v5114, %v5110
    %v5259 = vpack.c.b16 %v5115, %v5111
    %v5260 = vpack.c.b16 %v5116, %v5112
    %v5261 = vpack.c.b16 %v5117, %v5113
    %v5262 = vpack.c.b16 %v5122, %v5118
    %v5263 = vpack.c.b16 %v5123, %v5119
    %v5264 = vpack.c.b16 %v5124, %v5120
    %v5265 = vpack.c.b16 %v5125, %v5121
    %v5266 = vpack.c.b16 %v5130, %v5126
    %v5267 = vpack.c.b16 %v5131, %v5127
    %v5268 = vpack.c.b16 %v5132, %v5128
    %v5269 = vpack.c.b16 %v5133, %v5129
    %v5270 = vpack.c.b16 %v5138, %v5134
    %v5271 = vpack.c.b16 %v5139, %v5135
    %v5272 = vpack.c.b16 %v5140, %v5136
    %v5273 = vpack.c.b16 %v5141, %v5137
    %v5274 = vpack.c.b16 %v5146, %v5142
    %v5275 = vpack.c.b16 %v5147, %v5143
    %v5276 = vpack.c.b16 %v5148, %v5144
    %v5277 = vpack.c.b16 %v5149, %v5145
    %5406 = vmatprep.subr.bf16.mxu0 %v5151
    %5407 = vmatpush1.bf16.msra.mxu0 %v5150
    %5408 = vmatprep.subr.bf16.mxu0 %v5155
    %5409 = vmatpush1.bf16.msra.mxu0 %v5154
    %5410 = vmatprep.subr.bf16.mxu0 %v5159
    %5411 = vmatpush1.bf16.msra.mxu0 %v5158
    %5412 = vmatprep.subr.bf16.mxu0 %v5163
    %5413 = vmatpush1.bf16.msra.mxu0 %v5162
    %5414 = vmatprep.subr.bf16.mxu0 %v5167
    %5415 = vmatpush1.bf16.msra.mxu0 %v5166
    %5416 = vmatprep.subr.bf16.mxu0 %v5171
    %5417 = vmatpush1.bf16.msra.mxu0 %v5170
    %5418 = vmatprep.subr.bf16.mxu0 %v5175
    %5419 = vmatpush1.bf16.msra.mxu0 %v5174
    %5420 = vmatprep.subr.bf16.mxu0 %v5179
    %5421 = vmatpush1.bf16.msra.mxu0 %v5178
    %5422 = vmatprep.subr.bf16.mxu0 %v5183
    %5423 = vmatpush1.bf16.msra.mxu0 %v5182
    %5424 = vmatprep.subr.bf16.mxu0 %v5187
    %5425 = vmatpush1.bf16.msra.mxu0 %v5186
    %5426 = vmatprep.subr.bf16.mxu0 %v5191
    %5427 = vmatpush1.bf16.msra.mxu0 %v5190
    %5428 = vmatprep.subr.bf16.mxu0 %v5195
    %5429 = vmatpush1.bf16.msra.mxu0 %v5194
    %5430 = vmatprep.subr.bf16.mxu0 %v5199
    %5431 = vmatpush1.bf16.msra.mxu0 %v5198
    %5432 = vmatprep.subr.bf16.mxu0 %v5203
    %5433 = vmatpush1.bf16.msra.mxu0 %v5202
    %5434 = vmatprep.subr.bf16.mxu0 %v5207
    %5435 = vmatpush1.bf16.msra.mxu0 %v5206
    %5436 = vmatprep.subr.bf16.mxu0 %v5211
    %5437 = vmatpush1.bf16.msra.mxu0 %v5210
    %5438 = vmatprep.mubr.bf16.mxu0 %v4611
    %5439 = vmatmul.mubr.bf16.gmra.mrb[0].mxu0 %v4610
    %v5440 = vpop.f32.mrb[0].mxu0
    %v5441 = vadd.f32 %v4749, %v5440
    %v5442 = vpop.f32.mrb[0].mxu0
    %v5443 = vadd.f32 %v4753, %v5442
    %v5444 = vpop.f32.mrb[0].mxu0
    %v5445 = vpop.f32.mrb[0].mxu0
    %5446 = vdwg.mxu0
    %5447 = vmatprep.subr.bf16.mxu0 %v5215
    %5448 = vmatpush1.bf16.msra.mxu0 %v5214
    %5449 = vmatprep.subr.bf16.mxu0 %v5219
    %5450 = vmatpush1.bf16.msra.mxu0 %v5218
    %5451 = vmatprep.subr.bf16.mxu0 %v5223
    %5452 = vmatpush1.bf16.msra.mxu0 %v5222
    %5453 = vmatprep.subr.bf16.mxu0 %v5227
    %5454 = vmatpush1.bf16.msra.mxu0 %v5226
    %5455 = vmatprep.subr.bf16.mxu0 %v5231
    %5456 = vmatpush1.bf16.msra.mxu0 %v5230
    %5457 = vmatprep.subr.bf16.mxu0 %v5235
    %5458 = vmatpush1.bf16.msra.mxu0 %v5234
    %5459 = vmatprep.subr.bf16.mxu0 %v5239
    %5460 = vmatpush1.bf16.msra.mxu0 %v5238
    %5461 = vmatprep.subr.bf16.mxu0 %v5243
    %5462 = vmatpush1.bf16.msra.mxu0 %v5242
    %5463 = vmatprep.subr.bf16.mxu0 %v5247
    %5464 = vmatpush1.bf16.msra.mxu0 %v5246
    %5465 = vmatprep.subr.bf16.mxu0 %v5251
    %5466 = vmatpush1.bf16.msra.mxu0 %v5250
    %5467 = vmatprep.subr.bf16.mxu0 %v5255
    %5468 = vmatpush1.bf16.msra.mxu0 %v5254
    %5469 = vmatprep.subr.bf16.mxu0 %v5259
    %5470 = vmatpush1.bf16.msra.mxu0 %v5258
    %5471 = vmatprep.subr.bf16.mxu0 %v5263
    %5472 = vmatpush1.bf16.msra.mxu0 %v5262
    %5473 = vmatprep.subr.bf16.mxu0 %v5267
    %5474 = vmatpush1.bf16.msra.mxu0 %v5266
    %5475 = vmatprep.subr.bf16.mxu0 %v5271
    %5476 = vmatpush1.bf16.msra.mxu0 %v5270
    %5477 = vmatprep.subr.bf16.mxu0 %v5275
    %5478 = vmatpush1.bf16.msra.mxu0 %v5274
    %5479 = vmatprep.mubr.bf16.mxu0 %v4613
    %5480 = vmatmul.mubr.bf16.gmra.mrb[0].mxu0 %v4612
    %v5481 = vpop.f32.mrb[0].mxu0
    %v5482 = vadd.f32 %v5441, %v5481
    %v5483 = vpop.f32.mrb[0].mxu0
    %v5484 = vadd.f32 %v5443, %v5483
    %v5485 = vpop.f32.mrb[0].mxu0
    %v5486 = vpop.f32.mrb[0].mxu0
    %5487 = vdwg.mxu0
    %5488 = vmatprep.subr.bf16.mxu0 %v5153
    %5489 = vmatpush1.bf16.msra.mxu0 %v5152
    %5490 = vmatprep.subr.bf16.mxu0 %v5157
    %5491 = vmatpush1.bf16.msra.mxu0 %v5156
    %5492 = vmatprep.subr.bf16.mxu0 %v5161
    %5493 = vmatpush1.bf16.msra.mxu0 %v5160
    %5494 = vmatprep.subr.bf16.mxu0 %v5165
    %5495 = vmatpush1.bf16.msra.mxu0 %v5164
    %5496 = vmatprep.subr.bf16.mxu0 %v5169
    %5497 = vmatpush1.bf16.msra.mxu0 %v5168
    %5498 = vmatprep.subr.bf16.mxu0 %v5173
    %5499 = vmatpush1.bf16.msra.mxu0 %v5172
    %5500 = vmatprep.subr.bf16.mxu0 %v5177
    %5501 = vmatpush1.bf16.msra.mxu0 %v5176
    %5502 = vmatprep.subr.bf16.mxu0 %v5181
    %5503 = vmatpush1.bf16.msra.mxu0 %v5180
    %5504 = vmatprep.subr.bf16.mxu0 %v5185
    %5505 = vmatpush1.bf16.msra.mxu0 %v5184
    %5506 = vmatprep.subr.bf16.mxu0 %v5189
    %5507 = vmatpush1.bf16.msra.mxu0 %v5188
    %5508 = vmatprep.subr.bf16.mxu0 %v5193
    %5509 = vmatpush1.bf16.msra.mxu0 %v5192
    %5510 = vmatprep.subr.bf16.mxu0 %v5197
    %5511 = vmatpush1.bf16.msra.mxu0 %v5196
    %5512 = vmatprep.subr.bf16.mxu0 %v5201
    %5513 = vmatpush1.bf16.msra.mxu0 %v5200
    %5514 = vmatprep.subr.bf16.mxu0 %v5205
    %5515 = vmatpush1.bf16.msra.mxu0 %v5204
    %5516 = vmatprep.subr.bf16.mxu0 %v5209
    %5517 = vmatpush1.bf16.msra.mxu0 %v5208
    %5518 = vmatprep.subr.bf16.mxu0 %v5213
    %5519 = vmatpush1.bf16.msra.mxu0 %v5212
    %5520 = vmatprep.mubr.bf16.mxu0 %v4611
    %5521 = vmatmul.mubr.bf16.gmra.mrb[0].mxu0 %v4610
    %v5522 = vpop.f32.mrb[0].mxu0
    %v5523 = vadd.f32 %v4757, %v5522
    %v5524 = vpop.f32.mrb[0].mxu0
    %v5525 = vadd.f32 %v4761, %v5524
    %v5526 = vpop.f32.mrb[0].mxu0
    %v5527 = vpop.f32.mrb[0].mxu0
    %5528 = vdwg.mxu0
    %5529 = vmatprep.subr.bf16.mxu0 %v5217
    %5530 = vmatpush1.bf16.msra.mxu0 %v5216
    %5531 = vmatprep.subr.bf16.mxu0 %v5221
    %5532 = vmatpush1.bf16.msra.mxu0 %v5220
    %5533 = vmatprep.subr.bf16.mxu0 %v5225
    %5534 = vmatpush1.bf16.msra.mxu0 %v5224
    %5535 = vmatprep.subr.bf16.mxu0 %v5229
    %5536 = vmatpush1.bf16.msra.mxu0 %v5228
    %5537 = vmatprep.subr.bf16.mxu0 %v5233
    %5538 = vmatpush1.bf16.msra.mxu0 %v5232
    %5539 = vmatprep.subr.bf16.mxu0 %v5237
    %5540 = vmatpush1.bf16.msra.mxu0 %v5236
    %5541 = vmatprep.subr.bf16.mxu0 %v5241
    %5542 = vmatpush1.bf16.msra.mxu0 %v5240
    %5543 = vmatprep.subr.bf16.mxu0 %v5245
    %5544 = vmatpush1.bf16.msra.mxu0 %v5244
    %5545 = vmatprep.subr.bf16.mxu0 %v5249
    %5546 = vmatpush1.bf16.msra.mxu0 %v5248
    %5547 = vmatprep.subr.bf16.mxu0 %v5253
    %5548 = vmatpush1.bf16.msra.mxu0 %v5252
    %5549 = vmatprep.subr.bf16.mxu0 %v5257
    %5550 = vmatpush1.bf16.msra.mxu0 %v5256
    %5551 = vmatprep.subr.bf16.mxu0 %v5261
    %5552 = vmatpush1.bf16.msra.mxu0 %v5260
    %5553 = vmatprep.subr.bf16.mxu0 %v5265
    %5554 = vmatpush1.bf16.msra.mxu0 %v5264
    %5555 = vmatprep.subr.bf16.mxu0 %v5269
    %5556 = vmatpush1.bf16.msra.mxu0 %v5268
    %5557 = vmatprep.subr.bf16.mxu0 %v5273
    %5558 = vmatpush1.bf16.msra.mxu0 %v5272
    %5559 = vmatprep.subr.bf16.mxu0 %v5277
    %5560 = vmatpush1.bf16.msra.mxu0 %v5276
    %5561 = vmatprep.mubr.bf16.mxu0 %v4613
    %5562 = vmatmul.mubr.bf16.gmra.mrb[0].mxu0 %v4612
    %v5563 = vpop.f32.mrb[0].mxu0
    %v5564 = vadd.f32 %v5523, %v5563
    %v5565 = vpop.f32.mrb[0].mxu0
    %v5566 = vadd.f32 %v5525, %v5565
    %v5567 = vpop.f32.mrb[0].mxu0
    %v5568 = vpop.f32.mrb[0].mxu0
    %5569 = vdwg.mxu0
    %s5570 = scalar_lea.vmem [#allocation10], 38
    %v5571 = vld [vmem:[%s5570] ss:$8 sm:$0xf]
    %s5572 = scalar_lea.vmem [#allocation10], 39
    %v5573 = vld [vmem:[%s5572] ss:$8 sm:$0xf]
    %v5574 = vadd.f32 %v5482, %v5484
    %v5575 = vadd.f32 %v5574, %v5564
    %v5576 = vadd.f32 %v5575, %v5566
    %5577 = vadd.xlane.f32.xlu0 %v5576
    %v5578 = vpop.xlane.xlu0 %5577
    %v5579 = vmul.f32 %v5578, %v1242
    %v5580 = vmul.f32 %v5482, %v5482
    %v5581 = vmul.f32 %v5484, %v5484
    %v5582 = vmul.f32 %v5564, %v5564
    %v5583 = vmul.f32 %v5566, %v5566
    %v5584 = vadd.f32 %v5580, %v5581
    %v5585 = vadd.f32 %v5584, %v5582
    %v5586 = vadd.f32 %v5585, %v5583
    %5587 = vadd.xlane.f32.xlu0 %v5586
    %v5588 = vpop.xlane.xlu0 %5587
    %v5589 = vmul.f32 %v5588, %v1242
    %v5590 = vmul.f32 %v5579, %v5579
    %v5591 = vsub.f32 %v5589, %v5590
    %v5592 = vadd.f32 %v5591, 1e-05
    %v5593 = vrsqrt.pop %v5592
    %v5595 = vlaneseq
    %v5596 = vshrl.u32 %v5595, 7
    %v5597 = vsub.s32 0, %v5596
    %v5598 = vrot.slane %v5571, %v5597
    %v5599 = vlaneseq
    %v5600 = vshrl.u32 %v5599, 7
    %v5601 = vsub.s32 1, %v5600
    %v5602 = vrot.slane %v5571, %v5601
    %v5603 = vlaneseq
    %v5604 = vshrl.u32 %v5603, 7
    %v5605 = vsub.s32 2, %v5604
    %v5606 = vrot.slane %v5571, %v5605
    %v5607 = vlaneseq
    %v5608 = vshrl.u32 %v5607, 7
    %v5609 = vsub.s32 3, %v5608
    %v5610 = vrot.slane %v5571, %v5609
    %v5615 = vmul.f32 %v5593, %v5598
    %v5616 = vmul.f32 %v5593, %v5602
    %v5617 = vmul.f32 %v5593, %v5606
    %v5618 = vmul.f32 %v5593, %v5610
    %v5619 = vmul.f32 %v5482, %v5615
    %v5620 = vmul.f32 %v5484, %v5616
    %v5621 = vmul.f32 %v5564, %v5617
    %v5622 = vmul.f32 %v5566, %v5618
    %v5623 = vmul.f32 %v5579, %v5615
    %v5624 = vmul.f32 %v5579, %v5616
    %v5625 = vmul.f32 %v5579, %v5617
    %v5626 = vmul.f32 %v5579, %v5618
    %v5628 = vlaneseq
    %v5629 = vshrl.u32 %v5628, 7
    %v5630 = vsub.s32 0, %v5629
    %v5631 = vrot.slane %v5573, %v5630
    %v5632 = vlaneseq
    %v5633 = vshrl.u32 %v5632, 7
    %v5634 = vsub.s32 1, %v5633
    %v5635 = vrot.slane %v5573, %v5634
    %v5636 = vlaneseq
    %v5637 = vshrl.u32 %v5636, 7
    %v5638 = vsub.s32 2, %v5637
    %v5639 = vrot.slane %v5573, %v5638
    %v5640 = vlaneseq
    %v5641 = vshrl.u32 %v5640, 7
    %v5642 = vsub.s32 3, %v5641
    %v5643 = vrot.slane %v5573, %v5642
    %v5648 = vsub.f32 %v5631, %v5623
    %v5649 = vsub.f32 %v5635, %v5624
    %v5650 = vsub.f32 %v5639, %v5625
    %v5651 = vsub.f32 %v5643, %v5626
    %v5652 = vadd.f32 %v5619, %v5648
    %v5653 = vadd.f32 %v5620, %v5649
    %v5654 = vadd.f32 %v5621, %v5650
    %v5655 = vadd.f32 %v5622, %v5651
    %v5656 = vmul.f32 %v5652, 0.5
    %v5657 = vmul.f32 %v5653, 0.5
    %v5658 = vmul.f32 %v5654, 0.5
    %v5659 = vmul.f32 %v5655, 0.5
    %v5660 = vmul.f32 %v5652, %v5652
    %v5661 = vmul.f32 %v5653, %v5653
    %v5662 = vmul.f32 %v5654, %v5654
    %v5663 = vmul.f32 %v5655, %v5655
    %v5664 = vmul.f32 %v5660, %v5652
    %v5665 = vmul.f32 %v5661, %v5653
    %v5666 = vmul.f32 %v5662, %v5654
    %v5667 = vmul.f32 %v5663, %v5655
    %v5668 = vmul.f32 %v5664, 0.044715
    %v5669 = vmul.f32 %v5665, 0.044715
    %v5670 = vmul.f32 %v5666, 0.044715
    %v5671 = vmul.f32 %v5667, 0.044715
    %v5672 = vadd.f32 %v5652, %v5668
    %v5673 = vadd.f32 %v5653, %v5669
    %v5674 = vadd.f32 %v5654, %v5670
    %v5675 = vadd.f32 %v5655, %v5671
    %v5676 = vmul.f32 %v5672, 0.7978846
    %v5677 = vmul.f32 %v5673, 0.7978846
    %v5678 = vmul.f32 %v5674, 0.7978846
    %v5679 = vmul.f32 %v5675, 0.7978846
    %v5680 = vtanh.pop %v5676
    %v5681 = vtanh.pop %v5677
    %v5682 = vtanh.pop %v5678
    %v5683 = vtanh.pop %v5679
    %v5684 = vadd.f32 %v5680, 1.0
    %v5685 = vadd.f32 %v5681, 1.0
    %v5686 = vadd.f32 %v5682, 1.0
    %v5687 = vadd.f32 %v5683, 1.0
    %v5688 = vmul.f32 %v5656, %v5684
    %v5689 = vmul.f32 %v5657, %v5685
    %v5690 = vmul.f32 %v5658, %v5686
    %v5691 = vmul.f32 %v5659, %v5687
    %v5692 = vpack.c.bf16 %v5688, %v5688
    %v5693 = vpack.c.bf16 %v5689, %v5689
    %v5694 = vpack.c.bf16 %v5690, %v5690
    %v5695 = vpack.c.bf16 %v5691, %v5691
    %s5696 = scalar_lea.vmem [#allocation6], 5120
    %v5697 = vld [vmem:[%s5696] sm:$0xff]
    %v5698 = vld [vmem:[%s5696 + $0x8] sm:$0xff]
    %v5699 = vld [vmem:[%s5696 + $0x10] sm:$0xff]
    %v5700 = vld [vmem:[%s5696 + $0x18] sm:$0xff]
    %v5701 = vld [vmem:[%s5696 + $0x20] sm:$0xff]
    %v5702 = vld [vmem:[%s5696 + $0x28] sm:$0xff]
    %v5703 = vld [vmem:[%s5696 + $0x30] sm:$0xff]
    %v5704 = vld [vmem:[%s5696 + $0x38] sm:$0xff]
    %v5705 = vld [vmem:[%s5696 + $0x40] sm:$0xff]
    %v5706 = vld [vmem:[%s5696 + $0x48] sm:$0xff]
    %v5707 = vld [vmem:[%s5696 + $0x50] sm:$0xff]
    %v5708 = vld [vmem:[%s5696 + $0x58] sm:$0xff]
    %v5709 = vld [vmem:[%s5696 + $0x60] sm:$0xff]
    %v5710 = vld [vmem:[%s5696 + $0x68] sm:$0xff]
    %v5711 = vld [vmem:[%s5696 + $0x70] sm:$0xff]
    %v5712 = vld [vmem:[%s5696 + $0x78] sm:$0xff]
    %v5713 = vld [vmem:[%s5696 + $0x80] sm:$0xff]
    %v5714 = vld [vmem:[%s5696 + $0x88] sm:$0xff]
    %v5715 = vld [vmem:[%s5696 + $0x90] sm:$0xff]
    %v5716 = vld [vmem:[%s5696 + $0x98] sm:$0xff]
    %v5717 = vld [vmem:[%s5696 + $0xa0] sm:$0xff]
    %v5718 = vld [vmem:[%s5696 + $0xa8] sm:$0xff]
    %v5719 = vld [vmem:[%s5696 + $0xb0] sm:$0xff]
    %v5720 = vld [vmem:[%s5696 + $0xb8] sm:$0xff]
    %v5721 = vld [vmem:[%s5696 + $0xc0] sm:$0xff]
    %v5722 = vld [vmem:[%s5696 + $0xc8] sm:$0xff]
    %v5723 = vld [vmem:[%s5696 + $0xd0] sm:$0xff]
    %v5724 = vld [vmem:[%s5696 + $0xd8] sm:$0xff]
    %v5725 = vld [vmem:[%s5696 + $0xe0] sm:$0xff]
    %v5726 = vld [vmem:[%s5696 + $0xe8] sm:$0xff]
    %v5727 = vld [vmem:[%s5696 + $0xf0] sm:$0xff]
    %v5728 = vld [vmem:[%s5696 + $0xf8] sm:$0xff]
    %v5729 = vld [vmem:[%s5696 + $0x100] sm:$0xff]
    %v5730 = vld [vmem:[%s5696 + $0x108] sm:$0xff]
    %v5731 = vld [vmem:[%s5696 + $0x110] sm:$0xff]
    %v5732 = vld [vmem:[%s5696 + $0x118] sm:$0xff]
    %v5733 = vld [vmem:[%s5696 + $0x120] sm:$0xff]
    %v5734 = vld [vmem:[%s5696 + $0x128] sm:$0xff]
    %v5735 = vld [vmem:[%s5696 + $0x130] sm:$0xff]
    %v5736 = vld [vmem:[%s5696 + $0x138] sm:$0xff]
    %v5737 = vld [vmem:[%s5696 + $0x140] sm:$0xff]
    %v5738 = vld [vmem:[%s5696 + $0x148] sm:$0xff]
    %v5739 = vld [vmem:[%s5696 + $0x150] sm:$0xff]
    %v5740 = vld [vmem:[%s5696 + $0x158] sm:$0xff]
    %v5741 = vld [vmem:[%s5696 + $0x160] sm:$0xff]
    %v5742 = vld [vmem:[%s5696 + $0x168] sm:$0xff]
    %v5743 = vld [vmem:[%s5696 + $0x170] sm:$0xff]
    %v5744 = vld [vmem:[%s5696 + $0x178] sm:$0xff]
    %v5745 = vld [vmem:[%s5696 + $0x180] sm:$0xff]
    %v5746 = vld [vmem:[%s5696 + $0x188] sm:$0xff]
    %v5747 = vld [vmem:[%s5696 + $0x190] sm:$0xff]
    %v5748 = vld [vmem:[%s5696 + $0x198] sm:$0xff]
    %v5749 = vld [vmem:[%s5696 + $0x1a0] sm:$0xff]
    %v5750 = vld [vmem:[%s5696 + $0x1a8] sm:$0xff]
    %v5751 = vld [vmem:[%s5696 + $0x1b0] sm:$0xff]
    %v5752 = vld [vmem:[%s5696 + $0x1b8] sm:$0xff]
    %v5753 = vld [vmem:[%s5696 + $0x1c0] sm:$0xff]
    %v5754 = vld [vmem:[%s5696 + $0x1c8] sm:$0xff]
    %v5755 = vld [vmem:[%s5696 + $0x1d0] sm:$0xff]
    %v5756 = vld [vmem:[%s5696 + $0x1d8] sm:$0xff]
    %v5757 = vld [vmem:[%s5696 + $0x1e0] sm:$0xff]
    %v5758 = vld [vmem:[%s5696 + $0x1e8] sm:$0xff]
    %v5759 = vld [vmem:[%s5696 + $0x1f0] sm:$0xff]
    %v5760 = vld [vmem:[%s5696 + $0x1f8] sm:$0xff]
    %v5761 = vld [vmem:[%s5696 + $0x200] sm:$0xff]
    %v5762 = vld [vmem:[%s5696 + $0x208] sm:$0xff]
    %v5763 = vld [vmem:[%s5696 + $0x210] sm:$0xff]
    %v5764 = vld [vmem:[%s5696 + $0x218] sm:$0xff]
    %v5765 = vld [vmem:[%s5696 + $0x220] sm:$0xff]
    %v5766 = vld [vmem:[%s5696 + $0x228] sm:$0xff]
    %v5767 = vld [vmem:[%s5696 + $0x230] sm:$0xff]
    %v5768 = vld [vmem:[%s5696 + $0x238] sm:$0xff]
    %v5769 = vld [vmem:[%s5696 + $0x240] sm:$0xff]
    %v5770 = vld [vmem:[%s5696 + $0x248] sm:$0xff]
    %v5771 = vld [vmem:[%s5696 + $0x250] sm:$0xff]
    %v5772 = vld [vmem:[%s5696 + $0x258] sm:$0xff]
    %v5773 = vld [vmem:[%s5696 + $0x260] sm:$0xff]
    %v5774 = vld [vmem:[%s5696 + $0x268] sm:$0xff]
    %v5775 = vld [vmem:[%s5696 + $0x270] sm:$0xff]
    %v5776 = vld [vmem:[%s5696 + $0x278] sm:$0xff]
    %v5777 = vld [vmem:[%s5696 + $0x280] sm:$0xff]
    %v5778 = vld [vmem:[%s5696 + $0x288] sm:$0xff]
    %v5779 = vld [vmem:[%s5696 + $0x290] sm:$0xff]
    %v5780 = vld [vmem:[%s5696 + $0x298] sm:$0xff]
    %v5781 = vld [vmem:[%s5696 + $0x2a0] sm:$0xff]
    %v5782 = vld [vmem:[%s5696 + $0x2a8] sm:$0xff]
    %v5783 = vld [vmem:[%s5696 + $0x2b0] sm:$0xff]
    %v5784 = vld [vmem:[%s5696 + $0x2b8] sm:$0xff]
    %v5785 = vld [vmem:[%s5696 + $0x2c0] sm:$0xff]
    %v5786 = vld [vmem:[%s5696 + $0x2c8] sm:$0xff]
    %v5787 = vld [vmem:[%s5696 + $0x2d0] sm:$0xff]
    %v5788 = vld [vmem:[%s5696 + $0x2d8] sm:$0xff]
    %v5789 = vld [vmem:[%s5696 + $0x2e0] sm:$0xff]
    %v5790 = vld [vmem:[%s5696 + $0x2e8] sm:$0xff]
    %v5791 = vld [vmem:[%s5696 + $0x2f0] sm:$0xff]
    %v5792 = vld [vmem:[%s5696 + $0x2f8] sm:$0xff]
    %v5793 = vld [vmem:[%s5696 + $0x300] sm:$0xff]
    %v5794 = vld [vmem:[%s5696 + $0x308] sm:$0xff]
    %v5795 = vld [vmem:[%s5696 + $0x310] sm:$0xff]
    %v5796 = vld [vmem:[%s5696 + $0x318] sm:$0xff]
    %v5797 = vld [vmem:[%s5696 + $0x320] sm:$0xff]
    %v5798 = vld [vmem:[%s5696 + $0x328] sm:$0xff]
    %v5799 = vld [vmem:[%s5696 + $0x330] sm:$0xff]
    %v5800 = vld [vmem:[%s5696 + $0x338] sm:$0xff]
    %v5801 = vld [vmem:[%s5696 + $0x340] sm:$0xff]
    %v5802 = vld [vmem:[%s5696 + $0x348] sm:$0xff]
    %v5803 = vld [vmem:[%s5696 + $0x350] sm:$0xff]
    %v5804 = vld [vmem:[%s5696 + $0x358] sm:$0xff]
    %v5805 = vld [vmem:[%s5696 + $0x360] sm:$0xff]
    %v5806 = vld [vmem:[%s5696 + $0x368] sm:$0xff]
    %v5807 = vld [vmem:[%s5696 + $0x370] sm:$0xff]
    %v5808 = vld [vmem:[%s5696 + $0x378] sm:$0xff]
    %v5809 = vld [vmem:[%s5696 + $0x380] sm:$0xff]
    %v5810 = vld [vmem:[%s5696 + $0x388] sm:$0xff]
    %v5811 = vld [vmem:[%s5696 + $0x390] sm:$0xff]
    %v5812 = vld [vmem:[%s5696 + $0x398] sm:$0xff]
    %v5813 = vld [vmem:[%s5696 + $0x3a0] sm:$0xff]
    %v5814 = vld [vmem:[%s5696 + $0x3a8] sm:$0xff]
    %v5815 = vld [vmem:[%s5696 + $0x3b0] sm:$0xff]
    %v5816 = vld [vmem:[%s5696 + $0x3b8] sm:$0xff]
    %v5817 = vld [vmem:[%s5696 + $0x3c0] sm:$0xff]
    %v5818 = vld [vmem:[%s5696 + $0x3c8] sm:$0xff]
    %v5819 = vld [vmem:[%s5696 + $0x3d0] sm:$0xff]
    %v5820 = vld [vmem:[%s5696 + $0x3d8] sm:$0xff]
    %v5821 = vld [vmem:[%s5696 + $0x3e0] sm:$0xff]
    %v5822 = vld [vmem:[%s5696 + $0x3e8] sm:$0xff]
    %v5823 = vld [vmem:[%s5696 + $0x3f0] sm:$0xff]
    %v5824 = vld [vmem:[%s5696 + $0x3f8] sm:$0xff]
    %s5825 = scalar_lea.vmem [#allocation10], 64
    %v5826 = vld [vmem:[%s5825] ss:$8 sm:$0xf]
    %v5828 = vlaneseq
    %v5829 = vshrl.u32 %v5828, 7
    %v5830 = vsub.s32 0, %v5829
    %v5831 = vrot.slane %v5826, %v5830
    %v5832 = vlaneseq
    %v5833 = vshrl.u32 %v5832, 7
    %v5834 = vsub.s32 1, %v5833
    %v5835 = vrot.slane %v5826, %v5834
    %v5836 = vlaneseq
    %v5837 = vshrl.u32 %v5836, 7
    %v5838 = vsub.s32 2, %v5837
    %v5839 = vrot.slane %v5826, %v5838
    %v5840 = vlaneseq
    %v5841 = vshrl.u32 %v5840, 7
    %v5842 = vsub.s32 3, %v5841
    %v5843 = vrot.slane %v5826, %v5842
    %v5976 = vunpack.c.l.b16 %v5697
    %v5977 = vunpack.c.h.b16 %v5697
    %v5978 = vunpack.c.l.b16 %v5698
    %v5979 = vunpack.c.h.b16 %v5698
    %v5980 = vunpack.c.l.b16 %v5699
    %v5981 = vunpack.c.h.b16 %v5699
    %v5982 = vunpack.c.l.b16 %v5700
    %v5983 = vunpack.c.h.b16 %v5700
    %v5984 = vunpack.c.l.b16 %v5701
    %v5985 = vunpack.c.h.b16 %v5701
    %v5986 = vunpack.c.l.b16 %v5702
    %v5987 = vunpack.c.h.b16 %v5702
    %v5988 = vunpack.c.l.b16 %v5703
    %v5989 = vunpack.c.h.b16 %v5703
    %v5990 = vunpack.c.l.b16 %v5704
    %v5991 = vunpack.c.h.b16 %v5704
    %v5992 = vunpack.c.l.b16 %v5705
    %v5993 = vunpack.c.h.b16 %v5705
    %v5994 = vunpack.c.l.b16 %v5706
    %v5995 = vunpack.c.h.b16 %v5706
    %v5996 = vunpack.c.l.b16 %v5707
    %v5997 = vunpack.c.h.b16 %v5707
    %v5998 = vunpack.c.l.b16 %v5708
    %v5999 = vunpack.c.h.b16 %v5708
    %v6000 = vunpack.c.l.b16 %v5709
    %v6001 = vunpack.c.h.b16 %v5709
    %v6002 = vunpack.c.l.b16 %v5710
    %v6003 = vunpack.c.h.b16 %v5710
    %v6004 = vunpack.c.l.b16 %v5711
    %v6005 = vunpack.c.h.b16 %v5711
    %v6006 = vunpack.c.l.b16 %v5712
    %v6007 = vunpack.c.h.b16 %v5712
    %v6008 = vunpack.c.l.b16 %v5713
    %v6009 = vunpack.c.h.b16 %v5713
    %v6010 = vunpack.c.l.b16 %v5714
    %v6011 = vunpack.c.h.b16 %v5714
    %v6012 = vunpack.c.l.b16 %v5715
    %v6013 = vunpack.c.h.b16 %v5715
    %v6014 = vunpack.c.l.b16 %v5716
    %v6015 = vunpack.c.h.b16 %v5716
    %v6016 = vunpack.c.l.b16 %v5717
    %v6017 = vunpack.c.h.b16 %v5717
    %v6018 = vunpack.c.l.b16 %v5718
    %v6019 = vunpack.c.h.b16 %v5718
    %v6020 = vunpack.c.l.b16 %v5719
    %v6021 = vunpack.c.h.b16 %v5719
    %v6022 = vunpack.c.l.b16 %v5720
    %v6023 = vunpack.c.h.b16 %v5720
    %v6024 = vunpack.c.l.b16 %v5721
    %v6025 = vunpack.c.h.b16 %v5721
    %v6026 = vunpack.c.l.b16 %v5722
    %v6027 = vunpack.c.h.b16 %v5722
    %v6028 = vunpack.c.l.b16 %v5723
    %v6029 = vunpack.c.h.b16 %v5723
    %v6030 = vunpack.c.l.b16 %v5724
    %v6031 = vunpack.c.h.b16 %v5724
    %v6032 = vunpack.c.l.b16 %v5725
    %v6033 = vunpack.c.h.b16 %v5725
    %v6034 = vunpack.c.l.b16 %v5726
    %v6035 = vunpack.c.h.b16 %v5726
    %v6036 = vunpack.c.l.b16 %v5727
    %v6037 = vunpack.c.h.b16 %v5727
    %v6038 = vunpack.c.l.b16 %v5728
    %v6039 = vunpack.c.h.b16 %v5728
    %v6040 = vunpack.c.l.b16 %v5729
    %v6041 = vunpack.c.h.b16 %v5729
    %v6042 = vunpack.c.l.b16 %v5730
    %v6043 = vunpack.c.h.b16 %v5730
    %v6044 = vunpack.c.l.b16 %v5731
    %v6045 = vunpack.c.h.b16 %v5731
    %v6046 = vunpack.c.l.b16 %v5732
    %v6047 = vunpack.c.h.b16 %v5732
    %v6048 = vunpack.c.l.b16 %v5733
    %v6049 = vunpack.c.h.b16 %v5733
    %v6050 = vunpack.c.l.b16 %v5734
    %v6051 = vunpack.c.h.b16 %v5734
    %v6052 = vunpack.c.l.b16 %v5735
    %v6053 = vunpack.c.h.b16 %v5735
    %v6054 = vunpack.c.l.b16 %v5736
    %v6055 = vunpack.c.h.b16 %v5736
    %v6056 = vunpack.c.l.b16 %v5737
    %v6057 = vunpack.c.h.b16 %v5737
    %v6058 = vunpack.c.l.b16 %v5738
    %v6059 = vunpack.c.h.b16 %v5738
    %v6060 = vunpack.c.l.b16 %v5739
    %v6061 = vunpack.c.h.b16 %v5739
    %v6062 = vunpack.c.l.b16 %v5740
    %v6063 = vunpack.c.h.b16 %v5740
    %v6064 = vunpack.c.l.b16 %v5741
    %v6065 = vunpack.c.h.b16 %v5741
    %v6066 = vunpack.c.l.b16 %v5742
    %v6067 = vunpack.c.h.b16 %v5742
    %v6068 = vunpack.c.l.b16 %v5743
    %v6069 = vunpack.c.h.b16 %v5743
    %v6070 = vunpack.c.l.b16 %v5744
    %v6071 = vunpack.c.h.b16 %v5744
    %v6072 = vunpack.c.l.b16 %v5745
    %v6073 = vunpack.c.h.b16 %v5745
    %v6074 = vunpack.c.l.b16 %v5746
    %v6075 = vunpack.c.h.b16 %v5746
    %v6076 = vunpack.c.l.b16 %v5747
    %v6077 = vunpack.c.h.b16 %v5747
    %v6078 = vunpack.c.l.b16 %v5748
    %v6079 = vunpack.c.h.b16 %v5748
    %v6080 = vunpack.c.l.b16 %v5749
    %v6081 = vunpack.c.h.b16 %v5749
    %v6082 = vunpack.c.l.b16 %v5750
    %v6083 = vunpack.c.h.b16 %v5750
    %v6084 = vunpack.c.l.b16 %v5751
    %v6085 = vunpack.c.h.b16 %v5751
    %v6086 = vunpack.c.l.b16 %v5752
    %v6087 = vunpack.c.h.b16 %v5752
    %v6088 = vunpack.c.l.b16 %v5753
    %v6089 = vunpack.c.h.b16 %v5753
    %v6090 = vunpack.c.l.b16 %v5754
    %v6091 = vunpack.c.h.b16 %v5754
    %v6092 = vunpack.c.l.b16 %v5755
    %v6093 = vunpack.c.h.b16 %v5755
    %v6094 = vunpack.c.l.b16 %v5756
    %v6095 = vunpack.c.h.b16 %v5756
    %v6096 = vunpack.c.l.b16 %v5757
    %v6097 = vunpack.c.h.b16 %v5757
    %v6098 = vunpack.c.l.b16 %v5758
    %v6099 = vunpack.c.h.b16 %v5758
    %v6100 = vunpack.c.l.b16 %v5759
    %v6101 = vunpack.c.h.b16 %v5759
    %v6102 = vunpack.c.l.b16 %v5760
    %v6103 = vunpack.c.h.b16 %v5760
    %v6104 = vunpack.c.l.b16 %v5761
    %v6105 = vunpack.c.h.b16 %v5761
    %v6106 = vunpack.c.l.b16 %v5762
    %v6107 = vunpack.c.h.b16 %v5762
    %v6108 = vunpack.c.l.b16 %v5763
    %v6109 = vunpack.c.h.b16 %v5763
    %v6110 = vunpack.c.l.b16 %v5764
    %v6111 = vunpack.c.h.b16 %v5764
    %v6112 = vunpack.c.l.b16 %v5765
    %v6113 = vunpack.c.h.b16 %v5765
    %v6114 = vunpack.c.l.b16 %v5766
    %v6115 = vunpack.c.h.b16 %v5766
    %v6116 = vunpack.c.l.b16 %v5767
    %v6117 = vunpack.c.h.b16 %v5767
    %v6118 = vunpack.c.l.b16 %v5768
    %v6119 = vunpack.c.h.b16 %v5768
    %v6120 = vunpack.c.l.b16 %v5769
    %v6121 = vunpack.c.h.b16 %v5769
    %v6122 = vunpack.c.l.b16 %v5770
    %v6123 = vunpack.c.h.b16 %v5770
    %v6124 = vunpack.c.l.b16 %v5771
    %v6125 = vunpack.c.h.b16 %v5771
    %v6126 = vunpack.c.l.b16 %v5772
    %v6127 = vunpack.c.h.b16 %v5772
    %v6128 = vunpack.c.l.b16 %v5773
    %v6129 = vunpack.c.h.b16 %v5773
    %v6130 = vunpack.c.l.b16 %v5774
    %v6131 = vunpack.c.h.b16 %v5774
    %v6132 = vunpack.c.l.b16 %v5775
    %v6133 = vunpack.c.h.b16 %v5775
    %v6134 = vunpack.c.l.b16 %v5776
    %v6135 = vunpack.c.h.b16 %v5776
    %v6136 = vunpack.c.l.b16 %v5777
    %v6137 = vunpack.c.h.b16 %v5777
    %v6138 = vunpack.c.l.b16 %v5778
    %v6139 = vunpack.c.h.b16 %v5778
    %v6140 = vunpack.c.l.b16 %v5779
    %v6141 = vunpack.c.h.b16 %v5779
    %v6142 = vunpack.c.l.b16 %v5780
    %v6143 = vunpack.c.h.b16 %v5780
    %v6144 = vunpack.c.l.b16 %v5781
    %v6145 = vunpack.c.h.b16 %v5781
    %v6146 = vunpack.c.l.b16 %v5782
    %v6147 = vunpack.c.h.b16 %v5782
    %v6148 = vunpack.c.l.b16 %v5783
    %v6149 = vunpack.c.h.b16 %v5783
    %v6150 = vunpack.c.l.b16 %v5784
    %v6151 = vunpack.c.h.b16 %v5784
    %v6152 = vunpack.c.l.b16 %v5785
    %v6153 = vunpack.c.h.b16 %v5785
    %v6154 = vunpack.c.l.b16 %v5786
    %v6155 = vunpack.c.h.b16 %v5786
    %v6156 = vunpack.c.l.b16 %v5787
    %v6157 = vunpack.c.h.b16 %v5787
    %v6158 = vunpack.c.l.b16 %v5788
    %v6159 = vunpack.c.h.b16 %v5788
    %v6160 = vunpack.c.l.b16 %v5789
    %v6161 = vunpack.c.h.b16 %v5789
    %v6162 = vunpack.c.l.b16 %v5790
    %v6163 = vunpack.c.h.b16 %v5790
    %v6164 = vunpack.c.l.b16 %v5791
    %v6165 = vunpack.c.h.b16 %v5791
    %v6166 = vunpack.c.l.b16 %v5792
    %v6167 = vunpack.c.h.b16 %v5792
    %v6168 = vunpack.c.l.b16 %v5793
    %v6169 = vunpack.c.h.b16 %v5793
    %v6170 = vunpack.c.l.b16 %v5794
    %v6171 = vunpack.c.h.b16 %v5794
    %v6172 = vunpack.c.l.b16 %v5795
    %v6173 = vunpack.c.h.b16 %v5795
    %v6174 = vunpack.c.l.b16 %v5796
    %v6175 = vunpack.c.h.b16 %v5796
    %v6176 = vunpack.c.l.b16 %v5797
    %v6177 = vunpack.c.h.b16 %v5797
    %v6178 = vunpack.c.l.b16 %v5798
    %v6179 = vunpack.c.h.b16 %v5798
    %v6180 = vunpack.c.l.b16 %v5799
    %v6181 = vunpack.c.h.b16 %v5799
    %v6182 = vunpack.c.l.b16 %v5800
    %v6183 = vunpack.c.h.b16 %v5800
    %v6184 = vunpack.c.l.b16 %v5801
    %v6185 = vunpack.c.h.b16 %v5801
    %v6186 = vunpack.c.l.b16 %v5802
    %v6187 = vunpack.c.h.b16 %v5802
    %v6188 = vunpack.c.l.b16 %v5803
    %v6189 = vunpack.c.h.b16 %v5803
    %v6190 = vunpack.c.l.b16 %v5804
    %v6191 = vunpack.c.h.b16 %v5804
    %v6192 = vunpack.c.l.b16 %v5805
    %v6193 = vunpack.c.h.b16 %v5805
    %v6194 = vunpack.c.l.b16 %v5806
    %v6195 = vunpack.c.h.b16 %v5806
    %v6196 = vunpack.c.l.b16 %v5807
    %v6197 = vunpack.c.h.b16 %v5807
    %v6198 = vunpack.c.l.b16 %v5808
    %v6199 = vunpack.c.h.b16 %v5808
    %v6200 = vunpack.c.l.b16 %v5809
    %v6201 = vunpack.c.h.b16 %v5809
    %v6202 = vunpack.c.l.b16 %v5810
    %v6203 = vunpack.c.h.b16 %v5810
    %v6204 = vunpack.c.l.b16 %v5811
    %v6205 = vunpack.c.h.b16 %v5811
    %v6206 = vunpack.c.l.b16 %v5812
    %v6207 = vunpack.c.h.b16 %v5812
    %v6208 = vunpack.c.l.b16 %v5813
    %v6209 = vunpack.c.h.b16 %v5813
    %v6210 = vunpack.c.l.b16 %v5814
    %v6211 = vunpack.c.h.b16 %v5814
    %v6212 = vunpack.c.l.b16 %v5815
    %v6213 = vunpack.c.h.b16 %v5815
    %v6214 = vunpack.c.l.b16 %v5816
    %v6215 = vunpack.c.h.b16 %v5816
    %v6216 = vunpack.c.l.b16 %v5817
    %v6217 = vunpack.c.h.b16 %v5817
    %v6218 = vunpack.c.l.b16 %v5818
    %v6219 = vunpack.c.h.b16 %v5818
    %v6220 = vunpack.c.l.b16 %v5819
    %v6221 = vunpack.c.h.b16 %v5819
    %v6222 = vunpack.c.l.b16 %v5820
    %v6223 = vunpack.c.h.b16 %v5820
    %v6224 = vunpack.c.l.b16 %v5821
    %v6225 = vunpack.c.h.b16 %v5821
    %v6226 = vunpack.c.l.b16 %v5822
    %v6227 = vunpack.c.h.b16 %v5822
    %v6228 = vunpack.c.l.b16 %v5823
    %v6229 = vunpack.c.h.b16 %v5823
    %v6230 = vunpack.c.l.b16 %v5824
    %v6231 = vunpack.c.h.b16 %v5824
    %v6232 = vpack.c.b16 %v5980, %v5976
    %v6233 = vpack.c.b16 %v5981, %v5977
    %v6234 = vpack.c.b16 %v5982, %v5978
    %v6235 = vpack.c.b16 %v5983, %v5979
    %v6236 = vpack.c.b16 %v5988, %v5984
    %v6237 = vpack.c.b16 %v5989, %v5985
    %v6238 = vpack.c.b16 %v5990, %v5986
    %v6239 = vpack.c.b16 %v5991, %v5987
    %v6240 = vpack.c.b16 %v5996, %v5992
    %v6241 = vpack.c.b16 %v5997, %v5993
    %v6242 = vpack.c.b16 %v5998, %v5994
    %v6243 = vpack.c.b16 %v5999, %v5995
    %v6244 = vpack.c.b16 %v6004, %v6000
    %v6245 = vpack.c.b16 %v6005, %v6001
    %v6246 = vpack.c.b16 %v6006, %v6002
    %v6247 = vpack.c.b16 %v6007, %v6003
    %v6248 = vpack.c.b16 %v6012, %v6008
    %v6249 = vpack.c.b16 %v6013, %v6009
    %v6250 = vpack.c.b16 %v6014, %v6010
    %v6251 = vpack.c.b16 %v6015, %v6011
    %v6252 = vpack.c.b16 %v6020, %v6016
    %v6253 = vpack.c.b16 %v6021, %v6017
    %v6254 = vpack.c.b16 %v6022, %v6018
    %v6255 = vpack.c.b16 %v6023, %v6019
    %v6256 = vpack.c.b16 %v6028, %v6024
    %v6257 = vpack.c.b16 %v6029, %v6025
    %v6258 = vpack.c.b16 %v6030, %v6026
    %v6259 = vpack.c.b16 %v6031, %v6027
    %v6260 = vpack.c.b16 %v6036, %v6032
    %v6261 = vpack.c.b16 %v6037, %v6033
    %v6262 = vpack.c.b16 %v6038, %v6034
    %v6263 = vpack.c.b16 %v6039, %v6035
    %v6264 = vpack.c.b16 %v6044, %v6040
    %v6265 = vpack.c.b16 %v6045, %v6041
    %v6266 = vpack.c.b16 %v6046, %v6042
    %v6267 = vpack.c.b16 %v6047, %v6043
    %v6268 = vpack.c.b16 %v6052, %v6048
    %v6269 = vpack.c.b16 %v6053, %v6049
    %v6270 = vpack.c.b16 %v6054, %v6050
    %v6271 = vpack.c.b16 %v6055, %v6051
    %v6272 = vpack.c.b16 %v6060, %v6056
    %v6273 = vpack.c.b16 %v6061, %v6057
    %v6274 = vpack.c.b16 %v6062, %v6058
    %v6275 = vpack.c.b16 %v6063, %v6059
    %v6276 = vpack.c.b16 %v6068, %v6064
    %v6277 = vpack.c.b16 %v6069, %v6065
    %v6278 = vpack.c.b16 %v6070, %v6066
    %v6279 = vpack.c.b16 %v6071, %v6067
    %v6280 = vpack.c.b16 %v6076, %v6072
    %v6281 = vpack.c.b16 %v6077, %v6073
    %v6282 = vpack.c.b16 %v6078, %v6074
    %v6283 = vpack.c.b16 %v6079, %v6075
    %v6284 = vpack.c.b16 %v6084, %v6080
    %v6285 = vpack.c.b16 %v6085, %v6081
    %v6286 = vpack.c.b16 %v6086, %v6082
    %v6287 = vpack.c.b16 %v6087, %v6083
    %v6288 = vpack.c.b16 %v6092, %v6088
    %v6289 = vpack.c.b16 %v6093, %v6089
    %v6290 = vpack.c.b16 %v6094, %v6090
    %v6291 = vpack.c.b16 %v6095, %v6091
    %v6292 = vpack.c.b16 %v6100, %v6096
    %v6293 = vpack.c.b16 %v6101, %v6097
    %v6294 = vpack.c.b16 %v6102, %v6098
    %v6295 = vpack.c.b16 %v6103, %v6099
    %v6296 = vpack.c.b16 %v6108, %v6104
    %v6297 = vpack.c.b16 %v6109, %v6105
    %v6298 = vpack.c.b16 %v6110, %v6106
    %v6299 = vpack.c.b16 %v6111, %v6107
    %v6300 = vpack.c.b16 %v6116, %v6112
    %v6301 = vpack.c.b16 %v6117, %v6113
    %v6302 = vpack.c.b16 %v6118, %v6114
    %v6303 = vpack.c.b16 %v6119, %v6115
    %v6304 = vpack.c.b16 %v6124, %v6120
    %v6305 = vpack.c.b16 %v6125, %v6121
    %v6306 = vpack.c.b16 %v6126, %v6122
    %v6307 = vpack.c.b16 %v6127, %v6123
    %v6308 = vpack.c.b16 %v6132, %v6128
    %v6309 = vpack.c.b16 %v6133, %v6129
    %v6310 = vpack.c.b16 %v6134, %v6130
    %v6311 = vpack.c.b16 %v6135, %v6131
    %v6312 = vpack.c.b16 %v6140, %v6136
    %v6313 = vpack.c.b16 %v6141, %v6137
    %v6314 = vpack.c.b16 %v6142, %v6138
    %v6315 = vpack.c.b16 %v6143, %v6139
    %v6316 = vpack.c.b16 %v6148, %v6144
    %v6317 = vpack.c.b16 %v6149, %v6145
    %v6318 = vpack.c.b16 %v6150, %v6146
    %v6319 = vpack.c.b16 %v6151, %v6147
    %v6320 = vpack.c.b16 %v6156, %v6152
    %v6321 = vpack.c.b16 %v6157, %v6153
    %v6322 = vpack.c.b16 %v6158, %v6154
    %v6323 = vpack.c.b16 %v6159, %v6155
    %v6324 = vpack.c.b16 %v6164, %v6160
    %v6325 = vpack.c.b16 %v6165, %v6161
    %v6326 = vpack.c.b16 %v6166, %v6162
    %v6327 = vpack.c.b16 %v6167, %v6163
    %v6328 = vpack.c.b16 %v6172, %v6168
    %v6329 = vpack.c.b16 %v6173, %v6169
    %v6330 = vpack.c.b16 %v6174, %v6170
    %v6331 = vpack.c.b16 %v6175, %v6171
    %v6332 = vpack.c.b16 %v6180, %v6176
    %v6333 = vpack.c.b16 %v6181, %v6177
    %v6334 = vpack.c.b16 %v6182, %v6178
    %v6335 = vpack.c.b16 %v6183, %v6179
    %v6336 = vpack.c.b16 %v6188, %v6184
    %v6337 = vpack.c.b16 %v6189, %v6185
    %v6338 = vpack.c.b16 %v6190, %v6186
    %v6339 = vpack.c.b16 %v6191, %v6187
    %v6340 = vpack.c.b16 %v6196, %v6192
    %v6341 = vpack.c.b16 %v6197, %v6193
    %v6342 = vpack.c.b16 %v6198, %v6194
    %v6343 = vpack.c.b16 %v6199, %v6195
    %v6344 = vpack.c.b16 %v6204, %v6200
    %v6345 = vpack.c.b16 %v6205, %v6201
    %v6346 = vpack.c.b16 %v6206, %v6202
    %v6347 = vpack.c.b16 %v6207, %v6203
    %v6348 = vpack.c.b16 %v6212, %v6208
    %v6349 = vpack.c.b16 %v6213, %v6209
    %v6350 = vpack.c.b16 %v6214, %v6210
    %v6351 = vpack.c.b16 %v6215, %v6211
    %v6352 = vpack.c.b16 %v6220, %v6216
    %v6353 = vpack.c.b16 %v6221, %v6217
    %v6354 = vpack.c.b16 %v6222, %v6218
    %v6355 = vpack.c.b16 %v6223, %v6219
    %v6356 = vpack.c.b16 %v6228, %v6224
    %v6357 = vpack.c.b16 %v6229, %v6225
    %v6358 = vpack.c.b16 %v6230, %v6226
    %v6359 = vpack.c.b16 %v6231, %v6227
    %6488 = vmatprep.subr.bf16.mxu0 %v6233
    %6489 = vmatpush1.bf16.msra.mxu0 %v6232
    %6490 = vmatprep.subr.bf16.mxu0 %v6237
    %6491 = vmatpush1.bf16.msra.mxu0 %v6236
    %6492 = vmatprep.subr.bf16.mxu0 %v6241
    %6493 = vmatpush1.bf16.msra.mxu0 %v6240
    %6494 = vmatprep.subr.bf16.mxu0 %v6245
    %6495 = vmatpush1.bf16.msra.mxu0 %v6244
    %6496 = vmatprep.subr.bf16.mxu0 %v6249
    %6497 = vmatpush1.bf16.msra.mxu0 %v6248
    %6498 = vmatprep.subr.bf16.mxu0 %v6253
    %6499 = vmatpush1.bf16.msra.mxu0 %v6252
    %6500 = vmatprep.subr.bf16.mxu0 %v6257
    %6501 = vmatpush1.bf16.msra.mxu0 %v6256
    %6502 = vmatprep.subr.bf16.mxu0 %v6261
    %6503 = vmatpush1.bf16.msra.mxu0 %v6260
    %6504 = vmatprep.subr.bf16.mxu0 %v6265
    %6505 = vmatpush1.bf16.msra.mxu0 %v6264
    %6506 = vmatprep.subr.bf16.mxu0 %v6269
    %6507 = vmatpush1.bf16.msra.mxu0 %v6268
    %6508 = vmatprep.subr.bf16.mxu0 %v6273
    %6509 = vmatpush1.bf16.msra.mxu0 %v6272
    %6510 = vmatprep.subr.bf16.mxu0 %v6277
    %6511 = vmatpush1.bf16.msra.mxu0 %v6276
    %6512 = vmatprep.subr.bf16.mxu0 %v6281
    %6513 = vmatpush1.bf16.msra.mxu0 %v6280
    %6514 = vmatprep.subr.bf16.mxu0 %v6285
    %6515 = vmatpush1.bf16.msra.mxu0 %v6284
    %6516 = vmatprep.subr.bf16.mxu0 %v6289
    %6517 = vmatpush1.bf16.msra.mxu0 %v6288
    %6518 = vmatprep.subr.bf16.mxu0 %v6293
    %6519 = vmatpush1.bf16.msra.mxu0 %v6292
    %6520 = vmatprep.mubr.bf16.mxu0 %v5693
    %6521 = vmatmul.mubr.bf16.gmra.mrb[0].mxu0 %v5692
    %v6522 = vpop.f32.mrb[0].mxu0
    %v6523 = vadd.f32 %v5831, %v6522
    %v6524 = vpop.f32.mrb[0].mxu0
    %v6525 = vadd.f32 %v5835, %v6524
    %v6526 = vpop.f32.mrb[0].mxu0
    %v6527 = vpop.f32.mrb[0].mxu0
    %6528 = vdwg.mxu0
    %6529 = vmatprep.subr.bf16.mxu0 %v6297
    %6530 = vmatpush1.bf16.msra.mxu0 %v6296
    %6531 = vmatprep.subr.bf16.mxu0 %v6301
    %6532 = vmatpush1.bf16.msra.mxu0 %v6300
    %6533 = vmatprep.subr.bf16.mxu0 %v6305
    %6534 = vmatpush1.bf16.msra.mxu0 %v6304
    %6535 = vmatprep.subr.bf16.mxu0 %v6309
    %6536 = vmatpush1.bf16.msra.mxu0 %v6308
    %6537 = vmatprep.subr.bf16.mxu0 %v6313
    %6538 = vmatpush1.bf16.msra.mxu0 %v6312
    %6539 = vmatprep.subr.bf16.mxu0 %v6317
    %6540 = vmatpush1.bf16.msra.mxu0 %v6316
    %6541 = vmatprep.subr.bf16.mxu0 %v6321
    %6542 = vmatpush1.bf16.msra.mxu0 %v6320
    %6543 = vmatprep.subr.bf16.mxu0 %v6325
    %6544 = vmatpush1.bf16.msra.mxu0 %v6324
    %6545 = vmatprep.subr.bf16.mxu0 %v6329
    %6546 = vmatpush1.bf16.msra.mxu0 %v6328
    %6547 = vmatprep.subr.bf16.mxu0 %v6333
    %6548 = vmatpush1.bf16.msra.mxu0 %v6332
    %6549 = vmatprep.subr.bf16.mxu0 %v6337
    %6550 = vmatpush1.bf16.msra.mxu0 %v6336
    %6551 = vmatprep.subr.bf16.mxu0 %v6341
    %6552 = vmatpush1.bf16.msra.mxu0 %v6340
    %6553 = vmatprep.subr.bf16.mxu0 %v6345
    %6554 = vmatpush1.bf16.msra.mxu0 %v6344
    %6555 = vmatprep.subr.bf16.mxu0 %v6349
    %6556 = vmatpush1.bf16.msra.mxu0 %v6348
    %6557 = vmatprep.subr.bf16.mxu0 %v6353
    %6558 = vmatpush1.bf16.msra.mxu0 %v6352
    %6559 = vmatprep.subr.bf16.mxu0 %v6357
    %6560 = vmatpush1.bf16.msra.mxu0 %v6356
    %6561 = vmatprep.mubr.bf16.mxu0 %v5695
    %6562 = vmatmul.mubr.bf16.gmra.mrb[0].mxu0 %v5694
    %v6563 = vpop.f32.mrb[0].mxu0
    %v6564 = vadd.f32 %v6523, %v6563
    %v6565 = vpop.f32.mrb[0].mxu0
    %v6566 = vadd.f32 %v6525, %v6565
    %v6567 = vpop.f32.mrb[0].mxu0
    %v6568 = vpop.f32.mrb[0].mxu0
    %6569 = vdwg.mxu0
    %6570 = vmatprep.subr.bf16.mxu0 %v6235
    %6571 = vmatpush1.bf16.msra.mxu0 %v6234
    %6572 = vmatprep.subr.bf16.mxu0 %v6239
    %6573 = vmatpush1.bf16.msra.mxu0 %v6238
    %6574 = vmatprep.subr.bf16.mxu0 %v6243
    %6575 = vmatpush1.bf16.msra.mxu0 %v6242
    %6576 = vmatprep.subr.bf16.mxu0 %v6247
    %6577 = vmatpush1.bf16.msra.mxu0 %v6246
    %6578 = vmatprep.subr.bf16.mxu0 %v6251
    %6579 = vmatpush1.bf16.msra.mxu0 %v6250
    %6580 = vmatprep.subr.bf16.mxu0 %v6255
    %6581 = vmatpush1.bf16.msra.mxu0 %v6254
    %6582 = vmatprep.subr.bf16.mxu0 %v6259
    %6583 = vmatpush1.bf16.msra.mxu0 %v6258
    %6584 = vmatprep.subr.bf16.mxu0 %v6263
    %6585 = vmatpush1.bf16.msra.mxu0 %v6262
    %6586 = vmatprep.subr.bf16.mxu0 %v6267
    %6587 = vmatpush1.bf16.msra.mxu0 %v6266
    %6588 = vmatprep.subr.bf16.mxu0 %v6271
    %6589 = vmatpush1.bf16.msra.mxu0 %v6270
    %6590 = vmatprep.subr.bf16.mxu0 %v6275
    %6591 = vmatpush1.bf16.msra.mxu0 %v6274
    %6592 = vmatprep.subr.bf16.mxu0 %v6279
    %6593 = vmatpush1.bf16.msra.mxu0 %v6278
    %6594 = vmatprep.subr.bf16.mxu0 %v6283
    %6595 = vmatpush1.bf16.msra.mxu0 %v6282
    %6596 = vmatprep.subr.bf16.mxu0 %v6287
    %6597 = vmatpush1.bf16.msra.mxu0 %v6286
    %6598 = vmatprep.subr.bf16.mxu0 %v6291
    %6599 = vmatpush1.bf16.msra.mxu0 %v6290
    %6600 = vmatprep.subr.bf16.mxu0 %v6295
    %6601 = vmatpush1.bf16.msra.mxu0 %v6294
    %6602 = vmatprep.mubr.bf16.mxu0 %v5693
    %6603 = vmatmul.mubr.bf16.gmra.mrb[0].mxu0 %v5692
    %v6604 = vpop.f32.mrb[0].mxu0
    %v6605 = vadd.f32 %v5839, %v6604
    %v6606 = vpop.f32.mrb[0].mxu0
    %v6607 = vadd.f32 %v5843, %v6606
    %v6608 = vpop.f32.mrb[0].mxu0
    %v6609 = vpop.f32.mrb[0].mxu0
    %6610 = vdwg.mxu0
    %6611 = vmatprep.subr.bf16.mxu0 %v6299
    %6612 = vmatpush1.bf16.msra.mxu0 %v6298
    %6613 = vmatprep.subr.bf16.mxu0 %v6303
    %6614 = vmatpush1.bf16.msra.mxu0 %v6302
    %6615 = vmatprep.subr.bf16.mxu0 %v6307
    %6616 = vmatpush1.bf16.msra.mxu0 %v6306
    %6617 = vmatprep.subr.bf16.mxu0 %v6311
    %6618 = vmatpush1.bf16.msra.mxu0 %v6310
    %6619 = vmatprep.subr.bf16.mxu0 %v6315
    %6620 = vmatpush1.bf16.msra.mxu0 %v6314
    %6621 = vmatprep.subr.bf16.mxu0 %v6319
    %6622 = vmatpush1.bf16.msra.mxu0 %v6318
    %6623 = vmatprep.subr.bf16.mxu0 %v6323
    %6624 = vmatpush1.bf16.msra.mxu0 %v6322
    %6625 = vmatprep.subr.bf16.mxu0 %v6327
    %6626 = vmatpush1.bf16.msra.mxu0 %v6326
    %6627 = vmatprep.subr.bf16.mxu0 %v6331
    %6628 = vmatpush1.bf16.msra.mxu0 %v6330
    %6629 = vmatprep.subr.bf16.mxu0 %v6335
    %6630 = vmatpush1.bf16.msra.mxu0 %v6334
    %6631 = vmatprep.subr.bf16.mxu0 %v6339
    %6632 = vmatpush1.bf16.msra.mxu0 %v6338
    %6633 = vmatprep.subr.bf16.mxu0 %v6343
    %6634 = vmatpush1.bf16.msra.mxu0 %v6342
    %6635 = vmatprep.subr.bf16.mxu0 %v6347
    %6636 = vmatpush1.bf16.msra.mxu0 %v6346
    %6637 = vmatprep.subr.bf16.mxu0 %v6351
    %6638 = vmatpush1.bf16.msra.mxu0 %v6350
    %6639 = vmatprep.subr.bf16.mxu0 %v6355
    %6640 = vmatpush1.bf16.msra.mxu0 %v6354
    %6641 = vmatprep.subr.bf16.mxu0 %v6359
    %6642 = vmatpush1.bf16.msra.mxu0 %v6358
    %6643 = vmatprep.mubr.bf16.mxu0 %v5695
    %6644 = vmatmul.mubr.bf16.gmra.mrb[0].mxu0 %v5694
    %v6645 = vpop.f32.mrb[0].mxu0
    %v6646 = vadd.f32 %v6605, %v6645
    %v6647 = vpop.f32.mrb[0].mxu0
    %v6648 = vadd.f32 %v6607, %v6647
    %v6649 = vpop.f32.mrb[0].mxu0
    %v6650 = vpop.f32.mrb[0].mxu0
    %6651 = vdwg.mxu0
    %s6652 = scalar_lea.vmem [#allocation10], 65
    %v6653 = vld [vmem:[%s6652] ss:$8 sm:$0xf]
    %s6654 = scalar_lea.vmem [#allocation10], 66
    %v6655 = vld [vmem:[%s6654] ss:$8 sm:$0xf]
    %v6656 = vadd.f32 %v6564, %v6566
    %v6657 = vadd.f32 %v6656, %v6646
    %v6658 = vadd.f32 %v6657, %v6648
    %6659 = vadd.xlane.f32.xlu0 %v6658
    %v6660 = vpop.xlane.xlu0 %6659
    %v6661 = vmul.f32 %v6660, %v1242
    %v6662 = vmul.f32 %v6564, %v6564
    %v6663 = vmul.f32 %v6566, %v6566
    %v6664 = vmul.f32 %v6646, %v6646
    %v6665 = vmul.f32 %v6648, %v6648
    %v6666 = vadd.f32 %v6662, %v6663
    %v6667 = vadd.f32 %v6666, %v6664
    %v6668 = vadd.f32 %v6667, %v6665
    %6669 = vadd.xlane.f32.xlu0 %v6668
    %v6670 = vpop.xlane.xlu0 %6669
    %v6671 = vmul.f32 %v6670, %v1242
    %v6672 = vmul.f32 %v6661, %v6661
    %v6673 = vsub.f32 %v6671, %v6672
    %v6674 = vadd.f32 %v6673, 1e-05
    %v6675 = vrsqrt.pop %v6674
    %v6677 = vlaneseq
    %v6678 = vshrl.u32 %v6677, 7
    %v6679 = vsub.s32 0, %v6678
    %v6680 = vrot.slane %v6653, %v6679
    %v6681 = vlaneseq
    %v6682 = vshrl.u32 %v6681, 7
    %v6683 = vsub.s32 1, %v6682
    %v6684 = vrot.slane %v6653, %v6683
    %v6685 = vlaneseq
    %v6686 = vshrl.u32 %v6685, 7
    %v6687 = vsub.s32 2, %v6686
    %v6688 = vrot.slane %v6653, %v6687
    %v6689 = vlaneseq
    %v6690 = vshrl.u32 %v6689, 7
    %v6691 = vsub.s32 3, %v6690
    %v6692 = vrot.slane %v6653, %v6691
    %v6697 = vmul.f32 %v6675, %v6680
    %v6698 = vmul.f32 %v6675, %v6684
    %v6699 = vmul.f32 %v6675, %v6688
    %v6700 = vmul.f32 %v6675, %v6692
    %v6701 = vmul.f32 %v6564, %v6697
    %v6702 = vmul.f32 %v6566, %v6698
    %v6703 = vmul.f32 %v6646, %v6699
    %v6704 = vmul.f32 %v6648, %v6700
    %v6705 = vmul.f32 %v6661, %v6697
    %v6706 = vmul.f32 %v6661, %v6698
    %v6707 = vmul.f32 %v6661, %v6699
    %v6708 = vmul.f32 %v6661, %v6700
    %v6710 = vlaneseq
    %v6711 = vshrl.u32 %v6710, 7
    %v6712 = vsub.s32 0, %v6711
    %v6713 = vrot.slane %v6655, %v6712
    %v6714 = vlaneseq
    %v6715 = vshrl.u32 %v6714, 7
    %v6716 = vsub.s32 1, %v6715
    %v6717 = vrot.slane %v6655, %v6716
    %v6718 = vlaneseq
    %v6719 = vshrl.u32 %v6718, 7
    %v6720 = vsub.s32 2, %v6719
    %v6721 = vrot.slane %v6655, %v6720
    %v6722 = vlaneseq
    %v6723 = vshrl.u32 %v6722, 7
    %v6724 = vsub.s32 3, %v6723
    %v6725 = vrot.slane %v6655, %v6724
    %v6730 = vsub.f32 %v6713, %v6705
    %v6731 = vsub.f32 %v6717, %v6706
    %v6732 = vsub.f32 %v6721, %v6707
    %v6733 = vsub.f32 %v6725, %v6708
    %v6734 = vadd.f32 %v6701, %v6730
    %v6735 = vadd.f32 %v6702, %v6731
    %v6736 = vadd.f32 %v6703, %v6732
    %v6737 = vadd.f32 %v6704, %v6733
    %v6738 = vadd.f32 %v6734, %v4606
    %v6739 = vadd.f32 %v6735, %v4607
    %v6740 = vadd.f32 %v6736, %v4608
    %v6741 = vadd.f32 %v6737, %v4609
    %v6742 = vmul.f32 %v6738, 0.5
    %v6743 = vmul.f32 %v6739, 0.5
    %v6744 = vmul.f32 %v6740, 0.5
    %v6745 = vmul.f32 %v6741, 0.5
    %v6746 = vmul.f32 %v6738, %v6738
    %v6747 = vmul.f32 %v6739, %v6739
    %v6748 = vmul.f32 %v6740, %v6740
    %v6749 = vmul.f32 %v6741, %v6741
    %v6750 = vmul.f32 %v6746, %v6738
    %v6751 = vmul.f32 %v6747, %v6739
    %v6752 = vmul.f32 %v6748, %v6740
    %v6753 = vmul.f32 %v6749, %v6741
    %v6754 = vmul.f32 %v6750, 0.044715
    %v6755 = vmul.f32 %v6751, 0.044715
    %v6756 = vmul.f32 %v6752, 0.044715
    %v6757 = vmul.f32 %v6753, 0.044715
    %v6758 = vadd.f32 %v6738, %v6754
    %v6759 = vadd.f32 %v6739, %v6755
    %v6760 = vadd.f32 %v6740, %v6756
    %v6761 = vadd.f32 %v6741, %v6757
    %v6762 = vmul.f32 %v6758, 0.7978846
    %v6763 = vmul.f32 %v6759, 0.7978846
    %v6764 = vmul.f32 %v6760, 0.7978846
    %v6765 = vmul.f32 %v6761, 0.7978846
    %v6766 = vtanh.pop %v6762
    %v6767 = vtanh.pop %v6763
    %v6768 = vtanh.pop %v6764
    %v6769 = vtanh.pop %v6765
    %v6770 = vadd.f32 %v6766, 1.0
    %v6771 = vadd.f32 %v6767, 1.0
    %v6772 = vadd.f32 %v6768, 1.0
    %v6773 = vadd.f32 %v6769, 1.0
    %v6774 = vmul.f32 %v6742, %v6770
    %v6775 = vmul.f32 %v6743, %v6771
    %v6776 = vmul.f32 %v6744, %v6772
    %v6777 = vmul.f32 %v6745, %v6773
    %v6778 = vpack.c.bf16 %v6774, %v6774
    %v6779 = vpack.c.bf16 %v6775, %v6775
    %v6780 = vpack.c.bf16 %v6776, %v6776
    %v6781 = vpack.c.bf16 %v6777, %v6777
    %v6782 = vld [vmem:[#allocation7] sm:$0xff]
    %v6783 = vld [vmem:[#allocation7 + $0x8] sm:$0xff]
    %v6784 = vld [vmem:[#allocation7 + $0x10] sm:$0xff]
    %v6785 = vld [vmem:[#allocation7 + $0x18] sm:$0xff]
    %v6786 = vld [vmem:[#allocation7 + $0x20] sm:$0xff]
    %v6787 = vld [vmem:[#allocation7 + $0x28] sm:$0xff]
    %v6788 = vld [vmem:[#allocation7 + $0x30] sm:$0xff]
    %v6789 = vld [vmem:[#allocation7 + $0x38] sm:$0xff]
    %v6790 = vld [vmem:[#allocation7 + $0x40] sm:$0xff]
    %v6791 = vld [vmem:[#allocation7 + $0x48] sm:$0xff]
    %v6792 = vld [vmem:[#allocation7 + $0x50] sm:$0xff]
    %v6793 = vld [vmem:[#allocation7 + $0x58] sm:$0xff]
    %v6794 = vld [vmem:[#allocation7 + $0x60] sm:$0xff]
    %v6795 = vld [vmem:[#allocation7 + $0x68] sm:$0xff]
    %v6796 = vld [vmem:[#allocation7 + $0x70] sm:$0xff]
    %v6797 = vld [vmem:[#allocation7 + $0x78] sm:$0xff]
    %v6798 = vld [vmem:[#allocation7 + $0x80] sm:$0xff]
    %v6799 = vld [vmem:[#allocation7 + $0x88] sm:$0xff]
    %v6800 = vld [vmem:[#allocation7 + $0x90] sm:$0xff]
    %v6801 = vld [vmem:[#allocation7 + $0x98] sm:$0xff]
    %v6802 = vld [vmem:[#allocation7 + $0xa0] sm:$0xff]
    %v6803 = vld [vmem:[#allocation7 + $0xa8] sm:$0xff]
    %v6804 = vld [vmem:[#allocation7 + $0xb0] sm:$0xff]
    %v6805 = vld [vmem:[#allocation7 + $0xb8] sm:$0xff]
    %v6806 = vld [vmem:[#allocation7 + $0xc0] sm:$0xff]
    %v6807 = vld [vmem:[#allocation7 + $0xc8] sm:$0xff]
    %v6808 = vld [vmem:[#allocation7 + $0xd0] sm:$0xff]
    %v6809 = vld [vmem:[#allocation7 + $0xd8] sm:$0xff]
    %v6810 = vld [vmem:[#allocation7 + $0xe0] sm:$0xff]
    %v6811 = vld [vmem:[#allocation7 + $0xe8] sm:$0xff]
    %v6812 = vld [vmem:[#allocation7 + $0xf0] sm:$0xff]
    %v6813 = vld [vmem:[#allocation7 + $0xf8] sm:$0xff]
    %v6814 = vld [vmem:[#allocation7 + $0x100] sm:$0xff]
    %v6815 = vld [vmem:[#allocation7 + $0x108] sm:$0xff]
    %v6816 = vld [vmem:[#allocation7 + $0x110] sm:$0xff]
    %v6817 = vld [vmem:[#allocation7 + $0x118] sm:$0xff]
    %v6818 = vld [vmem:[#allocation7 + $0x120] sm:$0xff]
    %v6819 = vld [vmem:[#allocation7 + $0x128] sm:$0xff]
    %v6820 = vld [vmem:[#allocation7 + $0x130] sm:$0xff]
    %v6821 = vld [vmem:[#allocation7 + $0x138] sm:$0xff]
    %v6822 = vld [vmem:[#allocation7 + $0x140] sm:$0xff]
    %v6823 = vld [vmem:[#allocation7 + $0x148] sm:$0xff]
    %v6824 = vld [vmem:[#allocation7 + $0x150] sm:$0xff]
    %v6825 = vld [vmem:[#allocation7 + $0x158] sm:$0xff]
    %v6826 = vld [vmem:[#allocation7 + $0x160] sm:$0xff]
    %v6827 = vld [vmem:[#allocation7 + $0x168] sm:$0xff]
    %v6828 = vld [vmem:[#allocation7 + $0x170] sm:$0xff]
    %v6829 = vld [vmem:[#allocation7 + $0x178] sm:$0xff]
    %v6830 = vld [vmem:[#allocation7 + $0x180] sm:$0xff]
    %v6831 = vld [vmem:[#allocation7 + $0x188] sm:$0xff]
    %v6832 = vld [vmem:[#allocation7 + $0x190] sm:$0xff]
    %v6833 = vld [vmem:[#allocation7 + $0x198] sm:$0xff]
    %v6834 = vld [vmem:[#allocation7 + $0x1a0] sm:$0xff]
    %v6835 = vld [vmem:[#allocation7 + $0x1a8] sm:$0xff]
    %v6836 = vld [vmem:[#allocation7 + $0x1b0] sm:$0xff]
    %v6837 = vld [vmem:[#allocation7 + $0x1b8] sm:$0xff]
    %v6838 = vld [vmem:[#allocation7 + $0x1c0] sm:$0xff]
    %v6839 = vld [vmem:[#allocation7 + $0x1c8] sm:$0xff]
    %v6840 = vld [vmem:[#allocation7 + $0x1d0] sm:$0xff]
    %v6841 = vld [vmem:[#allocation7 + $0x1d8] sm:$0xff]
    %v6842 = vld [vmem:[#allocation7 + $0x1e0] sm:$0xff]
    %v6843 = vld [vmem:[#allocation7 + $0x1e8] sm:$0xff]
    %v6844 = vld [vmem:[#allocation7 + $0x1f0] sm:$0xff]
    %v6845 = vld [vmem:[#allocation7 + $0x1f8] sm:$0xff]
    %s6846 = scalar_lea.vmem [#allocation10], 67
    %v6847 = vld [vmem:[%s6846] ss:$8 sm:$0x3]
    %v6849 = vlaneseq
    %v6850 = vshrl.u32 %v6849, 7
    %v6851 = vsub.s32 0, %v6850
    %v6852 = vrot.slane %v6847, %v6851
    %v6853 = vlaneseq
    %v6854 = vshrl.u32 %v6853, 7
    %v6855 = vsub.s32 1, %v6854
    %v6856 = vrot.slane %v6847, %v6855
    %v6923 = vunpack.c.l.b16 %v6782
    %v6924 = vunpack.c.h.b16 %v6782
    %v6925 = vunpack.c.l.b16 %v6783
    %v6926 = vunpack.c.h.b16 %v6783
    %v6927 = vunpack.c.l.b16 %v6784
    %v6928 = vunpack.c.h.b16 %v6784
    %v6929 = vunpack.c.l.b16 %v6785
    %v6930 = vunpack.c.h.b16 %v6785
    %v6931 = vunpack.c.l.b16 %v6786
    %v6932 = vunpack.c.h.b16 %v6786
    %v6933 = vunpack.c.l.b16 %v6787
    %v6934 = vunpack.c.h.b16 %v6787
    %v6935 = vunpack.c.l.b16 %v6788
    %v6936 = vunpack.c.h.b16 %v6788
    %v6937 = vunpack.c.l.b16 %v6789
    %v6938 = vunpack.c.h.b16 %v6789
    %v6939 = vunpack.c.l.b16 %v6790
    %v6940 = vunpack.c.h.b16 %v6790
    %v6941 = vunpack.c.l.b16 %v6791
    %v6942 = vunpack.c.h.b16 %v6791
    %v6943 = vunpack.c.l.b16 %v6792
    %v6944 = vunpack.c.h.b16 %v6792
    %v6945 = vunpack.c.l.b16 %v6793
    %v6946 = vunpack.c.h.b16 %v6793
    %v6947 = vunpack.c.l.b16 %v6794
    %v6948 = vunpack.c.h.b16 %v6794
    %v6949 = vunpack.c.l.b16 %v6795
    %v6950 = vunpack.c.h.b16 %v6795
    %v6951 = vunpack.c.l.b16 %v6796
    %v6952 = vunpack.c.h.b16 %v6796
    %v6953 = vunpack.c.l.b16 %v6797
    %v6954 = vunpack.c.h.b16 %v6797
    %v6955 = vunpack.c.l.b16 %v6798
    %v6956 = vunpack.c.h.b16 %v6798
    %v6957 = vunpack.c.l.b16 %v6799
    %v6958 = vunpack.c.h.b16 %v6799
    %v6959 = vunpack.c.l.b16 %v6800
    %v6960 = vunpack.c.h.b16 %v6800
    %v6961 = vunpack.c.l.b16 %v6801
    %v6962 = vunpack.c.h.b16 %v6801
    %v6963 = vunpack.c.l.b16 %v6802
    %v6964 = vunpack.c.h.b16 %v6802
    %v6965 = vunpack.c.l.b16 %v6803
    %v6966 = vunpack.c.h.b16 %v6803
    %v6967 = vunpack.c.l.b16 %v6804
    %v6968 = vunpack.c.h.b16 %v6804
    %v6969 = vunpack.c.l.b16 %v6805
    %v6970 = vunpack.c.h.b16 %v6805
    %v6971 = vunpack.c.l.b16 %v6806
    %v6972 = vunpack.c.h.b16 %v6806
    %v6973 = vunpack.c.l.b16 %v6807
    %v6974 = vunpack.c.h.b16 %v6807
    %v6975 = vunpack.c.l.b16 %v6808
    %v6976 = vunpack.c.h.b16 %v6808
    %v6977 = vunpack.c.l.b16 %v6809
    %v6978 = vunpack.c.h.b16 %v6809
    %v6979 = vunpack.c.l.b16 %v6810
    %v6980 = vunpack.c.h.b16 %v6810
    %v6981 = vunpack.c.l.b16 %v6811
    %v6982 = vunpack.c.h.b16 %v6811
    %v6983 = vunpack.c.l.b16 %v6812
    %v6984 = vunpack.c.h.b16 %v6812
    %v6985 = vunpack.c.l.b16 %v6813
    %v6986 = vunpack.c.h.b16 %v6813
    %v6987 = vunpack.c.l.b16 %v6814
    %v6988 = vunpack.c.h.b16 %v6814
    %v6989 = vunpack.c.l.b16 %v6815
    %v6990 = vunpack.c.h.b16 %v6815
    %v6991 = vunpack.c.l.b16 %v6816
    %v6992 = vunpack.c.h.b16 %v6816
    %v6993 = vunpack.c.l.b16 %v6817
    %v6994 = vunpack.c.h.b16 %v6817
    %v6995 = vunpack.c.l.b16 %v6818
    %v6996 = vunpack.c.h.b16 %v6818
    %v6997 = vunpack.c.l.b16 %v6819
    %v6998 = vunpack.c.h.b16 %v6819
    %v6999 = vunpack.c.l.b16 %v6820
    %v7000 = vunpack.c.h.b16 %v6820
    %v7001 = vunpack.c.l.b16 %v6821
    %v7002 = vunpack.c.h.b16 %v6821
    %v7003 = vunpack.c.l.b16 %v6822
    %v7004 = vunpack.c.h.b16 %v6822
    %v7005 = vunpack.c.l.b16 %v6823
    %v7006 = vunpack.c.h.b16 %v6823
    %v7007 = vunpack.c.l.b16 %v6824
    %v7008 = vunpack.c.h.b16 %v6824
    %v7009 = vunpack.c.l.b16 %v6825
    %v7010 = vunpack.c.h.b16 %v6825
    %v7011 = vunpack.c.l.b16 %v6826
    %v7012 = vunpack.c.h.b16 %v6826
    %v7013 = vunpack.c.l.b16 %v6827
    %v7014 = vunpack.c.h.b16 %v6827
    %v7015 = vunpack.c.l.b16 %v6828
    %v7016 = vunpack.c.h.b16 %v6828
    %v7017 = vunpack.c.l.b16 %v6829
    %v7018 = vunpack.c.h.b16 %v6829
    %v7019 = vunpack.c.l.b16 %v6830
    %v7020 = vunpack.c.h.b16 %v6830
    %v7021 = vunpack.c.l.b16 %v6831
    %v7022 = vunpack.c.h.b16 %v6831
    %v7023 = vunpack.c.l.b16 %v6832
    %v7024 = vunpack.c.h.b16 %v6832
    %v7025 = vunpack.c.l.b16 %v6833
    %v7026 = vunpack.c.h.b16 %v6833
    %v7027 = vunpack.c.l.b16 %v6834
    %v7028 = vunpack.c.h.b16 %v6834
    %v7029 = vunpack.c.l.b16 %v6835
    %v7030 = vunpack.c.h.b16 %v6835
    %v7031 = vunpack.c.l.b16 %v6836
    %v7032 = vunpack.c.h.b16 %v6836
    %v7033 = vunpack.c.l.b16 %v6837
    %v7034 = vunpack.c.h.b16 %v6837
    %v7035 = vunpack.c.l.b16 %v6838
    %v7036 = vunpack.c.h.b16 %v6838
    %v7037 = vunpack.c.l.b16 %v6839
    %v7038 = vunpack.c.h.b16 %v6839
    %v7039 = vunpack.c.l.b16 %v6840
    %v7040 = vunpack.c.h.b16 %v6840
    %v7041 = vunpack.c.l.b16 %v6841
    %v7042 = vunpack.c.h.b16 %v6841
    %v7043 = vunpack.c.l.b16 %v6842
    %v7044 = vunpack.c.h.b16 %v6842
    %v7045 = vunpack.c.l.b16 %v6843
    %v7046 = vunpack.c.h.b16 %v6843
    %v7047 = vunpack.c.l.b16 %v6844
    %v7048 = vunpack.c.h.b16 %v6844
    %v7049 = vunpack.c.l.b16 %v6845
    %v7050 = vunpack.c.h.b16 %v6845
    %v7051 = vpack.c.b16 %v6925, %v6923
    %v7052 = vpack.c.b16 %v6926, %v6924
    %v7053 = vpack.c.b16 %v6929, %v6927
    %v7054 = vpack.c.b16 %v6930, %v6928
    %v7055 = vpack.c.b16 %v6933, %v6931
    %v7056 = vpack.c.b16 %v6934, %v6932
    %v7057 = vpack.c.b16 %v6937, %v6935
    %v7058 = vpack.c.b16 %v6938, %v6936
    %v7059 = vpack.c.b16 %v6941, %v6939
    %v7060 = vpack.c.b16 %v6942, %v6940
    %v7061 = vpack.c.b16 %v6945, %v6943
    %v7062 = vpack.c.b16 %v6946, %v6944
    %v7063 = vpack.c.b16 %v6949, %v6947
    %v7064 = vpack.c.b16 %v6950, %v6948
    %v7065 = vpack.c.b16 %v6953, %v6951
    %v7066 = vpack.c.b16 %v6954, %v6952
    %v7067 = vpack.c.b16 %v6957, %v6955
    %v7068 = vpack.c.b16 %v6958, %v6956
    %v7069 = vpack.c.b16 %v6961, %v6959
    %v7070 = vpack.c.b16 %v6962, %v6960
    %v7071 = vpack.c.b16 %v6965, %v6963
    %v7072 = vpack.c.b16 %v6966, %v6964
    %v7073 = vpack.c.b16 %v6969, %v6967
    %v7074 = vpack.c.b16 %v6970, %v6968
    %v7075 = vpack.c.b16 %v6973, %v6971
    %v7076 = vpack.c.b16 %v6974, %v6972
    %v7077 = vpack.c.b16 %v6977, %v6975
    %v7078 = vpack.c.b16 %v6978, %v6976
    %v7079 = vpack.c.b16 %v6981, %v6979
    %v7080 = vpack.c.b16 %v6982, %v6980
    %v7081 = vpack.c.b16 %v6985, %v6983
    %v7082 = vpack.c.b16 %v6986, %v6984
    %v7083 = vpack.c.b16 %v6989, %v6987
    %v7084 = vpack.c.b16 %v6990, %v6988
    %v7085 = vpack.c.b16 %v6993, %v6991
    %v7086 = vpack.c.b16 %v6994, %v6992
    %v7087 = vpack.c.b16 %v6997, %v6995
    %v7088 = vpack.c.b16 %v6998, %v6996
    %v7089 = vpack.c.b16 %v7001, %v6999
    %v7090 = vpack.c.b16 %v7002, %v7000
    %v7091 = vpack.c.b16 %v7005, %v7003
    %v7092 = vpack.c.b16 %v7006, %v7004
    %v7093 = vpack.c.b16 %v7009, %v7007
    %v7094 = vpack.c.b16 %v7010, %v7008
    %v7095 = vpack.c.b16 %v7013, %v7011
    %v7096 = vpack.c.b16 %v7014, %v7012
    %v7097 = vpack.c.b16 %v7017, %v7015
    %v7098 = vpack.c.b16 %v7018, %v7016
    %v7099 = vpack.c.b16 %v7021, %v7019
    %v7100 = vpack.c.b16 %v7022, %v7020
    %v7101 = vpack.c.b16 %v7025, %v7023
    %v7102 = vpack.c.b16 %v7026, %v7024
    %v7103 = vpack.c.b16 %v7029, %v7027
    %v7104 = vpack.c.b16 %v7030, %v7028
    %v7105 = vpack.c.b16 %v7033, %v7031
    %v7106 = vpack.c.b16 %v7034, %v7032
    %v7107 = vpack.c.b16 %v7037, %v7035
    %v7108 = vpack.c.b16 %v7038, %v7036
    %v7109 = vpack.c.b16 %v7041, %v7039
    %v7110 = vpack.c.b16 %v7042, %v7040
    %v7111 = vpack.c.b16 %v7045, %v7043
    %v7112 = vpack.c.b16 %v7046, %v7044
    %v7113 = vpack.c.b16 %v7049, %v7047
    %v7114 = vpack.c.b16 %v7050, %v7048
    %7179 = vmatprep.subr.bf16.mxu0 %v7052
    %7180 = vmatpush1.bf16.msra.mxu0 %v7051
    %7181 = vmatprep.subr.bf16.mxu0 %v7054
    %7182 = vmatpush1.bf16.msra.mxu0 %v7053
    %7183 = vmatprep.subr.bf16.mxu0 %v7056
    %7184 = vmatpush1.bf16.msra.mxu0 %v7055
    %7185 = vmatprep.subr.bf16.mxu0 %v7058
    %7186 = vmatpush1.bf16.msra.mxu0 %v7057
    %7187 = vmatprep.subr.bf16.mxu0 %v7060
    %7188 = vmatpush1.bf16.msra.mxu0 %v7059
    %7189 = vmatprep.subr.bf16.mxu0 %v7062
    %7190 = vmatpush1.bf16.msra.mxu0 %v7061
    %7191 = vmatprep.subr.bf16.mxu0 %v7064
    %7192 = vmatpush1.bf16.msra.mxu0 %v7063
    %7193 = vmatprep.subr.bf16.mxu0 %v7066
    %7194 = vmatpush1.bf16.msra.mxu0 %v7065
    %7195 = vmatprep.subr.bf16.mxu0 %v7068
    %7196 = vmatpush1.bf16.msra.mxu0 %v7067
    %7197 = vmatprep.subr.bf16.mxu0 %v7070
    %7198 = vmatpush1.bf16.msra.mxu0 %v7069
    %7199 = vmatprep.subr.bf16.mxu0 %v7072
    %7200 = vmatpush1.bf16.msra.mxu0 %v7071
    %7201 = vmatprep.subr.bf16.mxu0 %v7074
    %7202 = vmatpush1.bf16.msra.mxu0 %v7073
    %7203 = vmatprep.subr.bf16.mxu0 %v7076
    %7204 = vmatpush1.bf16.msra.mxu0 %v7075
    %7205 = vmatprep.subr.bf16.mxu0 %v7078
    %7206 = vmatpush1.bf16.msra.mxu0 %v7077
    %7207 = vmatprep.subr.bf16.mxu0 %v7080
    %7208 = vmatpush1.bf16.msra.mxu0 %v7079
    %7209 = vmatprep.subr.bf16.mxu0 %v7082
    %7210 = vmatpush1.bf16.msra.mxu0 %v7081
    %7211 = vmatprep.mubr.bf16.mxu0 %v6779
    %7212 = vmatmul.mubr.bf16.gmra.mrb[0].mxu0 %v6778
    %v7213 = vpop.f32.mrb[0].mxu0
    %v7214 = vadd.f32 %v6852, %v7213
    %v7215 = vpop.f32.mrb[0].mxu0
    %v7216 = vadd.f32 %v6856, %v7215
    %v7217 = vpop.f32.mrb[0].mxu0
    %v7218 = vpop.f32.mrb[0].mxu0
    %7219 = vdwg.mxu0
    %7220 = vmatprep.subr.bf16.mxu0 %v7084
    %7221 = vmatpush1.bf16.msra.mxu0 %v7083
    %7222 = vmatprep.subr.bf16.mxu0 %v7086
    %7223 = vmatpush1.bf16.msra.mxu0 %v7085
    %7224 = vmatprep.subr.bf16.mxu0 %v7088
    %7225 = vmatpush1.bf16.msra.mxu0 %v7087
    %7226 = vmatprep.subr.bf16.mxu0 %v7090
    %7227 = vmatpush1.bf16.msra.mxu0 %v7089
    %7228 = vmatprep.subr.bf16.mxu0 %v7092
    %7229 = vmatpush1.bf16.msra.mxu0 %v7091
    %7230 = vmatprep.subr.bf16.mxu0 %v7094
    %7231 = vmatpush1.bf16.msra.mxu0 %v7093
    %7232 = vmatprep.subr.bf16.mxu0 %v7096
    %7233 = vmatpush1.bf16.msra.mxu0 %v7095
    %7234 = vmatprep.subr.bf16.mxu0 %v7098
    %7235 = vmatpush1.bf16.msra.mxu0 %v7097
    %7236 = vmatprep.subr.bf16.mxu0 %v7100
    %7237 = vmatpush1.bf16.msra.mxu0 %v7099
    %7238 = vmatprep.subr.bf16.mxu0 %v7102
    %7239 = vmatpush1.bf16.msra.mxu0 %v7101
    %7240 = vmatprep.subr.bf16.mxu0 %v7104
    %7241 = vmatpush1.bf16.msra.mxu0 %v7103
    %7242 = vmatprep.subr.bf16.mxu0 %v7106
    %7243 = vmatpush1.bf16.msra.mxu0 %v7105
    %7244 = vmatprep.subr.bf16.mxu0 %v7108
    %7245 = vmatpush1.bf16.msra.mxu0 %v7107
    %7246 = vmatprep.subr.bf16.mxu0 %v7110
    %7247 = vmatpush1.bf16.msra.mxu0 %v7109
    %7248 = vmatprep.subr.bf16.mxu0 %v7112
    %7249 = vmatpush1.bf16.msra.mxu0 %v7111
    %7250 = vmatprep.subr.bf16.mxu0 %v7114
    %7251 = vmatpush1.bf16.msra.mxu0 %v7113
    %7252 = vmatprep.mubr.bf16.mxu0 %v6781
    %7253 = vmatmul.mubr.bf16.gmra.mrb[0].mxu0 %v6780
    %v7254 = vpop.f32.mrb[0].mxu0
    %v7255 = vadd.f32 %v7214, %v7254
    %v7256 = vpop.f32.mrb[0].mxu0
    %v7257 = vadd.f32 %v7216, %v7256
    %v7258 = vpop.f32.mrb[0].mxu0
    %v7259 = vpop.f32.mrb[0].mxu0
    %7260 = vdwg.mxu0
    %s7261 = scalar_lea.vmem [#allocation10], 68
    %v7262 = vld [vmem:[%s7261] ss:$8 sm:$0x3]
    %s7263 = scalar_lea.vmem [#allocation10], 69
    %v7264 = vld [vmem:[%s7263] ss:$8 sm:$0x3]
    %v7265 = vadd.f32 %v7255, %v7257
    %7266 = vadd.xlane.f32.xlu0 %v7265
    %v7267 = vpop.xlane.xlu0 %7266
    %v7268 = vrcp.pop 256.0
    %v7269 = vmul.f32 %v7267, %v7268
    %v7270 = vmul.f32 %v7255, %v7255
    %v7271 = vmul.f32 %v7257, %v7257
    %v7272 = vadd.f32 %v7270, %v7271
    %7273 = vadd.xlane.f32.xlu0 %v7272
    %v7274 = vpop.xlane.xlu0 %7273
    %v7275 = vmul.f32 %v7274, %v7268
    %v7276 = vmul.f32 %v7269, %v7269
    %v7277 = vsub.f32 %v7275, %v7276
    %v7278 = vadd.f32 %v7277, 1e-05
    %v7279 = vrsqrt.pop %v7278
    %v7281 = vlaneseq
    %v7282 = vshrl.u32 %v7281, 7
    %v7283 = vsub.s32 0, %v7282
    %v7284 = vrot.slane %v7262, %v7283
    %v7285 = vlaneseq
    %v7286 = vshrl.u32 %v7285, 7
    %v7287 = vsub.s32 1, %v7286
    %v7288 = vrot.slane %v7262, %v7287
    %v7291 = vmul.f32 %v7279, %v7284
    %v7292 = vmul.f32 %v7279, %v7288
    %v7293 = vmul.f32 %v7255, %v7291
    %v7294 = vmul.f32 %v7257, %v7292
    %v7295 = vmul.f32 %v7269, %v7291
    %v7296 = vmul.f32 %v7269, %v7292
    %v7298 = vlaneseq
    %v7299 = vshrl.u32 %v7298, 7
    %v7300 = vsub.s32 0, %v7299
    %v7301 = vrot.slane %v7264, %v7300
    %v7302 = vlaneseq
    %v7303 = vshrl.u32 %v7302, 7
    %v7304 = vsub.s32 1, %v7303
    %v7305 = vrot.slane %v7264, %v7304
    %v7308 = vsub.f32 %v7301, %v7295
    %v7309 = vsub.f32 %v7305, %v7296
    %v7310 = vadd.f32 %v7293, %v7308
    %v7311 = vadd.f32 %v7294, %v7309
    %vm7312 = vcmp.gt.f32.partialorder %v7310, 0.0
    %vm7313 = vcmp.gt.f32.partialorder %v7311, 0.0
    %v7314 = vmul.f32 %v7310, 1.442695
    %v7315 = vpow.pop %v7314
    %v7316 = vmul.f32 %v7311, 1.442695
    %v7317 = vpow.pop %v7316
    %v7318 = vsub.f32 %v7315, 1.0
    %v7319 = vsub.f32 %v7317, 1.0
    %v7320 = vmul.f32 %v7318, 1.6732632
    %v7321 = vmul.f32 %v7319, 1.6732632
    %v7322 = vsel %vm7312, %v7310, %v7320
    %v7323 = vsel %vm7313, %v7311, %v7321
    %v7324 = vmul.f32 %v7322, 1.050701
    %v7325 = vmul.f32 %v7323, 1.050701
    %v7326 = vpack.c.bf16 %v7324, %v7324
    %v7327 = vpack.c.bf16 %v7325, %v7325
    %v7328 = vld [vmem:[#allocation9] sm:$0xf]
    %v7329 = vld [vmem:[#allocation9 + $0x4] sm:$0xf]
    %v7330 = vld [vmem:[#allocation9 + $0x8] sm:$0xf]
    %v7331 = vld [vmem:[#allocation9 + $0xc] sm:$0xf]
    %v7332 = vld [vmem:[#allocation9 + $0x10] sm:$0xf]
    %v7333 = vld [vmem:[#allocation9 + $0x14] sm:$0xf]
    %v7334 = vld [vmem:[#allocation9 + $0x18] sm:$0xf]
    %v7335 = vld [vmem:[#allocation9 + $0x1c] sm:$0xf]
    %v7336 = vld [vmem:[#allocation9 + $0x20] sm:$0xf]
    %v7337 = vld [vmem:[#allocation9 + $0x24] sm:$0xf]
    %v7338 = vld [vmem:[#allocation9 + $0x28] sm:$0xf]
    %v7339 = vld [vmem:[#allocation9 + $0x2c] sm:$0xf]
    %v7340 = vld [vmem:[#allocation9 + $0x30] sm:$0xf]
    %v7341 = vld [vmem:[#allocation9 + $0x34] sm:$0xf]
    %v7342 = vld [vmem:[#allocation9 + $0x38] sm:$0xf]
    %v7343 = vld [vmem:[#allocation9 + $0x3c] sm:$0xf]
    %v7344 = vld [vmem:[#allocation9 + $0x40] sm:$0xf]
    %v7345 = vld [vmem:[#allocation9 + $0x44] sm:$0xf]
    %v7346 = vld [vmem:[#allocation9 + $0x48] sm:$0xf]
    %v7347 = vld [vmem:[#allocation9 + $0x4c] sm:$0xf]
    %v7348 = vld [vmem:[#allocation9 + $0x50] sm:$0xf]
    %v7349 = vld [vmem:[#allocation9 + $0x54] sm:$0xf]
    %v7350 = vld [vmem:[#allocation9 + $0x58] sm:$0xf]
    %v7351 = vld [vmem:[#allocation9 + $0x5c] sm:$0xf]
    %v7352 = vld [vmem:[#allocation9 + $0x60] sm:$0xf]
    %v7353 = vld [vmem:[#allocation9 + $0x64] sm:$0xf]
    %v7354 = vld [vmem:[#allocation9 + $0x68] sm:$0xf]
    %v7355 = vld [vmem:[#allocation9 + $0x6c] sm:$0xf]
    %v7356 = vld [vmem:[#allocation9 + $0x70] sm:$0xf]
    %v7357 = vld [vmem:[#allocation9 + $0x74] sm:$0xf]
    %v7358 = vld [vmem:[#allocation9 + $0x78] sm:$0xf]
    %v7359 = vld [vmem:[#allocation9 + $0x7c] sm:$0xf]
    %v7360 = vld [vmem:[#allocation10 + $0x46] ss:$0 sm:$0xff]
    %v7393 = vunpack.c.l.b16 %v7328
    %v7394 = vunpack.c.l.b16 %v7329
    %v7395 = vunpack.c.l.b16 %v7330
    %v7396 = vunpack.c.l.b16 %v7331
    %v7397 = vunpack.c.l.b16 %v7332
    %v7398 = vunpack.c.l.b16 %v7333
    %v7399 = vunpack.c.l.b16 %v7334
    %v7400 = vunpack.c.l.b16 %v7335
    %v7401 = vunpack.c.l.b16 %v7336
    %v7402 = vunpack.c.l.b16 %v7337
    %v7403 = vunpack.c.l.b16 %v7338
    %v7404 = vunpack.c.l.b16 %v7339
    %v7405 = vunpack.c.l.b16 %v7340
    %v7406 = vunpack.c.l.b16 %v7341
    %v7407 = vunpack.c.l.b16 %v7342
    %v7408 = vunpack.c.l.b16 %v7343
    %v7409 = vunpack.c.l.b16 %v7344
    %v7410 = vunpack.c.l.b16 %v7345
    %v7411 = vunpack.c.l.b16 %v7346
    %v7412 = vunpack.c.l.b16 %v7347
    %v7413 = vunpack.c.l.b16 %v7348
    %v7414 = vunpack.c.l.b16 %v7349
    %v7415 = vunpack.c.l.b16 %v7350
    %v7416 = vunpack.c.l.b16 %v7351
    %v7417 = vunpack.c.l.b16 %v7352
    %v7418 = vunpack.c.l.b16 %v7353
    %v7419 = vunpack.c.l.b16 %v7354
    %v7420 = vunpack.c.l.b16 %v7355
    %v7421 = vunpack.c.l.b16 %v7356
    %v7422 = vunpack.c.l.b16 %v7357
    %v7423 = vunpack.c.l.b16 %v7358
    %v7424 = vunpack.c.l.b16 %v7359
    %v7425 = vpack.c.b16 %v7394, %v7393
    %v7426 = vpack.c.b16 %v7396, %v7395
    %v7427 = vpack.c.b16 %v7398, %v7397
    %v7428 = vpack.c.b16 %v7400, %v7399
    %v7429 = vpack.c.b16 %v7402, %v7401
    %v7430 = vpack.c.b16 %v7404, %v7403
    %v7431 = vpack.c.b16 %v7406, %v7405
    %v7432 = vpack.c.b16 %v7408, %v7407
    %v7433 = vpack.c.b16 %v7410, %v7409
    %v7434 = vpack.c.b16 %v7412, %v7411
    %v7435 = vpack.c.b16 %v7414, %v7413
    %v7436 = vpack.c.b16 %v7416, %v7415
    %v7437 = vpack.c.b16 %v7418, %v7417
    %v7438 = vpack.c.b16 %v7420, %v7419
    %v7439 = vpack.c.b16 %v7422, %v7421
    %v7440 = vpack.c.b16 %v7424, %v7423
    %7457 = vmatprep.subr.bf16.mxu0 0
    %7458 = vmatpush1.bf16.msra.mxu0 %v7425
    %7459 = vmatprep.subr.bf16.mxu0 0
    %7460 = vmatpush1.bf16.msra.mxu0 %v7426
    %7461 = vmatprep.subr.bf16.mxu0 0
    %7462 = vmatpush1.bf16.msra.mxu0 %v7427
    %7463 = vmatprep.subr.bf16.mxu0 0
    %7464 = vmatpush1.bf16.msra.mxu0 %v7428
    %7465 = vmatprep.subr.bf16.mxu0 0
    %7466 = vmatpush1.bf16.msra.mxu0 %v7429
    %7467 = vmatprep.subr.bf16.mxu0 0
    %7468 = vmatpush1.bf16.msra.mxu0 %v7430
    %7469 = vmatprep.subr.bf16.mxu0 0
    %7470 = vmatpush1.bf16.msra.mxu0 %v7431
    %7471 = vmatprep.subr.bf16.mxu0 0
    %7472 = vmatpush1.bf16.msra.mxu0 %v7432
    %7473 = vmatprep.subr.bf16.mxu0 0
    %7474 = vmatpush1.bf16.msra.mxu0 %v7433
    %7475 = vmatprep.subr.bf16.mxu0 0
    %7476 = vmatpush1.bf16.msra.mxu0 %v7434
    %7477 = vmatprep.subr.bf16.mxu0 0
    %7478 = vmatpush1.bf16.msra.mxu0 %v7435
    %7479 = vmatprep.subr.bf16.mxu0 0
    %7480 = vmatpush1.bf16.msra.mxu0 %v7436
    %7481 = vmatprep.subr.bf16.mxu0 0
    %7482 = vmatpush1.bf16.msra.mxu0 %v7437
    %7483 = vmatprep.subr.bf16.mxu0 0
    %7484 = vmatpush1.bf16.msra.mxu0 %v7438
    %7485 = vmatprep.subr.bf16.mxu0 0
    %7486 = vmatpush1.bf16.msra.mxu0 %v7439
    %7487 = vmatprep.subr.bf16.mxu0 0
    %7488 = vmatpush1.bf16.msra.mxu0 %v7440
    %7489 = vmatprep.mubr.bf16.mxu0 %v7327
    %7490 = vmatmul.mubr.bf16.gmra.mrb[0].mxu0 %v7326
    %v7491 = vpop.f32.mrb[0].mxu0
    %v7492 = vadd.f32 %v7360, %v7491
    %v7493 = vpop.f32.mrb[0].mxu0
    %v7494 = vpop.f32.mrb[0].mxu0
    %v7495 = vpop.f32.mrb[0].mxu0
    %7496 = vdwg.mxu0
    %v7497 = vld [vmem:[#allocation10 + $0x47] ss:$0 sm:$0xff]
    %v7498 = vld [vmem:[#allocation10 + $0x60] ss:$0 sm:$0xff]
    %7499 = vadd.xlane.f32.xlu0 %v7492
    %v7500 = vpop.xlane.xlu0 %7499
    %v7501 = vrcp.pop 128.0
    %v7502 = vmul.f32 %v7500, %v7501
    %v7503 = vmul.f32 %v7492, %v7492
    %7504 = vadd.xlane.f32.xlu0 %v7503
    %v7505 = vpop.xlane.xlu0 %7504
    %v7506 = vmul.f32 %v7505, %v7501
    %v7507 = vmul.f32 %v7502, %v7502
    %v7508 = vsub.f32 %v7506, %v7507
    %v7509 = vadd.f32 %v7508, 1e-05
    %v7510 = vrsqrt.pop %v7509
    %v7511 = vmul.f32 %v7510, %v7497
    %v7512 = vmul.f32 %v7492, %v7511
    %v7513 = vmul.f32 %v7502, %v7511
    %v7514 = vsub.f32 %v7498, %v7513
    %v7515 = vadd.f32 %v7512, %v7514
    %vm7516 = vcmp.gt.f32.partialorder %v7515, 0.0
    %v7517 = vmul.f32 %v7515, 1.442695
    %v7518 = vpow.pop %v7517
    %v7519 = vsub.f32 %v7518, 1.0
    %v7520 = vmul.f32 %v7519, 1.6732632
    %v7521 = vsel %vm7516, %v7515, %v7520
    %v7522 = vmul.f32 %v7521, 1.050701
    %v7523 = vld [vmem:[#allocation10 + $0x61] ss:$0 sm:$0xff]
    %v7524 = vld [vmem:[#allocation10 + $0x62] ss:$0 sm:$0xff]
    %v7525 = vmul.f32 %v7522, %v7523
    %7526 = vadd.xlane.f32.xlu0 %v7525
    %v7527 = vpop.xlane.xlu0 %7526
    %v7528 = vadd.f32 %v7527, %v7524
    %vm7529 = vcmask 7168
    %7530 = vst.msk [vmem:[%s6] sm:$0xff] %vm7529, %v7528
    // Predicated region
    $region50: #{energy_predictor.1} parent=1 // pred_check
      _
    $region51: #{energy_predictor.1} parent=1 // pred_check_branch
      %7532 = sbr.rel (0) target = $region53
    $region52: #{energy_predictor.1} parent=1 // pred_region
      _
    $region53: #{energy_predictor.1} parent=1 // pred_fallthru
      _
    // Predicated region
    $region54: #{energy_predictor.1} parent=1 // pred_check
      _
    $region55: #{energy_predictor.1} parent=1 // pred_check_branch
      %7534 = sbr.rel (0) target = $region57
    $region56: #{energy_predictor.1} parent=1 // pred_region
      _
    $region57: #{energy_predictor.1} parent=1 // pred_fallthru
      _
    %7535 = vsyncpa [#allocation3], 1
    %7536 = vsyncpa [#allocation5], 1
    %7537 = vsyncpa [#allocation8], 1
    %7538 = vsyncpa [#allocation11], 1

</llo_original>
